<compile_context>
chip_gen: v7x
topology: tpu7x:2x2x1
jax: 0.10.0
libtpu: 0.0.40
codegen_flags: <defaults>
</compile_context>

<pallas_src>
import jax
import jax.numpy as jnp
from jax import lax
from jax.experimental import pallas as pl
from jax.experimental.pallas import tpu as pltpu

T = 128      # sequence length implied by fc1 = Linear(36 * 32, 128)
C_IN = 9
C1 = 18
C2 = 36
HID = 128
T2 = T // 2  # 64
T4 = T // 4  # 32


def _har_kernel(x_ref, w1_ref, b1_ref, w2_ref, b2_ref,
                wf1_ref, bf1_ref, wf2_ref, bf2_ref,
                out_ref, p2_ref):
    n0 = x_ref.shape[0]                 # T * bb   (time-major: row = t*bb + b)
    bb = n0 // T

    # ---- conv1 (k=3, stride=1, pad=1) + ReLU, as ONE K=27 MXU matmul --------
    # Shifted taps are whole-slab sublane rolls (shift = bb, a multiple of 8);
    # rows whose roll crosses the block's time boundary are exactly the conv
    # zero-padding rows and are masked to zero.
    x = x_ref[...]                                               # (n0, 9)
    r0 = lax.broadcasted_iota(jnp.int32, (n0, 1), 0)
    x_prev = jnp.where(r0 < bb, 0.0, pltpu.roll(x, shift=bb, axis=0))
    x_next = jnp.where(r0 >= n0 - bb, 0.0, pltpu.roll(x, shift=n0 - bb, axis=0))
    lhs1 = jnp.concatenate([x_prev, x, x_next], axis=1)          # (n0, 27)
    a1 = jnp.dot(lhs1, w1_ref[...], preferred_element_type=jnp.float32)
    a1 = jnp.maximum(a1 + b1_ref[...], 0.0)                      # (n0, 18)

    # ---- maxpool(2,2) along time: pair-max of adjacent bb-row slabs ---------
    a1 = a1.reshape(T2, 2 * bb, C1)
    p1 = jnp.maximum(a1[:, :bb, :], a1[:, bb:, :]).reshape(T2 * bb, C1)

    # ---- conv2 (k=3, stride=1, pad=1) + ReLU, as ONE K=54 MXU matmul --------
    n1 = T2 * bb
    r1 = lax.broadcasted_iota(jnp.int32, (n1, 1), 0)
    p1_prev = jnp.where(r1 < bb, 0.0, pltpu.roll(p1, shift=bb, axis=0))
    p1_next = jnp.where(r1 >= n1 - bb, 0.0, pltpu.roll(p1, shift=n1 - bb, axis=0))
    lhs2 = jnp.concatenate([p1_prev, p1, p1_next], axis=1)       # (n1, 54)
    a2 = jnp.dot(lhs2, w2_ref[...], preferred_element_type=jnp.float32)
    a2 = jnp.maximum(a2 + b2_ref[...], 0.0)                      # (n1, 36)

    # ---- maxpool(2,2) --------------------------------------------------------
    a2 = a2.reshape(T4, 2 * bb, C2)
    p2_ref[...] = jnp.maximum(a2[:, :bb, :], a2[:, bb:, :])      # (T4, bb, 36)

    # ---- fc1 over the flattened (36, 32) feature map + ReLU -----------------
    # fc1 weight pre-permuted host-side to (32, 36, 128); each LHS is a dense,
    # 8-aligned (bb, 36) slab load.  Four independent accumulators expose ILP.
    accs = [jnp.zeros((bb, HID), jnp.float32) for _ in range(4)]
    for t in range(T4):
        accs[t % 4] = accs[t % 4] + jnp.dot(
            p2_ref[t], wf1_ref[t], preferred_element_type=jnp.float32)
    z1 = jnp.maximum((accs[0] + accs[1]) + (accs[2] + accs[3]) + bf1_ref[...], 0.0)

    # ---- fc2 (lane-dense output: num_classes zero-padded to 128 lanes) ------
    out_ref[...] = (jnp.dot(z1, wf2_ref[...], preferred_element_type=jnp.float32)
                    + bf2_ref[...])


def har_cnn_forward(x, params, num_classes, block_b=None):
    b = x.shape[0]
    assert x.shape == (b, T, C_IN)
    if block_b is None:
        # Multiple of 8; >=2 grid steps when the batch allows (so v7x's two
        # TensorCores both get work); capped at 32 samples/step by default
        # (lane-padded VMEM footprint is ~240 KB/sample).  Raise explicitly
        # (e.g. 64-128) on v6e for very large batches.
        half = -(-b // 2)
        block_b = min(32, max(8, ((half + 7) // 8) * 8))
    assert block_b % 8 == 0
    b_pad = ((b + block_b - 1) // block_b) * block_b
    nblk = b_pad // block_b

    xf = x.astype(jnp.float32)
    if b_pad != b:
        xf = jnp.pad(xf, ((0, b_pad - b), (0, 0), (0, 0)))
    # Time-major within each block: row = t*block_b + b.
    x2d = (xf.reshape(nblk, block_b, T, C_IN)
             .transpose(0, 2, 1, 3)
             .reshape(nblk * T * block_b, C_IN))

    # Glue: re-layout PyTorch-shaped parameters for the kernel.
    w1f = jnp.transpose(params["w1"].astype(jnp.float32), (2, 1, 0)).reshape(3 * C_IN, C1)
    w2f = jnp.transpose(params["w2"].astype(jnp.float32), (2, 1, 0)).reshape(3 * C1, C2)
    wf1k = (params["wf1"].astype(jnp.float32)
            .reshape(HID, C2, T4).transpose(2, 1, 0))            # (32, 36, 128)
    nc_pad = ((num_classes + 127) // 128) * 128
    wf2p = jnp.zeros((HID, nc_pad), jnp.float32)
    wf2p = wf2p.at[:, :num_classes].set(params["wf2"].astype(jnp.float32).T)
    bf2p = jnp.zeros((1, nc_pad), jnp.float32)
    bf2p = bf2p.at[:, :num_classes].set(params["bf2"].astype(jnp.float32)[None, :])
    b1k = params["b1"].astype(jnp.float32)[None, :]
    b2k = params["b2"].astype(jnp.float32)[None, :]
    bf1k = params["bf1"].astype(jnp.float32)[None, :]

    out = pl.pallas_call(
        _har_kernel,
        out_shape=jax.ShapeDtypeStruct((b_pad, nc_pad), jnp.float32),
        grid_spec=pltpu.PrefetchScalarGridSpec(
            num_scalar_prefetch=0,
            grid=(nblk,),
            in_specs=[
                pl.BlockSpec((T * block_b, C_IN), lambda i: (i, 0)),
                pl.BlockSpec((3 * C_IN, C1), lambda i: (0, 0)),
                pl.BlockSpec((1, C1), lambda i: (0, 0)),
                pl.BlockSpec((3 * C1, C2), lambda i: (0, 0)),
                pl.BlockSpec((1, C2), lambda i: (0, 0)),
                pl.BlockSpec((T4, C2, HID), lambda i: (0, 0, 0)),
                pl.BlockSpec((1, HID), lambda i: (0, 0)),
                pl.BlockSpec((HID, nc_pad), lambda i: (0, 0)),
                pl.BlockSpec((1, nc_pad), lambda i: (0, 0)),
            ],
            out_specs=pl.BlockSpec((block_b, nc_pad), lambda i: (i, 0)),
            scratch_shapes=[pltpu.VMEM((T4, block_b, C2), jnp.float32)],
        ),
        compiler_params=pltpu.CompilerParams(
            dimension_semantics=("parallel",),       # batch blocks shard across TCs
            vmem_limit_bytes=48 * 1024 * 1024),      # explicit budget (lane padding!)
    )(x2d, w1f, b1k, w2f, b2k, wf1k, bf1k, wf2p, bf2p)
    return out[:b, :num_classes]


def init_params(key, num_classes):
    """Deterministic PyTorch-default-style init (uniform +/- 1/sqrt(fan_in))."""
    ks = jax.random.split(key, 8)

    def u(k, shape, fan_in):
        bound = 1.0 / jnp.sqrt(jnp.float32(fan_in))
        return jax.random.uniform(k, shape, jnp.float32, -bound, bound)

    return {
        "w1": u(ks[0], (C1, C_IN, 3), C_IN * 3),
        "b1": u(ks[1], (C1,), C_IN * 3),
        "w2": u(ks[2], (C2, C1, 3), C1 * 3),
        "b2": u(ks[3], (C2,), C1 * 3),
        "wf1": u(ks[4], (HID, C2 * T4), C2 * T4),
        "bf1": u(ks[5], (HID,), C2 * T4),
        "wf2": u(ks[6], (num_classes, HID), HID),
        "bf2": u(ks[7], (num_classes,), HID),
    }


def reference_forward(x, params):
    """Pure-JAX replica of the PyTorch forward (NCL conv) for validation."""
    y = jnp.transpose(x, (0, 2, 1))                                   # (B, 9, T)
    y = lax.conv_general_dilated(y, params["w1"], (1,), [(1, 1)],
                                 dimension_numbers=("NCH", "OIH", "NCH"))
    y = jax.nn.relu(y + params["b1"][None, :, None])
    y = lax.reduce_window(y, -jnp.inf, lax.max, (1, 1, 2), (1, 1, 2), "VALID")
    y = lax.conv_general_dilated(y, params["w2"], (1,), [(1, 1)],
                                 dimension_numbers=("NCH", "OIH", "NCH"))
    y = jax.nn.relu(y + params["b2"][None, :, None])
    y = lax.reduce_window(y, -jnp.inf, lax.max, (1, 1, 2), (1, 1, 2), "VALID")
    y = y.reshape(y.shape[0], -1)                                     # (B, 1152)
    y = jax.nn.relu(y @ params["wf1"].T + params["bf1"])
    return y @ params["wf2"].T + params["bf2"]


if __name__ == "__main__":
    num_classes = 6
    key = jax.random.PRNGKey(0)
    kx, kp = jax.random.split(key)
    params = init_params(kp, num_classes)
    x = jax.random.normal(kx, (2, T, C_IN), jnp.float32)   # (batch=2, seq=128, feat=9)

    out = jax.block_until_ready(har_cnn_forward(x, params, num_classes))
    ref = jax.block_until_ready(reference_forward(x, params))

    assert out.shape == (2, num_classes), out.shape
    if not jnp.allclose(out, ref, atol=5e-2, rtol=5e-2):
        raise AssertionError(
            f"kernel/reference mismatch, max abs err {jnp.max(jnp.abs(out - ref))}")
    print("KERNEL_OK")
</pallas_src>

<mosaic_0001>
module attributes {stable_mosaic.version = 11 : i64} {
  func.func @_har_kernel(%arg0: i32, %arg1: memref<1024x9xf32, #tpu.memory_space<vmem>>, %arg2: memref<27x18xf32, #tpu.memory_space<vmem>>, %arg3: memref<1x18xf32, #tpu.memory_space<vmem>>, %arg4: memref<54x36xf32, #tpu.memory_space<vmem>>, %arg5: memref<1x36xf32, #tpu.memory_space<vmem>>, %arg6: memref<32x36x128xf32, #tpu.memory_space<vmem>>, %arg7: memref<1x128xf32, #tpu.memory_space<vmem>>, %arg8: memref<128x128xf32, #tpu.memory_space<vmem>>, %arg9: memref<1x128xf32, #tpu.memory_space<vmem>>, %arg10: memref<8x128xf32, #tpu.memory_space<vmem>>, %arg11: memref<32x8x36xf32, #tpu.memory_space<vmem>>) attributes {dimension_semantics = [#tpu.dimension_semantics<parallel>], iteration_bounds = array<i64: 1>, scalar_prefetch = 0 : i64, scratch_operands = 1 : i64, tpu.core_type = #tpu.core_type<tc>, window_params = [{transform_indices = @transform_0, window_bounds = array<i64: 1024, 9>}, {pipeline_mode = #tpu.pipeline_mode<synchronous>, transform_indices = @transform_1, window_bounds = array<i64: 27, 18>}, {pipeline_mode = #tpu.pipeline_mode<synchronous>, transform_indices = @transform_2, window_bounds = array<i64: 1, 18>}, {pipeline_mode = #tpu.pipeline_mode<synchronous>, transform_indices = @transform_3, window_bounds = array<i64: 54, 36>}, {pipeline_mode = #tpu.pipeline_mode<synchronous>, transform_indices = @transform_4, window_bounds = array<i64: 1, 36>}, {pipeline_mode = #tpu.pipeline_mode<synchronous>, transform_indices = @transform_5, window_bounds = array<i64: 32, 36, 128>}, {pipeline_mode = #tpu.pipeline_mode<synchronous>, transform_indices = @transform_6, window_bounds = array<i64: 1, 128>}, {pipeline_mode = #tpu.pipeline_mode<synchronous>, transform_indices = @transform_7, window_bounds = array<i64: 128, 128>}, {pipeline_mode = #tpu.pipeline_mode<synchronous>, transform_indices = @transform_8, window_bounds = array<i64: 1, 128>}, {transform_indices = @transform_9, window_bounds = array<i64: 8, 128>}]} {
    %c0 = arith.constant 0 : index
    %c0_0 = arith.constant 0 : index
    %0 = vector.load %arg1[%c0, %c0_0] : memref<1024x9xf32, #tpu.memory_space<vmem>>, vector<1024x9xf32>
    %1 = tpu.iota {dimensions = array<i32: 0>} : vector<1024x1xi32>
    %c8_i32 = arith.constant 8 : i32
    %2 = vector.broadcast %c8_i32 : i32 to vector<1024x1xi32>
    %3 = arith.cmpi slt, %1, %2 : vector<1024x1xi32>
    %c8_i32_1 = arith.constant 8 : i32
    %4 = tpu.dynamic_rotate %0 by %c8_i32_1 dim 0 : vector<1024x9xf32>, i32 -> vector<1024x9xf32>
    %cst = arith.constant 0.000000e+00 : f32
    %5 = vector.shape_cast %3 : vector<1024x1xi1> to vector<1024x1xi1>
    %6 = vector.broadcast %5 : vector<1024x1xi1> to vector<1024x9xi1>
    %7 = vector.broadcast %cst : f32 to vector<1024x9xf32>
    %8 = arith.select %6, %7, %4 : vector<1024x9xi1>, vector<1024x9xf32>
    %c1016_i32 = arith.constant 1016 : i32
    %9 = vector.broadcast %c1016_i32 : i32 to vector<1024x1xi32>
    %10 = arith.cmpi sge, %1, %9 : vector<1024x1xi32>
    %c1016_i32_2 = arith.constant 1016 : i32
    %11 = tpu.dynamic_rotate %0 by %c1016_i32_2 dim 0 : vector<1024x9xf32>, i32 -> vector<1024x9xf32>
    %cst_3 = arith.constant 0.000000e+00 : f32
    %12 = vector.shape_cast %10 : vector<1024x1xi1> to vector<1024x1xi1>
    %13 = vector.broadcast %12 : vector<1024x1xi1> to vector<1024x9xi1>
    %14 = vector.broadcast %cst_3 : f32 to vector<1024x9xf32>
    %15 = arith.select %13, %14, %11 : vector<1024x9xi1>, vector<1024x9xf32>
    %16 = tpu.concatenate %8, %0, %15 in 1 : vector<1024x9xf32>, vector<1024x9xf32>, vector<1024x9xf32> -> vector<1024x27xf32>
    %c0_4 = arith.constant 0 : index
    %c0_5 = arith.constant 0 : index
    %17 = vector.load %arg2[%c0_4, %c0_5] : memref<27x18xf32, #tpu.memory_space<vmem>>, vector<27x18xf32>
    %cst_6 = arith.constant dense<0.000000e+00> : vector<1024x18xf32>
    %18 = tpu.matmul %16, %17, %cst_6 {dimension_numbers = #tpu.dot_dimension_numbers<[1], [0], [0], [1], [0, 0, 1, 1], [], []>} : vector<1024x27xf32>, vector<27x18xf32>, vector<1024x18xf32> -> vector<1024x18xf32>
    %c0_7 = arith.constant 0 : index
    %c0_8 = arith.constant 0 : index
    %19 = vector.load %arg3[%c0_7, %c0_8] : memref<1x18xf32, #tpu.memory_space<vmem>>, vector<1x18xf32>
    %20 = vector.broadcast %19 : vector<1x18xf32> to vector<1024x18xf32>
    %21 = arith.addf %18, %20 : vector<1024x18xf32>
    %cst_9 = arith.constant 0.000000e+00 : f32
    %22 = vector.broadcast %cst_9 : f32 to vector<1024x18xf32>
    %23 = arith.maximumf %21, %22 : vector<1024x18xf32>
    %24 = vector.shape_cast %23 : vector<1024x18xf32> to vector<64x16x18xf32>
    %25 = vector.extract_strided_slice %24 {offsets = [0, 0, 0], sizes = [64, 8, 18], strides = [1, 1, 1]} : vector<64x16x18xf32> to vector<64x8x18xf32>
    %26 = vector.extract_strided_slice %24 {offsets = [0, 8, 0], sizes = [64, 8, 18], strides = [1, 1, 1]} : vector<64x16x18xf32> to vector<64x8x18xf32>
    %27 = arith.maximumf %25, %26 : vector<64x8x18xf32>
    %28 = vector.shape_cast %27 : vector<64x8x18xf32> to vector<512x18xf32>
    %29 = tpu.iota {dimensions = array<i32: 0>} : vector<512x1xi32>
    %c8_i32_10 = arith.constant 8 : i32
    %30 = vector.broadcast %c8_i32_10 : i32 to vector<512x1xi32>
    %31 = arith.cmpi slt, %29, %30 : vector<512x1xi32>
    %c8_i32_11 = arith.constant 8 : i32
    %32 = tpu.dynamic_rotate %28 by %c8_i32_11 dim 0 : vector<512x18xf32>, i32 -> vector<512x18xf32>
    %cst_12 = arith.constant 0.000000e+00 : f32
    %33 = vector.shape_cast %31 : vector<512x1xi1> to vector<512x1xi1>
    %34 = vector.broadcast %33 : vector<512x1xi1> to vector<512x18xi1>
    %35 = vector.broadcast %cst_12 : f32 to vector<512x18xf32>
    %36 = arith.select %34, %35, %32 : vector<512x18xi1>, vector<512x18xf32>
    %c504_i32 = arith.constant 504 : i32
    %37 = vector.broadcast %c504_i32 : i32 to vector<512x1xi32>
    %38 = arith.cmpi sge, %29, %37 : vector<512x1xi32>
    %c504_i32_13 = arith.constant 504 : i32
    %39 = tpu.dynamic_rotate %28 by %c504_i32_13 dim 0 : vector<512x18xf32>, i32 -> vector<512x18xf32>
    %cst_14 = arith.constant 0.000000e+00 : f32
    %40 = vector.shape_cast %38 : vector<512x1xi1> to vector<512x1xi1>
    %41 = vector.broadcast %40 : vector<512x1xi1> to vector<512x18xi1>
    %42 = vector.broadcast %cst_14 : f32 to vector<512x18xf32>
    %43 = arith.select %41, %42, %39 : vector<512x18xi1>, vector<512x18xf32>
    %44 = tpu.concatenate %36, %28, %43 in 1 : vector<512x18xf32>, vector<512x18xf32>, vector<512x18xf32> -> vector<512x54xf32>
    %c0_15 = arith.constant 0 : index
    %c0_16 = arith.constant 0 : index
    %45 = vector.load %arg4[%c0_15, %c0_16] : memref<54x36xf32, #tpu.memory_space<vmem>>, vector<54x36xf32>
    %cst_17 = arith.constant dense<0.000000e+00> : vector<512x36xf32>
    %46 = tpu.matmul %44, %45, %cst_17 {dimension_numbers = #tpu.dot_dimension_numbers<[1], [0], [0], [1], [0, 0, 1, 1], [], []>} : vector<512x54xf32>, vector<54x36xf32>, vector<512x36xf32> -> vector<512x36xf32>
    %c0_18 = arith.constant 0 : index
    %c0_19 = arith.constant 0 : index
    %47 = vector.load %arg5[%c0_18, %c0_19] : memref<1x36xf32, #tpu.memory_space<vmem>>, vector<1x36xf32>
    %48 = vector.broadcast %47 : vector<1x36xf32> to vector<512x36xf32>
    %49 = arith.addf %46, %48 : vector<512x36xf32>
    %cst_20 = arith.constant 0.000000e+00 : f32
    %50 = vector.broadcast %cst_20 : f32 to vector<512x36xf32>
    %51 = arith.maximumf %49, %50 : vector<512x36xf32>
    %52 = vector.shape_cast %51 : vector<512x36xf32> to vector<32x16x36xf32>
    %53 = vector.extract_strided_slice %52 {offsets = [0, 0, 0], sizes = [32, 8, 36], strides = [1, 1, 1]} : vector<32x16x36xf32> to vector<32x8x36xf32>
    %54 = vector.extract_strided_slice %52 {offsets = [0, 8, 0], sizes = [32, 8, 36], strides = [1, 1, 1]} : vector<32x16x36xf32> to vector<32x8x36xf32>
    %55 = arith.maximumf %53, %54 : vector<32x8x36xf32>
    %c0_21 = arith.constant 0 : index
    %c0_22 = arith.constant 0 : index
    %c0_23 = arith.constant 0 : index
    %56 = vector.load %arg11[%c0_21, %c0_22, %c0_23] : memref<32x8x36xf32, #tpu.memory_space<vmem>>, vector<32x8x36xf32>
    tpu.vector_store %arg11[%c0_21, %c0_22, %c0_23], %55 {strides = array<i32>} : memref<32x8x36xf32, #tpu.memory_space<vmem>>, vector<32x8x36xf32>,
    %cst_24 = arith.constant 0.000000e+00 : f32
    %57 = vector.broadcast %cst_24 : f32 to vector<8x128xf32>
    %cst_25 = arith.constant 0.000000e+00 : f32
    %58 = vector.broadcast %cst_25 : f32 to vector<8x128xf32>
    %cst_26 = arith.constant 0.000000e+00 : f32
    %59 = vector.broadcast %cst_26 : f32 to vector<8x128xf32>
    %cst_27 = arith.constant 0.000000e+00 : f32
    %60 = vector.broadcast %cst_27 : f32 to vector<8x128xf32>
    %c0_28 = arith.constant 0 : index
    %c0_29 = arith.constant 0 : index
    %c0_30 = arith.constant 0 : index
    %61 = vector.load %arg11[%c0_28, %c0_29, %c0_30] : memref<32x8x36xf32, #tpu.memory_space<vmem>>, vector<1x8x36xf32>
    %62 = vector.shape_cast %61 : vector<1x8x36xf32> to vector<8x36xf32>
    %c0_31 = arith.constant 0 : index
    %c0_32 = arith.constant 0 : index
    %c0_33 = arith.constant 0 : index
    %63 = vector.load %arg6[%c0_31, %c0_32, %c0_33] : memref<32x36x128xf32, #tpu.memory_space<vmem>>, vector<1x36x128xf32>
    %64 = vector.shape_cast %63 : vector<1x36x128xf32> to vector<36x128xf32>
    %cst_34 = arith.constant dense<0.000000e+00> : vector<8x128xf32>
    %65 = tpu.matmul %62, %64, %cst_34 {dimension_numbers = #tpu.dot_dimension_numbers<[1], [0], [0], [1], [0, 0, 1, 1], [], []>} : vector<8x36xf32>, vector<36x128xf32>, vector<8x128xf32> -> vector<8x128xf32>
    %66 = arith.addf %57, %65 : vector<8x128xf32>
    %c1 = arith.constant 1 : index
    %c0_35 = arith.constant 0 : index
    %c0_36 = arith.constant 0 : index
    %67 = vector.load %arg11[%c1, %c0_35, %c0_36] : memref<32x8x36xf32, #tpu.memory_space<vmem>>, vector<1x8x36xf32>
    %68 = vector.shape_cast %67 : vector<1x8x36xf32> to vector<8x36xf32>
    %c1_37 = arith.constant 1 : index
    %c0_38 = arith.constant 0 : index
    %c0_39 = arith.constant 0 : index
    %69 = vector.load %arg6[%c1_37, %c0_38, %c0_39] : memref<32x36x128xf32, #tpu.memory_space<vmem>>, vector<1x36x128xf32>
    %70 = vector.shape_cast %69 : vector<1x36x128xf32> to vector<36x128xf32>
    %cst_40 = arith.constant dense<0.000000e+00> : vector<8x128xf32>
    %71 = tpu.matmul %68, %70, %cst_40 {dimension_numbers = #tpu.dot_dimension_numbers<[1], [0], [0], [1], [0, 0, 1, 1], [], []>} : vector<8x36xf32>, vector<36x128xf32>, vector<8x128xf32> -> vector<8x128xf32>
    %72 = arith.addf %58, %71 : vector<8x128xf32>
    %c2 = arith.constant 2 : index
    %c0_41 = arith.constant 0 : index
    %c0_42 = arith.constant 0 : index
    %73 = vector.load %arg11[%c2, %c0_41, %c0_42] : memref<32x8x36xf32, #tpu.memory_space<vmem>>, vector<1x8x36xf32>
    %74 = vector.shape_cast %73 : vector<1x8x36xf32> to vector<8x36xf32>
    %c2_43 = arith.constant 2 : index
    %c0_44 = arith.constant 0 : index
    %c0_45 = arith.constant 0 : index
    %75 = vector.load %arg6[%c2_43, %c0_44, %c0_45] : memref<32x36x128xf32, #tpu.memory_space<vmem>>, vector<1x36x128xf32>
    %76 = vector.shape_cast %75 : vector<1x36x128xf32> to vector<36x128xf32>
    %cst_46 = arith.constant dense<0.000000e+00> : vector<8x128xf32>
    %77 = tpu.matmul %74, %76, %cst_46 {dimension_numbers = #tpu.dot_dimension_numbers<[1], [0], [0], [1], [0, 0, 1, 1], [], []>} : vector<8x36xf32>, vector<36x128xf32>, vector<8x128xf32> -> vector<8x128xf32>
    %78 = arith.addf %59, %77 : vector<8x128xf32>
    %c3 = arith.constant 3 : index
    %c0_47 = arith.constant 0 : index
    %c0_48 = arith.constant 0 : index
    %79 = vector.load %arg11[%c3, %c0_47, %c0_48] : memref<32x8x36xf32, #tpu.memory_space<vmem>>, vector<1x8x36xf32>
    %80 = vector.shape_cast %79 : vector<1x8x36xf32> to vector<8x36xf32>
    %c3_49 = arith.constant 3 : index
    %c0_50 = arith.constant 0 : index
    %c0_51 = arith.constant 0 : index
    %81 = vector.load %arg6[%c3_49, %c0_50, %c0_51] : memref<32x36x128xf32, #tpu.memory_space<vmem>>, vector<1x36x128xf32>
    %82 = vector.shape_cast %81 : vector<1x36x128xf32> to vector<36x128xf32>
    %cst_52 = arith.constant dense<0.000000e+00> : vector<8x128xf32>
    %83 = tpu.matmul %80, %82, %cst_52 {dimension_numbers = #tpu.dot_dimension_numbers<[1], [0], [0], [1], [0, 0, 1, 1], [], []>} : vector<8x36xf32>, vector<36x128xf32>, vector<8x128xf32> -> vector<8x128xf32>
    %84 = arith.addf %60, %83 : vector<8x128xf32>
    %c4 = arith.constant 4 : index
    %c0_53 = arith.constant 0 : index
    %c0_54 = arith.constant 0 : index
    %85 = vector.load %arg11[%c4, %c0_53, %c0_54] : memref<32x8x36xf32, #tpu.memory_space<vmem>>, vector<1x8x36xf32>
    %86 = vector.shape_cast %85 : vector<1x8x36xf32> to vector<8x36xf32>
    %c4_55 = arith.constant 4 : index
    %c0_56 = arith.constant 0 : index
    %c0_57 = arith.constant 0 : index
    %87 = vector.load %arg6[%c4_55, %c0_56, %c0_57] : memref<32x36x128xf32, #tpu.memory_space<vmem>>, vector<1x36x128xf32>
    %88 = vector.shape_cast %87 : vector<1x36x128xf32> to vector<36x128xf32>
    %cst_58 = arith.constant dense<0.000000e+00> : vector<8x128xf32>
    %89 = tpu.matmul %86, %88, %cst_58 {dimension_numbers = #tpu.dot_dimension_numbers<[1], [0], [0], [1], [0, 0, 1, 1], [], []>} : vector<8x36xf32>, vector<36x128xf32>, vector<8x128xf32> -> vector<8x128xf32>
    %90 = arith.addf %66, %89 : vector<8x128xf32>
    %c5 = arith.constant 5 : index
    %c0_59 = arith.constant 0 : index
    %c0_60 = arith.constant 0 : index
    %91 = vector.load %arg11[%c5, %c0_59, %c0_60] : memref<32x8x36xf32, #tpu.memory_space<vmem>>, vector<1x8x36xf32>
    %92 = vector.shape_cast %91 : vector<1x8x36xf32> to vector<8x36xf32>
    %c5_61 = arith.constant 5 : index
    %c0_62 = arith.constant 0 : index
    %c0_63 = arith.constant 0 : index
    %93 = vector.load %arg6[%c5_61, %c0_62, %c0_63] : memref<32x36x128xf32, #tpu.memory_space<vmem>>, vector<1x36x128xf32>
    %94 = vector.shape_cast %93 : vector<1x36x128xf32> to vector<36x128xf32>
    %cst_64 = arith.constant dense<0.000000e+00> : vector<8x128xf32>
    %95 = tpu.matmul %92, %94, %cst_64 {dimension_numbers = #tpu.dot_dimension_numbers<[1], [0], [0], [1], [0, 0, 1, 1], [], []>} : vector<8x36xf32>, vector<36x128xf32>, vector<8x128xf32> -> vector<8x128xf32>
    %96 = arith.addf %72, %95 : vector<8x128xf32>
    %c6 = arith.constant 6 : index
    %c0_65 = arith.constant 0 : index
    %c0_66 = arith.constant 0 : index
    %97 = vector.load %arg11[%c6, %c0_65, %c0_66] : memref<32x8x36xf32, #tpu.memory_space<vmem>>, vector<1x8x36xf32>
    %98 = vector.shape_cast %97 : vector<1x8x36xf32> to vector<8x36xf32>
    %c6_67 = arith.constant 6 : index
    %c0_68 = arith.constant 0 : index
    %c0_69 = arith.constant 0 : index
    %99 = vector.load %arg6[%c6_67, %c0_68, %c0_69] : memref<32x36x128xf32, #tpu.memory_space<vmem>>, vector<1x36x128xf32>
    %100 = vector.shape_cast %99 : vector<1x36x128xf32> to vector<36x128xf32>
    %cst_70 = arith.constant dense<0.000000e+00> : vector<8x128xf32>
    %101 = tpu.matmul %98, %100, %cst_70 {dimension_numbers = #tpu.dot_dimension_numbers<[1], [0], [0], [1], [0, 0, 1, 1], [], []>} : vector<8x36xf32>, vector<36x128xf32>, vector<8x128xf32> -> vector<8x128xf32>
    %102 = arith.addf %78, %101 : vector<8x128xf32>
    %c7 = arith.constant 7 : index
    %c0_71 = arith.constant 0 : index
    %c0_72 = arith.constant 0 : index
    %103 = vector.load %arg11[%c7, %c0_71, %c0_72] : memref<32x8x36xf32, #tpu.memory_space<vmem>>, vector<1x8x36xf32>
    %104 = vector.shape_cast %103 : vector<1x8x36xf32> to vector<8x36xf32>
    %c7_73 = arith.constant 7 : index
    %c0_74 = arith.constant 0 : index
    %c0_75 = arith.constant 0 : index
    %105 = vector.load %arg6[%c7_73, %c0_74, %c0_75] : memref<32x36x128xf32, #tpu.memory_space<vmem>>, vector<1x36x128xf32>
    %106 = vector.shape_cast %105 : vector<1x36x128xf32> to vector<36x128xf32>
    %cst_76 = arith.constant dense<0.000000e+00> : vector<8x128xf32>
    %107 = tpu.matmul %104, %106, %cst_76 {dimension_numbers = #tpu.dot_dimension_numbers<[1], [0], [0], [1], [0, 0, 1, 1], [], []>} : vector<8x36xf32>, vector<36x128xf32>, vector<8x128xf32> -> vector<8x128xf32>
    %108 = arith.addf %84, %107 : vector<8x128xf32>
    %c8 = arith.constant 8 : index
    %c0_77 = arith.constant 0 : index
    %c0_78 = arith.constant 0 : index
    %109 = vector.load %arg11[%c8, %c0_77, %c0_78] : memref<32x8x36xf32, #tpu.memory_space<vmem>>, vector<1x8x36xf32>
    %110 = vector.shape_cast %109 : vector<1x8x36xf32> to vector<8x36xf32>
    %c8_79 = arith.constant 8 : index
    %c0_80 = arith.constant 0 : index
    %c0_81 = arith.constant 0 : index
    %111 = vector.load %arg6[%c8_79, %c0_80, %c0_81] : memref<32x36x128xf32, #tpu.memory_space<vmem>>, vector<1x36x128xf32>
    %112 = vector.shape_cast %111 : vector<1x36x128xf32> to vector<36x128xf32>
    %cst_82 = arith.constant dense<0.000000e+00> : vector<8x128xf32>
    %113 = tpu.matmul %110, %112, %cst_82 {dimension_numbers = #tpu.dot_dimension_numbers<[1], [0], [0], [1], [0, 0, 1, 1], [], []>} : vector<8x36xf32>, vector<36x128xf32>, vector<8x128xf32> -> vector<8x128xf32>
    %114 = arith.addf %90, %113 : vector<8x128xf32>
    %c9 = arith.constant 9 : index
    %c0_83 = arith.constant 0 : index
    %c0_84 = arith.constant 0 : index
    %115 = vector.load %arg11[%c9, %c0_83, %c0_84] : memref<32x8x36xf32, #tpu.memory_space<vmem>>, vector<1x8x36xf32>
    %116 = vector.shape_cast %115 : vector<1x8x36xf32> to vector<8x36xf32>
    %c9_85 = arith.constant 9 : index
    %c0_86 = arith.constant 0 : index
    %c0_87 = arith.constant 0 : index
    %117 = vector.load %arg6[%c9_85, %c0_86, %c0_87] : memref<32x36x128xf32, #tpu.memory_space<vmem>>, vector<1x36x128xf32>
    %118 = vector.shape_cast %117 : vector<1x36x128xf32> to vector<36x128xf32>
    %cst_88 = arith.constant dense<0.000000e+00> : vector<8x128xf32>
    %119 = tpu.matmul %116, %118, %cst_88 {dimension_numbers = #tpu.dot_dimension_numbers<[1], [0], [0], [1], [0, 0, 1, 1], [], []>} : vector<8x36xf32>, vector<36x128xf32>, vector<8x128xf32> -> vector<8x128xf32>
    %120 = arith.addf %96, %119 : vector<8x128xf32>
    %c10 = arith.constant 10 : index
    %c0_89 = arith.constant 0 : index
    %c0_90 = arith.constant 0 : index
    %121 = vector.load %arg11[%c10, %c0_89, %c0_90] : memref<32x8x36xf32, #tpu.memory_space<vmem>>, vector<1x8x36xf32>
    %122 = vector.shape_cast %121 : vector<1x8x36xf32> to vector<8x36xf32>
    %c10_91 = arith.constant 10 : index
    %c0_92 = arith.constant 0 : index
    %c0_93 = arith.constant 0 : index
    %123 = vector.load %arg6[%c10_91, %c0_92, %c0_93] : memref<32x36x128xf32, #tpu.memory_space<vmem>>, vector<1x36x128xf32>
    %124 = vector.shape_cast %123 : vector<1x36x128xf32> to vector<36x128xf32>
    %cst_94 = arith.constant dense<0.000000e+00> : vector<8x128xf32>
    %125 = tpu.matmul %122, %124, %cst_94 {dimension_numbers = #tpu.dot_dimension_numbers<[1], [0], [0], [1], [0, 0, 1, 1], [], []>} : vector<8x36xf32>, vector<36x128xf32>, vector<8x128xf32> -> vector<8x128xf32>
    %126 = arith.addf %102, %125 : vector<8x128xf32>
    %c11 = arith.constant 11 : index
    %c0_95 = arith.constant 0 : index
    %c0_96 = arith.constant 0 : index
    %127 = vector.load %arg11[%c11, %c0_95, %c0_96] : memref<32x8x36xf32, #tpu.memory_space<vmem>>, vector<1x8x36xf32>
    %128 = vector.shape_cast %127 : vector<1x8x36xf32> to vector<8x36xf32>
    %c11_97 = arith.constant 11 : index
    %c0_98 = arith.constant 0 : index
    %c0_99 = arith.constant 0 : index
    %129 = vector.load %arg6[%c11_97, %c0_98, %c0_99] : memref<32x36x128xf32, #tpu.memory_space<vmem>>, vector<1x36x128xf32>
    %130 = vector.shape_cast %129 : vector<1x36x128xf32> to vector<36x128xf32>
    %cst_100 = arith.constant dense<0.000000e+00> : vector<8x128xf32>
    %131 = tpu.matmul %128, %130, %cst_100 {dimension_numbers = #tpu.dot_dimension_numbers<[1], [0], [0], [1], [0, 0, 1, 1], [], []>} : vector<8x36xf32>, vector<36x128xf32>, vector<8x128xf32> -> vector<8x128xf32>
    %132 = arith.addf %108, %131 : vector<8x128xf32>
    %c12 = arith.constant 12 : index
    %c0_101 = arith.constant 0 : index
    %c0_102 = arith.constant 0 : index
    %133 = vector.load %arg11[%c12, %c0_101, %c0_102] : memref<32x8x36xf32, #tpu.memory_space<vmem>>, vector<1x8x36xf32>
    %134 = vector.shape_cast %133 : vector<1x8x36xf32> to vector<8x36xf32>
    %c12_103 = arith.constant 12 : index
    %c0_104 = arith.constant 0 : index
    %c0_105 = arith.constant 0 : index
    %135 = vector.load %arg6[%c12_103, %c0_104, %c0_105] : memref<32x36x128xf32, #tpu.memory_space<vmem>>, vector<1x36x128xf32>
    %136 = vector.shape_cast %135 : vector<1x36x128xf32> to vector<36x128xf32>
    %cst_106 = arith.constant dense<0.000000e+00> : vector<8x128xf32>
    %137 = tpu.matmul %134, %136, %cst_106 {dimension_numbers = #tpu.dot_dimension_numbers<[1], [0], [0], [1], [0, 0, 1, 1], [], []>} : vector<8x36xf32>, vector<36x128xf32>, vector<8x128xf32> -> vector<8x128xf32>
    %138 = arith.addf %114, %137 : vector<8x128xf32>
    %c13 = arith.constant 13 : index
    %c0_107 = arith.constant 0 : index
    %c0_108 = arith.constant 0 : index
    %139 = vector.load %arg11[%c13, %c0_107, %c0_108] : memref<32x8x36xf32, #tpu.memory_space<vmem>>, vector<1x8x36xf32>
    %140 = vector.shape_cast %139 : vector<1x8x36xf32> to vector<8x36xf32>
    %c13_109 = arith.constant 13 : index
    %c0_110 = arith.constant 0 : index
    %c0_111 = arith.constant 0 : index
    %141 = vector.load %arg6[%c13_109, %c0_110, %c0_111] : memref<32x36x128xf32, #tpu.memory_space<vmem>>, vector<1x36x128xf32>
    %142 = vector.shape_cast %141 : vector<1x36x128xf32> to vector<36x128xf32>
    %cst_112 = arith.constant dense<0.000000e+00> : vector<8x128xf32>
    %143 = tpu.matmul %140, %142, %cst_112 {dimension_numbers = #tpu.dot_dimension_numbers<[1], [0], [0], [1], [0, 0, 1, 1], [], []>} : vector<8x36xf32>, vector<36x128xf32>, vector<8x128xf32> -> vector<8x128xf32>
    %144 = arith.addf %120, %143 : vector<8x128xf32>
    %c14 = arith.constant 14 : index
    %c0_113 = arith.constant 0 : index
    %c0_114 = arith.constant 0 : index
    %145 = vector.load %arg11[%c14, %c0_113, %c0_114] : memref<32x8x36xf32, #tpu.memory_space<vmem>>, vector<1x8x36xf32>
    %146 = vector.shape_cast %145 : vector<1x8x36xf32> to vector<8x36xf32>
    %c14_115 = arith.constant 14 : index
    %c0_116 = arith.constant 0 : index
    %c0_117 = arith.constant 0 : index
    %147 = vector.load %arg6[%c14_115, %c0_116, %c0_117] : memref<32x36x128xf32, #tpu.memory_space<vmem>>, vector<1x36x128xf32>
    %148 = vector.shape_cast %147 : vector<1x36x128xf32> to vector<36x128xf32>
    %cst_118 = arith.constant dense<0.000000e+00> : vector<8x128xf32>
    %149 = tpu.matmul %146, %148, %cst_118 {dimension_numbers = #tpu.dot_dimension_numbers<[1], [0], [0], [1], [0, 0, 1, 1], [], []>} : vector<8x36xf32>, vector<36x128xf32>, vector<8x128xf32> -> vector<8x128xf32>
    %150 = arith.addf %126, %149 : vector<8x128xf32>
    %c15 = arith.constant 15 : index
    %c0_119 = arith.constant 0 : index
    %c0_120 = arith.constant 0 : index
    %151 = vector.load %arg11[%c15, %c0_119, %c0_120] : memref<32x8x36xf32, #tpu.memory_space<vmem>>, vector<1x8x36xf32>
    %152 = vector.shape_cast %151 : vector<1x8x36xf32> to vector<8x36xf32>
    %c15_121 = arith.constant 15 : index
    %c0_122 = arith.constant 0 : index
    %c0_123 = arith.constant 0 : index
    %153 = vector.load %arg6[%c15_121, %c0_122, %c0_123] : memref<32x36x128xf32, #tpu.memory_space<vmem>>, vector<1x36x128xf32>
    %154 = vector.shape_cast %153 : vector<1x36x128xf32> to vector<36x128xf32>
    %cst_124 = arith.constant dense<0.000000e+00> : vector<8x128xf32>
    %155 = tpu.matmul %152, %154, %cst_124 {dimension_numbers = #tpu.dot_dimension_numbers<[1], [0], [0], [1], [0, 0, 1, 1], [], []>} : vector<8x36xf32>, vector<36x128xf32>, vector<8x128xf32> -> vector<8x128xf32>
    %156 = arith.addf %132, %155 : vector<8x128xf32>
    %c16 = arith.constant 16 : index
    %c0_125 = arith.constant 0 : index
    %c0_126 = arith.constant 0 : index
    %157 = vector.load %arg11[%c16, %c0_125, %c0_126] : memref<32x8x36xf32, #tpu.memory_space<vmem>>, vector<1x8x36xf32>
    %158 = vector.shape_cast %157 : vector<1x8x36xf32> to vector<8x36xf32>
    %c16_127 = arith.constant 16 : index
    %c0_128 = arith.constant 0 : index
    %c0_129 = arith.constant 0 : index
    %159 = vector.load %arg6[%c16_127, %c0_128, %c0_129] : memref<32x36x128xf32, #tpu.memory_space<vmem>>, vector<1x36x128xf32>
    %160 = vector.shape_cast %159 : vector<1x36x128xf32> to vector<36x128xf32>
    %cst_130 = arith.constant dense<0.000000e+00> : vector<8x128xf32>
    %161 = tpu.matmul %158, %160, %cst_130 {dimension_numbers = #tpu.dot_dimension_numbers<[1], [0], [0], [1], [0, 0, 1, 1], [], []>} : vector<8x36xf32>, vector<36x128xf32>, vector<8x128xf32> -> vector<8x128xf32>
    %162 = arith.addf %138, %161 : vector<8x128xf32>
    %c17 = arith.constant 17 : index
    %c0_131 = arith.constant 0 : index
    %c0_132 = arith.constant 0 : index
    %163 = vector.load %arg11[%c17, %c0_131, %c0_132] : memref<32x8x36xf32, #tpu.memory_space<vmem>>, vector<1x8x36xf32>
    %164 = vector.shape_cast %163 : vector<1x8x36xf32> to vector<8x36xf32>
    %c17_133 = arith.constant 17 : index
    %c0_134 = arith.constant 0 : index
    %c0_135 = arith.constant 0 : index
    %165 = vector.load %arg6[%c17_133, %c0_134, %c0_135] : memref<32x36x128xf32, #tpu.memory_space<vmem>>, vector<1x36x128xf32>
    %166 = vector.shape_cast %165 : vector<1x36x128xf32> to vector<36x128xf32>
    %cst_136 = arith.constant dense<0.000000e+00> : vector<8x128xf32>
    %167 = tpu.matmul %164, %166, %cst_136 {dimension_numbers = #tpu.dot_dimension_numbers<[1], [0], [0], [1], [0, 0, 1, 1], [], []>} : vector<8x36xf32>, vector<36x128xf32>, vector<8x128xf32> -> vector<8x128xf32>
    %168 = arith.addf %144, %167 : vector<8x128xf32>
    %c18 = arith.constant 18 : index
    %c0_137 = arith.constant 0 : index
    %c0_138 = arith.constant 0 : index
    %169 = vector.load %arg11[%c18, %c0_137, %c0_138] : memref<32x8x36xf32, #tpu.memory_space<vmem>>, vector<1x8x36xf32>
    %170 = vector.shape_cast %169 : vector<1x8x36xf32> to vector<8x36xf32>
    %c18_139 = arith.constant 18 : index
    %c0_140 = arith.constant 0 : index
    %c0_141 = arith.constant 0 : index
    %171 = vector.load %arg6[%c18_139, %c0_140, %c0_141] : memref<32x36x128xf32, #tpu.memory_space<vmem>>, vector<1x36x128xf32>
    %172 = vector.shape_cast %171 : vector<1x36x128xf32> to vector<36x128xf32>
    %cst_142 = arith.constant dense<0.000000e+00> : vector<8x128xf32>
    %173 = tpu.matmul %170, %172, %cst_142 {dimension_numbers = #tpu.dot_dimension_numbers<[1], [0], [0], [1], [0, 0, 1, 1], [], []>} : vector<8x36xf32>, vector<36x128xf32>, vector<8x128xf32> -> vector<8x128xf32>
    %174 = arith.addf %150, %173 : vector<8x128xf32>
    %c19 = arith.constant 19 : index
    %c0_143 = arith.constant 0 : index
    %c0_144 = arith.constant 0 : index
    %175 = vector.load %arg11[%c19, %c0_143, %c0_144] : memref<32x8x36xf32, #tpu.memory_space<vmem>>, vector<1x8x36xf32>
    %176 = vector.shape_cast %175 : vector<1x8x36xf32> to vector<8x36xf32>
    %c19_145 = arith.constant 19 : index
    %c0_146 = arith.constant 0 : index
    %c0_147 = arith.constant 0 : index
    %177 = vector.load %arg6[%c19_145, %c0_146, %c0_147] : memref<32x36x128xf32, #tpu.memory_space<vmem>>, vector<1x36x128xf32>
    %178 = vector.shape_cast %177 : vector<1x36x128xf32> to vector<36x128xf32>
    %cst_148 = arith.constant dense<0.000000e+00> : vector<8x128xf32>
    %179 = tpu.matmul %176, %178, %cst_148 {dimension_numbers = #tpu.dot_dimension_numbers<[1], [0], [0], [1], [0, 0, 1, 1], [], []>} : vector<8x36xf32>, vector<36x128xf32>, vector<8x128xf32> -> vector<8x128xf32>
    %180 = arith.addf %156, %179 : vector<8x128xf32>
    %c20 = arith.constant 20 : index
    %c0_149 = arith.constant 0 : index
    %c0_150 = arith.constant 0 : index
    %181 = vector.load %arg11[%c20, %c0_149, %c0_150] : memref<32x8x36xf32, #tpu.memory_space<vmem>>, vector<1x8x36xf32>
    %182 = vector.shape_cast %181 : vector<1x8x36xf32> to vector<8x36xf32>
    %c20_151 = arith.constant 20 : index
    %c0_152 = arith.constant 0 : index
    %c0_153 = arith.constant 0 : index
    %183 = vector.load %arg6[%c20_151, %c0_152, %c0_153] : memref<32x36x128xf32, #tpu.memory_space<vmem>>, vector<1x36x128xf32>
    %184 = vector.shape_cast %183 : vector<1x36x128xf32> to vector<36x128xf32>
    %cst_154 = arith.constant dense<0.000000e+00> : vector<8x128xf32>
    %185 = tpu.matmul %182, %184, %cst_154 {dimension_numbers = #tpu.dot_dimension_numbers<[1], [0], [0], [1], [0, 0, 1, 1], [], []>} : vector<8x36xf32>, vector<36x128xf32>, vector<8x128xf32> -> vector<8x128xf32>
    %186 = arith.addf %162, %185 : vector<8x128xf32>
    %c21 = arith.constant 21 : index
    %c0_155 = arith.constant 0 : index
    %c0_156 = arith.constant 0 : index
    %187 = vector.load %arg11[%c21, %c0_155, %c0_156] : memref<32x8x36xf32, #tpu.memory_space<vmem>>, vector<1x8x36xf32>
    %188 = vector.shape_cast %187 : vector<1x8x36xf32> to vector<8x36xf32>
    %c21_157 = arith.constant 21 : index
    %c0_158 = arith.constant 0 : index
    %c0_159 = arith.constant 0 : index
    %189 = vector.load %arg6[%c21_157, %c0_158, %c0_159] : memref<32x36x128xf32, #tpu.memory_space<vmem>>, vector<1x36x128xf32>
    %190 = vector.shape_cast %189 : vector<1x36x128xf32> to vector<36x128xf32>
    %cst_160 = arith.constant dense<0.000000e+00> : vector<8x128xf32>
    %191 = tpu.matmul %188, %190, %cst_160 {dimension_numbers = #tpu.dot_dimension_numbers<[1], [0], [0], [1], [0, 0, 1, 1], [], []>} : vector<8x36xf32>, vector<36x128xf32>, vector<8x128xf32> -> vector<8x128xf32>
    %192 = arith.addf %168, %191 : vector<8x128xf32>
    %c22 = arith.constant 22 : index
    %c0_161 = arith.constant 0 : index
    %c0_162 = arith.constant 0 : index
    %193 = vector.load %arg11[%c22, %c0_161, %c0_162] : memref<32x8x36xf32, #tpu.memory_space<vmem>>, vector<1x8x36xf32>
    %194 = vector.shape_cast %193 : vector<1x8x36xf32> to vector<8x36xf32>
    %c22_163 = arith.constant 22 : index
    %c0_164 = arith.constant 0 : index
    %c0_165 = arith.constant 0 : index
    %195 = vector.load %arg6[%c22_163, %c0_164, %c0_165] : memref<32x36x128xf32, #tpu.memory_space<vmem>>, vector<1x36x128xf32>
    %196 = vector.shape_cast %195 : vector<1x36x128xf32> to vector<36x128xf32>
    %cst_166 = arith.constant dense<0.000000e+00> : vector<8x128xf32>
    %197 = tpu.matmul %194, %196, %cst_166 {dimension_numbers = #tpu.dot_dimension_numbers<[1], [0], [0], [1], [0, 0, 1, 1], [], []>} : vector<8x36xf32>, vector<36x128xf32>, vector<8x128xf32> -> vector<8x128xf32>
    %198 = arith.addf %174, %197 : vector<8x128xf32>
    %c23 = arith.constant 23 : index
    %c0_167 = arith.constant 0 : index
    %c0_168 = arith.constant 0 : index
    %199 = vector.load %arg11[%c23, %c0_167, %c0_168] : memref<32x8x36xf32, #tpu.memory_space<vmem>>, vector<1x8x36xf32>
    %200 = vector.shape_cast %199 : vector<1x8x36xf32> to vector<8x36xf32>
    %c23_169 = arith.constant 23 : index
    %c0_170 = arith.constant 0 : index
    %c0_171 = arith.constant 0 : index
    %201 = vector.load %arg6[%c23_169, %c0_170, %c0_171] : memref<32x36x128xf32, #tpu.memory_space<vmem>>, vector<1x36x128xf32>
    %202 = vector.shape_cast %201 : vector<1x36x128xf32> to vector<36x128xf32>
    %cst_172 = arith.constant dense<0.000000e+00> : vector<8x128xf32>
    %203 = tpu.matmul %200, %202, %cst_172 {dimension_numbers = #tpu.dot_dimension_numbers<[1], [0], [0], [1], [0, 0, 1, 1], [], []>} : vector<8x36xf32>, vector<36x128xf32>, vector<8x128xf32> -> vector<8x128xf32>
    %204 = arith.addf %180, %203 : vector<8x128xf32>
    %c24 = arith.constant 24 : index
    %c0_173 = arith.constant 0 : index
    %c0_174 = arith.constant 0 : index
    %205 = vector.load %arg11[%c24, %c0_173, %c0_174] : memref<32x8x36xf32, #tpu.memory_space<vmem>>, vector<1x8x36xf32>
    %206 = vector.shape_cast %205 : vector<1x8x36xf32> to vector<8x36xf32>
    %c24_175 = arith.constant 24 : index
    %c0_176 = arith.constant 0 : index
    %c0_177 = arith.constant 0 : index
    %207 = vector.load %arg6[%c24_175, %c0_176, %c0_177] : memref<32x36x128xf32, #tpu.memory_space<vmem>>, vector<1x36x128xf32>
    %208 = vector.shape_cast %207 : vector<1x36x128xf32> to vector<36x128xf32>
    %cst_178 = arith.constant dense<0.000000e+00> : vector<8x128xf32>
    %209 = tpu.matmul %206, %208, %cst_178 {dimension_numbers = #tpu.dot_dimension_numbers<[1], [0], [0], [1], [0, 0, 1, 1], [], []>} : vector<8x36xf32>, vector<36x128xf32>, vector<8x128xf32> -> vector<8x128xf32>
    %210 = arith.addf %186, %209 : vector<8x128xf32>
    %c25 = arith.constant 25 : index
    %c0_179 = arith.constant 0 : index
    %c0_180 = arith.constant 0 : index
    %211 = vector.load %arg11[%c25, %c0_179, %c0_180] : memref<32x8x36xf32, #tpu.memory_space<vmem>>, vector<1x8x36xf32>
    %212 = vector.shape_cast %211 : vector<1x8x36xf32> to vector<8x36xf32>
    %c25_181 = arith.constant 25 : index
    %c0_182 = arith.constant 0 : index
    %c0_183 = arith.constant 0 : index
    %213 = vector.load %arg6[%c25_181, %c0_182, %c0_183] : memref<32x36x128xf32, #tpu.memory_space<vmem>>, vector<1x36x128xf32>
    %214 = vector.shape_cast %213 : vector<1x36x128xf32> to vector<36x128xf32>
    %cst_184 = arith.constant dense<0.000000e+00> : vector<8x128xf32>
    %215 = tpu.matmul %212, %214, %cst_184 {dimension_numbers = #tpu.dot_dimension_numbers<[1], [0], [0], [1], [0, 0, 1, 1], [], []>} : vector<8x36xf32>, vector<36x128xf32>, vector<8x128xf32> -> vector<8x128xf32>
    %216 = arith.addf %192, %215 : vector<8x128xf32>
    %c26 = arith.constant 26 : index
    %c0_185 = arith.constant 0 : index
    %c0_186 = arith.constant 0 : index
    %217 = vector.load %arg11[%c26, %c0_185, %c0_186] : memref<32x8x36xf32, #tpu.memory_space<vmem>>, vector<1x8x36xf32>
    %218 = vector.shape_cast %217 : vector<1x8x36xf32> to vector<8x36xf32>
    %c26_187 = arith.constant 26 : index
    %c0_188 = arith.constant 0 : index
    %c0_189 = arith.constant 0 : index
    %219 = vector.load %arg6[%c26_187, %c0_188, %c0_189] : memref<32x36x128xf32, #tpu.memory_space<vmem>>, vector<1x36x128xf32>
    %220 = vector.shape_cast %219 : vector<1x36x128xf32> to vector<36x128xf32>
    %cst_190 = arith.constant dense<0.000000e+00> : vector<8x128xf32>
    %221 = tpu.matmul %218, %220, %cst_190 {dimension_numbers = #tpu.dot_dimension_numbers<[1], [0], [0], [1], [0, 0, 1, 1], [], []>} : vector<8x36xf32>, vector<36x128xf32>, vector<8x128xf32> -> vector<8x128xf32>
    %222 = arith.addf %198, %221 : vector<8x128xf32>
    %c27 = arith.constant 27 : index
    %c0_191 = arith.constant 0 : index
    %c0_192 = arith.constant 0 : index
    %223 = vector.load %arg11[%c27, %c0_191, %c0_192] : memref<32x8x36xf32, #tpu.memory_space<vmem>>, vector<1x8x36xf32>
    %224 = vector.shape_cast %223 : vector<1x8x36xf32> to vector<8x36xf32>
    %c27_193 = arith.constant 27 : index
    %c0_194 = arith.constant 0 : index
    %c0_195 = arith.constant 0 : index
    %225 = vector.load %arg6[%c27_193, %c0_194, %c0_195] : memref<32x36x128xf32, #tpu.memory_space<vmem>>, vector<1x36x128xf32>
    %226 = vector.shape_cast %225 : vector<1x36x128xf32> to vector<36x128xf32>
    %cst_196 = arith.constant dense<0.000000e+00> : vector<8x128xf32>
    %227 = tpu.matmul %224, %226, %cst_196 {dimension_numbers = #tpu.dot_dimension_numbers<[1], [0], [0], [1], [0, 0, 1, 1], [], []>} : vector<8x36xf32>, vector<36x128xf32>, vector<8x128xf32> -> vector<8x128xf32>
    %228 = arith.addf %204, %227 : vector<8x128xf32>
    %c28 = arith.constant 28 : index
    %c0_197 = arith.constant 0 : index
    %c0_198 = arith.constant 0 : index
    %229 = vector.load %arg11[%c28, %c0_197, %c0_198] : memref<32x8x36xf32, #tpu.memory_space<vmem>>, vector<1x8x36xf32>
    %230 = vector.shape_cast %229 : vector<1x8x36xf32> to vector<8x36xf32>
    %c28_199 = arith.constant 28 : index
    %c0_200 = arith.constant 0 : index
    %c0_201 = arith.constant 0 : index
    %231 = vector.load %arg6[%c28_199, %c0_200, %c0_201] : memref<32x36x128xf32, #tpu.memory_space<vmem>>, vector<1x36x128xf32>
    %232 = vector.shape_cast %231 : vector<1x36x128xf32> to vector<36x128xf32>
    %cst_202 = arith.constant dense<0.000000e+00> : vector<8x128xf32>
    %233 = tpu.matmul %230, %232, %cst_202 {dimension_numbers = #tpu.dot_dimension_numbers<[1], [0], [0], [1], [0, 0, 1, 1], [], []>} : vector<8x36xf32>, vector<36x128xf32>, vector<8x128xf32> -> vector<8x128xf32>
    %234 = arith.addf %210, %233 : vector<8x128xf32>
    %c29 = arith.constant 29 : index
    %c0_203 = arith.constant 0 : index
    %c0_204 = arith.constant 0 : index
    %235 = vector.load %arg11[%c29, %c0_203, %c0_204] : memref<32x8x36xf32, #tpu.memory_space<vmem>>, vector<1x8x36xf32>
    %236 = vector.shape_cast %235 : vector<1x8x36xf32> to vector<8x36xf32>
    %c29_205 = arith.constant 29 : index
    %c0_206 = arith.constant 0 : index
    %c0_207 = arith.constant 0 : index
    %237 = vector.load %arg6[%c29_205, %c0_206, %c0_207] : memref<32x36x128xf32, #tpu.memory_space<vmem>>, vector<1x36x128xf32>
    %238 = vector.shape_cast %237 : vector<1x36x128xf32> to vector<36x128xf32>
    %cst_208 = arith.constant dense<0.000000e+00> : vector<8x128xf32>
    %239 = tpu.matmul %236, %238, %cst_208 {dimension_numbers = #tpu.dot_dimension_numbers<[1], [0], [0], [1], [0, 0, 1, 1], [], []>} : vector<8x36xf32>, vector<36x128xf32>, vector<8x128xf32> -> vector<8x128xf32>
    %240 = arith.addf %216, %239 : vector<8x128xf32>
    %c30 = arith.constant 30 : index
    %c0_209 = arith.constant 0 : index
    %c0_210 = arith.constant 0 : index
    %241 = vector.load %arg11[%c30, %c0_209, %c0_210] : memref<32x8x36xf32, #tpu.memory_space<vmem>>, vector<1x8x36xf32>
    %242 = vector.shape_cast %241 : vector<1x8x36xf32> to vector<8x36xf32>
    %c30_211 = arith.constant 30 : index
    %c0_212 = arith.constant 0 : index
    %c0_213 = arith.constant 0 : index
    %243 = vector.load %arg6[%c30_211, %c0_212, %c0_213] : memref<32x36x128xf32, #tpu.memory_space<vmem>>, vector<1x36x128xf32>
    %244 = vector.shape_cast %243 : vector<1x36x128xf32> to vector<36x128xf32>
    %cst_214 = arith.constant dense<0.000000e+00> : vector<8x128xf32>
    %245 = tpu.matmul %242, %244, %cst_214 {dimension_numbers = #tpu.dot_dimension_numbers<[1], [0], [0], [1], [0, 0, 1, 1], [], []>} : vector<8x36xf32>, vector<36x128xf32>, vector<8x128xf32> -> vector<8x128xf32>
    %246 = arith.addf %222, %245 : vector<8x128xf32>
    %c31 = arith.constant 31 : index
    %c0_215 = arith.constant 0 : index
    %c0_216 = arith.constant 0 : index
    %247 = vector.load %arg11[%c31, %c0_215, %c0_216] : memref<32x8x36xf32, #tpu.memory_space<vmem>>, vector<1x8x36xf32>
    %248 = vector.shape_cast %247 : vector<1x8x36xf32> to vector<8x36xf32>
    %c31_217 = arith.constant 31 : index
    %c0_218 = arith.constant 0 : index
    %c0_219 = arith.constant 0 : index
    %249 = vector.load %arg6[%c31_217, %c0_218, %c0_219] : memref<32x36x128xf32, #tpu.memory_space<vmem>>, vector<1x36x128xf32>
    %250 = vector.shape_cast %249 : vector<1x36x128xf32> to vector<36x128xf32>
    %cst_220 = arith.constant dense<0.000000e+00> : vector<8x128xf32>
    %251 = tpu.matmul %248, %250, %cst_220 {dimension_numbers = #tpu.dot_dimension_numbers<[1], [0], [0], [1], [0, 0, 1, 1], [], []>} : vector<8x36xf32>, vector<36x128xf32>, vector<8x128xf32> -> vector<8x128xf32>
    %252 = arith.addf %228, %251 : vector<8x128xf32>
    %253 = arith.addf %234, %240 : vector<8x128xf32>
    %254 = arith.addf %246, %252 : vector<8x128xf32>
    %255 = arith.addf %253, %254 : vector<8x128xf32>
    %c0_221 = arith.constant 0 : index
    %c0_222 = arith.constant 0 : index
    %256 = vector.load %arg7[%c0_221, %c0_222] : memref<1x128xf32, #tpu.memory_space<vmem>>, vector<1x128xf32>
    %257 = vector.broadcast %256 : vector<1x128xf32> to vector<8x128xf32>
    %258 = arith.addf %255, %257 : vector<8x128xf32>
    %cst_223 = arith.constant 0.000000e+00 : f32
    %259 = vector.broadcast %cst_223 : f32 to vector<8x128xf32>
    %260 = arith.maximumf %258, %259 : vector<8x128xf32>
    %c0_224 = arith.constant 0 : index
    %c0_225 = arith.constant 0 : index
    %261 = vector.load %arg8[%c0_224, %c0_225] : memref<128x128xf32, #tpu.memory_space<vmem>>, vector<128x128xf32>
    %cst_226 = arith.constant dense<0.000000e+00> : vector<8x128xf32>
    %262 = tpu.matmul %260, %261, %cst_226 {dimension_numbers = #tpu.dot_dimension_numbers<[1], [0], [0], [1], [0, 0, 1, 1], [], []>} : vector<8x128xf32>, vector<128x128xf32>, vector<8x128xf32> -> vector<8x128xf32>
    %c0_227 = arith.constant 0 : index
    %c0_228 = arith.constant 0 : index
    %263 = vector.load %arg9[%c0_227, %c0_228] : memref<1x128xf32, #tpu.memory_space<vmem>>, vector<1x128xf32>
    %264 = vector.broadcast %263 : vector<1x128xf32> to vector<8x128xf32>
    %265 = arith.addf %262, %264 : vector<8x128xf32>
    %c0_229 = arith.constant 0 : index
    %c0_230 = arith.constant 0 : index
    %266 = vector.load %arg10[%c0_229, %c0_230] : memref<8x128xf32, #tpu.memory_space<vmem>>, vector<8x128xf32>
    tpu.vector_store %arg10[%c0_229, %c0_230], %265 {strides = array<i32>} : memref<8x128xf32, #tpu.memory_space<vmem>>, vector<8x128xf32>,
    return
  }
  func.func @transform_0(%arg0: i32) -> (i32, i32) {
    %c0_i32 = arith.constant 0 : i32
    %c0_i32_0 = arith.constant 0 : i32
    return %arg0, %c0_i32 : i32, i32
  }
  func.func @transform_1(%arg0: i32) -> (i32, i32) {
    %c0_i32 = arith.constant 0 : i32
    %c0_i32_0 = arith.constant 0 : i32
    %c0_i32_1 = arith.constant 0 : i32
    return %c0_i32, %c0_i32_0 : i32, i32
  }
  func.func @transform_2(%arg0: i32) -> (i32, i32) {
    %c0_i32 = arith.constant 0 : i32
    %c0_i32_0 = arith.constant 0 : i32
    %c0_i32_1 = arith.constant 0 : i32
    return %c0_i32, %c0_i32_0 : i32, i32
  }
  func.func @transform_3(%arg0: i32) -> (i32, i32) {
    %c0_i32 = arith.constant 0 : i32
    %c0_i32_0 = arith.constant 0 : i32
    %c0_i32_1 = arith.constant 0 : i32
    return %c0_i32, %c0_i32_0 : i32, i32
  }
  func.func @transform_4(%arg0: i32) -> (i32, i32) {
    %c0_i32 = arith.constant 0 : i32
    %c0_i32_0 = arith.constant 0 : i32
    %c0_i32_1 = arith.constant 0 : i32
    return %c0_i32, %c0_i32_0 : i32, i32
  }
  func.func @transform_5(%arg0: i32) -> (i32, i32, i32) {
    %c0_i32 = arith.constant 0 : i32
    %c0_i32_0 = arith.constant 0 : i32
    %c0_i32_1 = arith.constant 0 : i32
    %c0_i32_2 = arith.constant 0 : i32
    return %c0_i32, %c0_i32_0, %c0_i32_1 : i32, i32, i32
  }
  func.func @transform_6(%arg0: i32) -> (i32, i32) {
    %c0_i32 = arith.constant 0 : i32
    %c0_i32_0 = arith.constant 0 : i32
    %c0_i32_1 = arith.constant 0 : i32
    return %c0_i32, %c0_i32_0 : i32, i32
  }
  func.func @transform_7(%arg0: i32) -> (i32, i32) {
    %c0_i32 = arith.constant 0 : i32
    %c0_i32_0 = arith.constant 0 : i32
    %c0_i32_1 = arith.constant 0 : i32
    return %c0_i32, %c0_i32_0 : i32, i32
  }
  func.func @transform_8(%arg0: i32) -> (i32, i32) {
    %c0_i32 = arith.constant 0 : i32
    %c0_i32_0 = arith.constant 0 : i32
    %c0_i32_1 = arith.constant 0 : i32
    return %c0_i32, %c0_i32_0 : i32, i32
  }
  func.func @transform_9(%arg0: i32) -> (i32, i32) {
    %c0_i32 = arith.constant 0 : i32
    %c0_i32_0 = arith.constant 0 : i32
    return %arg0, %c0_i32 : i32, i32
  }
}

</mosaic_0001>

<llo_original>
// kernel: tpu_custom_call.1
$region0: #{tpu_custom_call.1}
  #allocation0 [shape = 'u32[]', space=smem, size = 0x4, offset = 0x4, fixed_abs, tag = 'smem constant byte address 0x4 - core index']
  #allocation1 [shape = 'u32[144,128]{1,0:T(1,128)}', space=vmem, size = 0x12000, scoped, tag = 'internal scratch']
  #allocation2 [shape = 'f32[32,8,36]{2,1,0:T(8,128)}', space=vmem, size = 0x20000, scoped, tag = 'scratch operand']
  %s0 = inlined_call_operand.vmem [shape: f32[1024,9], index: 0, kind: input, shape index: {}]
  %s1 = inlined_call_operand.vmem [shape: f32[27,18], index: 1, kind: input, shape index: {}]
  %s2 = inlined_call_operand.vmem [shape: f32[1,18], index: 2, kind: input, shape index: {}]
  %s3 = inlined_call_operand.vmem [shape: f32[54,36], index: 3, kind: input, shape index: {}]
  %s4 = inlined_call_operand.vmem [shape: f32[1,36], index: 4, kind: input, shape index: {}]
  %s5 = inlined_call_operand.vmem [shape: f32[32,36,128], index: 5, kind: input, shape index: {}]
  %s6 = inlined_call_operand.vmem [shape: f32[1,128], index: 6, kind: input, shape index: {}]
  %s7 = inlined_call_operand.vmem [shape: f32[128,128], index: 7, kind: input, shape index: {}]
  %s8 = inlined_call_operand.vmem [shape: f32[1,128], index: 8, kind: input, shape index: {}]
  %s9 = inlined_call_operand.hbm [shape: f32[8,128], index: 9, kind: output, shape index: {}]
  %s10 = sld [smem:[#allocation0]]
  $region46: #{tpu_custom_call.1} parent=0
    _
  %s12 = ssub.s32 1, %s10
  %s13 = scalar_select 0, %s12, %s10
  $region1: #{tpu_custom_call.1} parent=0
    #allocation3 [shape = 'u8[4096]{0}', space=vmem, size = 0x1000, scoped, tag = 'output window, operand 0, single buffered']
    #allocation4 [shape = 's32[1]{0}', space=sflag, size = 0x4, scoped, tag = 'scoped memory for tpu_custom_call.1']
    %14 = vsyncpa [#allocation4], 0
    // Predicated region
    $region2: #{tpu_custom_call.1} parent=1 // pred_check
      _
    $region3: #{tpu_custom_call.1} parent=1 // pred_check_branch
      %16 = sbr.rel (0) target = $region5
    $region4: #{tpu_custom_call.1} parent=1 // pred_region
      _
    $region5: #{tpu_custom_call.1} parent=1 // pred_fallthru
      _
    // Predicated region
    $region6: #{tpu_custom_call.1} parent=1 // pred_check
      _
    $region7: #{tpu_custom_call.1} parent=1 // pred_check_branch
      %18 = sbr.rel (0) target = $region9
    $region8: #{tpu_custom_call.1} parent=1 // pred_region
      _
    $region9: #{tpu_custom_call.1} parent=1 // pred_fallthru
      _
    // Predicated region
    $region10: #{tpu_custom_call.1} parent=1 // pred_check
      _
    $region11: #{tpu_custom_call.1} parent=1 // pred_check_branch
      %20 = sbr.rel (0) target = $region13
    $region12: #{tpu_custom_call.1} parent=1 // pred_region
      _
    $region13: #{tpu_custom_call.1} parent=1 // pred_fallthru
      _
    // Predicated region
    $region14: #{tpu_custom_call.1} parent=1 // pred_check
      _
    $region15: #{tpu_custom_call.1} parent=1 // pred_check_branch
      %22 = sbr.rel (0) target = $region17
    $region16: #{tpu_custom_call.1} parent=1 // pred_region
      _
    $region17: #{tpu_custom_call.1} parent=1 // pred_fallthru
      _
    // Predicated region
    $region18: #{tpu_custom_call.1} parent=1 // pred_check
      _
    $region19: #{tpu_custom_call.1} parent=1 // pred_check_branch
      %24 = sbr.rel (0) target = $region21
    $region20: #{tpu_custom_call.1} parent=1 // pred_region
      _
    $region21: #{tpu_custom_call.1} parent=1 // pred_fallthru
      _
    // Predicated region
    $region22: #{tpu_custom_call.1} parent=1 // pred_check
      _
    $region23: #{tpu_custom_call.1} parent=1 // pred_check_branch
      %26 = sbr.rel (0) target = $region25
    $region24: #{tpu_custom_call.1} parent=1 // pred_region
      _
    $region25: #{tpu_custom_call.1} parent=1 // pred_fallthru
      _
    // Predicated region
    $region26: #{tpu_custom_call.1} parent=1 // pred_check
      _
    $region27: #{tpu_custom_call.1} parent=1 // pred_check_branch
      %28 = sbr.rel (0) target = $region29
    $region28: #{tpu_custom_call.1} parent=1 // pred_region
      _
    $region29: #{tpu_custom_call.1} parent=1 // pred_fallthru
      _
    // Predicated region
    $region30: #{tpu_custom_call.1} parent=1 // pred_check
      _
    $region31: #{tpu_custom_call.1} parent=1 // pred_check_branch
      %30 = sbr.rel (0) target = $region33
    $region32: #{tpu_custom_call.1} parent=1 // pred_region
      _
    $region33: #{tpu_custom_call.1} parent=1 // pred_fallthru
      _
    // Predicated region
    $region34: #{tpu_custom_call.1} parent=1 // pred_check
      _
    $region35: #{tpu_custom_call.1} parent=1 // pred_check_branch
      %32 = sbr.rel (0) target = $region37
    $region36: #{tpu_custom_call.1} parent=1 // pred_region
      _
    $region37: #{tpu_custom_call.1} parent=1 // pred_fallthru
      _
    %v33 = vld [vmem:[%s0] sm:$0xff]
    %v34 = vld [vmem:[%s0 + $0x8] sm:$0xff]
    %v35 = vld [vmem:[%s0 + $0x10] sm:$0xff]
    %v36 = vld [vmem:[%s0 + $0x18] sm:$0xff]
    %v37 = vld [vmem:[%s0 + $0x20] sm:$0xff]
    %v38 = vld [vmem:[%s0 + $0x28] sm:$0xff]
    %v39 = vld [vmem:[%s0 + $0x30] sm:$0xff]
    %v40 = vld [vmem:[%s0 + $0x38] sm:$0xff]
    %v41 = vld [vmem:[%s0 + $0x40] sm:$0xff]
    %v42 = vld [vmem:[%s0 + $0x48] sm:$0xff]
    %v43 = vld [vmem:[%s0 + $0x50] sm:$0xff]
    %v44 = vld [vmem:[%s0 + $0x58] sm:$0xff]
    %v45 = vld [vmem:[%s0 + $0x60] sm:$0xff]
    %v46 = vld [vmem:[%s0 + $0x68] sm:$0xff]
    %v47 = vld [vmem:[%s0 + $0x70] sm:$0xff]
    %v48 = vld [vmem:[%s0 + $0x78] sm:$0xff]
    %v49 = vld [vmem:[%s0 + $0x80] sm:$0xff]
    %v50 = vld [vmem:[%s0 + $0x88] sm:$0xff]
    %v51 = vld [vmem:[%s0 + $0x90] sm:$0xff]
    %v52 = vld [vmem:[%s0 + $0x98] sm:$0xff]
    %v53 = vld [vmem:[%s0 + $0xa0] sm:$0xff]
    %v54 = vld [vmem:[%s0 + $0xa8] sm:$0xff]
    %v55 = vld [vmem:[%s0 + $0xb0] sm:$0xff]
    %v56 = vld [vmem:[%s0 + $0xb8] sm:$0xff]
    %v57 = vld [vmem:[%s0 + $0xc0] sm:$0xff]
    %v58 = vld [vmem:[%s0 + $0xc8] sm:$0xff]
    %v59 = vld [vmem:[%s0 + $0xd0] sm:$0xff]
    %v60 = vld [vmem:[%s0 + $0xd8] sm:$0xff]
    %v61 = vld [vmem:[%s0 + $0xe0] sm:$0xff]
    %v62 = vld [vmem:[%s0 + $0xe8] sm:$0xff]
    %v63 = vld [vmem:[%s0 + $0xf0] sm:$0xff]
    %v64 = vld [vmem:[%s0 + $0xf8] sm:$0xff]
    %v65 = vld [vmem:[%s0 + $0x100] sm:$0xff]
    %v66 = vld [vmem:[%s0 + $0x108] sm:$0xff]
    %v67 = vld [vmem:[%s0 + $0x110] sm:$0xff]
    %v68 = vld [vmem:[%s0 + $0x118] sm:$0xff]
    %v69 = vld [vmem:[%s0 + $0x120] sm:$0xff]
    %v70 = vld [vmem:[%s0 + $0x128] sm:$0xff]
    %v71 = vld [vmem:[%s0 + $0x130] sm:$0xff]
    %v72 = vld [vmem:[%s0 + $0x138] sm:$0xff]
    %v73 = vld [vmem:[%s0 + $0x140] sm:$0xff]
    %v74 = vld [vmem:[%s0 + $0x148] sm:$0xff]
    %v75 = vld [vmem:[%s0 + $0x150] sm:$0xff]
    %v76 = vld [vmem:[%s0 + $0x158] sm:$0xff]
    %v77 = vld [vmem:[%s0 + $0x160] sm:$0xff]
    %v78 = vld [vmem:[%s0 + $0x168] sm:$0xff]
    %v79 = vld [vmem:[%s0 + $0x170] sm:$0xff]
    %v80 = vld [vmem:[%s0 + $0x178] sm:$0xff]
    %v81 = vld [vmem:[%s0 + $0x180] sm:$0xff]
    %v82 = vld [vmem:[%s0 + $0x188] sm:$0xff]
    %v83 = vld [vmem:[%s0 + $0x190] sm:$0xff]
    %v84 = vld [vmem:[%s0 + $0x198] sm:$0xff]
    %v85 = vld [vmem:[%s0 + $0x1a0] sm:$0xff]
    %v86 = vld [vmem:[%s0 + $0x1a8] sm:$0xff]
    %v87 = vld [vmem:[%s0 + $0x1b0] sm:$0xff]
    %v88 = vld [vmem:[%s0 + $0x1b8] sm:$0xff]
    %v89 = vld [vmem:[%s0 + $0x1c0] sm:$0xff]
    %v90 = vld [vmem:[%s0 + $0x1c8] sm:$0xff]
    %v91 = vld [vmem:[%s0 + $0x1d0] sm:$0xff]
    %v92 = vld [vmem:[%s0 + $0x1d8] sm:$0xff]
    %v93 = vld [vmem:[%s0 + $0x1e0] sm:$0xff]
    %v94 = vld [vmem:[%s0 + $0x1e8] sm:$0xff]
    %v95 = vld [vmem:[%s0 + $0x1f0] sm:$0xff]
    %v96 = vld [vmem:[%s0 + $0x1f8] sm:$0xff]
    %v97 = vld [vmem:[%s0 + $0x200] sm:$0xff]
    %v98 = vld [vmem:[%s0 + $0x208] sm:$0xff]
    %v99 = vld [vmem:[%s0 + $0x210] sm:$0xff]
    %v100 = vld [vmem:[%s0 + $0x218] sm:$0xff]
    %v101 = vld [vmem:[%s0 + $0x220] sm:$0xff]
    %v102 = vld [vmem:[%s0 + $0x228] sm:$0xff]
    %v103 = vld [vmem:[%s0 + $0x230] sm:$0xff]
    %v104 = vld [vmem:[%s0 + $0x238] sm:$0xff]
    %v105 = vld [vmem:[%s0 + $0x240] sm:$0xff]
    %v106 = vld [vmem:[%s0 + $0x248] sm:$0xff]
    %v107 = vld [vmem:[%s0 + $0x250] sm:$0xff]
    %v108 = vld [vmem:[%s0 + $0x258] sm:$0xff]
    %v109 = vld [vmem:[%s0 + $0x260] sm:$0xff]
    %v110 = vld [vmem:[%s0 + $0x268] sm:$0xff]
    %v111 = vld [vmem:[%s0 + $0x270] sm:$0xff]
    %v112 = vld [vmem:[%s0 + $0x278] sm:$0xff]
    %v113 = vld [vmem:[%s0 + $0x280] sm:$0xff]
    %v114 = vld [vmem:[%s0 + $0x288] sm:$0xff]
    %v115 = vld [vmem:[%s0 + $0x290] sm:$0xff]
    %v116 = vld [vmem:[%s0 + $0x298] sm:$0xff]
    %v117 = vld [vmem:[%s0 + $0x2a0] sm:$0xff]
    %v118 = vld [vmem:[%s0 + $0x2a8] sm:$0xff]
    %v119 = vld [vmem:[%s0 + $0x2b0] sm:$0xff]
    %v120 = vld [vmem:[%s0 + $0x2b8] sm:$0xff]
    %v121 = vld [vmem:[%s0 + $0x2c0] sm:$0xff]
    %v122 = vld [vmem:[%s0 + $0x2c8] sm:$0xff]
    %v123 = vld [vmem:[%s0 + $0x2d0] sm:$0xff]
    %v124 = vld [vmem:[%s0 + $0x2d8] sm:$0xff]
    %v125 = vld [vmem:[%s0 + $0x2e0] sm:$0xff]
    %v126 = vld [vmem:[%s0 + $0x2e8] sm:$0xff]
    %v127 = vld [vmem:[%s0 + $0x2f0] sm:$0xff]
    %v128 = vld [vmem:[%s0 + $0x2f8] sm:$0xff]
    %v129 = vld [vmem:[%s0 + $0x300] sm:$0xff]
    %v130 = vld [vmem:[%s0 + $0x308] sm:$0xff]
    %v131 = vld [vmem:[%s0 + $0x310] sm:$0xff]
    %v132 = vld [vmem:[%s0 + $0x318] sm:$0xff]
    %v133 = vld [vmem:[%s0 + $0x320] sm:$0xff]
    %v134 = vld [vmem:[%s0 + $0x328] sm:$0xff]
    %v135 = vld [vmem:[%s0 + $0x330] sm:$0xff]
    %v136 = vld [vmem:[%s0 + $0x338] sm:$0xff]
    %v137 = vld [vmem:[%s0 + $0x340] sm:$0xff]
    %v138 = vld [vmem:[%s0 + $0x348] sm:$0xff]
    %v139 = vld [vmem:[%s0 + $0x350] sm:$0xff]
    %v140 = vld [vmem:[%s0 + $0x358] sm:$0xff]
    %v141 = vld [vmem:[%s0 + $0x360] sm:$0xff]
    %v142 = vld [vmem:[%s0 + $0x368] sm:$0xff]
    %v143 = vld [vmem:[%s0 + $0x370] sm:$0xff]
    %v144 = vld [vmem:[%s0 + $0x378] sm:$0xff]
    %v145 = vld [vmem:[%s0 + $0x380] sm:$0xff]
    %v146 = vld [vmem:[%s0 + $0x388] sm:$0xff]
    %v147 = vld [vmem:[%s0 + $0x390] sm:$0xff]
    %v148 = vld [vmem:[%s0 + $0x398] sm:$0xff]
    %v149 = vld [vmem:[%s0 + $0x3a0] sm:$0xff]
    %v150 = vld [vmem:[%s0 + $0x3a8] sm:$0xff]
    %v151 = vld [vmem:[%s0 + $0x3b0] sm:$0xff]
    %v152 = vld [vmem:[%s0 + $0x3b8] sm:$0xff]
    %v153 = vld [vmem:[%s0 + $0x3c0] sm:$0xff]
    %v154 = vld [vmem:[%s0 + $0x3c8] sm:$0xff]
    %v155 = vld [vmem:[%s0 + $0x3d0] sm:$0xff]
    %v156 = vld [vmem:[%s0 + $0x3d8] sm:$0xff]
    %v157 = vld [vmem:[%s0 + $0x3e0] sm:$0xff]
    %v158 = vld [vmem:[%s0 + $0x3e8] sm:$0xff]
    %v159 = vld [vmem:[%s0 + $0x3f0] sm:$0xff]
    %v160 = vld [vmem:[%s0 + $0x3f8] sm:$0xff]
    %v161 = vlaneseq
    %v162 = vshrl.u32 %v161, 7
    %v163 = vadd.s32 %v162, 8
    %v164 = vadd.s32 %v162, 16
    %v165 = vadd.s32 %v162, 24
    %v166 = vadd.s32 %v162, 32
    %v167 = vadd.s32 %v162, 40
    %v168 = vadd.s32 %v162, 48
    %v169 = vadd.s32 %v162, 56
    %v170 = vadd.s32 %v162, 64
    %v171 = vadd.s32 %v162, 72
    %v172 = vadd.s32 %v162, 80
    %v173 = vadd.s32 %v162, 88
    %v174 = vadd.s32 %v162, 96
    %v175 = vadd.s32 %v162, 104
    %v176 = vadd.s32 %v162, 112
    %v177 = vadd.s32 %v162, 120
    %v178 = vadd.s32 %v162, 128
    %v179 = vadd.s32 %v162, 136
    %v180 = vadd.s32 %v162, 144
    %v181 = vadd.s32 %v162, 152
    %v182 = vadd.s32 %v162, 160
    %v183 = vadd.s32 %v162, 168
    %v184 = vadd.s32 %v162, 176
    %v185 = vadd.s32 %v162, 184
    %v186 = vadd.s32 %v162, 192
    %v187 = vadd.s32 %v162, 200
    %v188 = vadd.s32 %v162, 208
    %v189 = vadd.s32 %v162, 216
    %v190 = vadd.s32 %v162, 224
    %v191 = vadd.s32 %v162, 232
    %v192 = vadd.s32 %v162, 240
    %v193 = vadd.s32 %v162, 248
    %v194 = vadd.s32 %v162, 256
    %v195 = vadd.s32 %v162, 264
    %v196 = vadd.s32 %v162, 272
    %v197 = vadd.s32 %v162, 280
    %v198 = vadd.s32 %v162, 288
    %v199 = vadd.s32 %v162, 296
    %v200 = vadd.s32 %v162, 304
    %v201 = vadd.s32 %v162, 312
    %v202 = vadd.s32 %v162, 320
    %v203 = vadd.s32 %v162, 328
    %v204 = vadd.s32 %v162, 336
    %v205 = vadd.s32 %v162, 344
    %v206 = vadd.s32 %v162, 352
    %v207 = vadd.s32 %v162, 360
    %v208 = vadd.s32 %v162, 368
    %v209 = vadd.s32 %v162, 376
    %v210 = vadd.s32 %v162, 384
    %v211 = vadd.s32 %v162, 392
    %v212 = vadd.s32 %v162, 400
    %v213 = vadd.s32 %v162, 408
    %v214 = vadd.s32 %v162, 416
    %v215 = vadd.s32 %v162, 424
    %v216 = vadd.s32 %v162, 432
    %v217 = vadd.s32 %v162, 440
    %v218 = vadd.s32 %v162, 448
    %v219 = vadd.s32 %v162, 456
    %v220 = vadd.s32 %v162, 464
    %v221 = vadd.s32 %v162, 472
    %v222 = vadd.s32 %v162, 480
    %v223 = vadd.s32 %v162, 488
    %v224 = vadd.s32 %v162, 496
    %v225 = vadd.s32 %v162, 504
    %v226 = vadd.s32 %v162, 512
    %v227 = vadd.s32 %v162, 520
    %v228 = vadd.s32 %v162, 528
    %v229 = vadd.s32 %v162, 536
    %v230 = vadd.s32 %v162, 544
    %v231 = vadd.s32 %v162, 552
    %v232 = vadd.s32 %v162, 560
    %v233 = vadd.s32 %v162, 568
    %v234 = vadd.s32 %v162, 576
    %v235 = vadd.s32 %v162, 584
    %v236 = vadd.s32 %v162, 592
    %v237 = vadd.s32 %v162, 600
    %v238 = vadd.s32 %v162, 608
    %v239 = vadd.s32 %v162, 616
    %v240 = vadd.s32 %v162, 624
    %v241 = vadd.s32 %v162, 632
    %v242 = vadd.s32 %v162, 640
    %v243 = vadd.s32 %v162, 648
    %v244 = vadd.s32 %v162, 656
    %v245 = vadd.s32 %v162, 664
    %v246 = vadd.s32 %v162, 672
    %v247 = vadd.s32 %v162, 680
    %v248 = vadd.s32 %v162, 688
    %v249 = vadd.s32 %v162, 696
    %v250 = vadd.s32 %v162, 704
    %v251 = vadd.s32 %v162, 712
    %v252 = vadd.s32 %v162, 720
    %v253 = vadd.s32 %v162, 728
    %v254 = vadd.s32 %v162, 736
    %v255 = vadd.s32 %v162, 744
    %v256 = vadd.s32 %v162, 752
    %v257 = vadd.s32 %v162, 760
    %v258 = vadd.s32 %v162, 768
    %v259 = vadd.s32 %v162, 776
    %v260 = vadd.s32 %v162, 784
    %v261 = vadd.s32 %v162, 792
    %v262 = vadd.s32 %v162, 800
    %v263 = vadd.s32 %v162, 808
    %v264 = vadd.s32 %v162, 816
    %v265 = vadd.s32 %v162, 824
    %v266 = vadd.s32 %v162, 832
    %v267 = vadd.s32 %v162, 840
    %v268 = vadd.s32 %v162, 848
    %v269 = vadd.s32 %v162, 856
    %v270 = vadd.s32 %v162, 864
    %v271 = vadd.s32 %v162, 872
    %v272 = vadd.s32 %v162, 880
    %v273 = vadd.s32 %v162, 888
    %v274 = vadd.s32 %v162, 896
    %v275 = vadd.s32 %v162, 904
    %v276 = vadd.s32 %v162, 912
    %v277 = vadd.s32 %v162, 920
    %v278 = vadd.s32 %v162, 928
    %v279 = vadd.s32 %v162, 936
    %v280 = vadd.s32 %v162, 944
    %v281 = vadd.s32 %v162, 952
    %v282 = vadd.s32 %v162, 960
    %v283 = vadd.s32 %v162, 968
    %v284 = vadd.s32 %v162, 976
    %v285 = vadd.s32 %v162, 984
    %v286 = vadd.s32 %v162, 992
    %v287 = vadd.s32 %v162, 1000
    %v288 = vadd.s32 %v162, 1008
    %v289 = vadd.s32 %v162, 1016
    %vm290 = vcmp.lt.s32.totalorder %v162, 8
    %vm291 = vcmp.lt.s32.totalorder %v163, 8
    %vm292 = vcmp.lt.s32.totalorder %v164, 8
    %vm293 = vcmp.lt.s32.totalorder %v165, 8
    %vm294 = vcmp.lt.s32.totalorder %v166, 8
    %vm295 = vcmp.lt.s32.totalorder %v167, 8
    %vm296 = vcmp.lt.s32.totalorder %v168, 8
    %vm297 = vcmp.lt.s32.totalorder %v169, 8
    %vm298 = vcmp.lt.s32.totalorder %v170, 8
    %vm299 = vcmp.lt.s32.totalorder %v171, 8
    %vm300 = vcmp.lt.s32.totalorder %v172, 8
    %vm301 = vcmp.lt.s32.totalorder %v173, 8
    %vm302 = vcmp.lt.s32.totalorder %v174, 8
    %vm303 = vcmp.lt.s32.totalorder %v175, 8
    %vm304 = vcmp.lt.s32.totalorder %v176, 8
    %vm305 = vcmp.lt.s32.totalorder %v177, 8
    %vm306 = vcmp.lt.s32.totalorder %v178, 8
    %vm307 = vcmp.lt.s32.totalorder %v179, 8
    %vm308 = vcmp.lt.s32.totalorder %v180, 8
    %vm309 = vcmp.lt.s32.totalorder %v181, 8
    %vm310 = vcmp.lt.s32.totalorder %v182, 8
    %vm311 = vcmp.lt.s32.totalorder %v183, 8
    %vm312 = vcmp.lt.s32.totalorder %v184, 8
    %vm313 = vcmp.lt.s32.totalorder %v185, 8
    %vm314 = vcmp.lt.s32.totalorder %v186, 8
    %vm315 = vcmp.lt.s32.totalorder %v187, 8
    %vm316 = vcmp.lt.s32.totalorder %v188, 8
    %vm317 = vcmp.lt.s32.totalorder %v189, 8
    %vm318 = vcmp.lt.s32.totalorder %v190, 8
    %vm319 = vcmp.lt.s32.totalorder %v191, 8
    %vm320 = vcmp.lt.s32.totalorder %v192, 8
    %vm321 = vcmp.lt.s32.totalorder %v193, 8
    %vm322 = vcmp.lt.s32.totalorder %v194, 8
    %vm323 = vcmp.lt.s32.totalorder %v195, 8
    %vm324 = vcmp.lt.s32.totalorder %v196, 8
    %vm325 = vcmp.lt.s32.totalorder %v197, 8
    %vm326 = vcmp.lt.s32.totalorder %v198, 8
    %vm327 = vcmp.lt.s32.totalorder %v199, 8
    %vm328 = vcmp.lt.s32.totalorder %v200, 8
    %vm329 = vcmp.lt.s32.totalorder %v201, 8
    %vm330 = vcmp.lt.s32.totalorder %v202, 8
    %vm331 = vcmp.lt.s32.totalorder %v203, 8
    %vm332 = vcmp.lt.s32.totalorder %v204, 8
    %vm333 = vcmp.lt.s32.totalorder %v205, 8
    %vm334 = vcmp.lt.s32.totalorder %v206, 8
    %vm335 = vcmp.lt.s32.totalorder %v207, 8
    %vm336 = vcmp.lt.s32.totalorder %v208, 8
    %vm337 = vcmp.lt.s32.totalorder %v209, 8
    %vm338 = vcmp.lt.s32.totalorder %v210, 8
    %vm339 = vcmp.lt.s32.totalorder %v211, 8
    %vm340 = vcmp.lt.s32.totalorder %v212, 8
    %vm341 = vcmp.lt.s32.totalorder %v213, 8
    %vm342 = vcmp.lt.s32.totalorder %v214, 8
    %vm343 = vcmp.lt.s32.totalorder %v215, 8
    %vm344 = vcmp.lt.s32.totalorder %v216, 8
    %vm345 = vcmp.lt.s32.totalorder %v217, 8
    %vm346 = vcmp.lt.s32.totalorder %v218, 8
    %vm347 = vcmp.lt.s32.totalorder %v219, 8
    %vm348 = vcmp.lt.s32.totalorder %v220, 8
    %vm349 = vcmp.lt.s32.totalorder %v221, 8
    %vm350 = vcmp.lt.s32.totalorder %v222, 8
    %vm351 = vcmp.lt.s32.totalorder %v223, 8
    %vm352 = vcmp.lt.s32.totalorder %v224, 8
    %vm353 = vcmp.lt.s32.totalorder %v225, 8
    %vm354 = vcmp.lt.s32.totalorder %v226, 8
    %vm355 = vcmp.lt.s32.totalorder %v227, 8
    %vm356 = vcmp.lt.s32.totalorder %v228, 8
    %vm357 = vcmp.lt.s32.totalorder %v229, 8
    %vm358 = vcmp.lt.s32.totalorder %v230, 8
    %vm359 = vcmp.lt.s32.totalorder %v231, 8
    %vm360 = vcmp.lt.s32.totalorder %v232, 8
    %vm361 = vcmp.lt.s32.totalorder %v233, 8
    %vm362 = vcmp.lt.s32.totalorder %v234, 8
    %vm363 = vcmp.lt.s32.totalorder %v235, 8
    %vm364 = vcmp.lt.s32.totalorder %v236, 8
    %vm365 = vcmp.lt.s32.totalorder %v237, 8
    %vm366 = vcmp.lt.s32.totalorder %v238, 8
    %vm367 = vcmp.lt.s32.totalorder %v239, 8
    %vm368 = vcmp.lt.s32.totalorder %v240, 8
    %vm369 = vcmp.lt.s32.totalorder %v241, 8
    %vm370 = vcmp.lt.s32.totalorder %v242, 8
    %vm371 = vcmp.lt.s32.totalorder %v243, 8
    %vm372 = vcmp.lt.s32.totalorder %v244, 8
    %vm373 = vcmp.lt.s32.totalorder %v245, 8
    %vm374 = vcmp.lt.s32.totalorder %v246, 8
    %vm375 = vcmp.lt.s32.totalorder %v247, 8
    %vm376 = vcmp.lt.s32.totalorder %v248, 8
    %vm377 = vcmp.lt.s32.totalorder %v249, 8
    %vm378 = vcmp.lt.s32.totalorder %v250, 8
    %vm379 = vcmp.lt.s32.totalorder %v251, 8
    %vm380 = vcmp.lt.s32.totalorder %v252, 8
    %vm381 = vcmp.lt.s32.totalorder %v253, 8
    %vm382 = vcmp.lt.s32.totalorder %v254, 8
    %vm383 = vcmp.lt.s32.totalorder %v255, 8
    %vm384 = vcmp.lt.s32.totalorder %v256, 8
    %vm385 = vcmp.lt.s32.totalorder %v257, 8
    %vm386 = vcmp.lt.s32.totalorder %v258, 8
    %vm387 = vcmp.lt.s32.totalorder %v259, 8
    %vm388 = vcmp.lt.s32.totalorder %v260, 8
    %vm389 = vcmp.lt.s32.totalorder %v261, 8
    %vm390 = vcmp.lt.s32.totalorder %v262, 8
    %vm391 = vcmp.lt.s32.totalorder %v263, 8
    %vm392 = vcmp.lt.s32.totalorder %v264, 8
    %vm393 = vcmp.lt.s32.totalorder %v265, 8
    %vm394 = vcmp.lt.s32.totalorder %v266, 8
    %vm395 = vcmp.lt.s32.totalorder %v267, 8
    %vm396 = vcmp.lt.s32.totalorder %v268, 8
    %vm397 = vcmp.lt.s32.totalorder %v269, 8
    %vm398 = vcmp.lt.s32.totalorder %v270, 8
    %vm399 = vcmp.lt.s32.totalorder %v271, 8
    %vm400 = vcmp.lt.s32.totalorder %v272, 8
    %vm401 = vcmp.lt.s32.totalorder %v273, 8
    %vm402 = vcmp.lt.s32.totalorder %v274, 8
    %vm403 = vcmp.lt.s32.totalorder %v275, 8
    %vm404 = vcmp.lt.s32.totalorder %v276, 8
    %vm405 = vcmp.lt.s32.totalorder %v277, 8
    %vm406 = vcmp.lt.s32.totalorder %v278, 8
    %vm407 = vcmp.lt.s32.totalorder %v279, 8
    %vm408 = vcmp.lt.s32.totalorder %v280, 8
    %vm409 = vcmp.lt.s32.totalorder %v281, 8
    %vm410 = vcmp.lt.s32.totalorder %v282, 8
    %vm411 = vcmp.lt.s32.totalorder %v283, 8
    %vm412 = vcmp.lt.s32.totalorder %v284, 8
    %vm413 = vcmp.lt.s32.totalorder %v285, 8
    %vm414 = vcmp.lt.s32.totalorder %v286, 8
    %vm415 = vcmp.lt.s32.totalorder %v287, 8
    %vm416 = vcmp.lt.s32.totalorder %v288, 8
    %vm417 = vcmp.lt.s32.totalorder %v289, 8
    %v418 = vsel %vm290, 1, 0
    %v419 = vsel %vm291, 1, 0
    %v420 = vsel %vm292, 1, 0
    %v421 = vsel %vm293, 1, 0
    %v422 = vsel %vm294, 1, 0
    %v423 = vsel %vm295, 1, 0
    %v424 = vsel %vm296, 1, 0
    %v425 = vsel %vm297, 1, 0
    %v426 = vsel %vm298, 1, 0
    %v427 = vsel %vm299, 1, 0
    %v428 = vsel %vm300, 1, 0
    %v429 = vsel %vm301, 1, 0
    %v430 = vsel %vm302, 1, 0
    %v431 = vsel %vm303, 1, 0
    %v432 = vsel %vm304, 1, 0
    %v433 = vsel %vm305, 1, 0
    %v434 = vsel %vm306, 1, 0
    %v435 = vsel %vm307, 1, 0
    %v436 = vsel %vm308, 1, 0
    %v437 = vsel %vm309, 1, 0
    %v438 = vsel %vm310, 1, 0
    %v439 = vsel %vm311, 1, 0
    %v440 = vsel %vm312, 1, 0
    %v441 = vsel %vm313, 1, 0
    %v442 = vsel %vm314, 1, 0
    %v443 = vsel %vm315, 1, 0
    %v444 = vsel %vm316, 1, 0
    %v445 = vsel %vm317, 1, 0
    %v446 = vsel %vm318, 1, 0
    %v447 = vsel %vm319, 1, 0
    %v448 = vsel %vm320, 1, 0
    %v449 = vsel %vm321, 1, 0
    %v450 = vsel %vm322, 1, 0
    %v451 = vsel %vm323, 1, 0
    %v452 = vsel %vm324, 1, 0
    %v453 = vsel %vm325, 1, 0
    %v454 = vsel %vm326, 1, 0
    %v455 = vsel %vm327, 1, 0
    %v456 = vsel %vm328, 1, 0
    %v457 = vsel %vm329, 1, 0
    %v458 = vsel %vm330, 1, 0
    %v459 = vsel %vm331, 1, 0
    %v460 = vsel %vm332, 1, 0
    %v461 = vsel %vm333, 1, 0
    %v462 = vsel %vm334, 1, 0
    %v463 = vsel %vm335, 1, 0
    %v464 = vsel %vm336, 1, 0
    %v465 = vsel %vm337, 1, 0
    %v466 = vsel %vm338, 1, 0
    %v467 = vsel %vm339, 1, 0
    %v468 = vsel %vm340, 1, 0
    %v469 = vsel %vm341, 1, 0
    %v470 = vsel %vm342, 1, 0
    %v471 = vsel %vm343, 1, 0
    %v472 = vsel %vm344, 1, 0
    %v473 = vsel %vm345, 1, 0
    %v474 = vsel %vm346, 1, 0
    %v475 = vsel %vm347, 1, 0
    %v476 = vsel %vm348, 1, 0
    %v477 = vsel %vm349, 1, 0
    %v478 = vsel %vm350, 1, 0
    %v479 = vsel %vm351, 1, 0
    %v480 = vsel %vm352, 1, 0
    %v481 = vsel %vm353, 1, 0
    %v482 = vsel %vm354, 1, 0
    %v483 = vsel %vm355, 1, 0
    %v484 = vsel %vm356, 1, 0
    %v485 = vsel %vm357, 1, 0
    %v486 = vsel %vm358, 1, 0
    %v487 = vsel %vm359, 1, 0
    %v488 = vsel %vm360, 1, 0
    %v489 = vsel %vm361, 1, 0
    %v490 = vsel %vm362, 1, 0
    %v491 = vsel %vm363, 1, 0
    %v492 = vsel %vm364, 1, 0
    %v493 = vsel %vm365, 1, 0
    %v494 = vsel %vm366, 1, 0
    %v495 = vsel %vm367, 1, 0
    %v496 = vsel %vm368, 1, 0
    %v497 = vsel %vm369, 1, 0
    %v498 = vsel %vm370, 1, 0
    %v499 = vsel %vm371, 1, 0
    %v500 = vsel %vm372, 1, 0
    %v501 = vsel %vm373, 1, 0
    %v502 = vsel %vm374, 1, 0
    %v503 = vsel %vm375, 1, 0
    %v504 = vsel %vm376, 1, 0
    %v505 = vsel %vm377, 1, 0
    %v506 = vsel %vm378, 1, 0
    %v507 = vsel %vm379, 1, 0
    %v508 = vsel %vm380, 1, 0
    %v509 = vsel %vm381, 1, 0
    %v510 = vsel %vm382, 1, 0
    %v511 = vsel %vm383, 1, 0
    %v512 = vsel %vm384, 1, 0
    %v513 = vsel %vm385, 1, 0
    %v514 = vsel %vm386, 1, 0
    %v515 = vsel %vm387, 1, 0
    %v516 = vsel %vm388, 1, 0
    %v517 = vsel %vm389, 1, 0
    %v518 = vsel %vm390, 1, 0
    %v519 = vsel %vm391, 1, 0
    %v520 = vsel %vm392, 1, 0
    %v521 = vsel %vm393, 1, 0
    %v522 = vsel %vm394, 1, 0
    %v523 = vsel %vm395, 1, 0
    %v524 = vsel %vm396, 1, 0
    %v525 = vsel %vm397, 1, 0
    %v526 = vsel %vm398, 1, 0
    %v527 = vsel %vm399, 1, 0
    %v528 = vsel %vm400, 1, 0
    %v529 = vsel %vm401, 1, 0
    %v530 = vsel %vm402, 1, 0
    %v531 = vsel %vm403, 1, 0
    %v532 = vsel %vm404, 1, 0
    %v533 = vsel %vm405, 1, 0
    %v534 = vsel %vm406, 1, 0
    %v535 = vsel %vm407, 1, 0
    %v536 = vsel %vm408, 1, 0
    %v537 = vsel %vm409, 1, 0
    %v538 = vsel %vm410, 1, 0
    %v539 = vsel %vm411, 1, 0
    %v540 = vsel %vm412, 1, 0
    %v541 = vsel %vm413, 1, 0
    %v542 = vsel %vm414, 1, 0
    %v543 = vsel %vm415, 1, 0
    %v544 = vsel %vm416, 1, 0
    %v545 = vsel %vm417, 1, 0
    %vm546 = vcmp.eq.s32.totalorder %v418, 1
    %vm547 = vcmp.eq.s32.totalorder %v419, 1
    %vm548 = vcmp.eq.s32.totalorder %v420, 1
    %vm549 = vcmp.eq.s32.totalorder %v421, 1
    %vm550 = vcmp.eq.s32.totalorder %v422, 1
    %vm551 = vcmp.eq.s32.totalorder %v423, 1
    %vm552 = vcmp.eq.s32.totalorder %v424, 1
    %vm553 = vcmp.eq.s32.totalorder %v425, 1
    %vm554 = vcmp.eq.s32.totalorder %v426, 1
    %vm555 = vcmp.eq.s32.totalorder %v427, 1
    %vm556 = vcmp.eq.s32.totalorder %v428, 1
    %vm557 = vcmp.eq.s32.totalorder %v429, 1
    %vm558 = vcmp.eq.s32.totalorder %v430, 1
    %vm559 = vcmp.eq.s32.totalorder %v431, 1
    %vm560 = vcmp.eq.s32.totalorder %v432, 1
    %vm561 = vcmp.eq.s32.totalorder %v433, 1
    %vm562 = vcmp.eq.s32.totalorder %v434, 1
    %vm563 = vcmp.eq.s32.totalorder %v435, 1
    %vm564 = vcmp.eq.s32.totalorder %v436, 1
    %vm565 = vcmp.eq.s32.totalorder %v437, 1
    %vm566 = vcmp.eq.s32.totalorder %v438, 1
    %vm567 = vcmp.eq.s32.totalorder %v439, 1
    %vm568 = vcmp.eq.s32.totalorder %v440, 1
    %vm569 = vcmp.eq.s32.totalorder %v441, 1
    %vm570 = vcmp.eq.s32.totalorder %v442, 1
    %vm571 = vcmp.eq.s32.totalorder %v443, 1
    %vm572 = vcmp.eq.s32.totalorder %v444, 1
    %vm573 = vcmp.eq.s32.totalorder %v445, 1
    %vm574 = vcmp.eq.s32.totalorder %v446, 1
    %vm575 = vcmp.eq.s32.totalorder %v447, 1
    %vm576 = vcmp.eq.s32.totalorder %v448, 1
    %vm577 = vcmp.eq.s32.totalorder %v449, 1
    %vm578 = vcmp.eq.s32.totalorder %v450, 1
    %vm579 = vcmp.eq.s32.totalorder %v451, 1
    %vm580 = vcmp.eq.s32.totalorder %v452, 1
    %vm581 = vcmp.eq.s32.totalorder %v453, 1
    %vm582 = vcmp.eq.s32.totalorder %v454, 1
    %vm583 = vcmp.eq.s32.totalorder %v455, 1
    %vm584 = vcmp.eq.s32.totalorder %v456, 1
    %vm585 = vcmp.eq.s32.totalorder %v457, 1
    %vm586 = vcmp.eq.s32.totalorder %v458, 1
    %vm587 = vcmp.eq.s32.totalorder %v459, 1
    %vm588 = vcmp.eq.s32.totalorder %v460, 1
    %vm589 = vcmp.eq.s32.totalorder %v461, 1
    %vm590 = vcmp.eq.s32.totalorder %v462, 1
    %vm591 = vcmp.eq.s32.totalorder %v463, 1
    %vm592 = vcmp.eq.s32.totalorder %v464, 1
    %vm593 = vcmp.eq.s32.totalorder %v465, 1
    %vm594 = vcmp.eq.s32.totalorder %v466, 1
    %vm595 = vcmp.eq.s32.totalorder %v467, 1
    %vm596 = vcmp.eq.s32.totalorder %v468, 1
    %vm597 = vcmp.eq.s32.totalorder %v469, 1
    %vm598 = vcmp.eq.s32.totalorder %v470, 1
    %vm599 = vcmp.eq.s32.totalorder %v471, 1
    %vm600 = vcmp.eq.s32.totalorder %v472, 1
    %vm601 = vcmp.eq.s32.totalorder %v473, 1
    %vm602 = vcmp.eq.s32.totalorder %v474, 1
    %vm603 = vcmp.eq.s32.totalorder %v475, 1
    %vm604 = vcmp.eq.s32.totalorder %v476, 1
    %vm605 = vcmp.eq.s32.totalorder %v477, 1
    %vm606 = vcmp.eq.s32.totalorder %v478, 1
    %vm607 = vcmp.eq.s32.totalorder %v479, 1
    %vm608 = vcmp.eq.s32.totalorder %v480, 1
    %vm609 = vcmp.eq.s32.totalorder %v481, 1
    %vm610 = vcmp.eq.s32.totalorder %v482, 1
    %vm611 = vcmp.eq.s32.totalorder %v483, 1
    %vm612 = vcmp.eq.s32.totalorder %v484, 1
    %vm613 = vcmp.eq.s32.totalorder %v485, 1
    %vm614 = vcmp.eq.s32.totalorder %v486, 1
    %vm615 = vcmp.eq.s32.totalorder %v487, 1
    %vm616 = vcmp.eq.s32.totalorder %v488, 1
    %vm617 = vcmp.eq.s32.totalorder %v489, 1
    %vm618 = vcmp.eq.s32.totalorder %v490, 1
    %vm619 = vcmp.eq.s32.totalorder %v491, 1
    %vm620 = vcmp.eq.s32.totalorder %v492, 1
    %vm621 = vcmp.eq.s32.totalorder %v493, 1
    %vm622 = vcmp.eq.s32.totalorder %v494, 1
    %vm623 = vcmp.eq.s32.totalorder %v495, 1
    %vm624 = vcmp.eq.s32.totalorder %v496, 1
    %vm625 = vcmp.eq.s32.totalorder %v497, 1
    %vm626 = vcmp.eq.s32.totalorder %v498, 1
    %vm627 = vcmp.eq.s32.totalorder %v499, 1
    %vm628 = vcmp.eq.s32.totalorder %v500, 1
    %vm629 = vcmp.eq.s32.totalorder %v501, 1
    %vm630 = vcmp.eq.s32.totalorder %v502, 1
    %vm631 = vcmp.eq.s32.totalorder %v503, 1
    %vm632 = vcmp.eq.s32.totalorder %v504, 1
    %vm633 = vcmp.eq.s32.totalorder %v505, 1
    %vm634 = vcmp.eq.s32.totalorder %v506, 1
    %vm635 = vcmp.eq.s32.totalorder %v507, 1
    %vm636 = vcmp.eq.s32.totalorder %v508, 1
    %vm637 = vcmp.eq.s32.totalorder %v509, 1
    %vm638 = vcmp.eq.s32.totalorder %v510, 1
    %vm639 = vcmp.eq.s32.totalorder %v511, 1
    %vm640 = vcmp.eq.s32.totalorder %v512, 1
    %vm641 = vcmp.eq.s32.totalorder %v513, 1
    %vm642 = vcmp.eq.s32.totalorder %v514, 1
    %vm643 = vcmp.eq.s32.totalorder %v515, 1
    %vm644 = vcmp.eq.s32.totalorder %v516, 1
    %vm645 = vcmp.eq.s32.totalorder %v517, 1
    %vm646 = vcmp.eq.s32.totalorder %v518, 1
    %vm647 = vcmp.eq.s32.totalorder %v519, 1
    %vm648 = vcmp.eq.s32.totalorder %v520, 1
    %vm649 = vcmp.eq.s32.totalorder %v521, 1
    %vm650 = vcmp.eq.s32.totalorder %v522, 1
    %vm651 = vcmp.eq.s32.totalorder %v523, 1
    %vm652 = vcmp.eq.s32.totalorder %v524, 1
    %vm653 = vcmp.eq.s32.totalorder %v525, 1
    %vm654 = vcmp.eq.s32.totalorder %v526, 1
    %vm655 = vcmp.eq.s32.totalorder %v527, 1
    %vm656 = vcmp.eq.s32.totalorder %v528, 1
    %vm657 = vcmp.eq.s32.totalorder %v529, 1
    %vm658 = vcmp.eq.s32.totalorder %v530, 1
    %vm659 = vcmp.eq.s32.totalorder %v531, 1
    %vm660 = vcmp.eq.s32.totalorder %v532, 1
    %vm661 = vcmp.eq.s32.totalorder %v533, 1
    %vm662 = vcmp.eq.s32.totalorder %v534, 1
    %vm663 = vcmp.eq.s32.totalorder %v535, 1
    %vm664 = vcmp.eq.s32.totalorder %v536, 1
    %vm665 = vcmp.eq.s32.totalorder %v537, 1
    %vm666 = vcmp.eq.s32.totalorder %v538, 1
    %vm667 = vcmp.eq.s32.totalorder %v539, 1
    %vm668 = vcmp.eq.s32.totalorder %v540, 1
    %vm669 = vcmp.eq.s32.totalorder %v541, 1
    %vm670 = vcmp.eq.s32.totalorder %v542, 1
    %vm671 = vcmp.eq.s32.totalorder %v543, 1
    %vm672 = vcmp.eq.s32.totalorder %v544, 1
    %vm673 = vcmp.eq.s32.totalorder %v545, 1
    %v674 = vsel %vm546, 0.0, %v160
    %v675 = vsel %vm547, 0.0, %v33
    %v676 = vsel %vm548, 0.0, %v34
    %v677 = vsel %vm549, 0.0, %v35
    %v678 = vsel %vm550, 0.0, %v36
    %v679 = vsel %vm551, 0.0, %v37
    %v680 = vsel %vm552, 0.0, %v38
    %v681 = vsel %vm553, 0.0, %v39
    %v682 = vsel %vm554, 0.0, %v40
    %v683 = vsel %vm555, 0.0, %v41
    %v684 = vsel %vm556, 0.0, %v42
    %v685 = vsel %vm557, 0.0, %v43
    %v686 = vsel %vm558, 0.0, %v44
    %v687 = vsel %vm559, 0.0, %v45
    %v688 = vsel %vm560, 0.0, %v46
    %v689 = vsel %vm561, 0.0, %v47
    %v690 = vsel %vm562, 0.0, %v48
    %v691 = vsel %vm563, 0.0, %v49
    %v692 = vsel %vm564, 0.0, %v50
    %v693 = vsel %vm565, 0.0, %v51
    %v694 = vsel %vm566, 0.0, %v52
    %v695 = vsel %vm567, 0.0, %v53
    %v696 = vsel %vm568, 0.0, %v54
    %v697 = vsel %vm569, 0.0, %v55
    %v698 = vsel %vm570, 0.0, %v56
    %v699 = vsel %vm571, 0.0, %v57
    %v700 = vsel %vm572, 0.0, %v58
    %v701 = vsel %vm573, 0.0, %v59
    %v702 = vsel %vm574, 0.0, %v60
    %v703 = vsel %vm575, 0.0, %v61
    %v704 = vsel %vm576, 0.0, %v62
    %v705 = vsel %vm577, 0.0, %v63
    %v706 = vsel %vm578, 0.0, %v64
    %v707 = vsel %vm579, 0.0, %v65
    %v708 = vsel %vm580, 0.0, %v66
    %v709 = vsel %vm581, 0.0, %v67
    %v710 = vsel %vm582, 0.0, %v68
    %v711 = vsel %vm583, 0.0, %v69
    %v712 = vsel %vm584, 0.0, %v70
    %v713 = vsel %vm585, 0.0, %v71
    %v714 = vsel %vm586, 0.0, %v72
    %v715 = vsel %vm587, 0.0, %v73
    %v716 = vsel %vm588, 0.0, %v74
    %v717 = vsel %vm589, 0.0, %v75
    %v718 = vsel %vm590, 0.0, %v76
    %v719 = vsel %vm591, 0.0, %v77
    %v720 = vsel %vm592, 0.0, %v78
    %v721 = vsel %vm593, 0.0, %v79
    %v722 = vsel %vm594, 0.0, %v80
    %v723 = vsel %vm595, 0.0, %v81
    %v724 = vsel %vm596, 0.0, %v82
    %v725 = vsel %vm597, 0.0, %v83
    %v726 = vsel %vm598, 0.0, %v84
    %v727 = vsel %vm599, 0.0, %v85
    %v728 = vsel %vm600, 0.0, %v86
    %v729 = vsel %vm601, 0.0, %v87
    %v730 = vsel %vm602, 0.0, %v88
    %v731 = vsel %vm603, 0.0, %v89
    %v732 = vsel %vm604, 0.0, %v90
    %v733 = vsel %vm605, 0.0, %v91
    %v734 = vsel %vm606, 0.0, %v92
    %v735 = vsel %vm607, 0.0, %v93
    %v736 = vsel %vm608, 0.0, %v94
    %v737 = vsel %vm609, 0.0, %v95
    %v738 = vsel %vm610, 0.0, %v96
    %v739 = vsel %vm611, 0.0, %v97
    %v740 = vsel %vm612, 0.0, %v98
    %v741 = vsel %vm613, 0.0, %v99
    %v742 = vsel %vm614, 0.0, %v100
    %v743 = vsel %vm615, 0.0, %v101
    %v744 = vsel %vm616, 0.0, %v102
    %v745 = vsel %vm617, 0.0, %v103
    %v746 = vsel %vm618, 0.0, %v104
    %v747 = vsel %vm619, 0.0, %v105
    %v748 = vsel %vm620, 0.0, %v106
    %v749 = vsel %vm621, 0.0, %v107
    %v750 = vsel %vm622, 0.0, %v108
    %v751 = vsel %vm623, 0.0, %v109
    %v752 = vsel %vm624, 0.0, %v110
    %v753 = vsel %vm625, 0.0, %v111
    %v754 = vsel %vm626, 0.0, %v112
    %v755 = vsel %vm627, 0.0, %v113
    %v756 = vsel %vm628, 0.0, %v114
    %v757 = vsel %vm629, 0.0, %v115
    %v758 = vsel %vm630, 0.0, %v116
    %v759 = vsel %vm631, 0.0, %v117
    %v760 = vsel %vm632, 0.0, %v118
    %v761 = vsel %vm633, 0.0, %v119
    %v762 = vsel %vm634, 0.0, %v120
    %v763 = vsel %vm635, 0.0, %v121
    %v764 = vsel %vm636, 0.0, %v122
    %v765 = vsel %vm637, 0.0, %v123
    %v766 = vsel %vm638, 0.0, %v124
    %v767 = vsel %vm639, 0.0, %v125
    %v768 = vsel %vm640, 0.0, %v126
    %v769 = vsel %vm641, 0.0, %v127
    %v770 = vsel %vm642, 0.0, %v128
    %v771 = vsel %vm643, 0.0, %v129
    %v772 = vsel %vm644, 0.0, %v130
    %v773 = vsel %vm645, 0.0, %v131
    %v774 = vsel %vm646, 0.0, %v132
    %v775 = vsel %vm647, 0.0, %v133
    %v776 = vsel %vm648, 0.0, %v134
    %v777 = vsel %vm649, 0.0, %v135
    %v778 = vsel %vm650, 0.0, %v136
    %v779 = vsel %vm651, 0.0, %v137
    %v780 = vsel %vm652, 0.0, %v138
    %v781 = vsel %vm653, 0.0, %v139
    %v782 = vsel %vm654, 0.0, %v140
    %v783 = vsel %vm655, 0.0, %v141
    %v784 = vsel %vm656, 0.0, %v142
    %v785 = vsel %vm657, 0.0, %v143
    %v786 = vsel %vm658, 0.0, %v144
    %v787 = vsel %vm659, 0.0, %v145
    %v788 = vsel %vm660, 0.0, %v146
    %v789 = vsel %vm661, 0.0, %v147
    %v790 = vsel %vm662, 0.0, %v148
    %v791 = vsel %vm663, 0.0, %v149
    %v792 = vsel %vm664, 0.0, %v150
    %v793 = vsel %vm665, 0.0, %v151
    %v794 = vsel %vm666, 0.0, %v152
    %v795 = vsel %vm667, 0.0, %v153
    %v796 = vsel %vm668, 0.0, %v154
    %v797 = vsel %vm669, 0.0, %v155
    %v798 = vsel %vm670, 0.0, %v156
    %v799 = vsel %vm671, 0.0, %v157
    %v800 = vsel %vm672, 0.0, %v158
    %v801 = vsel %vm673, 0.0, %v159
    %vm802 = vcmp.ge.s32.totalorder %v162, 1016
    %vm803 = vcmp.ge.s32.totalorder %v163, 1016
    %vm804 = vcmp.ge.s32.totalorder %v164, 1016
    %vm805 = vcmp.ge.s32.totalorder %v165, 1016
    %vm806 = vcmp.ge.s32.totalorder %v166, 1016
    %vm807 = vcmp.ge.s32.totalorder %v167, 1016
    %vm808 = vcmp.ge.s32.totalorder %v168, 1016
    %vm809 = vcmp.ge.s32.totalorder %v169, 1016
    %vm810 = vcmp.ge.s32.totalorder %v170, 1016
    %vm811 = vcmp.ge.s32.totalorder %v171, 1016
    %vm812 = vcmp.ge.s32.totalorder %v172, 1016
    %vm813 = vcmp.ge.s32.totalorder %v173, 1016
    %vm814 = vcmp.ge.s32.totalorder %v174, 1016
    %vm815 = vcmp.ge.s32.totalorder %v175, 1016
    %vm816 = vcmp.ge.s32.totalorder %v176, 1016
    %vm817 = vcmp.ge.s32.totalorder %v177, 1016
    %vm818 = vcmp.ge.s32.totalorder %v178, 1016
    %vm819 = vcmp.ge.s32.totalorder %v179, 1016
    %vm820 = vcmp.ge.s32.totalorder %v180, 1016
    %vm821 = vcmp.ge.s32.totalorder %v181, 1016
    %vm822 = vcmp.ge.s32.totalorder %v182, 1016
    %vm823 = vcmp.ge.s32.totalorder %v183, 1016
    %vm824 = vcmp.ge.s32.totalorder %v184, 1016
    %vm825 = vcmp.ge.s32.totalorder %v185, 1016
    %vm826 = vcmp.ge.s32.totalorder %v186, 1016
    %vm827 = vcmp.ge.s32.totalorder %v187, 1016
    %vm828 = vcmp.ge.s32.totalorder %v188, 1016
    %vm829 = vcmp.ge.s32.totalorder %v189, 1016
    %vm830 = vcmp.ge.s32.totalorder %v190, 1016
    %vm831 = vcmp.ge.s32.totalorder %v191, 1016
    %vm832 = vcmp.ge.s32.totalorder %v192, 1016
    %vm833 = vcmp.ge.s32.totalorder %v193, 1016
    %vm834 = vcmp.ge.s32.totalorder %v194, 1016
    %vm835 = vcmp.ge.s32.totalorder %v195, 1016
    %vm836 = vcmp.ge.s32.totalorder %v196, 1016
    %vm837 = vcmp.ge.s32.totalorder %v197, 1016
    %vm838 = vcmp.ge.s32.totalorder %v198, 1016
    %vm839 = vcmp.ge.s32.totalorder %v199, 1016
    %vm840 = vcmp.ge.s32.totalorder %v200, 1016
    %vm841 = vcmp.ge.s32.totalorder %v201, 1016
    %vm842 = vcmp.ge.s32.totalorder %v202, 1016
    %vm843 = vcmp.ge.s32.totalorder %v203, 1016
    %vm844 = vcmp.ge.s32.totalorder %v204, 1016
    %vm845 = vcmp.ge.s32.totalorder %v205, 1016
    %vm846 = vcmp.ge.s32.totalorder %v206, 1016
    %vm847 = vcmp.ge.s32.totalorder %v207, 1016
    %vm848 = vcmp.ge.s32.totalorder %v208, 1016
    %vm849 = vcmp.ge.s32.totalorder %v209, 1016
    %vm850 = vcmp.ge.s32.totalorder %v210, 1016
    %vm851 = vcmp.ge.s32.totalorder %v211, 1016
    %vm852 = vcmp.ge.s32.totalorder %v212, 1016
    %vm853 = vcmp.ge.s32.totalorder %v213, 1016
    %vm854 = vcmp.ge.s32.totalorder %v214, 1016
    %vm855 = vcmp.ge.s32.totalorder %v215, 1016
    %vm856 = vcmp.ge.s32.totalorder %v216, 1016
    %vm857 = vcmp.ge.s32.totalorder %v217, 1016
    %vm858 = vcmp.ge.s32.totalorder %v218, 1016
    %vm859 = vcmp.ge.s32.totalorder %v219, 1016
    %vm860 = vcmp.ge.s32.totalorder %v220, 1016
    %vm861 = vcmp.ge.s32.totalorder %v221, 1016
    %vm862 = vcmp.ge.s32.totalorder %v222, 1016
    %vm863 = vcmp.ge.s32.totalorder %v223, 1016
    %vm864 = vcmp.ge.s32.totalorder %v224, 1016
    %vm865 = vcmp.ge.s32.totalorder %v225, 1016
    %vm866 = vcmp.ge.s32.totalorder %v226, 1016
    %vm867 = vcmp.ge.s32.totalorder %v227, 1016
    %vm868 = vcmp.ge.s32.totalorder %v228, 1016
    %vm869 = vcmp.ge.s32.totalorder %v229, 1016
    %vm870 = vcmp.ge.s32.totalorder %v230, 1016
    %vm871 = vcmp.ge.s32.totalorder %v231, 1016
    %vm872 = vcmp.ge.s32.totalorder %v232, 1016
    %vm873 = vcmp.ge.s32.totalorder %v233, 1016
    %vm874 = vcmp.ge.s32.totalorder %v234, 1016
    %vm875 = vcmp.ge.s32.totalorder %v235, 1016
    %vm876 = vcmp.ge.s32.totalorder %v236, 1016
    %vm877 = vcmp.ge.s32.totalorder %v237, 1016
    %vm878 = vcmp.ge.s32.totalorder %v238, 1016
    %vm879 = vcmp.ge.s32.totalorder %v239, 1016
    %vm880 = vcmp.ge.s32.totalorder %v240, 1016
    %vm881 = vcmp.ge.s32.totalorder %v241, 1016
    %vm882 = vcmp.ge.s32.totalorder %v242, 1016
    %vm883 = vcmp.ge.s32.totalorder %v243, 1016
    %vm884 = vcmp.ge.s32.totalorder %v244, 1016
    %vm885 = vcmp.ge.s32.totalorder %v245, 1016
    %vm886 = vcmp.ge.s32.totalorder %v246, 1016
    %vm887 = vcmp.ge.s32.totalorder %v247, 1016
    %vm888 = vcmp.ge.s32.totalorder %v248, 1016
    %vm889 = vcmp.ge.s32.totalorder %v249, 1016
    %vm890 = vcmp.ge.s32.totalorder %v250, 1016
    %vm891 = vcmp.ge.s32.totalorder %v251, 1016
    %vm892 = vcmp.ge.s32.totalorder %v252, 1016
    %vm893 = vcmp.ge.s32.totalorder %v253, 1016
    %vm894 = vcmp.ge.s32.totalorder %v254, 1016
    %vm895 = vcmp.ge.s32.totalorder %v255, 1016
    %vm896 = vcmp.ge.s32.totalorder %v256, 1016
    %vm897 = vcmp.ge.s32.totalorder %v257, 1016
    %vm898 = vcmp.ge.s32.totalorder %v258, 1016
    %vm899 = vcmp.ge.s32.totalorder %v259, 1016
    %vm900 = vcmp.ge.s32.totalorder %v260, 1016
    %vm901 = vcmp.ge.s32.totalorder %v261, 1016
    %vm902 = vcmp.ge.s32.totalorder %v262, 1016
    %vm903 = vcmp.ge.s32.totalorder %v263, 1016
    %vm904 = vcmp.ge.s32.totalorder %v264, 1016
    %vm905 = vcmp.ge.s32.totalorder %v265, 1016
    %vm906 = vcmp.ge.s32.totalorder %v266, 1016
    %vm907 = vcmp.ge.s32.totalorder %v267, 1016
    %vm908 = vcmp.ge.s32.totalorder %v268, 1016
    %vm909 = vcmp.ge.s32.totalorder %v269, 1016
    %vm910 = vcmp.ge.s32.totalorder %v270, 1016
    %vm911 = vcmp.ge.s32.totalorder %v271, 1016
    %vm912 = vcmp.ge.s32.totalorder %v272, 1016
    %vm913 = vcmp.ge.s32.totalorder %v273, 1016
    %vm914 = vcmp.ge.s32.totalorder %v274, 1016
    %vm915 = vcmp.ge.s32.totalorder %v275, 1016
    %vm916 = vcmp.ge.s32.totalorder %v276, 1016
    %vm917 = vcmp.ge.s32.totalorder %v277, 1016
    %vm918 = vcmp.ge.s32.totalorder %v278, 1016
    %vm919 = vcmp.ge.s32.totalorder %v279, 1016
    %vm920 = vcmp.ge.s32.totalorder %v280, 1016
    %vm921 = vcmp.ge.s32.totalorder %v281, 1016
    %vm922 = vcmp.ge.s32.totalorder %v282, 1016
    %vm923 = vcmp.ge.s32.totalorder %v283, 1016
    %vm924 = vcmp.ge.s32.totalorder %v284, 1016
    %vm925 = vcmp.ge.s32.totalorder %v285, 1016
    %vm926 = vcmp.ge.s32.totalorder %v286, 1016
    %vm927 = vcmp.ge.s32.totalorder %v287, 1016
    %vm928 = vcmp.ge.s32.totalorder %v288, 1016
    %vm929 = vcmp.ge.s32.totalorder %v289, 1016
    %v930 = vsel %vm802, 1, 0
    %v931 = vsel %vm803, 1, 0
    %v932 = vsel %vm804, 1, 0
    %v933 = vsel %vm805, 1, 0
    %v934 = vsel %vm806, 1, 0
    %v935 = vsel %vm807, 1, 0
    %v936 = vsel %vm808, 1, 0
    %v937 = vsel %vm809, 1, 0
    %v938 = vsel %vm810, 1, 0
    %v939 = vsel %vm811, 1, 0
    %v940 = vsel %vm812, 1, 0
    %v941 = vsel %vm813, 1, 0
    %v942 = vsel %vm814, 1, 0
    %v943 = vsel %vm815, 1, 0
    %v944 = vsel %vm816, 1, 0
    %v945 = vsel %vm817, 1, 0
    %v946 = vsel %vm818, 1, 0
    %v947 = vsel %vm819, 1, 0
    %v948 = vsel %vm820, 1, 0
    %v949 = vsel %vm821, 1, 0
    %v950 = vsel %vm822, 1, 0
    %v951 = vsel %vm823, 1, 0
    %v952 = vsel %vm824, 1, 0
    %v953 = vsel %vm825, 1, 0
    %v954 = vsel %vm826, 1, 0
    %v955 = vsel %vm827, 1, 0
    %v956 = vsel %vm828, 1, 0
    %v957 = vsel %vm829, 1, 0
    %v958 = vsel %vm830, 1, 0
    %v959 = vsel %vm831, 1, 0
    %v960 = vsel %vm832, 1, 0
    %v961 = vsel %vm833, 1, 0
    %v962 = vsel %vm834, 1, 0
    %v963 = vsel %vm835, 1, 0
    %v964 = vsel %vm836, 1, 0
    %v965 = vsel %vm837, 1, 0
    %v966 = vsel %vm838, 1, 0
    %v967 = vsel %vm839, 1, 0
    %v968 = vsel %vm840, 1, 0
    %v969 = vsel %vm841, 1, 0
    %v970 = vsel %vm842, 1, 0
    %v971 = vsel %vm843, 1, 0
    %v972 = vsel %vm844, 1, 0
    %v973 = vsel %vm845, 1, 0
    %v974 = vsel %vm846, 1, 0
    %v975 = vsel %vm847, 1, 0
    %v976 = vsel %vm848, 1, 0
    %v977 = vsel %vm849, 1, 0
    %v978 = vsel %vm850, 1, 0
    %v979 = vsel %vm851, 1, 0
    %v980 = vsel %vm852, 1, 0
    %v981 = vsel %vm853, 1, 0
    %v982 = vsel %vm854, 1, 0
    %v983 = vsel %vm855, 1, 0
    %v984 = vsel %vm856, 1, 0
    %v985 = vsel %vm857, 1, 0
    %v986 = vsel %vm858, 1, 0
    %v987 = vsel %vm859, 1, 0
    %v988 = vsel %vm860, 1, 0
    %v989 = vsel %vm861, 1, 0
    %v990 = vsel %vm862, 1, 0
    %v991 = vsel %vm863, 1, 0
    %v992 = vsel %vm864, 1, 0
    %v993 = vsel %vm865, 1, 0
    %v994 = vsel %vm866, 1, 0
    %v995 = vsel %vm867, 1, 0
    %v996 = vsel %vm868, 1, 0
    %v997 = vsel %vm869, 1, 0
    %v998 = vsel %vm870, 1, 0
    %v999 = vsel %vm871, 1, 0
    %v1000 = vsel %vm872, 1, 0
    %v1001 = vsel %vm873, 1, 0
    %v1002 = vsel %vm874, 1, 0
    %v1003 = vsel %vm875, 1, 0
    %v1004 = vsel %vm876, 1, 0
    %v1005 = vsel %vm877, 1, 0
    %v1006 = vsel %vm878, 1, 0
    %v1007 = vsel %vm879, 1, 0
    %v1008 = vsel %vm880, 1, 0
    %v1009 = vsel %vm881, 1, 0
    %v1010 = vsel %vm882, 1, 0
    %v1011 = vsel %vm883, 1, 0
    %v1012 = vsel %vm884, 1, 0
    %v1013 = vsel %vm885, 1, 0
    %v1014 = vsel %vm886, 1, 0
    %v1015 = vsel %vm887, 1, 0
    %v1016 = vsel %vm888, 1, 0
    %v1017 = vsel %vm889, 1, 0
    %v1018 = vsel %vm890, 1, 0
    %v1019 = vsel %vm891, 1, 0
    %v1020 = vsel %vm892, 1, 0
    %v1021 = vsel %vm893, 1, 0
    %v1022 = vsel %vm894, 1, 0
    %v1023 = vsel %vm895, 1, 0
    %v1024 = vsel %vm896, 1, 0
    %v1025 = vsel %vm897, 1, 0
    %v1026 = vsel %vm898, 1, 0
    %v1027 = vsel %vm899, 1, 0
    %v1028 = vsel %vm900, 1, 0
    %v1029 = vsel %vm901, 1, 0
    %v1030 = vsel %vm902, 1, 0
    %v1031 = vsel %vm903, 1, 0
    %v1032 = vsel %vm904, 1, 0
    %v1033 = vsel %vm905, 1, 0
    %v1034 = vsel %vm906, 1, 0
    %v1035 = vsel %vm907, 1, 0
    %v1036 = vsel %vm908, 1, 0
    %v1037 = vsel %vm909, 1, 0
    %v1038 = vsel %vm910, 1, 0
    %v1039 = vsel %vm911, 1, 0
    %v1040 = vsel %vm912, 1, 0
    %v1041 = vsel %vm913, 1, 0
    %v1042 = vsel %vm914, 1, 0
    %v1043 = vsel %vm915, 1, 0
    %v1044 = vsel %vm916, 1, 0
    %v1045 = vsel %vm917, 1, 0
    %v1046 = vsel %vm918, 1, 0
    %v1047 = vsel %vm919, 1, 0
    %v1048 = vsel %vm920, 1, 0
    %v1049 = vsel %vm921, 1, 0
    %v1050 = vsel %vm922, 1, 0
    %v1051 = vsel %vm923, 1, 0
    %v1052 = vsel %vm924, 1, 0
    %v1053 = vsel %vm925, 1, 0
    %v1054 = vsel %vm926, 1, 0
    %v1055 = vsel %vm927, 1, 0
    %v1056 = vsel %vm928, 1, 0
    %v1057 = vsel %vm929, 1, 0
    %vm1058 = vcmp.eq.s32.totalorder %v930, 1
    %vm1059 = vcmp.eq.s32.totalorder %v931, 1
    %vm1060 = vcmp.eq.s32.totalorder %v932, 1
    %vm1061 = vcmp.eq.s32.totalorder %v933, 1
    %vm1062 = vcmp.eq.s32.totalorder %v934, 1
    %vm1063 = vcmp.eq.s32.totalorder %v935, 1
    %vm1064 = vcmp.eq.s32.totalorder %v936, 1
    %vm1065 = vcmp.eq.s32.totalorder %v937, 1
    %vm1066 = vcmp.eq.s32.totalorder %v938, 1
    %vm1067 = vcmp.eq.s32.totalorder %v939, 1
    %vm1068 = vcmp.eq.s32.totalorder %v940, 1
    %vm1069 = vcmp.eq.s32.totalorder %v941, 1
    %vm1070 = vcmp.eq.s32.totalorder %v942, 1
    %vm1071 = vcmp.eq.s32.totalorder %v943, 1
    %vm1072 = vcmp.eq.s32.totalorder %v944, 1
    %vm1073 = vcmp.eq.s32.totalorder %v945, 1
    %vm1074 = vcmp.eq.s32.totalorder %v946, 1
    %vm1075 = vcmp.eq.s32.totalorder %v947, 1
    %vm1076 = vcmp.eq.s32.totalorder %v948, 1
    %vm1077 = vcmp.eq.s32.totalorder %v949, 1
    %vm1078 = vcmp.eq.s32.totalorder %v950, 1
    %vm1079 = vcmp.eq.s32.totalorder %v951, 1
    %vm1080 = vcmp.eq.s32.totalorder %v952, 1
    %vm1081 = vcmp.eq.s32.totalorder %v953, 1
    %vm1082 = vcmp.eq.s32.totalorder %v954, 1
    %vm1083 = vcmp.eq.s32.totalorder %v955, 1
    %vm1084 = vcmp.eq.s32.totalorder %v956, 1
    %vm1085 = vcmp.eq.s32.totalorder %v957, 1
    %vm1086 = vcmp.eq.s32.totalorder %v958, 1
    %vm1087 = vcmp.eq.s32.totalorder %v959, 1
    %vm1088 = vcmp.eq.s32.totalorder %v960, 1
    %vm1089 = vcmp.eq.s32.totalorder %v961, 1
    %vm1090 = vcmp.eq.s32.totalorder %v962, 1
    %vm1091 = vcmp.eq.s32.totalorder %v963, 1
    %vm1092 = vcmp.eq.s32.totalorder %v964, 1
    %vm1093 = vcmp.eq.s32.totalorder %v965, 1
    %vm1094 = vcmp.eq.s32.totalorder %v966, 1
    %vm1095 = vcmp.eq.s32.totalorder %v967, 1
    %vm1096 = vcmp.eq.s32.totalorder %v968, 1
    %vm1097 = vcmp.eq.s32.totalorder %v969, 1
    %vm1098 = vcmp.eq.s32.totalorder %v970, 1
    %vm1099 = vcmp.eq.s32.totalorder %v971, 1
    %vm1100 = vcmp.eq.s32.totalorder %v972, 1
    %vm1101 = vcmp.eq.s32.totalorder %v973, 1
    %vm1102 = vcmp.eq.s32.totalorder %v974, 1
    %vm1103 = vcmp.eq.s32.totalorder %v975, 1
    %vm1104 = vcmp.eq.s32.totalorder %v976, 1
    %vm1105 = vcmp.eq.s32.totalorder %v977, 1
    %vm1106 = vcmp.eq.s32.totalorder %v978, 1
    %vm1107 = vcmp.eq.s32.totalorder %v979, 1
    %vm1108 = vcmp.eq.s32.totalorder %v980, 1
    %vm1109 = vcmp.eq.s32.totalorder %v981, 1
    %vm1110 = vcmp.eq.s32.totalorder %v982, 1
    %vm1111 = vcmp.eq.s32.totalorder %v983, 1
    %vm1112 = vcmp.eq.s32.totalorder %v984, 1
    %vm1113 = vcmp.eq.s32.totalorder %v985, 1
    %vm1114 = vcmp.eq.s32.totalorder %v986, 1
    %vm1115 = vcmp.eq.s32.totalorder %v987, 1
    %vm1116 = vcmp.eq.s32.totalorder %v988, 1
    %vm1117 = vcmp.eq.s32.totalorder %v989, 1
    %vm1118 = vcmp.eq.s32.totalorder %v990, 1
    %vm1119 = vcmp.eq.s32.totalorder %v991, 1
    %vm1120 = vcmp.eq.s32.totalorder %v992, 1
    %vm1121 = vcmp.eq.s32.totalorder %v993, 1
    %vm1122 = vcmp.eq.s32.totalorder %v994, 1
    %vm1123 = vcmp.eq.s32.totalorder %v995, 1
    %vm1124 = vcmp.eq.s32.totalorder %v996, 1
    %vm1125 = vcmp.eq.s32.totalorder %v997, 1
    %vm1126 = vcmp.eq.s32.totalorder %v998, 1
    %vm1127 = vcmp.eq.s32.totalorder %v999, 1
    %vm1128 = vcmp.eq.s32.totalorder %v1000, 1
    %vm1129 = vcmp.eq.s32.totalorder %v1001, 1
    %vm1130 = vcmp.eq.s32.totalorder %v1002, 1
    %vm1131 = vcmp.eq.s32.totalorder %v1003, 1
    %vm1132 = vcmp.eq.s32.totalorder %v1004, 1
    %vm1133 = vcmp.eq.s32.totalorder %v1005, 1
    %vm1134 = vcmp.eq.s32.totalorder %v1006, 1
    %vm1135 = vcmp.eq.s32.totalorder %v1007, 1
    %vm1136 = vcmp.eq.s32.totalorder %v1008, 1
    %vm1137 = vcmp.eq.s32.totalorder %v1009, 1
    %vm1138 = vcmp.eq.s32.totalorder %v1010, 1
    %vm1139 = vcmp.eq.s32.totalorder %v1011, 1
    %vm1140 = vcmp.eq.s32.totalorder %v1012, 1
    %vm1141 = vcmp.eq.s32.totalorder %v1013, 1
    %vm1142 = vcmp.eq.s32.totalorder %v1014, 1
    %vm1143 = vcmp.eq.s32.totalorder %v1015, 1
    %vm1144 = vcmp.eq.s32.totalorder %v1016, 1
    %vm1145 = vcmp.eq.s32.totalorder %v1017, 1
    %vm1146 = vcmp.eq.s32.totalorder %v1018, 1
    %vm1147 = vcmp.eq.s32.totalorder %v1019, 1
    %vm1148 = vcmp.eq.s32.totalorder %v1020, 1
    %vm1149 = vcmp.eq.s32.totalorder %v1021, 1
    %vm1150 = vcmp.eq.s32.totalorder %v1022, 1
    %vm1151 = vcmp.eq.s32.totalorder %v1023, 1
    %vm1152 = vcmp.eq.s32.totalorder %v1024, 1
    %vm1153 = vcmp.eq.s32.totalorder %v1025, 1
    %vm1154 = vcmp.eq.s32.totalorder %v1026, 1
    %vm1155 = vcmp.eq.s32.totalorder %v1027, 1
    %vm1156 = vcmp.eq.s32.totalorder %v1028, 1
    %vm1157 = vcmp.eq.s32.totalorder %v1029, 1
    %vm1158 = vcmp.eq.s32.totalorder %v1030, 1
    %vm1159 = vcmp.eq.s32.totalorder %v1031, 1
    %vm1160 = vcmp.eq.s32.totalorder %v1032, 1
    %vm1161 = vcmp.eq.s32.totalorder %v1033, 1
    %vm1162 = vcmp.eq.s32.totalorder %v1034, 1
    %vm1163 = vcmp.eq.s32.totalorder %v1035, 1
    %vm1164 = vcmp.eq.s32.totalorder %v1036, 1
    %vm1165 = vcmp.eq.s32.totalorder %v1037, 1
    %vm1166 = vcmp.eq.s32.totalorder %v1038, 1
    %vm1167 = vcmp.eq.s32.totalorder %v1039, 1
    %vm1168 = vcmp.eq.s32.totalorder %v1040, 1
    %vm1169 = vcmp.eq.s32.totalorder %v1041, 1
    %vm1170 = vcmp.eq.s32.totalorder %v1042, 1
    %vm1171 = vcmp.eq.s32.totalorder %v1043, 1
    %vm1172 = vcmp.eq.s32.totalorder %v1044, 1
    %vm1173 = vcmp.eq.s32.totalorder %v1045, 1
    %vm1174 = vcmp.eq.s32.totalorder %v1046, 1
    %vm1175 = vcmp.eq.s32.totalorder %v1047, 1
    %vm1176 = vcmp.eq.s32.totalorder %v1048, 1
    %vm1177 = vcmp.eq.s32.totalorder %v1049, 1
    %vm1178 = vcmp.eq.s32.totalorder %v1050, 1
    %vm1179 = vcmp.eq.s32.totalorder %v1051, 1
    %vm1180 = vcmp.eq.s32.totalorder %v1052, 1
    %vm1181 = vcmp.eq.s32.totalorder %v1053, 1
    %vm1182 = vcmp.eq.s32.totalorder %v1054, 1
    %vm1183 = vcmp.eq.s32.totalorder %v1055, 1
    %vm1184 = vcmp.eq.s32.totalorder %v1056, 1
    %vm1185 = vcmp.eq.s32.totalorder %v1057, 1
    %v1186 = vsel %vm1058, 0.0, %v34
    %v1187 = vsel %vm1059, 0.0, %v35
    %v1188 = vsel %vm1060, 0.0, %v36
    %v1189 = vsel %vm1061, 0.0, %v37
    %v1190 = vsel %vm1062, 0.0, %v38
    %v1191 = vsel %vm1063, 0.0, %v39
    %v1192 = vsel %vm1064, 0.0, %v40
    %v1193 = vsel %vm1065, 0.0, %v41
    %v1194 = vsel %vm1066, 0.0, %v42
    %v1195 = vsel %vm1067, 0.0, %v43
    %v1196 = vsel %vm1068, 0.0, %v44
    %v1197 = vsel %vm1069, 0.0, %v45
    %v1198 = vsel %vm1070, 0.0, %v46
    %v1199 = vsel %vm1071, 0.0, %v47
    %v1200 = vsel %vm1072, 0.0, %v48
    %v1201 = vsel %vm1073, 0.0, %v49
    %v1202 = vsel %vm1074, 0.0, %v50
    %v1203 = vsel %vm1075, 0.0, %v51
    %v1204 = vsel %vm1076, 0.0, %v52
    %v1205 = vsel %vm1077, 0.0, %v53
    %v1206 = vsel %vm1078, 0.0, %v54
    %v1207 = vsel %vm1079, 0.0, %v55
    %v1208 = vsel %vm1080, 0.0, %v56
    %v1209 = vsel %vm1081, 0.0, %v57
    %v1210 = vsel %vm1082, 0.0, %v58
    %v1211 = vsel %vm1083, 0.0, %v59
    %v1212 = vsel %vm1084, 0.0, %v60
    %v1213 = vsel %vm1085, 0.0, %v61
    %v1214 = vsel %vm1086, 0.0, %v62
    %v1215 = vsel %vm1087, 0.0, %v63
    %v1216 = vsel %vm1088, 0.0, %v64
    %v1217 = vsel %vm1089, 0.0, %v65
    %v1218 = vsel %vm1090, 0.0, %v66
    %v1219 = vsel %vm1091, 0.0, %v67
    %v1220 = vsel %vm1092, 0.0, %v68
    %v1221 = vsel %vm1093, 0.0, %v69
    %v1222 = vsel %vm1094, 0.0, %v70
    %v1223 = vsel %vm1095, 0.0, %v71
    %v1224 = vsel %vm1096, 0.0, %v72
    %v1225 = vsel %vm1097, 0.0, %v73
    %v1226 = vsel %vm1098, 0.0, %v74
    %v1227 = vsel %vm1099, 0.0, %v75
    %v1228 = vsel %vm1100, 0.0, %v76
    %v1229 = vsel %vm1101, 0.0, %v77
    %v1230 = vsel %vm1102, 0.0, %v78
    %v1231 = vsel %vm1103, 0.0, %v79
    %v1232 = vsel %vm1104, 0.0, %v80
    %v1233 = vsel %vm1105, 0.0, %v81
    %v1234 = vsel %vm1106, 0.0, %v82
    %v1235 = vsel %vm1107, 0.0, %v83
    %v1236 = vsel %vm1108, 0.0, %v84
    %v1237 = vsel %vm1109, 0.0, %v85
    %v1238 = vsel %vm1110, 0.0, %v86
    %v1239 = vsel %vm1111, 0.0, %v87
    %v1240 = vsel %vm1112, 0.0, %v88
    %v1241 = vsel %vm1113, 0.0, %v89
    %v1242 = vsel %vm1114, 0.0, %v90
    %v1243 = vsel %vm1115, 0.0, %v91
    %v1244 = vsel %vm1116, 0.0, %v92
    %v1245 = vsel %vm1117, 0.0, %v93
    %v1246 = vsel %vm1118, 0.0, %v94
    %v1247 = vsel %vm1119, 0.0, %v95
    %v1248 = vsel %vm1120, 0.0, %v96
    %v1249 = vsel %vm1121, 0.0, %v97
    %v1250 = vsel %vm1122, 0.0, %v98
    %v1251 = vsel %vm1123, 0.0, %v99
    %v1252 = vsel %vm1124, 0.0, %v100
    %v1253 = vsel %vm1125, 0.0, %v101
    %v1254 = vsel %vm1126, 0.0, %v102
    %v1255 = vsel %vm1127, 0.0, %v103
    %v1256 = vsel %vm1128, 0.0, %v104
    %v1257 = vsel %vm1129, 0.0, %v105
    %v1258 = vsel %vm1130, 0.0, %v106
    %v1259 = vsel %vm1131, 0.0, %v107
    %v1260 = vsel %vm1132, 0.0, %v108
    %v1261 = vsel %vm1133, 0.0, %v109
    %v1262 = vsel %vm1134, 0.0, %v110
    %v1263 = vsel %vm1135, 0.0, %v111
    %v1264 = vsel %vm1136, 0.0, %v112
    %v1265 = vsel %vm1137, 0.0, %v113
    %v1266 = vsel %vm1138, 0.0, %v114
    %v1267 = vsel %vm1139, 0.0, %v115
    %v1268 = vsel %vm1140, 0.0, %v116
    %v1269 = vsel %vm1141, 0.0, %v117
    %v1270 = vsel %vm1142, 0.0, %v118
    %v1271 = vsel %vm1143, 0.0, %v119
    %v1272 = vsel %vm1144, 0.0, %v120
    %v1273 = vsel %vm1145, 0.0, %v121
    %v1274 = vsel %vm1146, 0.0, %v122
    %v1275 = vsel %vm1147, 0.0, %v123
    %v1276 = vsel %vm1148, 0.0, %v124
    %v1277 = vsel %vm1149, 0.0, %v125
    %v1278 = vsel %vm1150, 0.0, %v126
    %v1279 = vsel %vm1151, 0.0, %v127
    %v1280 = vsel %vm1152, 0.0, %v128
    %v1281 = vsel %vm1153, 0.0, %v129
    %v1282 = vsel %vm1154, 0.0, %v130
    %v1283 = vsel %vm1155, 0.0, %v131
    %v1284 = vsel %vm1156, 0.0, %v132
    %v1285 = vsel %vm1157, 0.0, %v133
    %v1286 = vsel %vm1158, 0.0, %v134
    %v1287 = vsel %vm1159, 0.0, %v135
    %v1288 = vsel %vm1160, 0.0, %v136
    %v1289 = vsel %vm1161, 0.0, %v137
    %v1290 = vsel %vm1162, 0.0, %v138
    %v1291 = vsel %vm1163, 0.0, %v139
    %v1292 = vsel %vm1164, 0.0, %v140
    %v1293 = vsel %vm1165, 0.0, %v141
    %v1294 = vsel %vm1166, 0.0, %v142
    %v1295 = vsel %vm1167, 0.0, %v143
    %v1296 = vsel %vm1168, 0.0, %v144
    %v1297 = vsel %vm1169, 0.0, %v145
    %v1298 = vsel %vm1170, 0.0, %v146
    %v1299 = vsel %vm1171, 0.0, %v147
    %v1300 = vsel %vm1172, 0.0, %v148
    %v1301 = vsel %vm1173, 0.0, %v149
    %v1302 = vsel %vm1174, 0.0, %v150
    %v1303 = vsel %vm1175, 0.0, %v151
    %v1304 = vsel %vm1176, 0.0, %v152
    %v1305 = vsel %vm1177, 0.0, %v153
    %v1306 = vsel %vm1178, 0.0, %v154
    %v1307 = vsel %vm1179, 0.0, %v155
    %v1308 = vsel %vm1180, 0.0, %v156
    %v1309 = vsel %vm1181, 0.0, %v157
    %v1310 = vsel %vm1182, 0.0, %v158
    %v1311 = vsel %vm1183, 0.0, %v159
    %v1312 = vsel %vm1184, 0.0, %v160
    %v1313 = vsel %vm1185, 0.0, %v33
    %1442 = vrot.lane.b32.xlu0 %v33, 9
    %v1443 = vpop.permute.xlu0 %1442
    %1444 = vrot.lane.b32.xlu0 %v34, 9
    %v1445 = vpop.permute.xlu0 %1444
    %1446 = vrot.lane.b32.xlu0 %v35, 9
    %v1447 = vpop.permute.xlu0 %1446
    %1448 = vrot.lane.b32.xlu0 %v36, 9
    %v1449 = vpop.permute.xlu0 %1448
    %1450 = vrot.lane.b32.xlu0 %v37, 9
    %v1451 = vpop.permute.xlu0 %1450
    %1452 = vrot.lane.b32.xlu0 %v38, 9
    %v1453 = vpop.permute.xlu0 %1452
    %1454 = vrot.lane.b32.xlu0 %v39, 9
    %v1455 = vpop.permute.xlu0 %1454
    %1456 = vrot.lane.b32.xlu0 %v40, 9
    %v1457 = vpop.permute.xlu0 %1456
    %1458 = vrot.lane.b32.xlu0 %v41, 9
    %v1459 = vpop.permute.xlu0 %1458
    %1460 = vrot.lane.b32.xlu0 %v42, 9
    %v1461 = vpop.permute.xlu0 %1460
    %1462 = vrot.lane.b32.xlu0 %v43, 9
    %v1463 = vpop.permute.xlu0 %1462
    %1464 = vrot.lane.b32.xlu0 %v44, 9
    %v1465 = vpop.permute.xlu0 %1464
    %1466 = vrot.lane.b32.xlu0 %v45, 9
    %v1467 = vpop.permute.xlu0 %1466
    %1468 = vrot.lane.b32.xlu0 %v46, 9
    %v1469 = vpop.permute.xlu0 %1468
    %1470 = vrot.lane.b32.xlu0 %v47, 9
    %v1471 = vpop.permute.xlu0 %1470
    %1472 = vrot.lane.b32.xlu0 %v48, 9
    %v1473 = vpop.permute.xlu0 %1472
    %1474 = vrot.lane.b32.xlu0 %v49, 9
    %v1475 = vpop.permute.xlu0 %1474
    %1476 = vrot.lane.b32.xlu0 %v50, 9
    %v1477 = vpop.permute.xlu0 %1476
    %1478 = vrot.lane.b32.xlu0 %v51, 9
    %v1479 = vpop.permute.xlu0 %1478
    %1480 = vrot.lane.b32.xlu0 %v52, 9
    %v1481 = vpop.permute.xlu0 %1480
    %1482 = vrot.lane.b32.xlu0 %v53, 9
    %v1483 = vpop.permute.xlu0 %1482
    %1484 = vrot.lane.b32.xlu0 %v54, 9
    %v1485 = vpop.permute.xlu0 %1484
    %1486 = vrot.lane.b32.xlu0 %v55, 9
    %v1487 = vpop.permute.xlu0 %1486
    %1488 = vrot.lane.b32.xlu0 %v56, 9
    %v1489 = vpop.permute.xlu0 %1488
    %1490 = vrot.lane.b32.xlu0 %v57, 9
    %v1491 = vpop.permute.xlu0 %1490
    %1492 = vrot.lane.b32.xlu0 %v58, 9
    %v1493 = vpop.permute.xlu0 %1492
    %1494 = vrot.lane.b32.xlu0 %v59, 9
    %v1495 = vpop.permute.xlu0 %1494
    %1496 = vrot.lane.b32.xlu0 %v60, 9
    %v1497 = vpop.permute.xlu0 %1496
    %1498 = vrot.lane.b32.xlu0 %v61, 9
    %v1499 = vpop.permute.xlu0 %1498
    %1500 = vrot.lane.b32.xlu0 %v62, 9
    %v1501 = vpop.permute.xlu0 %1500
    %1502 = vrot.lane.b32.xlu0 %v63, 9
    %v1503 = vpop.permute.xlu0 %1502
    %1504 = vrot.lane.b32.xlu0 %v64, 9
    %v1505 = vpop.permute.xlu0 %1504
    %1506 = vrot.lane.b32.xlu0 %v65, 9
    %v1507 = vpop.permute.xlu0 %1506
    %1508 = vrot.lane.b32.xlu0 %v66, 9
    %v1509 = vpop.permute.xlu0 %1508
    %1510 = vrot.lane.b32.xlu0 %v67, 9
    %v1511 = vpop.permute.xlu0 %1510
    %1512 = vrot.lane.b32.xlu0 %v68, 9
    %v1513 = vpop.permute.xlu0 %1512
    %1514 = vrot.lane.b32.xlu0 %v69, 9
    %v1515 = vpop.permute.xlu0 %1514
    %1516 = vrot.lane.b32.xlu0 %v70, 9
    %v1517 = vpop.permute.xlu0 %1516
    %1518 = vrot.lane.b32.xlu0 %v71, 9
    %v1519 = vpop.permute.xlu0 %1518
    %1520 = vrot.lane.b32.xlu0 %v72, 9
    %v1521 = vpop.permute.xlu0 %1520
    %1522 = vrot.lane.b32.xlu0 %v73, 9
    %v1523 = vpop.permute.xlu0 %1522
    %1524 = vrot.lane.b32.xlu0 %v74, 9
    %v1525 = vpop.permute.xlu0 %1524
    %1526 = vrot.lane.b32.xlu0 %v75, 9
    %v1527 = vpop.permute.xlu0 %1526
    %1528 = vrot.lane.b32.xlu0 %v76, 9
    %v1529 = vpop.permute.xlu0 %1528
    %1530 = vrot.lane.b32.xlu0 %v77, 9
    %v1531 = vpop.permute.xlu0 %1530
    %1532 = vrot.lane.b32.xlu0 %v78, 9
    %v1533 = vpop.permute.xlu0 %1532
    %1534 = vrot.lane.b32.xlu0 %v79, 9
    %v1535 = vpop.permute.xlu0 %1534
    %1536 = vrot.lane.b32.xlu0 %v80, 9
    %v1537 = vpop.permute.xlu0 %1536
    %1538 = vrot.lane.b32.xlu0 %v81, 9
    %v1539 = vpop.permute.xlu0 %1538
    %1540 = vrot.lane.b32.xlu0 %v82, 9
    %v1541 = vpop.permute.xlu0 %1540
    %1542 = vrot.lane.b32.xlu0 %v83, 9
    %v1543 = vpop.permute.xlu0 %1542
    %1544 = vrot.lane.b32.xlu0 %v84, 9
    %v1545 = vpop.permute.xlu0 %1544
    %1546 = vrot.lane.b32.xlu0 %v85, 9
    %v1547 = vpop.permute.xlu0 %1546
    %1548 = vrot.lane.b32.xlu0 %v86, 9
    %v1549 = vpop.permute.xlu0 %1548
    %1550 = vrot.lane.b32.xlu0 %v87, 9
    %v1551 = vpop.permute.xlu0 %1550
    %1552 = vrot.lane.b32.xlu0 %v88, 9
    %v1553 = vpop.permute.xlu0 %1552
    %1554 = vrot.lane.b32.xlu0 %v89, 9
    %v1555 = vpop.permute.xlu0 %1554
    %1556 = vrot.lane.b32.xlu0 %v90, 9
    %v1557 = vpop.permute.xlu0 %1556
    %1558 = vrot.lane.b32.xlu0 %v91, 9
    %v1559 = vpop.permute.xlu0 %1558
    %1560 = vrot.lane.b32.xlu0 %v92, 9
    %v1561 = vpop.permute.xlu0 %1560
    %1562 = vrot.lane.b32.xlu0 %v93, 9
    %v1563 = vpop.permute.xlu0 %1562
    %1564 = vrot.lane.b32.xlu0 %v94, 9
    %v1565 = vpop.permute.xlu0 %1564
    %1566 = vrot.lane.b32.xlu0 %v95, 9
    %v1567 = vpop.permute.xlu0 %1566
    %1568 = vrot.lane.b32.xlu0 %v96, 9
    %v1569 = vpop.permute.xlu0 %1568
    %1570 = vrot.lane.b32.xlu0 %v97, 9
    %v1571 = vpop.permute.xlu0 %1570
    %1572 = vrot.lane.b32.xlu0 %v98, 9
    %v1573 = vpop.permute.xlu0 %1572
    %1574 = vrot.lane.b32.xlu0 %v99, 9
    %v1575 = vpop.permute.xlu0 %1574
    %1576 = vrot.lane.b32.xlu0 %v100, 9
    %v1577 = vpop.permute.xlu0 %1576
    %1578 = vrot.lane.b32.xlu0 %v101, 9
    %v1579 = vpop.permute.xlu0 %1578
    %1580 = vrot.lane.b32.xlu0 %v102, 9
    %v1581 = vpop.permute.xlu0 %1580
    %1582 = vrot.lane.b32.xlu0 %v103, 9
    %v1583 = vpop.permute.xlu0 %1582
    %1584 = vrot.lane.b32.xlu0 %v104, 9
    %v1585 = vpop.permute.xlu0 %1584
    %1586 = vrot.lane.b32.xlu0 %v105, 9
    %v1587 = vpop.permute.xlu0 %1586
    %1588 = vrot.lane.b32.xlu0 %v106, 9
    %v1589 = vpop.permute.xlu0 %1588
    %1590 = vrot.lane.b32.xlu0 %v107, 9
    %v1591 = vpop.permute.xlu0 %1590
    %1592 = vrot.lane.b32.xlu0 %v108, 9
    %v1593 = vpop.permute.xlu0 %1592
    %1594 = vrot.lane.b32.xlu0 %v109, 9
    %v1595 = vpop.permute.xlu0 %1594
    %1596 = vrot.lane.b32.xlu0 %v110, 9
    %v1597 = vpop.permute.xlu0 %1596
    %1598 = vrot.lane.b32.xlu0 %v111, 9
    %v1599 = vpop.permute.xlu0 %1598
    %1600 = vrot.lane.b32.xlu0 %v112, 9
    %v1601 = vpop.permute.xlu0 %1600
    %1602 = vrot.lane.b32.xlu0 %v113, 9
    %v1603 = vpop.permute.xlu0 %1602
    %1604 = vrot.lane.b32.xlu0 %v114, 9
    %v1605 = vpop.permute.xlu0 %1604
    %1606 = vrot.lane.b32.xlu0 %v115, 9
    %v1607 = vpop.permute.xlu0 %1606
    %1608 = vrot.lane.b32.xlu0 %v116, 9
    %v1609 = vpop.permute.xlu0 %1608
    %1610 = vrot.lane.b32.xlu0 %v117, 9
    %v1611 = vpop.permute.xlu0 %1610
    %1612 = vrot.lane.b32.xlu0 %v118, 9
    %v1613 = vpop.permute.xlu0 %1612
    %1614 = vrot.lane.b32.xlu0 %v119, 9
    %v1615 = vpop.permute.xlu0 %1614
    %1616 = vrot.lane.b32.xlu0 %v120, 9
    %v1617 = vpop.permute.xlu0 %1616
    %1618 = vrot.lane.b32.xlu0 %v121, 9
    %v1619 = vpop.permute.xlu0 %1618
    %1620 = vrot.lane.b32.xlu0 %v122, 9
    %v1621 = vpop.permute.xlu0 %1620
    %1622 = vrot.lane.b32.xlu0 %v123, 9
    %v1623 = vpop.permute.xlu0 %1622
    %1624 = vrot.lane.b32.xlu0 %v124, 9
    %v1625 = vpop.permute.xlu0 %1624
    %1626 = vrot.lane.b32.xlu0 %v125, 9
    %v1627 = vpop.permute.xlu0 %1626
    %1628 = vrot.lane.b32.xlu0 %v126, 9
    %v1629 = vpop.permute.xlu0 %1628
    %1630 = vrot.lane.b32.xlu0 %v127, 9
    %v1631 = vpop.permute.xlu0 %1630
    %1632 = vrot.lane.b32.xlu0 %v128, 9
    %v1633 = vpop.permute.xlu0 %1632
    %1634 = vrot.lane.b32.xlu0 %v129, 9
    %v1635 = vpop.permute.xlu0 %1634
    %1636 = vrot.lane.b32.xlu0 %v130, 9
    %v1637 = vpop.permute.xlu0 %1636
    %1638 = vrot.lane.b32.xlu0 %v131, 9
    %v1639 = vpop.permute.xlu0 %1638
    %1640 = vrot.lane.b32.xlu0 %v132, 9
    %v1641 = vpop.permute.xlu0 %1640
    %1642 = vrot.lane.b32.xlu0 %v133, 9
    %v1643 = vpop.permute.xlu0 %1642
    %1644 = vrot.lane.b32.xlu0 %v134, 9
    %v1645 = vpop.permute.xlu0 %1644
    %1646 = vrot.lane.b32.xlu0 %v135, 9
    %v1647 = vpop.permute.xlu0 %1646
    %1648 = vrot.lane.b32.xlu0 %v136, 9
    %v1649 = vpop.permute.xlu0 %1648
    %1650 = vrot.lane.b32.xlu0 %v137, 9
    %v1651 = vpop.permute.xlu0 %1650
    %1652 = vrot.lane.b32.xlu0 %v138, 9
    %v1653 = vpop.permute.xlu0 %1652
    %1654 = vrot.lane.b32.xlu0 %v139, 9
    %v1655 = vpop.permute.xlu0 %1654
    %1656 = vrot.lane.b32.xlu0 %v140, 9
    %v1657 = vpop.permute.xlu0 %1656
    %1658 = vrot.lane.b32.xlu0 %v141, 9
    %v1659 = vpop.permute.xlu0 %1658
    %1660 = vrot.lane.b32.xlu0 %v142, 9
    %v1661 = vpop.permute.xlu0 %1660
    %1662 = vrot.lane.b32.xlu0 %v143, 9
    %v1663 = vpop.permute.xlu0 %1662
    %1664 = vrot.lane.b32.xlu0 %v144, 9
    %v1665 = vpop.permute.xlu0 %1664
    %1666 = vrot.lane.b32.xlu0 %v145, 9
    %v1667 = vpop.permute.xlu0 %1666
    %1668 = vrot.lane.b32.xlu0 %v146, 9
    %v1669 = vpop.permute.xlu0 %1668
    %1670 = vrot.lane.b32.xlu0 %v147, 9
    %v1671 = vpop.permute.xlu0 %1670
    %1672 = vrot.lane.b32.xlu0 %v148, 9
    %v1673 = vpop.permute.xlu0 %1672
    %1674 = vrot.lane.b32.xlu0 %v149, 9
    %v1675 = vpop.permute.xlu0 %1674
    %1676 = vrot.lane.b32.xlu0 %v150, 9
    %v1677 = vpop.permute.xlu0 %1676
    %1678 = vrot.lane.b32.xlu0 %v151, 9
    %v1679 = vpop.permute.xlu0 %1678
    %1680 = vrot.lane.b32.xlu0 %v152, 9
    %v1681 = vpop.permute.xlu0 %1680
    %1682 = vrot.lane.b32.xlu0 %v153, 9
    %v1683 = vpop.permute.xlu0 %1682
    %1684 = vrot.lane.b32.xlu0 %v154, 9
    %v1685 = vpop.permute.xlu0 %1684
    %1686 = vrot.lane.b32.xlu0 %v155, 9
    %v1687 = vpop.permute.xlu0 %1686
    %1688 = vrot.lane.b32.xlu0 %v156, 9
    %v1689 = vpop.permute.xlu0 %1688
    %1690 = vrot.lane.b32.xlu0 %v157, 9
    %v1691 = vpop.permute.xlu0 %1690
    %1692 = vrot.lane.b32.xlu0 %v158, 9
    %v1693 = vpop.permute.xlu0 %1692
    %1694 = vrot.lane.b32.xlu0 %v159, 9
    %v1695 = vpop.permute.xlu0 %1694
    %1696 = vrot.lane.b32.xlu0 %v160, 9
    %v1697 = vpop.permute.xlu0 %1696
    %1954 = vrot.lane.b32.xlu0 %v1186, 18
    %v1955 = vpop.permute.xlu0 %1954
    %1956 = vrot.lane.b32.xlu0 %v1187, 18
    %v1957 = vpop.permute.xlu0 %1956
    %1958 = vrot.lane.b32.xlu0 %v1188, 18
    %v1959 = vpop.permute.xlu0 %1958
    %1960 = vrot.lane.b32.xlu0 %v1189, 18
    %v1961 = vpop.permute.xlu0 %1960
    %1962 = vrot.lane.b32.xlu0 %v1190, 18
    %v1963 = vpop.permute.xlu0 %1962
    %1964 = vrot.lane.b32.xlu0 %v1191, 18
    %v1965 = vpop.permute.xlu0 %1964
    %1966 = vrot.lane.b32.xlu0 %v1192, 18
    %v1967 = vpop.permute.xlu0 %1966
    %1968 = vrot.lane.b32.xlu0 %v1193, 18
    %v1969 = vpop.permute.xlu0 %1968
    %1970 = vrot.lane.b32.xlu0 %v1194, 18
    %v1971 = vpop.permute.xlu0 %1970
    %1972 = vrot.lane.b32.xlu0 %v1195, 18
    %v1973 = vpop.permute.xlu0 %1972
    %1974 = vrot.lane.b32.xlu0 %v1196, 18
    %v1975 = vpop.permute.xlu0 %1974
    %1976 = vrot.lane.b32.xlu0 %v1197, 18
    %v1977 = vpop.permute.xlu0 %1976
    %1978 = vrot.lane.b32.xlu0 %v1198, 18
    %v1979 = vpop.permute.xlu0 %1978
    %1980 = vrot.lane.b32.xlu0 %v1199, 18
    %v1981 = vpop.permute.xlu0 %1980
    %1982 = vrot.lane.b32.xlu0 %v1200, 18
    %v1983 = vpop.permute.xlu0 %1982
    %1984 = vrot.lane.b32.xlu0 %v1201, 18
    %v1985 = vpop.permute.xlu0 %1984
    %1986 = vrot.lane.b32.xlu0 %v1202, 18
    %v1987 = vpop.permute.xlu0 %1986
    %1988 = vrot.lane.b32.xlu0 %v1203, 18
    %v1989 = vpop.permute.xlu0 %1988
    %1990 = vrot.lane.b32.xlu0 %v1204, 18
    %v1991 = vpop.permute.xlu0 %1990
    %1992 = vrot.lane.b32.xlu0 %v1205, 18
    %v1993 = vpop.permute.xlu0 %1992
    %1994 = vrot.lane.b32.xlu0 %v1206, 18
    %v1995 = vpop.permute.xlu0 %1994
    %1996 = vrot.lane.b32.xlu0 %v1207, 18
    %v1997 = vpop.permute.xlu0 %1996
    %1998 = vrot.lane.b32.xlu0 %v1208, 18
    %v1999 = vpop.permute.xlu0 %1998
    %2000 = vrot.lane.b32.xlu0 %v1209, 18
    %v2001 = vpop.permute.xlu0 %2000
    %2002 = vrot.lane.b32.xlu0 %v1210, 18
    %v2003 = vpop.permute.xlu0 %2002
    %2004 = vrot.lane.b32.xlu0 %v1211, 18
    %v2005 = vpop.permute.xlu0 %2004
    %2006 = vrot.lane.b32.xlu0 %v1212, 18
    %v2007 = vpop.permute.xlu0 %2006
    %2008 = vrot.lane.b32.xlu0 %v1213, 18
    %v2009 = vpop.permute.xlu0 %2008
    %2010 = vrot.lane.b32.xlu0 %v1214, 18
    %v2011 = vpop.permute.xlu0 %2010
    %2012 = vrot.lane.b32.xlu0 %v1215, 18
    %v2013 = vpop.permute.xlu0 %2012
    %2014 = vrot.lane.b32.xlu0 %v1216, 18
    %v2015 = vpop.permute.xlu0 %2014
    %2016 = vrot.lane.b32.xlu0 %v1217, 18
    %v2017 = vpop.permute.xlu0 %2016
    %2018 = vrot.lane.b32.xlu0 %v1218, 18
    %v2019 = vpop.permute.xlu0 %2018
    %2020 = vrot.lane.b32.xlu0 %v1219, 18
    %v2021 = vpop.permute.xlu0 %2020
    %2022 = vrot.lane.b32.xlu0 %v1220, 18
    %v2023 = vpop.permute.xlu0 %2022
    %2024 = vrot.lane.b32.xlu0 %v1221, 18
    %v2025 = vpop.permute.xlu0 %2024
    %2026 = vrot.lane.b32.xlu0 %v1222, 18
    %v2027 = vpop.permute.xlu0 %2026
    %2028 = vrot.lane.b32.xlu0 %v1223, 18
    %v2029 = vpop.permute.xlu0 %2028
    %2030 = vrot.lane.b32.xlu0 %v1224, 18
    %v2031 = vpop.permute.xlu0 %2030
    %2032 = vrot.lane.b32.xlu0 %v1225, 18
    %v2033 = vpop.permute.xlu0 %2032
    %2034 = vrot.lane.b32.xlu0 %v1226, 18
    %v2035 = vpop.permute.xlu0 %2034
    %2036 = vrot.lane.b32.xlu0 %v1227, 18
    %v2037 = vpop.permute.xlu0 %2036
    %2038 = vrot.lane.b32.xlu0 %v1228, 18
    %v2039 = vpop.permute.xlu0 %2038
    %2040 = vrot.lane.b32.xlu0 %v1229, 18
    %v2041 = vpop.permute.xlu0 %2040
    %2042 = vrot.lane.b32.xlu0 %v1230, 18
    %v2043 = vpop.permute.xlu0 %2042
    %2044 = vrot.lane.b32.xlu0 %v1231, 18
    %v2045 = vpop.permute.xlu0 %2044
    %2046 = vrot.lane.b32.xlu0 %v1232, 18
    %v2047 = vpop.permute.xlu0 %2046
    %2048 = vrot.lane.b32.xlu0 %v1233, 18
    %v2049 = vpop.permute.xlu0 %2048
    %2050 = vrot.lane.b32.xlu0 %v1234, 18
    %v2051 = vpop.permute.xlu0 %2050
    %2052 = vrot.lane.b32.xlu0 %v1235, 18
    %v2053 = vpop.permute.xlu0 %2052
    %2054 = vrot.lane.b32.xlu0 %v1236, 18
    %v2055 = vpop.permute.xlu0 %2054
    %2056 = vrot.lane.b32.xlu0 %v1237, 18
    %v2057 = vpop.permute.xlu0 %2056
    %2058 = vrot.lane.b32.xlu0 %v1238, 18
    %v2059 = vpop.permute.xlu0 %2058
    %2060 = vrot.lane.b32.xlu0 %v1239, 18
    %v2061 = vpop.permute.xlu0 %2060
    %2062 = vrot.lane.b32.xlu0 %v1240, 18
    %v2063 = vpop.permute.xlu0 %2062
    %2064 = vrot.lane.b32.xlu0 %v1241, 18
    %v2065 = vpop.permute.xlu0 %2064
    %2066 = vrot.lane.b32.xlu0 %v1242, 18
    %v2067 = vpop.permute.xlu0 %2066
    %2068 = vrot.lane.b32.xlu0 %v1243, 18
    %v2069 = vpop.permute.xlu0 %2068
    %2070 = vrot.lane.b32.xlu0 %v1244, 18
    %v2071 = vpop.permute.xlu0 %2070
    %2072 = vrot.lane.b32.xlu0 %v1245, 18
    %v2073 = vpop.permute.xlu0 %2072
    %2074 = vrot.lane.b32.xlu0 %v1246, 18
    %v2075 = vpop.permute.xlu0 %2074
    %2076 = vrot.lane.b32.xlu0 %v1247, 18
    %v2077 = vpop.permute.xlu0 %2076
    %2078 = vrot.lane.b32.xlu0 %v1248, 18
    %v2079 = vpop.permute.xlu0 %2078
    %2080 = vrot.lane.b32.xlu0 %v1249, 18
    %v2081 = vpop.permute.xlu0 %2080
    %2082 = vrot.lane.b32.xlu0 %v1250, 18
    %v2083 = vpop.permute.xlu0 %2082
    %2084 = vrot.lane.b32.xlu0 %v1251, 18
    %v2085 = vpop.permute.xlu0 %2084
    %2086 = vrot.lane.b32.xlu0 %v1252, 18
    %v2087 = vpop.permute.xlu0 %2086
    %2088 = vrot.lane.b32.xlu0 %v1253, 18
    %v2089 = vpop.permute.xlu0 %2088
    %2090 = vrot.lane.b32.xlu0 %v1254, 18
    %v2091 = vpop.permute.xlu0 %2090
    %2092 = vrot.lane.b32.xlu0 %v1255, 18
    %v2093 = vpop.permute.xlu0 %2092
    %2094 = vrot.lane.b32.xlu0 %v1256, 18
    %v2095 = vpop.permute.xlu0 %2094
    %2096 = vrot.lane.b32.xlu0 %v1257, 18
    %v2097 = vpop.permute.xlu0 %2096
    %2098 = vrot.lane.b32.xlu0 %v1258, 18
    %v2099 = vpop.permute.xlu0 %2098
    %2100 = vrot.lane.b32.xlu0 %v1259, 18
    %v2101 = vpop.permute.xlu0 %2100
    %2102 = vrot.lane.b32.xlu0 %v1260, 18
    %v2103 = vpop.permute.xlu0 %2102
    %2104 = vrot.lane.b32.xlu0 %v1261, 18
    %v2105 = vpop.permute.xlu0 %2104
    %2106 = vrot.lane.b32.xlu0 %v1262, 18
    %v2107 = vpop.permute.xlu0 %2106
    %2108 = vrot.lane.b32.xlu0 %v1263, 18
    %v2109 = vpop.permute.xlu0 %2108
    %2110 = vrot.lane.b32.xlu0 %v1264, 18
    %v2111 = vpop.permute.xlu0 %2110
    %2112 = vrot.lane.b32.xlu0 %v1265, 18
    %v2113 = vpop.permute.xlu0 %2112
    %2114 = vrot.lane.b32.xlu0 %v1266, 18
    %v2115 = vpop.permute.xlu0 %2114
    %2116 = vrot.lane.b32.xlu0 %v1267, 18
    %v2117 = vpop.permute.xlu0 %2116
    %2118 = vrot.lane.b32.xlu0 %v1268, 18
    %v2119 = vpop.permute.xlu0 %2118
    %2120 = vrot.lane.b32.xlu0 %v1269, 18
    %v2121 = vpop.permute.xlu0 %2120
    %2122 = vrot.lane.b32.xlu0 %v1270, 18
    %v2123 = vpop.permute.xlu0 %2122
    %2124 = vrot.lane.b32.xlu0 %v1271, 18
    %v2125 = vpop.permute.xlu0 %2124
    %2126 = vrot.lane.b32.xlu0 %v1272, 18
    %v2127 = vpop.permute.xlu0 %2126
    %2128 = vrot.lane.b32.xlu0 %v1273, 18
    %v2129 = vpop.permute.xlu0 %2128
    %2130 = vrot.lane.b32.xlu0 %v1274, 18
    %v2131 = vpop.permute.xlu0 %2130
    %2132 = vrot.lane.b32.xlu0 %v1275, 18
    %v2133 = vpop.permute.xlu0 %2132
    %2134 = vrot.lane.b32.xlu0 %v1276, 18
    %v2135 = vpop.permute.xlu0 %2134
    %2136 = vrot.lane.b32.xlu0 %v1277, 18
    %v2137 = vpop.permute.xlu0 %2136
    %2138 = vrot.lane.b32.xlu0 %v1278, 18
    %v2139 = vpop.permute.xlu0 %2138
    %2140 = vrot.lane.b32.xlu0 %v1279, 18
    %v2141 = vpop.permute.xlu0 %2140
    %2142 = vrot.lane.b32.xlu0 %v1280, 18
    %v2143 = vpop.permute.xlu0 %2142
    %2144 = vrot.lane.b32.xlu0 %v1281, 18
    %v2145 = vpop.permute.xlu0 %2144
    %2146 = vrot.lane.b32.xlu0 %v1282, 18
    %v2147 = vpop.permute.xlu0 %2146
    %2148 = vrot.lane.b32.xlu0 %v1283, 18
    %v2149 = vpop.permute.xlu0 %2148
    %2150 = vrot.lane.b32.xlu0 %v1284, 18
    %v2151 = vpop.permute.xlu0 %2150
    %2152 = vrot.lane.b32.xlu0 %v1285, 18
    %v2153 = vpop.permute.xlu0 %2152
    %2154 = vrot.lane.b32.xlu0 %v1286, 18
    %v2155 = vpop.permute.xlu0 %2154
    %2156 = vrot.lane.b32.xlu0 %v1287, 18
    %v2157 = vpop.permute.xlu0 %2156
    %2158 = vrot.lane.b32.xlu0 %v1288, 18
    %v2159 = vpop.permute.xlu0 %2158
    %2160 = vrot.lane.b32.xlu0 %v1289, 18
    %v2161 = vpop.permute.xlu0 %2160
    %2162 = vrot.lane.b32.xlu0 %v1290, 18
    %v2163 = vpop.permute.xlu0 %2162
    %2164 = vrot.lane.b32.xlu0 %v1291, 18
    %v2165 = vpop.permute.xlu0 %2164
    %2166 = vrot.lane.b32.xlu0 %v1292, 18
    %v2167 = vpop.permute.xlu0 %2166
    %2168 = vrot.lane.b32.xlu0 %v1293, 18
    %v2169 = vpop.permute.xlu0 %2168
    %2170 = vrot.lane.b32.xlu0 %v1294, 18
    %v2171 = vpop.permute.xlu0 %2170
    %2172 = vrot.lane.b32.xlu0 %v1295, 18
    %v2173 = vpop.permute.xlu0 %2172
    %2174 = vrot.lane.b32.xlu0 %v1296, 18
    %v2175 = vpop.permute.xlu0 %2174
    %2176 = vrot.lane.b32.xlu0 %v1297, 18
    %v2177 = vpop.permute.xlu0 %2176
    %2178 = vrot.lane.b32.xlu0 %v1298, 18
    %v2179 = vpop.permute.xlu0 %2178
    %2180 = vrot.lane.b32.xlu0 %v1299, 18
    %v2181 = vpop.permute.xlu0 %2180
    %2182 = vrot.lane.b32.xlu0 %v1300, 18
    %v2183 = vpop.permute.xlu0 %2182
    %2184 = vrot.lane.b32.xlu0 %v1301, 18
    %v2185 = vpop.permute.xlu0 %2184
    %2186 = vrot.lane.b32.xlu0 %v1302, 18
    %v2187 = vpop.permute.xlu0 %2186
    %2188 = vrot.lane.b32.xlu0 %v1303, 18
    %v2189 = vpop.permute.xlu0 %2188
    %2190 = vrot.lane.b32.xlu0 %v1304, 18
    %v2191 = vpop.permute.xlu0 %2190
    %2192 = vrot.lane.b32.xlu0 %v1305, 18
    %v2193 = vpop.permute.xlu0 %2192
    %2194 = vrot.lane.b32.xlu0 %v1306, 18
    %v2195 = vpop.permute.xlu0 %2194
    %2196 = vrot.lane.b32.xlu0 %v1307, 18
    %v2197 = vpop.permute.xlu0 %2196
    %2198 = vrot.lane.b32.xlu0 %v1308, 18
    %v2199 = vpop.permute.xlu0 %2198
    %2200 = vrot.lane.b32.xlu0 %v1309, 18
    %v2201 = vpop.permute.xlu0 %2200
    %2202 = vrot.lane.b32.xlu0 %v1310, 18
    %v2203 = vpop.permute.xlu0 %2202
    %2204 = vrot.lane.b32.xlu0 %v1311, 18
    %v2205 = vpop.permute.xlu0 %2204
    %2206 = vrot.lane.b32.xlu0 %v1312, 18
    %v2207 = vpop.permute.xlu0 %2206
    %2208 = vrot.lane.b32.xlu0 %v1313, 18
    %v2209 = vpop.permute.xlu0 %2208
    %vm2338 = vcmask 72704
    %v2339 = vsel %vm2338, %v674, %v1443
    %v2340 = vsel %vm2338, %v675, %v1445
    %v2341 = vsel %vm2338, %v676, %v1447
    %v2342 = vsel %vm2338, %v677, %v1449
    %v2343 = vsel %vm2338, %v678, %v1451
    %v2344 = vsel %vm2338, %v679, %v1453
    %v2345 = vsel %vm2338, %v680, %v1455
    %v2346 = vsel %vm2338, %v681, %v1457
    %v2347 = vsel %vm2338, %v682, %v1459
    %v2348 = vsel %vm2338, %v683, %v1461
    %v2349 = vsel %vm2338, %v684, %v1463
    %v2350 = vsel %vm2338, %v685, %v1465
    %v2351 = vsel %vm2338, %v686, %v1467
    %v2352 = vsel %vm2338, %v687, %v1469
    %v2353 = vsel %vm2338, %v688, %v1471
    %v2354 = vsel %vm2338, %v689, %v1473
    %v2355 = vsel %vm2338, %v690, %v1475
    %v2356 = vsel %vm2338, %v691, %v1477
    %v2357 = vsel %vm2338, %v692, %v1479
    %v2358 = vsel %vm2338, %v693, %v1481
    %v2359 = vsel %vm2338, %v694, %v1483
    %v2360 = vsel %vm2338, %v695, %v1485
    %v2361 = vsel %vm2338, %v696, %v1487
    %v2362 = vsel %vm2338, %v697, %v1489
    %v2363 = vsel %vm2338, %v698, %v1491
    %v2364 = vsel %vm2338, %v699, %v1493
    %v2365 = vsel %vm2338, %v700, %v1495
    %v2366 = vsel %vm2338, %v701, %v1497
    %v2367 = vsel %vm2338, %v702, %v1499
    %v2368 = vsel %vm2338, %v703, %v1501
    %v2369 = vsel %vm2338, %v704, %v1503
    %v2370 = vsel %vm2338, %v705, %v1505
    %v2371 = vsel %vm2338, %v706, %v1507
    %v2372 = vsel %vm2338, %v707, %v1509
    %v2373 = vsel %vm2338, %v708, %v1511
    %v2374 = vsel %vm2338, %v709, %v1513
    %v2375 = vsel %vm2338, %v710, %v1515
    %v2376 = vsel %vm2338, %v711, %v1517
    %v2377 = vsel %vm2338, %v712, %v1519
    %v2378 = vsel %vm2338, %v713, %v1521
    %v2379 = vsel %vm2338, %v714, %v1523
    %v2380 = vsel %vm2338, %v715, %v1525
    %v2381 = vsel %vm2338, %v716, %v1527
    %v2382 = vsel %vm2338, %v717, %v1529
    %v2383 = vsel %vm2338, %v718, %v1531
    %v2384 = vsel %vm2338, %v719, %v1533
    %v2385 = vsel %vm2338, %v720, %v1535
    %v2386 = vsel %vm2338, %v721, %v1537
    %v2387 = vsel %vm2338, %v722, %v1539
    %v2388 = vsel %vm2338, %v723, %v1541
    %v2389 = vsel %vm2338, %v724, %v1543
    %v2390 = vsel %vm2338, %v725, %v1545
    %v2391 = vsel %vm2338, %v726, %v1547
    %v2392 = vsel %vm2338, %v727, %v1549
    %v2393 = vsel %vm2338, %v728, %v1551
    %v2394 = vsel %vm2338, %v729, %v1553
    %v2395 = vsel %vm2338, %v730, %v1555
    %v2396 = vsel %vm2338, %v731, %v1557
    %v2397 = vsel %vm2338, %v732, %v1559
    %v2398 = vsel %vm2338, %v733, %v1561
    %v2399 = vsel %vm2338, %v734, %v1563
    %v2400 = vsel %vm2338, %v735, %v1565
    %v2401 = vsel %vm2338, %v736, %v1567
    %v2402 = vsel %vm2338, %v737, %v1569
    %v2403 = vsel %vm2338, %v738, %v1571
    %v2404 = vsel %vm2338, %v739, %v1573
    %v2405 = vsel %vm2338, %v740, %v1575
    %v2406 = vsel %vm2338, %v741, %v1577
    %v2407 = vsel %vm2338, %v742, %v1579
    %v2408 = vsel %vm2338, %v743, %v1581
    %v2409 = vsel %vm2338, %v744, %v1583
    %v2410 = vsel %vm2338, %v745, %v1585
    %v2411 = vsel %vm2338, %v746, %v1587
    %v2412 = vsel %vm2338, %v747, %v1589
    %v2413 = vsel %vm2338, %v748, %v1591
    %v2414 = vsel %vm2338, %v749, %v1593
    %v2415 = vsel %vm2338, %v750, %v1595
    %v2416 = vsel %vm2338, %v751, %v1597
    %v2417 = vsel %vm2338, %v752, %v1599
    %v2418 = vsel %vm2338, %v753, %v1601
    %v2419 = vsel %vm2338, %v754, %v1603
    %v2420 = vsel %vm2338, %v755, %v1605
    %v2421 = vsel %vm2338, %v756, %v1607
    %v2422 = vsel %vm2338, %v757, %v1609
    %v2423 = vsel %vm2338, %v758, %v1611
    %v2424 = vsel %vm2338, %v759, %v1613
    %v2425 = vsel %vm2338, %v760, %v1615
    %v2426 = vsel %vm2338, %v761, %v1617
    %v2427 = vsel %vm2338, %v762, %v1619
    %v2428 = vsel %vm2338, %v763, %v1621
    %v2429 = vsel %vm2338, %v764, %v1623
    %v2430 = vsel %vm2338, %v765, %v1625
    %v2431 = vsel %vm2338, %v766, %v1627
    %v2432 = vsel %vm2338, %v767, %v1629
    %v2433 = vsel %vm2338, %v768, %v1631
    %v2434 = vsel %vm2338, %v769, %v1633
    %v2435 = vsel %vm2338, %v770, %v1635
    %v2436 = vsel %vm2338, %v771, %v1637
    %v2437 = vsel %vm2338, %v772, %v1639
    %v2438 = vsel %vm2338, %v773, %v1641
    %v2439 = vsel %vm2338, %v774, %v1643
    %v2440 = vsel %vm2338, %v775, %v1645
    %v2441 = vsel %vm2338, %v776, %v1647
    %v2442 = vsel %vm2338, %v777, %v1649
    %v2443 = vsel %vm2338, %v778, %v1651
    %v2444 = vsel %vm2338, %v779, %v1653
    %v2445 = vsel %vm2338, %v780, %v1655
    %v2446 = vsel %vm2338, %v781, %v1657
    %v2447 = vsel %vm2338, %v782, %v1659
    %v2448 = vsel %vm2338, %v783, %v1661
    %v2449 = vsel %vm2338, %v784, %v1663
    %v2450 = vsel %vm2338, %v785, %v1665
    %v2451 = vsel %vm2338, %v786, %v1667
    %v2452 = vsel %vm2338, %v787, %v1669
    %v2453 = vsel %vm2338, %v788, %v1671
    %v2454 = vsel %vm2338, %v789, %v1673
    %v2455 = vsel %vm2338, %v790, %v1675
    %v2456 = vsel %vm2338, %v791, %v1677
    %v2457 = vsel %vm2338, %v792, %v1679
    %v2458 = vsel %vm2338, %v793, %v1681
    %v2459 = vsel %vm2338, %v794, %v1683
    %v2460 = vsel %vm2338, %v795, %v1685
    %v2461 = vsel %vm2338, %v796, %v1687
    %v2462 = vsel %vm2338, %v797, %v1689
    %v2463 = vsel %vm2338, %v798, %v1691
    %v2464 = vsel %vm2338, %v799, %v1693
    %v2465 = vsel %vm2338, %v800, %v1695
    %v2466 = vsel %vm2338, %v801, %v1697
    %vm2467 = vcmask 146432
    %v2468 = vsel %vm2467, %v2339, %v1955
    %v2469 = vsel %vm2467, %v2340, %v1957
    %v2470 = vsel %vm2467, %v2341, %v1959
    %v2471 = vsel %vm2467, %v2342, %v1961
    %v2472 = vsel %vm2467, %v2343, %v1963
    %v2473 = vsel %vm2467, %v2344, %v1965
    %v2474 = vsel %vm2467, %v2345, %v1967
    %v2475 = vsel %vm2467, %v2346, %v1969
    %v2476 = vsel %vm2467, %v2347, %v1971
    %v2477 = vsel %vm2467, %v2348, %v1973
    %v2478 = vsel %vm2467, %v2349, %v1975
    %v2479 = vsel %vm2467, %v2350, %v1977
    %v2480 = vsel %vm2467, %v2351, %v1979
    %v2481 = vsel %vm2467, %v2352, %v1981
    %v2482 = vsel %vm2467, %v2353, %v1983
    %v2483 = vsel %vm2467, %v2354, %v1985
    %v2484 = vsel %vm2467, %v2355, %v1987
    %v2485 = vsel %vm2467, %v2356, %v1989
    %v2486 = vsel %vm2467, %v2357, %v1991
    %v2487 = vsel %vm2467, %v2358, %v1993
    %v2488 = vsel %vm2467, %v2359, %v1995
    %v2489 = vsel %vm2467, %v2360, %v1997
    %v2490 = vsel %vm2467, %v2361, %v1999
    %v2491 = vsel %vm2467, %v2362, %v2001
    %v2492 = vsel %vm2467, %v2363, %v2003
    %v2493 = vsel %vm2467, %v2364, %v2005
    %v2494 = vsel %vm2467, %v2365, %v2007
    %v2495 = vsel %vm2467, %v2366, %v2009
    %v2496 = vsel %vm2467, %v2367, %v2011
    %v2497 = vsel %vm2467, %v2368, %v2013
    %v2498 = vsel %vm2467, %v2369, %v2015
    %v2499 = vsel %vm2467, %v2370, %v2017
    %v2500 = vsel %vm2467, %v2371, %v2019
    %v2501 = vsel %vm2467, %v2372, %v2021
    %v2502 = vsel %vm2467, %v2373, %v2023
    %v2503 = vsel %vm2467, %v2374, %v2025
    %v2504 = vsel %vm2467, %v2375, %v2027
    %v2505 = vsel %vm2467, %v2376, %v2029
    %v2506 = vsel %vm2467, %v2377, %v2031
    %v2507 = vsel %vm2467, %v2378, %v2033
    %v2508 = vsel %vm2467, %v2379, %v2035
    %v2509 = vsel %vm2467, %v2380, %v2037
    %v2510 = vsel %vm2467, %v2381, %v2039
    %v2511 = vsel %vm2467, %v2382, %v2041
    %v2512 = vsel %vm2467, %v2383, %v2043
    %v2513 = vsel %vm2467, %v2384, %v2045
    %v2514 = vsel %vm2467, %v2385, %v2047
    %v2515 = vsel %vm2467, %v2386, %v2049
    %v2516 = vsel %vm2467, %v2387, %v2051
    %v2517 = vsel %vm2467, %v2388, %v2053
    %v2518 = vsel %vm2467, %v2389, %v2055
    %v2519 = vsel %vm2467, %v2390, %v2057
    %v2520 = vsel %vm2467, %v2391, %v2059
    %v2521 = vsel %vm2467, %v2392, %v2061
    %v2522 = vsel %vm2467, %v2393, %v2063
    %v2523 = vsel %vm2467, %v2394, %v2065
    %v2524 = vsel %vm2467, %v2395, %v2067
    %v2525 = vsel %vm2467, %v2396, %v2069
    %v2526 = vsel %vm2467, %v2397, %v2071
    %v2527 = vsel %vm2467, %v2398, %v2073
    %v2528 = vsel %vm2467, %v2399, %v2075
    %v2529 = vsel %vm2467, %v2400, %v2077
    %v2530 = vsel %vm2467, %v2401, %v2079
    %v2531 = vsel %vm2467, %v2402, %v2081
    %v2532 = vsel %vm2467, %v2403, %v2083
    %v2533 = vsel %vm2467, %v2404, %v2085
    %v2534 = vsel %vm2467, %v2405, %v2087
    %v2535 = vsel %vm2467, %v2406, %v2089
    %v2536 = vsel %vm2467, %v2407, %v2091
    %v2537 = vsel %vm2467, %v2408, %v2093
    %v2538 = vsel %vm2467, %v2409, %v2095
    %v2539 = vsel %vm2467, %v2410, %v2097
    %v2540 = vsel %vm2467, %v2411, %v2099
    %v2541 = vsel %vm2467, %v2412, %v2101
    %v2542 = vsel %vm2467, %v2413, %v2103
    %v2543 = vsel %vm2467, %v2414, %v2105
    %v2544 = vsel %vm2467, %v2415, %v2107
    %v2545 = vsel %vm2467, %v2416, %v2109
    %v2546 = vsel %vm2467, %v2417, %v2111
    %v2547 = vsel %vm2467, %v2418, %v2113
    %v2548 = vsel %vm2467, %v2419, %v2115
    %v2549 = vsel %vm2467, %v2420, %v2117
    %v2550 = vsel %vm2467, %v2421, %v2119
    %v2551 = vsel %vm2467, %v2422, %v2121
    %v2552 = vsel %vm2467, %v2423, %v2123
    %v2553 = vsel %vm2467, %v2424, %v2125
    %v2554 = vsel %vm2467, %v2425, %v2127
    %v2555 = vsel %vm2467, %v2426, %v2129
    %v2556 = vsel %vm2467, %v2427, %v2131
    %v2557 = vsel %vm2467, %v2428, %v2133
    %v2558 = vsel %vm2467, %v2429, %v2135
    %v2559 = vsel %vm2467, %v2430, %v2137
    %v2560 = vsel %vm2467, %v2431, %v2139
    %v2561 = vsel %vm2467, %v2432, %v2141
    %v2562 = vsel %vm2467, %v2433, %v2143
    %v2563 = vsel %vm2467, %v2434, %v2145
    %v2564 = vsel %vm2467, %v2435, %v2147
    %v2565 = vsel %vm2467, %v2436, %v2149
    %v2566 = vsel %vm2467, %v2437, %v2151
    %v2567 = vsel %vm2467, %v2438, %v2153
    %v2568 = vsel %vm2467, %v2439, %v2155
    %v2569 = vsel %vm2467, %v2440, %v2157
    %v2570 = vsel %vm2467, %v2441, %v2159
    %v2571 = vsel %vm2467, %v2442, %v2161
    %v2572 = vsel %vm2467, %v2443, %v2163
    %v2573 = vsel %vm2467, %v2444, %v2165
    %v2574 = vsel %vm2467, %v2445, %v2167
    %v2575 = vsel %vm2467, %v2446, %v2169
    %v2576 = vsel %vm2467, %v2447, %v2171
    %v2577 = vsel %vm2467, %v2448, %v2173
    %v2578 = vsel %vm2467, %v2449, %v2175
    %v2579 = vsel %vm2467, %v2450, %v2177
    %v2580 = vsel %vm2467, %v2451, %v2179
    %v2581 = vsel %vm2467, %v2452, %v2181
    %v2582 = vsel %vm2467, %v2453, %v2183
    %v2583 = vsel %vm2467, %v2454, %v2185
    %v2584 = vsel %vm2467, %v2455, %v2187
    %v2585 = vsel %vm2467, %v2456, %v2189
    %v2586 = vsel %vm2467, %v2457, %v2191
    %v2587 = vsel %vm2467, %v2458, %v2193
    %v2588 = vsel %vm2467, %v2459, %v2195
    %v2589 = vsel %vm2467, %v2460, %v2197
    %v2590 = vsel %vm2467, %v2461, %v2199
    %v2591 = vsel %vm2467, %v2462, %v2201
    %v2592 = vsel %vm2467, %v2463, %v2203
    %v2593 = vsel %vm2467, %v2464, %v2205
    %v2594 = vsel %vm2467, %v2465, %v2207
    %v2595 = vsel %vm2467, %v2466, %v2209
    %v2596 = vld [vmem:[%s1] sm:$0xff]
    %v2597 = vld [vmem:[%s1 + $0x8] sm:$0xff]
    %v2598 = vld [vmem:[%s1 + $0x10] sm:$0xff]
    %v2599 = vld [vmem:[%s1 + $0x18] sm:$0x7]
    %v2600 = vld [vmem:[%s2] sm:$0x1]
    %v2602 = vlaneseq
    %v2603 = vshrl.u32 %v2602, 7
    %v2604 = vsub.s32 0, %v2603
    %v2605 = vrot.slane %v2600, %v2604
    %vm2607 = vcmask 220160
    %v2609 = vsel %vm2607, %v2468, 0
    %v2612 = vsel %vm2607, %v2469, 0
    %v2615 = vsel %vm2607, %v2470, 0
    %v2618 = vsel %vm2607, %v2471, 0
    %v2621 = vsel %vm2607, %v2472, 0
    %v2624 = vsel %vm2607, %v2473, 0
    %v2627 = vsel %vm2607, %v2474, 0
    %v2630 = vsel %vm2607, %v2475, 0
    %v2633 = vsel %vm2607, %v2476, 0
    %v2636 = vsel %vm2607, %v2477, 0
    %v2639 = vsel %vm2607, %v2478, 0
    %v2642 = vsel %vm2607, %v2479, 0
    %v2645 = vsel %vm2607, %v2480, 0
    %v2648 = vsel %vm2607, %v2481, 0
    %v2651 = vsel %vm2607, %v2482, 0
    %v2654 = vsel %vm2607, %v2483, 0
    %v2657 = vsel %vm2607, %v2484, 0
    %v2660 = vsel %vm2607, %v2485, 0
    %v2663 = vsel %vm2607, %v2486, 0
    %v2666 = vsel %vm2607, %v2487, 0
    %v2669 = vsel %vm2607, %v2488, 0
    %v2672 = vsel %vm2607, %v2489, 0
    %v2675 = vsel %vm2607, %v2490, 0
    %v2678 = vsel %vm2607, %v2491, 0
    %v2681 = vsel %vm2607, %v2492, 0
    %v2684 = vsel %vm2607, %v2493, 0
    %v2687 = vsel %vm2607, %v2494, 0
    %v2690 = vsel %vm2607, %v2495, 0
    %v2693 = vsel %vm2607, %v2496, 0
    %v2696 = vsel %vm2607, %v2497, 0
    %v2699 = vsel %vm2607, %v2498, 0
    %v2702 = vsel %vm2607, %v2499, 0
    %v2705 = vsel %vm2607, %v2500, 0
    %v2708 = vsel %vm2607, %v2501, 0
    %v2711 = vsel %vm2607, %v2502, 0
    %v2714 = vsel %vm2607, %v2503, 0
    %v2717 = vsel %vm2607, %v2504, 0
    %v2720 = vsel %vm2607, %v2505, 0
    %v2723 = vsel %vm2607, %v2506, 0
    %v2726 = vsel %vm2607, %v2507, 0
    %v2729 = vsel %vm2607, %v2508, 0
    %v2732 = vsel %vm2607, %v2509, 0
    %v2735 = vsel %vm2607, %v2510, 0
    %v2738 = vsel %vm2607, %v2511, 0
    %v2741 = vsel %vm2607, %v2512, 0
    %v2744 = vsel %vm2607, %v2513, 0
    %v2747 = vsel %vm2607, %v2514, 0
    %v2750 = vsel %vm2607, %v2515, 0
    %v2753 = vsel %vm2607, %v2516, 0
    %v2756 = vsel %vm2607, %v2517, 0
    %v2759 = vsel %vm2607, %v2518, 0
    %v2762 = vsel %vm2607, %v2519, 0
    %v2765 = vsel %vm2607, %v2520, 0
    %v2768 = vsel %vm2607, %v2521, 0
    %v2771 = vsel %vm2607, %v2522, 0
    %v2774 = vsel %vm2607, %v2523, 0
    %v2777 = vsel %vm2607, %v2524, 0
    %v2780 = vsel %vm2607, %v2525, 0
    %v2783 = vsel %vm2607, %v2526, 0
    %v2786 = vsel %vm2607, %v2527, 0
    %v2789 = vsel %vm2607, %v2528, 0
    %v2792 = vsel %vm2607, %v2529, 0
    %v2795 = vsel %vm2607, %v2530, 0
    %v2798 = vsel %vm2607, %v2531, 0
    %v2801 = vsel %vm2607, %v2532, 0
    %v2804 = vsel %vm2607, %v2533, 0
    %v2807 = vsel %vm2607, %v2534, 0
    %v2810 = vsel %vm2607, %v2535, 0
    %v2813 = vsel %vm2607, %v2536, 0
    %v2816 = vsel %vm2607, %v2537, 0
    %v2819 = vsel %vm2607, %v2538, 0
    %v2822 = vsel %vm2607, %v2539, 0
    %v2825 = vsel %vm2607, %v2540, 0
    %v2828 = vsel %vm2607, %v2541, 0
    %v2831 = vsel %vm2607, %v2542, 0
    %v2834 = vsel %vm2607, %v2543, 0
    %v2837 = vsel %vm2607, %v2544, 0
    %v2840 = vsel %vm2607, %v2545, 0
    %v2843 = vsel %vm2607, %v2546, 0
    %v2846 = vsel %vm2607, %v2547, 0
    %v2849 = vsel %vm2607, %v2548, 0
    %v2852 = vsel %vm2607, %v2549, 0
    %v2855 = vsel %vm2607, %v2550, 0
    %v2858 = vsel %vm2607, %v2551, 0
    %v2861 = vsel %vm2607, %v2552, 0
    %v2864 = vsel %vm2607, %v2553, 0
    %v2867 = vsel %vm2607, %v2554, 0
    %v2870 = vsel %vm2607, %v2555, 0
    %v2873 = vsel %vm2607, %v2556, 0
    %v2876 = vsel %vm2607, %v2557, 0
    %v2879 = vsel %vm2607, %v2558, 0
    %v2882 = vsel %vm2607, %v2559, 0
    %v2885 = vsel %vm2607, %v2560, 0
    %v2888 = vsel %vm2607, %v2561, 0
    %v2891 = vsel %vm2607, %v2562, 0
    %v2894 = vsel %vm2607, %v2563, 0
    %v2897 = vsel %vm2607, %v2564, 0
    %v2900 = vsel %vm2607, %v2565, 0
    %v2903 = vsel %vm2607, %v2566, 0
    %v2906 = vsel %vm2607, %v2567, 0
    %v2909 = vsel %vm2607, %v2568, 0
    %v2912 = vsel %vm2607, %v2569, 0
    %v2915 = vsel %vm2607, %v2570, 0
    %v2918 = vsel %vm2607, %v2571, 0
    %v2921 = vsel %vm2607, %v2572, 0
    %v2924 = vsel %vm2607, %v2573, 0
    %v2927 = vsel %vm2607, %v2574, 0
    %v2930 = vsel %vm2607, %v2575, 0
    %v2933 = vsel %vm2607, %v2576, 0
    %v2936 = vsel %vm2607, %v2577, 0
    %v2939 = vsel %vm2607, %v2578, 0
    %v2942 = vsel %vm2607, %v2579, 0
    %v2945 = vsel %vm2607, %v2580, 0
    %v2948 = vsel %vm2607, %v2581, 0
    %v2951 = vsel %vm2607, %v2582, 0
    %v2954 = vsel %vm2607, %v2583, 0
    %v2957 = vsel %vm2607, %v2584, 0
    %v2960 = vsel %vm2607, %v2585, 0
    %v2963 = vsel %vm2607, %v2586, 0
    %v2966 = vsel %vm2607, %v2587, 0
    %v2969 = vsel %vm2607, %v2588, 0
    %v2972 = vsel %vm2607, %v2589, 0
    %v2975 = vsel %vm2607, %v2590, 0
    %v2978 = vsel %vm2607, %v2591, 0
    %v2981 = vsel %vm2607, %v2592, 0
    %v2984 = vsel %vm2607, %v2593, 0
    %v2987 = vsel %vm2607, %v2594, 0
    %v2990 = vsel %vm2607, %v2595, 0
    %vm2992 = vcmask 1042432
    %v2994 = vsel %vm2992, %v2599, 0
    %2996 = vmatprep.subr.mxu0 0.0
    %2997 = vmatpush1.msra.mxu0 %v2596
    %2998 = vmatprep.subr.mxu0 0.0
    %2999 = vmatpush1.msra.mxu0 %v2597
    %3000 = vmatprep.subr.mxu0 0.0
    %3001 = vmatpush1.msra.mxu0 %v2598
    %3002 = vmatprep.subr.mxu0 0.0
    %3003 = vmatpush1.msra.mxu0 %v2994
    %3004 = vmatprep.subr.mxu0 0.0
    %3005 = vmatpush1.msra.mxu0 0.0
    %3006 = vmatprep.subr.mxu0 0.0
    %3007 = vmatpush1.msra.mxu0 0.0
    %3008 = vmatprep.subr.mxu0 0.0
    %3009 = vmatpush1.msra.mxu0 0.0
    %3010 = vmatprep.subr.mxu0 0.0
    %3011 = vmatpush1.msra.mxu0 0.0
    %3012 = vmatprep.subr.mxu0 0.0
    %3013 = vmatpush1.msra.mxu0 0.0
    %3014 = vmatprep.subr.mxu0 0.0
    %3015 = vmatpush1.msra.mxu0 0.0
    %3016 = vmatprep.subr.mxu0 0.0
    %3017 = vmatpush1.msra.mxu0 0.0
    %3018 = vmatprep.subr.mxu0 0.0
    %3019 = vmatpush1.msra.mxu0 0.0
    %3020 = vmatprep.subr.mxu0 0.0
    %3021 = vmatpush1.msra.mxu0 0.0
    %3022 = vmatprep.subr.mxu0 0.0
    %3023 = vmatpush1.msra.mxu0 0.0
    %3024 = vmatprep.subr.mxu0 0.0
    %3025 = vmatpush1.msra.mxu0 0.0
    %3026 = vmatprep.subr.mxu0 0.0
    %3027 = vmatpush1.msra.mxu0 0.0
    %3028 = vmatprep.subr.mxu0 0.0
    %3029 = vmatpush1.msra.mxu0 0.0
    %3030 = vmatprep.subr.mxu0 0.0
    %3031 = vmatpush1.msra.mxu0 0.0
    %3032 = vmatprep.subr.mxu0 0.0
    %3033 = vmatpush1.msra.mxu0 0.0
    %3034 = vmatprep.subr.mxu0 0.0
    %3035 = vmatpush1.msra.mxu0 0.0
    %3036 = vmatprep.subr.mxu0 0.0
    %3037 = vmatpush1.msra.mxu0 0.0
    %3038 = vmatprep.subr.mxu0 0.0
    %3039 = vmatpush1.msra.mxu0 0.0
    %3040 = vmatprep.subr.mxu0 0.0
    %3041 = vmatpush1.msra.mxu0 0.0
    %3042 = vmatprep.subr.mxu0 0.0
    %3043 = vmatpush1.msra.mxu0 0.0
    %3044 = vmatprep.subr.mxu0 0.0
    %3045 = vmatpush1.msra.mxu0 0.0
    %3046 = vmatprep.subr.mxu0 0.0
    %3047 = vmatpush1.msra.mxu0 0.0
    %3048 = vmatprep.subr.mxu0 0.0
    %3049 = vmatpush1.msra.mxu0 0.0
    %3050 = vmatprep.subr.mxu0 0.0
    %3051 = vmatpush1.msra.mxu0 0.0
    %3052 = vmatprep.subr.mxu0 0.0
    %3053 = vmatpush1.msra.mxu0 0.0
    %3054 = vmatprep.subr.mxu0 0.0
    %3055 = vmatpush1.msra.mxu0 0.0
    %3056 = vmatprep.subr.mxu0 0.0
    %3057 = vmatpush1.msra.mxu0 0.0
    %3058 = vmatprep.subr.mxu0 0.0
    %3059 = vmatpush1.msra.mxu0 0.0
    %3060 = vmatprep.mubr.f32.mxu0 0.0
    %3061 = vmatmul.mubr.f32.gmra.mrb[0].mxu0 %v2609
    %v3062 = vpop.f32.mrb[0].mxu0
    %v3063 = vadd.f32 %v2605, %v3062
    %v3064 = vpop.f32.mrb[0].mxu0
    %3065 = vmatprep.mubr.f32.mxu0 0.0
    %3066 = vmatmul.mubr.f32.gmra.mrb[0].mxu0 %v2612
    %v3067 = vpop.f32.mrb[0].mxu0
    %v3068 = vadd.f32 %v2605, %v3067
    %v3069 = vpop.f32.mrb[0].mxu0
    %3070 = vmatprep.mubr.f32.mxu0 0.0
    %3071 = vmatmul.mubr.f32.gmra.mrb[0].mxu0 %v2615
    %v3072 = vpop.f32.mrb[0].mxu0
    %v3073 = vadd.f32 %v2605, %v3072
    %v3074 = vpop.f32.mrb[0].mxu0
    %3075 = vmatprep.mubr.f32.mxu0 0.0
    %3076 = vmatmul.mubr.f32.gmra.mrb[0].mxu0 %v2618
    %v3077 = vpop.f32.mrb[0].mxu0
    %v3078 = vadd.f32 %v2605, %v3077
    %v3079 = vpop.f32.mrb[0].mxu0
    %3080 = vmatprep.mubr.f32.mxu0 0.0
    %3081 = vmatmul.mubr.f32.gmra.mrb[0].mxu0 %v2621
    %v3082 = vpop.f32.mrb[0].mxu0
    %v3083 = vadd.f32 %v2605, %v3082
    %v3084 = vpop.f32.mrb[0].mxu0
    %3085 = vmatprep.mubr.f32.mxu0 0.0
    %3086 = vmatmul.mubr.f32.gmra.mrb[0].mxu0 %v2624
    %v3087 = vpop.f32.mrb[0].mxu0
    %v3088 = vadd.f32 %v2605, %v3087
    %v3089 = vpop.f32.mrb[0].mxu0
    %3090 = vmatprep.mubr.f32.mxu0 0.0
    %3091 = vmatmul.mubr.f32.gmra.mrb[0].mxu0 %v2627
    %v3092 = vpop.f32.mrb[0].mxu0
    %v3093 = vadd.f32 %v2605, %v3092
    %v3094 = vpop.f32.mrb[0].mxu0
    %3095 = vmatprep.mubr.f32.mxu0 0.0
    %3096 = vmatmul.mubr.f32.gmra.mrb[0].mxu0 %v2630
    %v3097 = vpop.f32.mrb[0].mxu0
    %v3098 = vadd.f32 %v2605, %v3097
    %v3099 = vpop.f32.mrb[0].mxu0
    %3100 = vmatprep.mubr.f32.mxu0 0.0
    %3101 = vmatmul.mubr.f32.gmra.mrb[0].mxu0 %v2633
    %v3102 = vpop.f32.mrb[0].mxu0
    %v3103 = vadd.f32 %v2605, %v3102
    %v3104 = vpop.f32.mrb[0].mxu0
    %3105 = vmatprep.mubr.f32.mxu0 0.0
    %3106 = vmatmul.mubr.f32.gmra.mrb[0].mxu0 %v2636
    %v3107 = vpop.f32.mrb[0].mxu0
    %v3108 = vadd.f32 %v2605, %v3107
    %v3109 = vpop.f32.mrb[0].mxu0
    %3110 = vmatprep.mubr.f32.mxu0 0.0
    %3111 = vmatmul.mubr.f32.gmra.mrb[0].mxu0 %v2639
    %v3112 = vpop.f32.mrb[0].mxu0
    %v3113 = vadd.f32 %v2605, %v3112
    %v3114 = vpop.f32.mrb[0].mxu0
    %3115 = vmatprep.mubr.f32.mxu0 0.0
    %3116 = vmatmul.mubr.f32.gmra.mrb[0].mxu0 %v2642
    %v3117 = vpop.f32.mrb[0].mxu0
    %v3118 = vadd.f32 %v2605, %v3117
    %v3119 = vpop.f32.mrb[0].mxu0
    %3120 = vmatprep.mubr.f32.mxu0 0.0
    %3121 = vmatmul.mubr.f32.gmra.mrb[0].mxu0 %v2645
    %v3122 = vpop.f32.mrb[0].mxu0
    %v3123 = vadd.f32 %v2605, %v3122
    %v3124 = vpop.f32.mrb[0].mxu0
    %3125 = vmatprep.mubr.f32.mxu0 0.0
    %3126 = vmatmul.mubr.f32.gmra.mrb[0].mxu0 %v2648
    %v3127 = vpop.f32.mrb[0].mxu0
    %v3128 = vadd.f32 %v2605, %v3127
    %v3129 = vpop.f32.mrb[0].mxu0
    %3130 = vmatprep.mubr.f32.mxu0 0.0
    %3131 = vmatmul.mubr.f32.gmra.mrb[0].mxu0 %v2651
    %v3132 = vpop.f32.mrb[0].mxu0
    %v3133 = vadd.f32 %v2605, %v3132
    %v3134 = vpop.f32.mrb[0].mxu0
    %3135 = vmatprep.mubr.f32.mxu0 0.0
    %3136 = vmatmul.mubr.f32.gmra.mrb[0].mxu0 %v2654
    %v3137 = vpop.f32.mrb[0].mxu0
    %v3138 = vadd.f32 %v2605, %v3137
    %v3139 = vpop.f32.mrb[0].mxu0
    %3140 = vmatprep.mubr.f32.mxu0 0.0
    %3141 = vmatmul.mubr.f32.gmra.mrb[0].mxu0 %v2657
    %v3142 = vpop.f32.mrb[0].mxu0
    %v3143 = vadd.f32 %v2605, %v3142
    %v3144 = vpop.f32.mrb[0].mxu0
    %3145 = vmatprep.mubr.f32.mxu0 0.0
    %3146 = vmatmul.mubr.f32.gmra.mrb[0].mxu0 %v2660
    %v3147 = vpop.f32.mrb[0].mxu0
    %v3148 = vadd.f32 %v2605, %v3147
    %v3149 = vpop.f32.mrb[0].mxu0
    %3150 = vmatprep.mubr.f32.mxu0 0.0
    %3151 = vmatmul.mubr.f32.gmra.mrb[0].mxu0 %v2663
    %v3152 = vpop.f32.mrb[0].mxu0
    %v3153 = vadd.f32 %v2605, %v3152
    %v3154 = vpop.f32.mrb[0].mxu0
    %3155 = vmatprep.mubr.f32.mxu0 0.0
    %3156 = vmatmul.mubr.f32.gmra.mrb[0].mxu0 %v2666
    %v3157 = vpop.f32.mrb[0].mxu0
    %v3158 = vadd.f32 %v2605, %v3157
    %v3159 = vpop.f32.mrb[0].mxu0
    %3160 = vmatprep.mubr.f32.mxu0 0.0
    %3161 = vmatmul.mubr.f32.gmra.mrb[0].mxu0 %v2669
    %v3162 = vpop.f32.mrb[0].mxu0
    %v3163 = vadd.f32 %v2605, %v3162
    %v3164 = vpop.f32.mrb[0].mxu0
    %3165 = vmatprep.mubr.f32.mxu0 0.0
    %3166 = vmatmul.mubr.f32.gmra.mrb[0].mxu0 %v2672
    %v3167 = vpop.f32.mrb[0].mxu0
    %v3168 = vadd.f32 %v2605, %v3167
    %v3169 = vpop.f32.mrb[0].mxu0
    %3170 = vmatprep.mubr.f32.mxu0 0.0
    %3171 = vmatmul.mubr.f32.gmra.mrb[0].mxu0 %v2675
    %v3172 = vpop.f32.mrb[0].mxu0
    %v3173 = vadd.f32 %v2605, %v3172
    %v3174 = vpop.f32.mrb[0].mxu0
    %3175 = vmatprep.mubr.f32.mxu0 0.0
    %3176 = vmatmul.mubr.f32.gmra.mrb[0].mxu0 %v2678
    %v3177 = vpop.f32.mrb[0].mxu0
    %v3178 = vadd.f32 %v2605, %v3177
    %v3179 = vpop.f32.mrb[0].mxu0
    %3180 = vmatprep.mubr.f32.mxu0 0.0
    %3181 = vmatmul.mubr.f32.gmra.mrb[0].mxu0 %v2681
    %v3182 = vpop.f32.mrb[0].mxu0
    %v3183 = vadd.f32 %v2605, %v3182
    %v3184 = vpop.f32.mrb[0].mxu0
    %3185 = vmatprep.mubr.f32.mxu0 0.0
    %3186 = vmatmul.mubr.f32.gmra.mrb[0].mxu0 %v2684
    %v3187 = vpop.f32.mrb[0].mxu0
    %v3188 = vadd.f32 %v2605, %v3187
    %v3189 = vpop.f32.mrb[0].mxu0
    %3190 = vmatprep.mubr.f32.mxu0 0.0
    %3191 = vmatmul.mubr.f32.gmra.mrb[0].mxu0 %v2687
    %v3192 = vpop.f32.mrb[0].mxu0
    %v3193 = vadd.f32 %v2605, %v3192
    %v3194 = vpop.f32.mrb[0].mxu0
    %3195 = vmatprep.mubr.f32.mxu0 0.0
    %3196 = vmatmul.mubr.f32.gmra.mrb[0].mxu0 %v2690
    %v3197 = vpop.f32.mrb[0].mxu0
    %v3198 = vadd.f32 %v2605, %v3197
    %v3199 = vpop.f32.mrb[0].mxu0
    %3200 = vmatprep.mubr.f32.mxu0 0.0
    %3201 = vmatmul.mubr.f32.gmra.mrb[0].mxu0 %v2693
    %v3202 = vpop.f32.mrb[0].mxu0
    %v3203 = vadd.f32 %v2605, %v3202
    %v3204 = vpop.f32.mrb[0].mxu0
    %3205 = vmatprep.mubr.f32.mxu0 0.0
    %3206 = vmatmul.mubr.f32.gmra.mrb[0].mxu0 %v2696
    %v3207 = vpop.f32.mrb[0].mxu0
    %v3208 = vadd.f32 %v2605, %v3207
    %v3209 = vpop.f32.mrb[0].mxu0
    %3210 = vmatprep.mubr.f32.mxu0 0.0
    %3211 = vmatmul.mubr.f32.gmra.mrb[0].mxu0 %v2699
    %v3212 = vpop.f32.mrb[0].mxu0
    %v3213 = vadd.f32 %v2605, %v3212
    %v3214 = vpop.f32.mrb[0].mxu0
    %3215 = vmatprep.mubr.f32.mxu0 0.0
    %3216 = vmatmul.mubr.f32.gmra.mrb[0].mxu0 %v2702
    %v3217 = vpop.f32.mrb[0].mxu0
    %v3218 = vadd.f32 %v2605, %v3217
    %v3219 = vpop.f32.mrb[0].mxu0
    %3220 = vmatprep.mubr.f32.mxu0 0.0
    %3221 = vmatmul.mubr.f32.gmra.mrb[0].mxu0 %v2705
    %v3222 = vpop.f32.mrb[0].mxu0
    %v3223 = vadd.f32 %v2605, %v3222
    %v3224 = vpop.f32.mrb[0].mxu0
    %3225 = vmatprep.mubr.f32.mxu0 0.0
    %3226 = vmatmul.mubr.f32.gmra.mrb[0].mxu0 %v2708
    %v3227 = vpop.f32.mrb[0].mxu0
    %v3228 = vadd.f32 %v2605, %v3227
    %v3229 = vpop.f32.mrb[0].mxu0
    %3230 = vmatprep.mubr.f32.mxu0 0.0
    %3231 = vmatmul.mubr.f32.gmra.mrb[0].mxu0 %v2711
    %v3232 = vpop.f32.mrb[0].mxu0
    %v3233 = vadd.f32 %v2605, %v3232
    %v3234 = vpop.f32.mrb[0].mxu0
    %3235 = vmatprep.mubr.f32.mxu0 0.0
    %3236 = vmatmul.mubr.f32.gmra.mrb[0].mxu0 %v2714
    %v3237 = vpop.f32.mrb[0].mxu0
    %v3238 = vadd.f32 %v2605, %v3237
    %v3239 = vpop.f32.mrb[0].mxu0
    %3240 = vmatprep.mubr.f32.mxu0 0.0
    %3241 = vmatmul.mubr.f32.gmra.mrb[0].mxu0 %v2717
    %v3242 = vpop.f32.mrb[0].mxu0
    %v3243 = vadd.f32 %v2605, %v3242
    %v3244 = vpop.f32.mrb[0].mxu0
    %3245 = vmatprep.mubr.f32.mxu0 0.0
    %3246 = vmatmul.mubr.f32.gmra.mrb[0].mxu0 %v2720
    %v3247 = vpop.f32.mrb[0].mxu0
    %v3248 = vadd.f32 %v2605, %v3247
    %v3249 = vpop.f32.mrb[0].mxu0
    %3250 = vmatprep.mubr.f32.mxu0 0.0
    %3251 = vmatmul.mubr.f32.gmra.mrb[0].mxu0 %v2723
    %v3252 = vpop.f32.mrb[0].mxu0
    %v3253 = vadd.f32 %v2605, %v3252
    %v3254 = vpop.f32.mrb[0].mxu0
    %3255 = vmatprep.mubr.f32.mxu0 0.0
    %3256 = vmatmul.mubr.f32.gmra.mrb[0].mxu0 %v2726
    %v3257 = vpop.f32.mrb[0].mxu0
    %v3258 = vadd.f32 %v2605, %v3257
    %v3259 = vpop.f32.mrb[0].mxu0
    %3260 = vmatprep.mubr.f32.mxu0 0.0
    %3261 = vmatmul.mubr.f32.gmra.mrb[0].mxu0 %v2729
    %v3262 = vpop.f32.mrb[0].mxu0
    %v3263 = vadd.f32 %v2605, %v3262
    %v3264 = vpop.f32.mrb[0].mxu0
    %3265 = vmatprep.mubr.f32.mxu0 0.0
    %3266 = vmatmul.mubr.f32.gmra.mrb[0].mxu0 %v2732
    %v3267 = vpop.f32.mrb[0].mxu0
    %v3268 = vadd.f32 %v2605, %v3267
    %v3269 = vpop.f32.mrb[0].mxu0
    %3270 = vmatprep.mubr.f32.mxu0 0.0
    %3271 = vmatmul.mubr.f32.gmra.mrb[0].mxu0 %v2735
    %v3272 = vpop.f32.mrb[0].mxu0
    %v3273 = vadd.f32 %v2605, %v3272
    %v3274 = vpop.f32.mrb[0].mxu0
    %3275 = vmatprep.mubr.f32.mxu0 0.0
    %3276 = vmatmul.mubr.f32.gmra.mrb[0].mxu0 %v2738
    %v3277 = vpop.f32.mrb[0].mxu0
    %v3278 = vadd.f32 %v2605, %v3277
    %v3279 = vpop.f32.mrb[0].mxu0
    %3280 = vmatprep.mubr.f32.mxu0 0.0
    %3281 = vmatmul.mubr.f32.gmra.mrb[0].mxu0 %v2741
    %v3282 = vpop.f32.mrb[0].mxu0
    %v3283 = vadd.f32 %v2605, %v3282
    %v3284 = vpop.f32.mrb[0].mxu0
    %3285 = vmatprep.mubr.f32.mxu0 0.0
    %3286 = vmatmul.mubr.f32.gmra.mrb[0].mxu0 %v2744
    %v3287 = vpop.f32.mrb[0].mxu0
    %v3288 = vadd.f32 %v2605, %v3287
    %v3289 = vpop.f32.mrb[0].mxu0
    %3290 = vmatprep.mubr.f32.mxu0 0.0
    %3291 = vmatmul.mubr.f32.gmra.mrb[0].mxu0 %v2747
    %v3292 = vpop.f32.mrb[0].mxu0
    %v3293 = vadd.f32 %v2605, %v3292
    %v3294 = vpop.f32.mrb[0].mxu0
    %3295 = vmatprep.mubr.f32.mxu0 0.0
    %3296 = vmatmul.mubr.f32.gmra.mrb[0].mxu0 %v2750
    %v3297 = vpop.f32.mrb[0].mxu0
    %v3298 = vadd.f32 %v2605, %v3297
    %v3299 = vpop.f32.mrb[0].mxu0
    %3300 = vmatprep.mubr.f32.mxu0 0.0
    %3301 = vmatmul.mubr.f32.gmra.mrb[0].mxu0 %v2753
    %v3302 = vpop.f32.mrb[0].mxu0
    %v3303 = vadd.f32 %v2605, %v3302
    %v3304 = vpop.f32.mrb[0].mxu0
    %3305 = vmatprep.mubr.f32.mxu0 0.0
    %3306 = vmatmul.mubr.f32.gmra.mrb[0].mxu0 %v2756
    %v3307 = vpop.f32.mrb[0].mxu0
    %v3308 = vadd.f32 %v2605, %v3307
    %v3309 = vpop.f32.mrb[0].mxu0
    %3310 = vmatprep.mubr.f32.mxu0 0.0
    %3311 = vmatmul.mubr.f32.gmra.mrb[0].mxu0 %v2759
    %v3312 = vpop.f32.mrb[0].mxu0
    %v3313 = vadd.f32 %v2605, %v3312
    %v3314 = vpop.f32.mrb[0].mxu0
    %3315 = vmatprep.mubr.f32.mxu0 0.0
    %3316 = vmatmul.mubr.f32.gmra.mrb[0].mxu0 %v2762
    %v3317 = vpop.f32.mrb[0].mxu0
    %v3318 = vadd.f32 %v2605, %v3317
    %v3319 = vpop.f32.mrb[0].mxu0
    %3320 = vmatprep.mubr.f32.mxu0 0.0
    %3321 = vmatmul.mubr.f32.gmra.mrb[0].mxu0 %v2765
    %v3322 = vpop.f32.mrb[0].mxu0
    %v3323 = vadd.f32 %v2605, %v3322
    %v3324 = vpop.f32.mrb[0].mxu0
    %3325 = vmatprep.mubr.f32.mxu0 0.0
    %3326 = vmatmul.mubr.f32.gmra.mrb[0].mxu0 %v2768
    %v3327 = vpop.f32.mrb[0].mxu0
    %v3328 = vadd.f32 %v2605, %v3327
    %v3329 = vpop.f32.mrb[0].mxu0
    %3330 = vmatprep.mubr.f32.mxu0 0.0
    %3331 = vmatmul.mubr.f32.gmra.mrb[0].mxu0 %v2771
    %v3332 = vpop.f32.mrb[0].mxu0
    %v3333 = vadd.f32 %v2605, %v3332
    %v3334 = vpop.f32.mrb[0].mxu0
    %3335 = vmatprep.mubr.f32.mxu0 0.0
    %3336 = vmatmul.mubr.f32.gmra.mrb[0].mxu0 %v2774
    %v3337 = vpop.f32.mrb[0].mxu0
    %v3338 = vadd.f32 %v2605, %v3337
    %v3339 = vpop.f32.mrb[0].mxu0
    %3340 = vmatprep.mubr.f32.mxu0 0.0
    %3341 = vmatmul.mubr.f32.gmra.mrb[0].mxu0 %v2777
    %v3342 = vpop.f32.mrb[0].mxu0
    %v3343 = vadd.f32 %v2605, %v3342
    %v3344 = vpop.f32.mrb[0].mxu0
    %3345 = vmatprep.mubr.f32.mxu0 0.0
    %3346 = vmatmul.mubr.f32.gmra.mrb[0].mxu0 %v2780
    %v3347 = vpop.f32.mrb[0].mxu0
    %v3348 = vadd.f32 %v2605, %v3347
    %v3349 = vpop.f32.mrb[0].mxu0
    %3350 = vmatprep.mubr.f32.mxu0 0.0
    %3351 = vmatmul.mubr.f32.gmra.mrb[0].mxu0 %v2783
    %v3352 = vpop.f32.mrb[0].mxu0
    %v3353 = vadd.f32 %v2605, %v3352
    %v3354 = vpop.f32.mrb[0].mxu0
    %3355 = vmatprep.mubr.f32.mxu0 0.0
    %3356 = vmatmul.mubr.f32.gmra.mrb[0].mxu0 %v2786
    %v3357 = vpop.f32.mrb[0].mxu0
    %v3358 = vadd.f32 %v2605, %v3357
    %v3359 = vpop.f32.mrb[0].mxu0
    %3360 = vmatprep.mubr.f32.mxu0 0.0
    %3361 = vmatmul.mubr.f32.gmra.mrb[0].mxu0 %v2789
    %v3362 = vpop.f32.mrb[0].mxu0
    %v3363 = vadd.f32 %v2605, %v3362
    %v3364 = vpop.f32.mrb[0].mxu0
    %3365 = vmatprep.mubr.f32.mxu0 0.0
    %3366 = vmatmul.mubr.f32.gmra.mrb[0].mxu0 %v2792
    %v3367 = vpop.f32.mrb[0].mxu0
    %v3368 = vadd.f32 %v2605, %v3367
    %v3369 = vpop.f32.mrb[0].mxu0
    %3370 = vmatprep.mubr.f32.mxu0 0.0
    %3371 = vmatmul.mubr.f32.gmra.mrb[0].mxu0 %v2795
    %v3372 = vpop.f32.mrb[0].mxu0
    %v3373 = vadd.f32 %v2605, %v3372
    %v3374 = vpop.f32.mrb[0].mxu0
    %3375 = vmatprep.mubr.f32.mxu0 0.0
    %3376 = vmatmul.mubr.f32.gmra.mrb[0].mxu0 %v2798
    %v3377 = vpop.f32.mrb[0].mxu0
    %v3378 = vadd.f32 %v2605, %v3377
    %v3379 = vpop.f32.mrb[0].mxu0
    %3380 = vmatprep.mubr.f32.mxu0 0.0
    %3381 = vmatmul.mubr.f32.gmra.mrb[0].mxu0 %v2801
    %v3382 = vpop.f32.mrb[0].mxu0
    %v3383 = vadd.f32 %v2605, %v3382
    %v3384 = vpop.f32.mrb[0].mxu0
    %3385 = vmatprep.mubr.f32.mxu0 0.0
    %3386 = vmatmul.mubr.f32.gmra.mrb[0].mxu0 %v2804
    %v3387 = vpop.f32.mrb[0].mxu0
    %v3388 = vadd.f32 %v2605, %v3387
    %v3389 = vpop.f32.mrb[0].mxu0
    %3390 = vmatprep.mubr.f32.mxu0 0.0
    %3391 = vmatmul.mubr.f32.gmra.mrb[0].mxu0 %v2807
    %v3392 = vpop.f32.mrb[0].mxu0
    %v3393 = vadd.f32 %v2605, %v3392
    %v3394 = vpop.f32.mrb[0].mxu0
    %3395 = vmatprep.mubr.f32.mxu0 0.0
    %3396 = vmatmul.mubr.f32.gmra.mrb[0].mxu0 %v2810
    %v3397 = vpop.f32.mrb[0].mxu0
    %v3398 = vadd.f32 %v2605, %v3397
    %v3399 = vpop.f32.mrb[0].mxu0
    %3400 = vmatprep.mubr.f32.mxu0 0.0
    %3401 = vmatmul.mubr.f32.gmra.mrb[0].mxu0 %v2813
    %v3402 = vpop.f32.mrb[0].mxu0
    %v3403 = vadd.f32 %v2605, %v3402
    %v3404 = vpop.f32.mrb[0].mxu0
    %3405 = vmatprep.mubr.f32.mxu0 0.0
    %3406 = vmatmul.mubr.f32.gmra.mrb[0].mxu0 %v2816
    %v3407 = vpop.f32.mrb[0].mxu0
    %v3408 = vadd.f32 %v2605, %v3407
    %v3409 = vpop.f32.mrb[0].mxu0
    %3410 = vmatprep.mubr.f32.mxu0 0.0
    %3411 = vmatmul.mubr.f32.gmra.mrb[0].mxu0 %v2819
    %v3412 = vpop.f32.mrb[0].mxu0
    %v3413 = vadd.f32 %v2605, %v3412
    %v3414 = vpop.f32.mrb[0].mxu0
    %3415 = vmatprep.mubr.f32.mxu0 0.0
    %3416 = vmatmul.mubr.f32.gmra.mrb[0].mxu0 %v2822
    %v3417 = vpop.f32.mrb[0].mxu0
    %v3418 = vadd.f32 %v2605, %v3417
    %v3419 = vpop.f32.mrb[0].mxu0
    %3420 = vmatprep.mubr.f32.mxu0 0.0
    %3421 = vmatmul.mubr.f32.gmra.mrb[0].mxu0 %v2825
    %v3422 = vpop.f32.mrb[0].mxu0
    %v3423 = vadd.f32 %v2605, %v3422
    %v3424 = vpop.f32.mrb[0].mxu0
    %3425 = vmatprep.mubr.f32.mxu0 0.0
    %3426 = vmatmul.mubr.f32.gmra.mrb[0].mxu0 %v2828
    %v3427 = vpop.f32.mrb[0].mxu0
    %v3428 = vadd.f32 %v2605, %v3427
    %v3429 = vpop.f32.mrb[0].mxu0
    %3430 = vmatprep.mubr.f32.mxu0 0.0
    %3431 = vmatmul.mubr.f32.gmra.mrb[0].mxu0 %v2831
    %v3432 = vpop.f32.mrb[0].mxu0
    %v3433 = vadd.f32 %v2605, %v3432
    %v3434 = vpop.f32.mrb[0].mxu0
    %3435 = vmatprep.mubr.f32.mxu0 0.0
    %3436 = vmatmul.mubr.f32.gmra.mrb[0].mxu0 %v2834
    %v3437 = vpop.f32.mrb[0].mxu0
    %v3438 = vadd.f32 %v2605, %v3437
    %v3439 = vpop.f32.mrb[0].mxu0
    %3440 = vmatprep.mubr.f32.mxu0 0.0
    %3441 = vmatmul.mubr.f32.gmra.mrb[0].mxu0 %v2837
    %v3442 = vpop.f32.mrb[0].mxu0
    %v3443 = vadd.f32 %v2605, %v3442
    %v3444 = vpop.f32.mrb[0].mxu0
    %3445 = vmatprep.mubr.f32.mxu0 0.0
    %3446 = vmatmul.mubr.f32.gmra.mrb[0].mxu0 %v2840
    %v3447 = vpop.f32.mrb[0].mxu0
    %v3448 = vadd.f32 %v2605, %v3447
    %v3449 = vpop.f32.mrb[0].mxu0
    %3450 = vmatprep.mubr.f32.mxu0 0.0
    %3451 = vmatmul.mubr.f32.gmra.mrb[0].mxu0 %v2843
    %v3452 = vpop.f32.mrb[0].mxu0
    %v3453 = vadd.f32 %v2605, %v3452
    %v3454 = vpop.f32.mrb[0].mxu0
    %3455 = vmatprep.mubr.f32.mxu0 0.0
    %3456 = vmatmul.mubr.f32.gmra.mrb[0].mxu0 %v2846
    %v3457 = vpop.f32.mrb[0].mxu0
    %v3458 = vadd.f32 %v2605, %v3457
    %v3459 = vpop.f32.mrb[0].mxu0
    %3460 = vmatprep.mubr.f32.mxu0 0.0
    %3461 = vmatmul.mubr.f32.gmra.mrb[0].mxu0 %v2849
    %v3462 = vpop.f32.mrb[0].mxu0
    %v3463 = vadd.f32 %v2605, %v3462
    %v3464 = vpop.f32.mrb[0].mxu0
    %3465 = vmatprep.mubr.f32.mxu0 0.0
    %3466 = vmatmul.mubr.f32.gmra.mrb[0].mxu0 %v2852
    %v3467 = vpop.f32.mrb[0].mxu0
    %v3468 = vadd.f32 %v2605, %v3467
    %v3469 = vpop.f32.mrb[0].mxu0
    %3470 = vmatprep.mubr.f32.mxu0 0.0
    %3471 = vmatmul.mubr.f32.gmra.mrb[0].mxu0 %v2855
    %v3472 = vpop.f32.mrb[0].mxu0
    %v3473 = vadd.f32 %v2605, %v3472
    %v3474 = vpop.f32.mrb[0].mxu0
    %3475 = vmatprep.mubr.f32.mxu0 0.0
    %3476 = vmatmul.mubr.f32.gmra.mrb[0].mxu0 %v2858
    %v3477 = vpop.f32.mrb[0].mxu0
    %v3478 = vadd.f32 %v2605, %v3477
    %v3479 = vpop.f32.mrb[0].mxu0
    %3480 = vmatprep.mubr.f32.mxu0 0.0
    %3481 = vmatmul.mubr.f32.gmra.mrb[0].mxu0 %v2861
    %v3482 = vpop.f32.mrb[0].mxu0
    %v3483 = vadd.f32 %v2605, %v3482
    %v3484 = vpop.f32.mrb[0].mxu0
    %3485 = vmatprep.mubr.f32.mxu0 0.0
    %3486 = vmatmul.mubr.f32.gmra.mrb[0].mxu0 %v2864
    %v3487 = vpop.f32.mrb[0].mxu0
    %v3488 = vadd.f32 %v2605, %v3487
    %v3489 = vpop.f32.mrb[0].mxu0
    %3490 = vmatprep.mubr.f32.mxu0 0.0
    %3491 = vmatmul.mubr.f32.gmra.mrb[0].mxu0 %v2867
    %v3492 = vpop.f32.mrb[0].mxu0
    %v3493 = vadd.f32 %v2605, %v3492
    %v3494 = vpop.f32.mrb[0].mxu0
    %3495 = vmatprep.mubr.f32.mxu0 0.0
    %3496 = vmatmul.mubr.f32.gmra.mrb[0].mxu0 %v2870
    %v3497 = vpop.f32.mrb[0].mxu0
    %v3498 = vadd.f32 %v2605, %v3497
    %v3499 = vpop.f32.mrb[0].mxu0
    %3500 = vmatprep.mubr.f32.mxu0 0.0
    %3501 = vmatmul.mubr.f32.gmra.mrb[0].mxu0 %v2873
    %v3502 = vpop.f32.mrb[0].mxu0
    %v3503 = vadd.f32 %v2605, %v3502
    %v3504 = vpop.f32.mrb[0].mxu0
    %3505 = vmatprep.mubr.f32.mxu0 0.0
    %3506 = vmatmul.mubr.f32.gmra.mrb[0].mxu0 %v2876
    %v3507 = vpop.f32.mrb[0].mxu0
    %v3508 = vadd.f32 %v2605, %v3507
    %v3509 = vpop.f32.mrb[0].mxu0
    %3510 = vmatprep.mubr.f32.mxu0 0.0
    %3511 = vmatmul.mubr.f32.gmra.mrb[0].mxu0 %v2879
    %v3512 = vpop.f32.mrb[0].mxu0
    %v3513 = vadd.f32 %v2605, %v3512
    %v3514 = vpop.f32.mrb[0].mxu0
    %3515 = vmatprep.mubr.f32.mxu0 0.0
    %3516 = vmatmul.mubr.f32.gmra.mrb[0].mxu0 %v2882
    %v3517 = vpop.f32.mrb[0].mxu0
    %v3518 = vadd.f32 %v2605, %v3517
    %v3519 = vpop.f32.mrb[0].mxu0
    %3520 = vmatprep.mubr.f32.mxu0 0.0
    %3521 = vmatmul.mubr.f32.gmra.mrb[0].mxu0 %v2885
    %v3522 = vpop.f32.mrb[0].mxu0
    %v3523 = vadd.f32 %v2605, %v3522
    %v3524 = vpop.f32.mrb[0].mxu0
    %3525 = vmatprep.mubr.f32.mxu0 0.0
    %3526 = vmatmul.mubr.f32.gmra.mrb[0].mxu0 %v2888
    %v3527 = vpop.f32.mrb[0].mxu0
    %v3528 = vadd.f32 %v2605, %v3527
    %v3529 = vpop.f32.mrb[0].mxu0
    %3530 = vmatprep.mubr.f32.mxu0 0.0
    %3531 = vmatmul.mubr.f32.gmra.mrb[0].mxu0 %v2891
    %v3532 = vpop.f32.mrb[0].mxu0
    %v3533 = vadd.f32 %v2605, %v3532
    %v3534 = vpop.f32.mrb[0].mxu0
    %3535 = vmatprep.mubr.f32.mxu0 0.0
    %3536 = vmatmul.mubr.f32.gmra.mrb[0].mxu0 %v2894
    %v3537 = vpop.f32.mrb[0].mxu0
    %v3538 = vadd.f32 %v2605, %v3537
    %v3539 = vpop.f32.mrb[0].mxu0
    %3540 = vmatprep.mubr.f32.mxu0 0.0
    %3541 = vmatmul.mubr.f32.gmra.mrb[0].mxu0 %v2897
    %v3542 = vpop.f32.mrb[0].mxu0
    %v3543 = vadd.f32 %v2605, %v3542
    %v3544 = vpop.f32.mrb[0].mxu0
    %3545 = vmatprep.mubr.f32.mxu0 0.0
    %3546 = vmatmul.mubr.f32.gmra.mrb[0].mxu0 %v2900
    %v3547 = vpop.f32.mrb[0].mxu0
    %v3548 = vadd.f32 %v2605, %v3547
    %v3549 = vpop.f32.mrb[0].mxu0
    %3550 = vmatprep.mubr.f32.mxu0 0.0
    %3551 = vmatmul.mubr.f32.gmra.mrb[0].mxu0 %v2903
    %v3552 = vpop.f32.mrb[0].mxu0
    %v3553 = vadd.f32 %v2605, %v3552
    %v3554 = vpop.f32.mrb[0].mxu0
    %3555 = vmatprep.mubr.f32.mxu0 0.0
    %3556 = vmatmul.mubr.f32.gmra.mrb[0].mxu0 %v2906
    %v3557 = vpop.f32.mrb[0].mxu0
    %v3558 = vadd.f32 %v2605, %v3557
    %v3559 = vpop.f32.mrb[0].mxu0
    %3560 = vmatprep.mubr.f32.mxu0 0.0
    %3561 = vmatmul.mubr.f32.gmra.mrb[0].mxu0 %v2909
    %v3562 = vpop.f32.mrb[0].mxu0
    %v3563 = vadd.f32 %v2605, %v3562
    %v3564 = vpop.f32.mrb[0].mxu0
    %3565 = vmatprep.mubr.f32.mxu0 0.0
    %3566 = vmatmul.mubr.f32.gmra.mrb[0].mxu0 %v2912
    %v3567 = vpop.f32.mrb[0].mxu0
    %v3568 = vadd.f32 %v2605, %v3567
    %v3569 = vpop.f32.mrb[0].mxu0
    %3570 = vmatprep.mubr.f32.mxu0 0.0
    %3571 = vmatmul.mubr.f32.gmra.mrb[0].mxu0 %v2915
    %v3572 = vpop.f32.mrb[0].mxu0
    %v3573 = vadd.f32 %v2605, %v3572
    %v3574 = vpop.f32.mrb[0].mxu0
    %3575 = vmatprep.mubr.f32.mxu0 0.0
    %3576 = vmatmul.mubr.f32.gmra.mrb[0].mxu0 %v2918
    %v3577 = vpop.f32.mrb[0].mxu0
    %v3578 = vadd.f32 %v2605, %v3577
    %v3579 = vpop.f32.mrb[0].mxu0
    %3580 = vmatprep.mubr.f32.mxu0 0.0
    %3581 = vmatmul.mubr.f32.gmra.mrb[0].mxu0 %v2921
    %v3582 = vpop.f32.mrb[0].mxu0
    %v3583 = vadd.f32 %v2605, %v3582
    %v3584 = vpop.f32.mrb[0].mxu0
    %3585 = vmatprep.mubr.f32.mxu0 0.0
    %3586 = vmatmul.mubr.f32.gmra.mrb[0].mxu0 %v2924
    %v3587 = vpop.f32.mrb[0].mxu0
    %v3588 = vadd.f32 %v2605, %v3587
    %v3589 = vpop.f32.mrb[0].mxu0
    %3590 = vmatprep.mubr.f32.mxu0 0.0
    %3591 = vmatmul.mubr.f32.gmra.mrb[0].mxu0 %v2927
    %v3592 = vpop.f32.mrb[0].mxu0
    %v3593 = vadd.f32 %v2605, %v3592
    %v3594 = vpop.f32.mrb[0].mxu0
    %3595 = vmatprep.mubr.f32.mxu0 0.0
    %3596 = vmatmul.mubr.f32.gmra.mrb[0].mxu0 %v2930
    %v3597 = vpop.f32.mrb[0].mxu0
    %v3598 = vadd.f32 %v2605, %v3597
    %v3599 = vpop.f32.mrb[0].mxu0
    %3600 = vmatprep.mubr.f32.mxu0 0.0
    %3601 = vmatmul.mubr.f32.gmra.mrb[0].mxu0 %v2933
    %v3602 = vpop.f32.mrb[0].mxu0
    %v3603 = vadd.f32 %v2605, %v3602
    %v3604 = vpop.f32.mrb[0].mxu0
    %3605 = vmatprep.mubr.f32.mxu0 0.0
    %3606 = vmatmul.mubr.f32.gmra.mrb[0].mxu0 %v2936
    %v3607 = vpop.f32.mrb[0].mxu0
    %v3608 = vadd.f32 %v2605, %v3607
    %v3609 = vpop.f32.mrb[0].mxu0
    %3610 = vmatprep.mubr.f32.mxu0 0.0
    %3611 = vmatmul.mubr.f32.gmra.mrb[0].mxu0 %v2939
    %v3612 = vpop.f32.mrb[0].mxu0
    %v3613 = vadd.f32 %v2605, %v3612
    %v3614 = vpop.f32.mrb[0].mxu0
    %3615 = vmatprep.mubr.f32.mxu0 0.0
    %3616 = vmatmul.mubr.f32.gmra.mrb[0].mxu0 %v2942
    %v3617 = vpop.f32.mrb[0].mxu0
    %v3618 = vadd.f32 %v2605, %v3617
    %v3619 = vpop.f32.mrb[0].mxu0
    %3620 = vmatprep.mubr.f32.mxu0 0.0
    %3621 = vmatmul.mubr.f32.gmra.mrb[0].mxu0 %v2945
    %v3622 = vpop.f32.mrb[0].mxu0
    %v3623 = vadd.f32 %v2605, %v3622
    %v3624 = vpop.f32.mrb[0].mxu0
    %3625 = vmatprep.mubr.f32.mxu0 0.0
    %3626 = vmatmul.mubr.f32.gmra.mrb[0].mxu0 %v2948
    %v3627 = vpop.f32.mrb[0].mxu0
    %v3628 = vadd.f32 %v2605, %v3627
    %v3629 = vpop.f32.mrb[0].mxu0
    %3630 = vmatprep.mubr.f32.mxu0 0.0
    %3631 = vmatmul.mubr.f32.gmra.mrb[0].mxu0 %v2951
    %v3632 = vpop.f32.mrb[0].mxu0
    %v3633 = vadd.f32 %v2605, %v3632
    %v3634 = vpop.f32.mrb[0].mxu0
    %3635 = vmatprep.mubr.f32.mxu0 0.0
    %3636 = vmatmul.mubr.f32.gmra.mrb[0].mxu0 %v2954
    %v3637 = vpop.f32.mrb[0].mxu0
    %v3638 = vadd.f32 %v2605, %v3637
    %v3639 = vpop.f32.mrb[0].mxu0
    %3640 = vmatprep.mubr.f32.mxu0 0.0
    %3641 = vmatmul.mubr.f32.gmra.mrb[0].mxu0 %v2957
    %v3642 = vpop.f32.mrb[0].mxu0
    %v3643 = vadd.f32 %v2605, %v3642
    %v3644 = vpop.f32.mrb[0].mxu0
    %3645 = vmatprep.mubr.f32.mxu0 0.0
    %3646 = vmatmul.mubr.f32.gmra.mrb[0].mxu0 %v2960
    %v3647 = vpop.f32.mrb[0].mxu0
    %v3648 = vadd.f32 %v2605, %v3647
    %v3649 = vpop.f32.mrb[0].mxu0
    %3650 = vmatprep.mubr.f32.mxu0 0.0
    %3651 = vmatmul.mubr.f32.gmra.mrb[0].mxu0 %v2963
    %v3652 = vpop.f32.mrb[0].mxu0
    %v3653 = vadd.f32 %v2605, %v3652
    %v3654 = vpop.f32.mrb[0].mxu0
    %3655 = vmatprep.mubr.f32.mxu0 0.0
    %3656 = vmatmul.mubr.f32.gmra.mrb[0].mxu0 %v2966
    %v3657 = vpop.f32.mrb[0].mxu0
    %v3658 = vadd.f32 %v2605, %v3657
    %v3659 = vpop.f32.mrb[0].mxu0
    %3660 = vmatprep.mubr.f32.mxu0 0.0
    %3661 = vmatmul.mubr.f32.gmra.mrb[0].mxu0 %v2969
    %v3662 = vpop.f32.mrb[0].mxu0
    %v3663 = vadd.f32 %v2605, %v3662
    %v3664 = vpop.f32.mrb[0].mxu0
    %3665 = vmatprep.mubr.f32.mxu0 0.0
    %3666 = vmatmul.mubr.f32.gmra.mrb[0].mxu0 %v2972
    %v3667 = vpop.f32.mrb[0].mxu0
    %v3668 = vadd.f32 %v2605, %v3667
    %v3669 = vpop.f32.mrb[0].mxu0
    %3670 = vmatprep.mubr.f32.mxu0 0.0
    %3671 = vmatmul.mubr.f32.gmra.mrb[0].mxu0 %v2975
    %v3672 = vpop.f32.mrb[0].mxu0
    %v3673 = vadd.f32 %v2605, %v3672
    %v3674 = vpop.f32.mrb[0].mxu0
    %3675 = vmatprep.mubr.f32.mxu0 0.0
    %3676 = vmatmul.mubr.f32.gmra.mrb[0].mxu0 %v2978
    %v3677 = vpop.f32.mrb[0].mxu0
    %v3678 = vadd.f32 %v2605, %v3677
    %v3679 = vpop.f32.mrb[0].mxu0
    %3680 = vmatprep.mubr.f32.mxu0 0.0
    %3681 = vmatmul.mubr.f32.gmra.mrb[0].mxu0 %v2981
    %v3682 = vpop.f32.mrb[0].mxu0
    %v3683 = vadd.f32 %v2605, %v3682
    %v3684 = vpop.f32.mrb[0].mxu0
    %3685 = vmatprep.mubr.f32.mxu0 0.0
    %3686 = vmatmul.mubr.f32.gmra.mrb[0].mxu0 %v2984
    %v3687 = vpop.f32.mrb[0].mxu0
    %v3688 = vadd.f32 %v2605, %v3687
    %v3689 = vpop.f32.mrb[0].mxu0
    %3690 = vmatprep.mubr.f32.mxu0 0.0
    %3691 = vmatmul.mubr.f32.gmra.mrb[0].mxu0 %v2987
    %v3692 = vpop.f32.mrb[0].mxu0
    %v3693 = vadd.f32 %v2605, %v3692
    %v3694 = vpop.f32.mrb[0].mxu0
    %3695 = vmatprep.mubr.f32.mxu0 0.0
    %3696 = vmatmul.mubr.f32.gmra.mrb[0].mxu0 %v2990
    %v3697 = vpop.f32.mrb[0].mxu0
    %v3698 = vadd.f32 %v2605, %v3697
    %v3699 = vpop.f32.mrb[0].mxu0
    %3700 = vdwg.mxu0
    %v3701 = vmax.f32 %v3063, 0.0
    %v3702 = vmax.f32 %v3068, 0.0
    %v3703 = vmax.f32 %v3073, 0.0
    %v3704 = vmax.f32 %v3078, 0.0
    %v3705 = vmax.f32 %v3083, 0.0
    %v3706 = vmax.f32 %v3088, 0.0
    %v3707 = vmax.f32 %v3093, 0.0
    %v3708 = vmax.f32 %v3098, 0.0
    %v3709 = vmax.f32 %v3103, 0.0
    %v3710 = vmax.f32 %v3108, 0.0
    %v3711 = vmax.f32 %v3113, 0.0
    %v3712 = vmax.f32 %v3118, 0.0
    %v3713 = vmax.f32 %v3123, 0.0
    %v3714 = vmax.f32 %v3128, 0.0
    %v3715 = vmax.f32 %v3133, 0.0
    %v3716 = vmax.f32 %v3138, 0.0
    %v3717 = vmax.f32 %v3143, 0.0
    %v3718 = vmax.f32 %v3148, 0.0
    %v3719 = vmax.f32 %v3153, 0.0
    %v3720 = vmax.f32 %v3158, 0.0
    %v3721 = vmax.f32 %v3163, 0.0
    %v3722 = vmax.f32 %v3168, 0.0
    %v3723 = vmax.f32 %v3173, 0.0
    %v3724 = vmax.f32 %v3178, 0.0
    %v3725 = vmax.f32 %v3183, 0.0
    %v3726 = vmax.f32 %v3188, 0.0
    %v3727 = vmax.f32 %v3193, 0.0
    %v3728 = vmax.f32 %v3198, 0.0
    %v3729 = vmax.f32 %v3203, 0.0
    %v3730 = vmax.f32 %v3208, 0.0
    %v3731 = vmax.f32 %v3213, 0.0
    %v3732 = vmax.f32 %v3218, 0.0
    %v3733 = vmax.f32 %v3223, 0.0
    %v3734 = vmax.f32 %v3228, 0.0
    %v3735 = vmax.f32 %v3233, 0.0
    %v3736 = vmax.f32 %v3238, 0.0
    %v3737 = vmax.f32 %v3243, 0.0
    %v3738 = vmax.f32 %v3248, 0.0
    %v3739 = vmax.f32 %v3253, 0.0
    %v3740 = vmax.f32 %v3258, 0.0
    %v3741 = vmax.f32 %v3263, 0.0
    %v3742 = vmax.f32 %v3268, 0.0
    %v3743 = vmax.f32 %v3273, 0.0
    %v3744 = vmax.f32 %v3278, 0.0
    %v3745 = vmax.f32 %v3283, 0.0
    %v3746 = vmax.f32 %v3288, 0.0
    %v3747 = vmax.f32 %v3293, 0.0
    %v3748 = vmax.f32 %v3298, 0.0
    %v3749 = vmax.f32 %v3303, 0.0
    %v3750 = vmax.f32 %v3308, 0.0
    %v3751 = vmax.f32 %v3313, 0.0
    %v3752 = vmax.f32 %v3318, 0.0
    %v3753 = vmax.f32 %v3323, 0.0
    %v3754 = vmax.f32 %v3328, 0.0
    %v3755 = vmax.f32 %v3333, 0.0
    %v3756 = vmax.f32 %v3338, 0.0
    %v3757 = vmax.f32 %v3343, 0.0
    %v3758 = vmax.f32 %v3348, 0.0
    %v3759 = vmax.f32 %v3353, 0.0
    %v3760 = vmax.f32 %v3358, 0.0
    %v3761 = vmax.f32 %v3363, 0.0
    %v3762 = vmax.f32 %v3368, 0.0
    %v3763 = vmax.f32 %v3373, 0.0
    %v3764 = vmax.f32 %v3378, 0.0
    %v3765 = vmax.f32 %v3383, 0.0
    %v3766 = vmax.f32 %v3388, 0.0
    %v3767 = vmax.f32 %v3393, 0.0
    %v3768 = vmax.f32 %v3398, 0.0
    %v3769 = vmax.f32 %v3403, 0.0
    %v3770 = vmax.f32 %v3408, 0.0
    %v3771 = vmax.f32 %v3413, 0.0
    %v3772 = vmax.f32 %v3418, 0.0
    %v3773 = vmax.f32 %v3423, 0.0
    %v3774 = vmax.f32 %v3428, 0.0
    %v3775 = vmax.f32 %v3433, 0.0
    %v3776 = vmax.f32 %v3438, 0.0
    %v3777 = vmax.f32 %v3443, 0.0
    %v3778 = vmax.f32 %v3448, 0.0
    %v3779 = vmax.f32 %v3453, 0.0
    %v3780 = vmax.f32 %v3458, 0.0
    %v3781 = vmax.f32 %v3463, 0.0
    %v3782 = vmax.f32 %v3468, 0.0
    %v3783 = vmax.f32 %v3473, 0.0
    %v3784 = vmax.f32 %v3478, 0.0
    %v3785 = vmax.f32 %v3483, 0.0
    %v3786 = vmax.f32 %v3488, 0.0
    %v3787 = vmax.f32 %v3493, 0.0
    %v3788 = vmax.f32 %v3498, 0.0
    %v3789 = vmax.f32 %v3503, 0.0
    %v3790 = vmax.f32 %v3508, 0.0
    %v3791 = vmax.f32 %v3513, 0.0
    %v3792 = vmax.f32 %v3518, 0.0
    %v3793 = vmax.f32 %v3523, 0.0
    %v3794 = vmax.f32 %v3528, 0.0
    %v3795 = vmax.f32 %v3533, 0.0
    %v3796 = vmax.f32 %v3538, 0.0
    %v3797 = vmax.f32 %v3543, 0.0
    %v3798 = vmax.f32 %v3548, 0.0
    %v3799 = vmax.f32 %v3553, 0.0
    %v3800 = vmax.f32 %v3558, 0.0
    %v3801 = vmax.f32 %v3563, 0.0
    %v3802 = vmax.f32 %v3568, 0.0
    %v3803 = vmax.f32 %v3573, 0.0
    %v3804 = vmax.f32 %v3578, 0.0
    %v3805 = vmax.f32 %v3583, 0.0
    %v3806 = vmax.f32 %v3588, 0.0
    %v3807 = vmax.f32 %v3593, 0.0
    %v3808 = vmax.f32 %v3598, 0.0
    %v3809 = vmax.f32 %v3603, 0.0
    %v3810 = vmax.f32 %v3608, 0.0
    %v3811 = vmax.f32 %v3613, 0.0
    %v3812 = vmax.f32 %v3618, 0.0
    %v3813 = vmax.f32 %v3623, 0.0
    %v3814 = vmax.f32 %v3628, 0.0
    %v3815 = vmax.f32 %v3633, 0.0
    %v3816 = vmax.f32 %v3638, 0.0
    %v3817 = vmax.f32 %v3643, 0.0
    %v3818 = vmax.f32 %v3648, 0.0
    %v3819 = vmax.f32 %v3653, 0.0
    %v3820 = vmax.f32 %v3658, 0.0
    %v3821 = vmax.f32 %v3663, 0.0
    %v3822 = vmax.f32 %v3668, 0.0
    %v3823 = vmax.f32 %v3673, 0.0
    %v3824 = vmax.f32 %v3678, 0.0
    %v3825 = vmax.f32 %v3683, 0.0
    %v3826 = vmax.f32 %v3688, 0.0
    %v3827 = vmax.f32 %v3693, 0.0
    %v3828 = vmax.f32 %v3698, 0.0
    %v3829 = vmax.f32 %v3701, %v3702
    %v3830 = vmax.f32 %v3703, %v3704
    %v3831 = vmax.f32 %v3705, %v3706
    %v3832 = vmax.f32 %v3707, %v3708
    %v3833 = vmax.f32 %v3709, %v3710
    %v3834 = vmax.f32 %v3711, %v3712
    %v3835 = vmax.f32 %v3713, %v3714
    %v3836 = vmax.f32 %v3715, %v3716
    %v3837 = vmax.f32 %v3717, %v3718
    %v3838 = vmax.f32 %v3719, %v3720
    %v3839 = vmax.f32 %v3721, %v3722
    %v3840 = vmax.f32 %v3723, %v3724
    %v3841 = vmax.f32 %v3725, %v3726
    %v3842 = vmax.f32 %v3727, %v3728
    %v3843 = vmax.f32 %v3729, %v3730
    %v3844 = vmax.f32 %v3731, %v3732
    %v3845 = vmax.f32 %v3733, %v3734
    %v3846 = vmax.f32 %v3735, %v3736
    %v3847 = vmax.f32 %v3737, %v3738
    %v3848 = vmax.f32 %v3739, %v3740
    %v3849 = vmax.f32 %v3741, %v3742
    %v3850 = vmax.f32 %v3743, %v3744
    %v3851 = vmax.f32 %v3745, %v3746
    %v3852 = vmax.f32 %v3747, %v3748
    %v3853 = vmax.f32 %v3749, %v3750
    %v3854 = vmax.f32 %v3751, %v3752
    %v3855 = vmax.f32 %v3753, %v3754
    %v3856 = vmax.f32 %v3755, %v3756
    %v3857 = vmax.f32 %v3757, %v3758
    %v3858 = vmax.f32 %v3759, %v3760
    %v3859 = vmax.f32 %v3761, %v3762
    %v3860 = vmax.f32 %v3763, %v3764
    %v3861 = vmax.f32 %v3765, %v3766
    %v3862 = vmax.f32 %v3767, %v3768
    %v3863 = vmax.f32 %v3769, %v3770
    %v3864 = vmax.f32 %v3771, %v3772
    %v3865 = vmax.f32 %v3773, %v3774
    %v3866 = vmax.f32 %v3775, %v3776
    %v3867 = vmax.f32 %v3777, %v3778
    %v3868 = vmax.f32 %v3779, %v3780
    %v3869 = vmax.f32 %v3781, %v3782
    %v3870 = vmax.f32 %v3783, %v3784
    %v3871 = vmax.f32 %v3785, %v3786
    %v3872 = vmax.f32 %v3787, %v3788
    %v3873 = vmax.f32 %v3789, %v3790
    %v3874 = vmax.f32 %v3791, %v3792
    %v3875 = vmax.f32 %v3793, %v3794
    %v3876 = vmax.f32 %v3795, %v3796
    %v3877 = vmax.f32 %v3797, %v3798
    %v3878 = vmax.f32 %v3799, %v3800
    %v3879 = vmax.f32 %v3801, %v3802
    %v3880 = vmax.f32 %v3803, %v3804
    %v3881 = vmax.f32 %v3805, %v3806
    %v3882 = vmax.f32 %v3807, %v3808
    %v3883 = vmax.f32 %v3809, %v3810
    %v3884 = vmax.f32 %v3811, %v3812
    %v3885 = vmax.f32 %v3813, %v3814
    %v3886 = vmax.f32 %v3815, %v3816
    %v3887 = vmax.f32 %v3817, %v3818
    %v3888 = vmax.f32 %v3819, %v3820
    %v3889 = vmax.f32 %v3821, %v3822
    %v3890 = vmax.f32 %v3823, %v3824
    %v3891 = vmax.f32 %v3825, %v3826
    %v3892 = vmax.f32 %v3827, %v3828
    %v3893 = vsel %vm546, 0.0, %v3892
    %v3894 = vsel %vm547, 0.0, %v3829
    %v3895 = vsel %vm548, 0.0, %v3830
    %v3896 = vsel %vm549, 0.0, %v3831
    %v3897 = vsel %vm550, 0.0, %v3832
    %v3898 = vsel %vm551, 0.0, %v3833
    %v3899 = vsel %vm552, 0.0, %v3834
    %v3900 = vsel %vm553, 0.0, %v3835
    %v3901 = vsel %vm554, 0.0, %v3836
    %v3902 = vsel %vm555, 0.0, %v3837
    %v3903 = vsel %vm556, 0.0, %v3838
    %v3904 = vsel %vm557, 0.0, %v3839
    %v3905 = vsel %vm558, 0.0, %v3840
    %v3906 = vsel %vm559, 0.0, %v3841
    %v3907 = vsel %vm560, 0.0, %v3842
    %v3908 = vsel %vm561, 0.0, %v3843
    %v3909 = vsel %vm562, 0.0, %v3844
    %v3910 = vsel %vm563, 0.0, %v3845
    %v3911 = vsel %vm564, 0.0, %v3846
    %v3912 = vsel %vm565, 0.0, %v3847
    %v3913 = vsel %vm566, 0.0, %v3848
    %v3914 = vsel %vm567, 0.0, %v3849
    %v3915 = vsel %vm568, 0.0, %v3850
    %v3916 = vsel %vm569, 0.0, %v3851
    %v3917 = vsel %vm570, 0.0, %v3852
    %v3918 = vsel %vm571, 0.0, %v3853
    %v3919 = vsel %vm572, 0.0, %v3854
    %v3920 = vsel %vm573, 0.0, %v3855
    %v3921 = vsel %vm574, 0.0, %v3856
    %v3922 = vsel %vm575, 0.0, %v3857
    %v3923 = vsel %vm576, 0.0, %v3858
    %v3924 = vsel %vm577, 0.0, %v3859
    %v3925 = vsel %vm578, 0.0, %v3860
    %v3926 = vsel %vm579, 0.0, %v3861
    %v3927 = vsel %vm580, 0.0, %v3862
    %v3928 = vsel %vm581, 0.0, %v3863
    %v3929 = vsel %vm582, 0.0, %v3864
    %v3930 = vsel %vm583, 0.0, %v3865
    %v3931 = vsel %vm584, 0.0, %v3866
    %v3932 = vsel %vm585, 0.0, %v3867
    %v3933 = vsel %vm586, 0.0, %v3868
    %v3934 = vsel %vm587, 0.0, %v3869
    %v3935 = vsel %vm588, 0.0, %v3870
    %v3936 = vsel %vm589, 0.0, %v3871
    %v3937 = vsel %vm590, 0.0, %v3872
    %v3938 = vsel %vm591, 0.0, %v3873
    %v3939 = vsel %vm592, 0.0, %v3874
    %v3940 = vsel %vm593, 0.0, %v3875
    %v3941 = vsel %vm594, 0.0, %v3876
    %v3942 = vsel %vm595, 0.0, %v3877
    %v3943 = vsel %vm596, 0.0, %v3878
    %v3944 = vsel %vm597, 0.0, %v3879
    %v3945 = vsel %vm598, 0.0, %v3880
    %v3946 = vsel %vm599, 0.0, %v3881
    %v3947 = vsel %vm600, 0.0, %v3882
    %v3948 = vsel %vm601, 0.0, %v3883
    %v3949 = vsel %vm602, 0.0, %v3884
    %v3950 = vsel %vm603, 0.0, %v3885
    %v3951 = vsel %vm604, 0.0, %v3886
    %v3952 = vsel %vm605, 0.0, %v3887
    %v3953 = vsel %vm606, 0.0, %v3888
    %v3954 = vsel %vm607, 0.0, %v3889
    %v3955 = vsel %vm608, 0.0, %v3890
    %v3956 = vsel %vm609, 0.0, %v3891
    %vm3957 = vcmp.ge.s32.totalorder %v162, 504
    %vm3958 = vcmp.ge.s32.totalorder %v163, 504
    %vm3959 = vcmp.ge.s32.totalorder %v164, 504
    %vm3960 = vcmp.ge.s32.totalorder %v165, 504
    %vm3961 = vcmp.ge.s32.totalorder %v166, 504
    %vm3962 = vcmp.ge.s32.totalorder %v167, 504
    %vm3963 = vcmp.ge.s32.totalorder %v168, 504
    %vm3964 = vcmp.ge.s32.totalorder %v169, 504
    %vm3965 = vcmp.ge.s32.totalorder %v170, 504
    %vm3966 = vcmp.ge.s32.totalorder %v171, 504
    %vm3967 = vcmp.ge.s32.totalorder %v172, 504
    %vm3968 = vcmp.ge.s32.totalorder %v173, 504
    %vm3969 = vcmp.ge.s32.totalorder %v174, 504
    %vm3970 = vcmp.ge.s32.totalorder %v175, 504
    %vm3971 = vcmp.ge.s32.totalorder %v176, 504
    %vm3972 = vcmp.ge.s32.totalorder %v177, 504
    %vm3973 = vcmp.ge.s32.totalorder %v178, 504
    %vm3974 = vcmp.ge.s32.totalorder %v179, 504
    %vm3975 = vcmp.ge.s32.totalorder %v180, 504
    %vm3976 = vcmp.ge.s32.totalorder %v181, 504
    %vm3977 = vcmp.ge.s32.totalorder %v182, 504
    %vm3978 = vcmp.ge.s32.totalorder %v183, 504
    %vm3979 = vcmp.ge.s32.totalorder %v184, 504
    %vm3980 = vcmp.ge.s32.totalorder %v185, 504
    %vm3981 = vcmp.ge.s32.totalorder %v186, 504
    %vm3982 = vcmp.ge.s32.totalorder %v187, 504
    %vm3983 = vcmp.ge.s32.totalorder %v188, 504
    %vm3984 = vcmp.ge.s32.totalorder %v189, 504
    %vm3985 = vcmp.ge.s32.totalorder %v190, 504
    %vm3986 = vcmp.ge.s32.totalorder %v191, 504
    %vm3987 = vcmp.ge.s32.totalorder %v192, 504
    %vm3988 = vcmp.ge.s32.totalorder %v193, 504
    %vm3989 = vcmp.ge.s32.totalorder %v194, 504
    %vm3990 = vcmp.ge.s32.totalorder %v195, 504
    %vm3991 = vcmp.ge.s32.totalorder %v196, 504
    %vm3992 = vcmp.ge.s32.totalorder %v197, 504
    %vm3993 = vcmp.ge.s32.totalorder %v198, 504
    %vm3994 = vcmp.ge.s32.totalorder %v199, 504
    %vm3995 = vcmp.ge.s32.totalorder %v200, 504
    %vm3996 = vcmp.ge.s32.totalorder %v201, 504
    %vm3997 = vcmp.ge.s32.totalorder %v202, 504
    %vm3998 = vcmp.ge.s32.totalorder %v203, 504
    %vm3999 = vcmp.ge.s32.totalorder %v204, 504
    %vm4000 = vcmp.ge.s32.totalorder %v205, 504
    %vm4001 = vcmp.ge.s32.totalorder %v206, 504
    %vm4002 = vcmp.ge.s32.totalorder %v207, 504
    %vm4003 = vcmp.ge.s32.totalorder %v208, 504
    %vm4004 = vcmp.ge.s32.totalorder %v209, 504
    %vm4005 = vcmp.ge.s32.totalorder %v210, 504
    %vm4006 = vcmp.ge.s32.totalorder %v211, 504
    %vm4007 = vcmp.ge.s32.totalorder %v212, 504
    %vm4008 = vcmp.ge.s32.totalorder %v213, 504
    %vm4009 = vcmp.ge.s32.totalorder %v214, 504
    %vm4010 = vcmp.ge.s32.totalorder %v215, 504
    %vm4011 = vcmp.ge.s32.totalorder %v216, 504
    %vm4012 = vcmp.ge.s32.totalorder %v217, 504
    %vm4013 = vcmp.ge.s32.totalorder %v218, 504
    %vm4014 = vcmp.ge.s32.totalorder %v219, 504
    %vm4015 = vcmp.ge.s32.totalorder %v220, 504
    %vm4016 = vcmp.ge.s32.totalorder %v221, 504
    %vm4017 = vcmp.ge.s32.totalorder %v222, 504
    %vm4018 = vcmp.ge.s32.totalorder %v223, 504
    %vm4019 = vcmp.ge.s32.totalorder %v224, 504
    %vm4020 = vcmp.ge.s32.totalorder %v225, 504
    %v4021 = vsel %vm3957, 1, 0
    %v4022 = vsel %vm3958, 1, 0
    %v4023 = vsel %vm3959, 1, 0
    %v4024 = vsel %vm3960, 1, 0
    %v4025 = vsel %vm3961, 1, 0
    %v4026 = vsel %vm3962, 1, 0
    %v4027 = vsel %vm3963, 1, 0
    %v4028 = vsel %vm3964, 1, 0
    %v4029 = vsel %vm3965, 1, 0
    %v4030 = vsel %vm3966, 1, 0
    %v4031 = vsel %vm3967, 1, 0
    %v4032 = vsel %vm3968, 1, 0
    %v4033 = vsel %vm3969, 1, 0
    %v4034 = vsel %vm3970, 1, 0
    %v4035 = vsel %vm3971, 1, 0
    %v4036 = vsel %vm3972, 1, 0
    %v4037 = vsel %vm3973, 1, 0
    %v4038 = vsel %vm3974, 1, 0
    %v4039 = vsel %vm3975, 1, 0
    %v4040 = vsel %vm3976, 1, 0
    %v4041 = vsel %vm3977, 1, 0
    %v4042 = vsel %vm3978, 1, 0
    %v4043 = vsel %vm3979, 1, 0
    %v4044 = vsel %vm3980, 1, 0
    %v4045 = vsel %vm3981, 1, 0
    %v4046 = vsel %vm3982, 1, 0
    %v4047 = vsel %vm3983, 1, 0
    %v4048 = vsel %vm3984, 1, 0
    %v4049 = vsel %vm3985, 1, 0
    %v4050 = vsel %vm3986, 1, 0
    %v4051 = vsel %vm3987, 1, 0
    %v4052 = vsel %vm3988, 1, 0
    %v4053 = vsel %vm3989, 1, 0
    %v4054 = vsel %vm3990, 1, 0
    %v4055 = vsel %vm3991, 1, 0
    %v4056 = vsel %vm3992, 1, 0
    %v4057 = vsel %vm3993, 1, 0
    %v4058 = vsel %vm3994, 1, 0
    %v4059 = vsel %vm3995, 1, 0
    %v4060 = vsel %vm3996, 1, 0
    %v4061 = vsel %vm3997, 1, 0
    %v4062 = vsel %vm3998, 1, 0
    %v4063 = vsel %vm3999, 1, 0
    %v4064 = vsel %vm4000, 1, 0
    %v4065 = vsel %vm4001, 1, 0
    %v4066 = vsel %vm4002, 1, 0
    %v4067 = vsel %vm4003, 1, 0
    %v4068 = vsel %vm4004, 1, 0
    %v4069 = vsel %vm4005, 1, 0
    %v4070 = vsel %vm4006, 1, 0
    %v4071 = vsel %vm4007, 1, 0
    %v4072 = vsel %vm4008, 1, 0
    %v4073 = vsel %vm4009, 1, 0
    %v4074 = vsel %vm4010, 1, 0
    %v4075 = vsel %vm4011, 1, 0
    %v4076 = vsel %vm4012, 1, 0
    %v4077 = vsel %vm4013, 1, 0
    %v4078 = vsel %vm4014, 1, 0
    %v4079 = vsel %vm4015, 1, 0
    %v4080 = vsel %vm4016, 1, 0
    %v4081 = vsel %vm4017, 1, 0
    %v4082 = vsel %vm4018, 1, 0
    %v4083 = vsel %vm4019, 1, 0
    %v4084 = vsel %vm4020, 1, 0
    %vm4085 = vcmp.eq.s32.totalorder %v4021, 1
    %vm4086 = vcmp.eq.s32.totalorder %v4022, 1
    %vm4087 = vcmp.eq.s32.totalorder %v4023, 1
    %vm4088 = vcmp.eq.s32.totalorder %v4024, 1
    %vm4089 = vcmp.eq.s32.totalorder %v4025, 1
    %vm4090 = vcmp.eq.s32.totalorder %v4026, 1
    %vm4091 = vcmp.eq.s32.totalorder %v4027, 1
    %vm4092 = vcmp.eq.s32.totalorder %v4028, 1
    %vm4093 = vcmp.eq.s32.totalorder %v4029, 1
    %vm4094 = vcmp.eq.s32.totalorder %v4030, 1
    %vm4095 = vcmp.eq.s32.totalorder %v4031, 1
    %vm4096 = vcmp.eq.s32.totalorder %v4032, 1
    %vm4097 = vcmp.eq.s32.totalorder %v4033, 1
    %vm4098 = vcmp.eq.s32.totalorder %v4034, 1
    %vm4099 = vcmp.eq.s32.totalorder %v4035, 1
    %vm4100 = vcmp.eq.s32.totalorder %v4036, 1
    %vm4101 = vcmp.eq.s32.totalorder %v4037, 1
    %vm4102 = vcmp.eq.s32.totalorder %v4038, 1
    %vm4103 = vcmp.eq.s32.totalorder %v4039, 1
    %vm4104 = vcmp.eq.s32.totalorder %v4040, 1
    %vm4105 = vcmp.eq.s32.totalorder %v4041, 1
    %vm4106 = vcmp.eq.s32.totalorder %v4042, 1
    %vm4107 = vcmp.eq.s32.totalorder %v4043, 1
    %vm4108 = vcmp.eq.s32.totalorder %v4044, 1
    %vm4109 = vcmp.eq.s32.totalorder %v4045, 1
    %vm4110 = vcmp.eq.s32.totalorder %v4046, 1
    %vm4111 = vcmp.eq.s32.totalorder %v4047, 1
    %vm4112 = vcmp.eq.s32.totalorder %v4048, 1
    %vm4113 = vcmp.eq.s32.totalorder %v4049, 1
    %vm4114 = vcmp.eq.s32.totalorder %v4050, 1
    %vm4115 = vcmp.eq.s32.totalorder %v4051, 1
    %vm4116 = vcmp.eq.s32.totalorder %v4052, 1
    %vm4117 = vcmp.eq.s32.totalorder %v4053, 1
    %vm4118 = vcmp.eq.s32.totalorder %v4054, 1
    %vm4119 = vcmp.eq.s32.totalorder %v4055, 1
    %vm4120 = vcmp.eq.s32.totalorder %v4056, 1
    %vm4121 = vcmp.eq.s32.totalorder %v4057, 1
    %vm4122 = vcmp.eq.s32.totalorder %v4058, 1
    %vm4123 = vcmp.eq.s32.totalorder %v4059, 1
    %vm4124 = vcmp.eq.s32.totalorder %v4060, 1
    %vm4125 = vcmp.eq.s32.totalorder %v4061, 1
    %vm4126 = vcmp.eq.s32.totalorder %v4062, 1
    %vm4127 = vcmp.eq.s32.totalorder %v4063, 1
    %vm4128 = vcmp.eq.s32.totalorder %v4064, 1
    %vm4129 = vcmp.eq.s32.totalorder %v4065, 1
    %vm4130 = vcmp.eq.s32.totalorder %v4066, 1
    %vm4131 = vcmp.eq.s32.totalorder %v4067, 1
    %vm4132 = vcmp.eq.s32.totalorder %v4068, 1
    %vm4133 = vcmp.eq.s32.totalorder %v4069, 1
    %vm4134 = vcmp.eq.s32.totalorder %v4070, 1
    %vm4135 = vcmp.eq.s32.totalorder %v4071, 1
    %vm4136 = vcmp.eq.s32.totalorder %v4072, 1
    %vm4137 = vcmp.eq.s32.totalorder %v4073, 1
    %vm4138 = vcmp.eq.s32.totalorder %v4074, 1
    %vm4139 = vcmp.eq.s32.totalorder %v4075, 1
    %vm4140 = vcmp.eq.s32.totalorder %v4076, 1
    %vm4141 = vcmp.eq.s32.totalorder %v4077, 1
    %vm4142 = vcmp.eq.s32.totalorder %v4078, 1
    %vm4143 = vcmp.eq.s32.totalorder %v4079, 1
    %vm4144 = vcmp.eq.s32.totalorder %v4080, 1
    %vm4145 = vcmp.eq.s32.totalorder %v4081, 1
    %vm4146 = vcmp.eq.s32.totalorder %v4082, 1
    %vm4147 = vcmp.eq.s32.totalorder %v4083, 1
    %vm4148 = vcmp.eq.s32.totalorder %v4084, 1
    %v4149 = vsel %vm4085, 0.0, %v3830
    %v4150 = vsel %vm4086, 0.0, %v3831
    %v4151 = vsel %vm4087, 0.0, %v3832
    %v4152 = vsel %vm4088, 0.0, %v3833
    %v4153 = vsel %vm4089, 0.0, %v3834
    %v4154 = vsel %vm4090, 0.0, %v3835
    %v4155 = vsel %vm4091, 0.0, %v3836
    %v4156 = vsel %vm4092, 0.0, %v3837
    %v4157 = vsel %vm4093, 0.0, %v3838
    %v4158 = vsel %vm4094, 0.0, %v3839
    %v4159 = vsel %vm4095, 0.0, %v3840
    %v4160 = vsel %vm4096, 0.0, %v3841
    %v4161 = vsel %vm4097, 0.0, %v3842
    %v4162 = vsel %vm4098, 0.0, %v3843
    %v4163 = vsel %vm4099, 0.0, %v3844
    %v4164 = vsel %vm4100, 0.0, %v3845
    %v4165 = vsel %vm4101, 0.0, %v3846
    %v4166 = vsel %vm4102, 0.0, %v3847
    %v4167 = vsel %vm4103, 0.0, %v3848
    %v4168 = vsel %vm4104, 0.0, %v3849
    %v4169 = vsel %vm4105, 0.0, %v3850
    %v4170 = vsel %vm4106, 0.0, %v3851
    %v4171 = vsel %vm4107, 0.0, %v3852
    %v4172 = vsel %vm4108, 0.0, %v3853
    %v4173 = vsel %vm4109, 0.0, %v3854
    %v4174 = vsel %vm4110, 0.0, %v3855
    %v4175 = vsel %vm4111, 0.0, %v3856
    %v4176 = vsel %vm4112, 0.0, %v3857
    %v4177 = vsel %vm4113, 0.0, %v3858
    %v4178 = vsel %vm4114, 0.0, %v3859
    %v4179 = vsel %vm4115, 0.0, %v3860
    %v4180 = vsel %vm4116, 0.0, %v3861
    %v4181 = vsel %vm4117, 0.0, %v3862
    %v4182 = vsel %vm4118, 0.0, %v3863
    %v4183 = vsel %vm4119, 0.0, %v3864
    %v4184 = vsel %vm4120, 0.0, %v3865
    %v4185 = vsel %vm4121, 0.0, %v3866
    %v4186 = vsel %vm4122, 0.0, %v3867
    %v4187 = vsel %vm4123, 0.0, %v3868
    %v4188 = vsel %vm4124, 0.0, %v3869
    %v4189 = vsel %vm4125, 0.0, %v3870
    %v4190 = vsel %vm4126, 0.0, %v3871
    %v4191 = vsel %vm4127, 0.0, %v3872
    %v4192 = vsel %vm4128, 0.0, %v3873
    %v4193 = vsel %vm4129, 0.0, %v3874
    %v4194 = vsel %vm4130, 0.0, %v3875
    %v4195 = vsel %vm4131, 0.0, %v3876
    %v4196 = vsel %vm4132, 0.0, %v3877
    %v4197 = vsel %vm4133, 0.0, %v3878
    %v4198 = vsel %vm4134, 0.0, %v3879
    %v4199 = vsel %vm4135, 0.0, %v3880
    %v4200 = vsel %vm4136, 0.0, %v3881
    %v4201 = vsel %vm4137, 0.0, %v3882
    %v4202 = vsel %vm4138, 0.0, %v3883
    %v4203 = vsel %vm4139, 0.0, %v3884
    %v4204 = vsel %vm4140, 0.0, %v3885
    %v4205 = vsel %vm4141, 0.0, %v3886
    %v4206 = vsel %vm4142, 0.0, %v3887
    %v4207 = vsel %vm4143, 0.0, %v3888
    %v4208 = vsel %vm4144, 0.0, %v3889
    %v4209 = vsel %vm4145, 0.0, %v3890
    %v4210 = vsel %vm4146, 0.0, %v3891
    %v4211 = vsel %vm4147, 0.0, %v3892
    %v4212 = vsel %vm4148, 0.0, %v3829
    %4277 = vrot.lane.b32.xlu0 %v3829, 18
    %v4278 = vpop.permute.xlu0 %4277
    %4279 = vrot.lane.b32.xlu0 %v3830, 18
    %v4280 = vpop.permute.xlu0 %4279
    %4281 = vrot.lane.b32.xlu0 %v3831, 18
    %v4282 = vpop.permute.xlu0 %4281
    %4283 = vrot.lane.b32.xlu0 %v3832, 18
    %v4284 = vpop.permute.xlu0 %4283
    %4285 = vrot.lane.b32.xlu0 %v3833, 18
    %v4286 = vpop.permute.xlu0 %4285
    %4287 = vrot.lane.b32.xlu0 %v3834, 18
    %v4288 = vpop.permute.xlu0 %4287
    %4289 = vrot.lane.b32.xlu0 %v3835, 18
    %v4290 = vpop.permute.xlu0 %4289
    %4291 = vrot.lane.b32.xlu0 %v3836, 18
    %v4292 = vpop.permute.xlu0 %4291
    %4293 = vrot.lane.b32.xlu0 %v3837, 18
    %v4294 = vpop.permute.xlu0 %4293
    %4295 = vrot.lane.b32.xlu0 %v3838, 18
    %v4296 = vpop.permute.xlu0 %4295
    %4297 = vrot.lane.b32.xlu0 %v3839, 18
    %v4298 = vpop.permute.xlu0 %4297
    %4299 = vrot.lane.b32.xlu0 %v3840, 18
    %v4300 = vpop.permute.xlu0 %4299
    %4301 = vrot.lane.b32.xlu0 %v3841, 18
    %v4302 = vpop.permute.xlu0 %4301
    %4303 = vrot.lane.b32.xlu0 %v3842, 18
    %v4304 = vpop.permute.xlu0 %4303
    %4305 = vrot.lane.b32.xlu0 %v3843, 18
    %v4306 = vpop.permute.xlu0 %4305
    %4307 = vrot.lane.b32.xlu0 %v3844, 18
    %v4308 = vpop.permute.xlu0 %4307
    %4309 = vrot.lane.b32.xlu0 %v3845, 18
    %v4310 = vpop.permute.xlu0 %4309
    %4311 = vrot.lane.b32.xlu0 %v3846, 18
    %v4312 = vpop.permute.xlu0 %4311
    %4313 = vrot.lane.b32.xlu0 %v3847, 18
    %v4314 = vpop.permute.xlu0 %4313
    %4315 = vrot.lane.b32.xlu0 %v3848, 18
    %v4316 = vpop.permute.xlu0 %4315
    %4317 = vrot.lane.b32.xlu0 %v3849, 18
    %v4318 = vpop.permute.xlu0 %4317
    %4319 = vrot.lane.b32.xlu0 %v3850, 18
    %v4320 = vpop.permute.xlu0 %4319
    %4321 = vrot.lane.b32.xlu0 %v3851, 18
    %v4322 = vpop.permute.xlu0 %4321
    %4323 = vrot.lane.b32.xlu0 %v3852, 18
    %v4324 = vpop.permute.xlu0 %4323
    %4325 = vrot.lane.b32.xlu0 %v3853, 18
    %v4326 = vpop.permute.xlu0 %4325
    %4327 = vrot.lane.b32.xlu0 %v3854, 18
    %v4328 = vpop.permute.xlu0 %4327
    %4329 = vrot.lane.b32.xlu0 %v3855, 18
    %v4330 = vpop.permute.xlu0 %4329
    %4331 = vrot.lane.b32.xlu0 %v3856, 18
    %v4332 = vpop.permute.xlu0 %4331
    %4333 = vrot.lane.b32.xlu0 %v3857, 18
    %v4334 = vpop.permute.xlu0 %4333
    %4335 = vrot.lane.b32.xlu0 %v3858, 18
    %v4336 = vpop.permute.xlu0 %4335
    %4337 = vrot.lane.b32.xlu0 %v3859, 18
    %v4338 = vpop.permute.xlu0 %4337
    %4339 = vrot.lane.b32.xlu0 %v3860, 18
    %v4340 = vpop.permute.xlu0 %4339
    %4341 = vrot.lane.b32.xlu0 %v3861, 18
    %v4342 = vpop.permute.xlu0 %4341
    %4343 = vrot.lane.b32.xlu0 %v3862, 18
    %v4344 = vpop.permute.xlu0 %4343
    %4345 = vrot.lane.b32.xlu0 %v3863, 18
    %v4346 = vpop.permute.xlu0 %4345
    %4347 = vrot.lane.b32.xlu0 %v3864, 18
    %v4348 = vpop.permute.xlu0 %4347
    %4349 = vrot.lane.b32.xlu0 %v3865, 18
    %v4350 = vpop.permute.xlu0 %4349
    %4351 = vrot.lane.b32.xlu0 %v3866, 18
    %v4352 = vpop.permute.xlu0 %4351
    %4353 = vrot.lane.b32.xlu0 %v3867, 18
    %v4354 = vpop.permute.xlu0 %4353
    %4355 = vrot.lane.b32.xlu0 %v3868, 18
    %v4356 = vpop.permute.xlu0 %4355
    %4357 = vrot.lane.b32.xlu0 %v3869, 18
    %v4358 = vpop.permute.xlu0 %4357
    %4359 = vrot.lane.b32.xlu0 %v3870, 18
    %v4360 = vpop.permute.xlu0 %4359
    %4361 = vrot.lane.b32.xlu0 %v3871, 18
    %v4362 = vpop.permute.xlu0 %4361
    %4363 = vrot.lane.b32.xlu0 %v3872, 18
    %v4364 = vpop.permute.xlu0 %4363
    %4365 = vrot.lane.b32.xlu0 %v3873, 18
    %v4366 = vpop.permute.xlu0 %4365
    %4367 = vrot.lane.b32.xlu0 %v3874, 18
    %v4368 = vpop.permute.xlu0 %4367
    %4369 = vrot.lane.b32.xlu0 %v3875, 18
    %v4370 = vpop.permute.xlu0 %4369
    %4371 = vrot.lane.b32.xlu0 %v3876, 18
    %v4372 = vpop.permute.xlu0 %4371
    %4373 = vrot.lane.b32.xlu0 %v3877, 18
    %v4374 = vpop.permute.xlu0 %4373
    %4375 = vrot.lane.b32.xlu0 %v3878, 18
    %v4376 = vpop.permute.xlu0 %4375
    %4377 = vrot.lane.b32.xlu0 %v3879, 18
    %v4378 = vpop.permute.xlu0 %4377
    %4379 = vrot.lane.b32.xlu0 %v3880, 18
    %v4380 = vpop.permute.xlu0 %4379
    %4381 = vrot.lane.b32.xlu0 %v3881, 18
    %v4382 = vpop.permute.xlu0 %4381
    %4383 = vrot.lane.b32.xlu0 %v3882, 18
    %v4384 = vpop.permute.xlu0 %4383
    %4385 = vrot.lane.b32.xlu0 %v3883, 18
    %v4386 = vpop.permute.xlu0 %4385
    %4387 = vrot.lane.b32.xlu0 %v3884, 18
    %v4388 = vpop.permute.xlu0 %4387
    %4389 = vrot.lane.b32.xlu0 %v3885, 18
    %v4390 = vpop.permute.xlu0 %4389
    %4391 = vrot.lane.b32.xlu0 %v3886, 18
    %v4392 = vpop.permute.xlu0 %4391
    %4393 = vrot.lane.b32.xlu0 %v3887, 18
    %v4394 = vpop.permute.xlu0 %4393
    %4395 = vrot.lane.b32.xlu0 %v3888, 18
    %v4396 = vpop.permute.xlu0 %4395
    %4397 = vrot.lane.b32.xlu0 %v3889, 18
    %v4398 = vpop.permute.xlu0 %4397
    %4399 = vrot.lane.b32.xlu0 %v3890, 18
    %v4400 = vpop.permute.xlu0 %4399
    %4401 = vrot.lane.b32.xlu0 %v3891, 18
    %v4402 = vpop.permute.xlu0 %4401
    %4403 = vrot.lane.b32.xlu0 %v3892, 18
    %v4404 = vpop.permute.xlu0 %4403
    %4533 = vrot.lane.b32.xlu0 %v4149, 36
    %v4534 = vpop.permute.xlu0 %4533
    %4535 = vrot.lane.b32.xlu0 %v4150, 36
    %v4536 = vpop.permute.xlu0 %4535
    %4537 = vrot.lane.b32.xlu0 %v4151, 36
    %v4538 = vpop.permute.xlu0 %4537
    %4539 = vrot.lane.b32.xlu0 %v4152, 36
    %v4540 = vpop.permute.xlu0 %4539
    %4541 = vrot.lane.b32.xlu0 %v4153, 36
    %v4542 = vpop.permute.xlu0 %4541
    %4543 = vrot.lane.b32.xlu0 %v4154, 36
    %v4544 = vpop.permute.xlu0 %4543
    %4545 = vrot.lane.b32.xlu0 %v4155, 36
    %v4546 = vpop.permute.xlu0 %4545
    %4547 = vrot.lane.b32.xlu0 %v4156, 36
    %v4548 = vpop.permute.xlu0 %4547
    %4549 = vrot.lane.b32.xlu0 %v4157, 36
    %v4550 = vpop.permute.xlu0 %4549
    %4551 = vrot.lane.b32.xlu0 %v4158, 36
    %v4552 = vpop.permute.xlu0 %4551
    %4553 = vrot.lane.b32.xlu0 %v4159, 36
    %v4554 = vpop.permute.xlu0 %4553
    %4555 = vrot.lane.b32.xlu0 %v4160, 36
    %v4556 = vpop.permute.xlu0 %4555
    %4557 = vrot.lane.b32.xlu0 %v4161, 36
    %v4558 = vpop.permute.xlu0 %4557
    %4559 = vrot.lane.b32.xlu0 %v4162, 36
    %v4560 = vpop.permute.xlu0 %4559
    %4561 = vrot.lane.b32.xlu0 %v4163, 36
    %v4562 = vpop.permute.xlu0 %4561
    %4563 = vrot.lane.b32.xlu0 %v4164, 36
    %v4564 = vpop.permute.xlu0 %4563
    %4565 = vrot.lane.b32.xlu0 %v4165, 36
    %v4566 = vpop.permute.xlu0 %4565
    %4567 = vrot.lane.b32.xlu0 %v4166, 36
    %v4568 = vpop.permute.xlu0 %4567
    %4569 = vrot.lane.b32.xlu0 %v4167, 36
    %v4570 = vpop.permute.xlu0 %4569
    %4571 = vrot.lane.b32.xlu0 %v4168, 36
    %v4572 = vpop.permute.xlu0 %4571
    %4573 = vrot.lane.b32.xlu0 %v4169, 36
    %v4574 = vpop.permute.xlu0 %4573
    %4575 = vrot.lane.b32.xlu0 %v4170, 36
    %v4576 = vpop.permute.xlu0 %4575
    %4577 = vrot.lane.b32.xlu0 %v4171, 36
    %v4578 = vpop.permute.xlu0 %4577
    %4579 = vrot.lane.b32.xlu0 %v4172, 36
    %v4580 = vpop.permute.xlu0 %4579
    %4581 = vrot.lane.b32.xlu0 %v4173, 36
    %v4582 = vpop.permute.xlu0 %4581
    %4583 = vrot.lane.b32.xlu0 %v4174, 36
    %v4584 = vpop.permute.xlu0 %4583
    %4585 = vrot.lane.b32.xlu0 %v4175, 36
    %v4586 = vpop.permute.xlu0 %4585
    %4587 = vrot.lane.b32.xlu0 %v4176, 36
    %v4588 = vpop.permute.xlu0 %4587
    %4589 = vrot.lane.b32.xlu0 %v4177, 36
    %v4590 = vpop.permute.xlu0 %4589
    %4591 = vrot.lane.b32.xlu0 %v4178, 36
    %v4592 = vpop.permute.xlu0 %4591
    %4593 = vrot.lane.b32.xlu0 %v4179, 36
    %v4594 = vpop.permute.xlu0 %4593
    %4595 = vrot.lane.b32.xlu0 %v4180, 36
    %v4596 = vpop.permute.xlu0 %4595
    %4597 = vrot.lane.b32.xlu0 %v4181, 36
    %v4598 = vpop.permute.xlu0 %4597
    %4599 = vrot.lane.b32.xlu0 %v4182, 36
    %v4600 = vpop.permute.xlu0 %4599
    %4601 = vrot.lane.b32.xlu0 %v4183, 36
    %v4602 = vpop.permute.xlu0 %4601
    %4603 = vrot.lane.b32.xlu0 %v4184, 36
    %v4604 = vpop.permute.xlu0 %4603
    %4605 = vrot.lane.b32.xlu0 %v4185, 36
    %v4606 = vpop.permute.xlu0 %4605
    %4607 = vrot.lane.b32.xlu0 %v4186, 36
    %v4608 = vpop.permute.xlu0 %4607
    %4609 = vrot.lane.b32.xlu0 %v4187, 36
    %v4610 = vpop.permute.xlu0 %4609
    %4611 = vrot.lane.b32.xlu0 %v4188, 36
    %v4612 = vpop.permute.xlu0 %4611
    %4613 = vrot.lane.b32.xlu0 %v4189, 36
    %v4614 = vpop.permute.xlu0 %4613
    %4615 = vrot.lane.b32.xlu0 %v4190, 36
    %v4616 = vpop.permute.xlu0 %4615
    %4617 = vrot.lane.b32.xlu0 %v4191, 36
    %v4618 = vpop.permute.xlu0 %4617
    %4619 = vrot.lane.b32.xlu0 %v4192, 36
    %v4620 = vpop.permute.xlu0 %4619
    %4621 = vrot.lane.b32.xlu0 %v4193, 36
    %v4622 = vpop.permute.xlu0 %4621
    %4623 = vrot.lane.b32.xlu0 %v4194, 36
    %v4624 = vpop.permute.xlu0 %4623
    %4625 = vrot.lane.b32.xlu0 %v4195, 36
    %v4626 = vpop.permute.xlu0 %4625
    %4627 = vrot.lane.b32.xlu0 %v4196, 36
    %v4628 = vpop.permute.xlu0 %4627
    %4629 = vrot.lane.b32.xlu0 %v4197, 36
    %v4630 = vpop.permute.xlu0 %4629
    %4631 = vrot.lane.b32.xlu0 %v4198, 36
    %v4632 = vpop.permute.xlu0 %4631
    %4633 = vrot.lane.b32.xlu0 %v4199, 36
    %v4634 = vpop.permute.xlu0 %4633
    %4635 = vrot.lane.b32.xlu0 %v4200, 36
    %v4636 = vpop.permute.xlu0 %4635
    %4637 = vrot.lane.b32.xlu0 %v4201, 36
    %v4638 = vpop.permute.xlu0 %4637
    %4639 = vrot.lane.b32.xlu0 %v4202, 36
    %v4640 = vpop.permute.xlu0 %4639
    %4641 = vrot.lane.b32.xlu0 %v4203, 36
    %v4642 = vpop.permute.xlu0 %4641
    %4643 = vrot.lane.b32.xlu0 %v4204, 36
    %v4644 = vpop.permute.xlu0 %4643
    %4645 = vrot.lane.b32.xlu0 %v4205, 36
    %v4646 = vpop.permute.xlu0 %4645
    %4647 = vrot.lane.b32.xlu0 %v4206, 36
    %v4648 = vpop.permute.xlu0 %4647
    %4649 = vrot.lane.b32.xlu0 %v4207, 36
    %v4650 = vpop.permute.xlu0 %4649
    %4651 = vrot.lane.b32.xlu0 %v4208, 36
    %v4652 = vpop.permute.xlu0 %4651
    %4653 = vrot.lane.b32.xlu0 %v4209, 36
    %v4654 = vpop.permute.xlu0 %4653
    %4655 = vrot.lane.b32.xlu0 %v4210, 36
    %v4656 = vpop.permute.xlu0 %4655
    %4657 = vrot.lane.b32.xlu0 %v4211, 36
    %v4658 = vpop.permute.xlu0 %4657
    %4659 = vrot.lane.b32.xlu0 %v4212, 36
    %v4660 = vpop.permute.xlu0 %4659
    %v4725 = vsel %vm2467, %v3893, %v4278
    %v4726 = vsel %vm2467, %v3894, %v4280
    %v4727 = vsel %vm2467, %v3895, %v4282
    %v4728 = vsel %vm2467, %v3896, %v4284
    %v4729 = vsel %vm2467, %v3897, %v4286
    %v4730 = vsel %vm2467, %v3898, %v4288
    %v4731 = vsel %vm2467, %v3899, %v4290
    %v4732 = vsel %vm2467, %v3900, %v4292
    %v4733 = vsel %vm2467, %v3901, %v4294
    %v4734 = vsel %vm2467, %v3902, %v4296
    %v4735 = vsel %vm2467, %v3903, %v4298
    %v4736 = vsel %vm2467, %v3904, %v4300
    %v4737 = vsel %vm2467, %v3905, %v4302
    %v4738 = vsel %vm2467, %v3906, %v4304
    %v4739 = vsel %vm2467, %v3907, %v4306
    %v4740 = vsel %vm2467, %v3908, %v4308
    %v4741 = vsel %vm2467, %v3909, %v4310
    %v4742 = vsel %vm2467, %v3910, %v4312
    %v4743 = vsel %vm2467, %v3911, %v4314
    %v4744 = vsel %vm2467, %v3912, %v4316
    %v4745 = vsel %vm2467, %v3913, %v4318
    %v4746 = vsel %vm2467, %v3914, %v4320
    %v4747 = vsel %vm2467, %v3915, %v4322
    %v4748 = vsel %vm2467, %v3916, %v4324
    %v4749 = vsel %vm2467, %v3917, %v4326
    %v4750 = vsel %vm2467, %v3918, %v4328
    %v4751 = vsel %vm2467, %v3919, %v4330
    %v4752 = vsel %vm2467, %v3920, %v4332
    %v4753 = vsel %vm2467, %v3921, %v4334
    %v4754 = vsel %vm2467, %v3922, %v4336
    %v4755 = vsel %vm2467, %v3923, %v4338
    %v4756 = vsel %vm2467, %v3924, %v4340
    %v4757 = vsel %vm2467, %v3925, %v4342
    %v4758 = vsel %vm2467, %v3926, %v4344
    %v4759 = vsel %vm2467, %v3927, %v4346
    %v4760 = vsel %vm2467, %v3928, %v4348
    %v4761 = vsel %vm2467, %v3929, %v4350
    %v4762 = vsel %vm2467, %v3930, %v4352
    %v4763 = vsel %vm2467, %v3931, %v4354
    %v4764 = vsel %vm2467, %v3932, %v4356
    %v4765 = vsel %vm2467, %v3933, %v4358
    %v4766 = vsel %vm2467, %v3934, %v4360
    %v4767 = vsel %vm2467, %v3935, %v4362
    %v4768 = vsel %vm2467, %v3936, %v4364
    %v4769 = vsel %vm2467, %v3937, %v4366
    %v4770 = vsel %vm2467, %v3938, %v4368
    %v4771 = vsel %vm2467, %v3939, %v4370
    %v4772 = vsel %vm2467, %v3940, %v4372
    %v4773 = vsel %vm2467, %v3941, %v4374
    %v4774 = vsel %vm2467, %v3942, %v4376
    %v4775 = vsel %vm2467, %v3943, %v4378
    %v4776 = vsel %vm2467, %v3944, %v4380
    %v4777 = vsel %vm2467, %v3945, %v4382
    %v4778 = vsel %vm2467, %v3946, %v4384
    %v4779 = vsel %vm2467, %v3947, %v4386
    %v4780 = vsel %vm2467, %v3948, %v4388
    %v4781 = vsel %vm2467, %v3949, %v4390
    %v4782 = vsel %vm2467, %v3950, %v4392
    %v4783 = vsel %vm2467, %v3951, %v4394
    %v4784 = vsel %vm2467, %v3952, %v4396
    %v4785 = vsel %vm2467, %v3953, %v4398
    %v4786 = vsel %vm2467, %v3954, %v4400
    %v4787 = vsel %vm2467, %v3955, %v4402
    %v4788 = vsel %vm2467, %v3956, %v4404
    %vm4789 = vcmask 293888
    %v4790 = vsel %vm4789, %v4725, %v4534
    %v4791 = vsel %vm4789, %v4726, %v4536
    %v4792 = vsel %vm4789, %v4727, %v4538
    %v4793 = vsel %vm4789, %v4728, %v4540
    %v4794 = vsel %vm4789, %v4729, %v4542
    %v4795 = vsel %vm4789, %v4730, %v4544
    %v4796 = vsel %vm4789, %v4731, %v4546
    %v4797 = vsel %vm4789, %v4732, %v4548
    %v4798 = vsel %vm4789, %v4733, %v4550
    %v4799 = vsel %vm4789, %v4734, %v4552
    %v4800 = vsel %vm4789, %v4735, %v4554
    %v4801 = vsel %vm4789, %v4736, %v4556
    %v4802 = vsel %vm4789, %v4737, %v4558
    %v4803 = vsel %vm4789, %v4738, %v4560
    %v4804 = vsel %vm4789, %v4739, %v4562
    %v4805 = vsel %vm4789, %v4740, %v4564
    %v4806 = vsel %vm4789, %v4741, %v4566
    %v4807 = vsel %vm4789, %v4742, %v4568
    %v4808 = vsel %vm4789, %v4743, %v4570
    %v4809 = vsel %vm4789, %v4744, %v4572
    %v4810 = vsel %vm4789, %v4745, %v4574
    %v4811 = vsel %vm4789, %v4746, %v4576
    %v4812 = vsel %vm4789, %v4747, %v4578
    %v4813 = vsel %vm4789, %v4748, %v4580
    %v4814 = vsel %vm4789, %v4749, %v4582
    %v4815 = vsel %vm4789, %v4750, %v4584
    %v4816 = vsel %vm4789, %v4751, %v4586
    %v4817 = vsel %vm4789, %v4752, %v4588
    %v4818 = vsel %vm4789, %v4753, %v4590
    %v4819 = vsel %vm4789, %v4754, %v4592
    %v4820 = vsel %vm4789, %v4755, %v4594
    %v4821 = vsel %vm4789, %v4756, %v4596
    %v4822 = vsel %vm4789, %v4757, %v4598
    %v4823 = vsel %vm4789, %v4758, %v4600
    %v4824 = vsel %vm4789, %v4759, %v4602
    %v4825 = vsel %vm4789, %v4760, %v4604
    %v4826 = vsel %vm4789, %v4761, %v4606
    %v4827 = vsel %vm4789, %v4762, %v4608
    %v4828 = vsel %vm4789, %v4763, %v4610
    %v4829 = vsel %vm4789, %v4764, %v4612
    %v4830 = vsel %vm4789, %v4765, %v4614
    %v4831 = vsel %vm4789, %v4766, %v4616
    %v4832 = vsel %vm4789, %v4767, %v4618
    %v4833 = vsel %vm4789, %v4768, %v4620
    %v4834 = vsel %vm4789, %v4769, %v4622
    %v4835 = vsel %vm4789, %v4770, %v4624
    %v4836 = vsel %vm4789, %v4771, %v4626
    %v4837 = vsel %vm4789, %v4772, %v4628
    %v4838 = vsel %vm4789, %v4773, %v4630
    %v4839 = vsel %vm4789, %v4774, %v4632
    %v4840 = vsel %vm4789, %v4775, %v4634
    %v4841 = vsel %vm4789, %v4776, %v4636
    %v4842 = vsel %vm4789, %v4777, %v4638
    %v4843 = vsel %vm4789, %v4778, %v4640
    %v4844 = vsel %vm4789, %v4779, %v4642
    %v4845 = vsel %vm4789, %v4780, %v4644
    %v4846 = vsel %vm4789, %v4781, %v4646
    %v4847 = vsel %vm4789, %v4782, %v4648
    %v4848 = vsel %vm4789, %v4783, %v4650
    %v4849 = vsel %vm4789, %v4784, %v4652
    %v4850 = vsel %vm4789, %v4785, %v4654
    %v4851 = vsel %vm4789, %v4786, %v4656
    %v4852 = vsel %vm4789, %v4787, %v4658
    %v4853 = vsel %vm4789, %v4788, %v4660
    %v4854 = vld [vmem:[%s3] sm:$0xff]
    %v4855 = vld [vmem:[%s3 + $0x8] sm:$0xff]
    %v4856 = vld [vmem:[%s3 + $0x10] sm:$0xff]
    %v4857 = vld [vmem:[%s3 + $0x18] sm:$0xff]
    %v4858 = vld [vmem:[%s3 + $0x20] sm:$0xff]
    %v4859 = vld [vmem:[%s3 + $0x28] sm:$0xff]
    %v4860 = vld [vmem:[%s3 + $0x30] sm:$0x3f]
    %v4861 = vld [vmem:[%s4] sm:$0x1]
    %v4863 = vlaneseq
    %v4864 = vshrl.u32 %v4863, 7
    %v4865 = vsub.s32 0, %v4864
    %v4866 = vrot.slane %v4861, %v4865
    %vm4868 = vcmask 441344
    %v4870 = vsel %vm4868, %v4790, 0
    %v4873 = vsel %vm4868, %v4791, 0
    %v4876 = vsel %vm4868, %v4792, 0
    %v4879 = vsel %vm4868, %v4793, 0
    %v4882 = vsel %vm4868, %v4794, 0
    %v4885 = vsel %vm4868, %v4795, 0
    %v4888 = vsel %vm4868, %v4796, 0
    %v4891 = vsel %vm4868, %v4797, 0
    %v4894 = vsel %vm4868, %v4798, 0
    %v4897 = vsel %vm4868, %v4799, 0
    %v4900 = vsel %vm4868, %v4800, 0
    %v4903 = vsel %vm4868, %v4801, 0
    %v4906 = vsel %vm4868, %v4802, 0
    %v4909 = vsel %vm4868, %v4803, 0
    %v4912 = vsel %vm4868, %v4804, 0
    %v4915 = vsel %vm4868, %v4805, 0
    %v4918 = vsel %vm4868, %v4806, 0
    %v4921 = vsel %vm4868, %v4807, 0
    %v4924 = vsel %vm4868, %v4808, 0
    %v4927 = vsel %vm4868, %v4809, 0
    %v4930 = vsel %vm4868, %v4810, 0
    %v4933 = vsel %vm4868, %v4811, 0
    %v4936 = vsel %vm4868, %v4812, 0
    %v4939 = vsel %vm4868, %v4813, 0
    %v4942 = vsel %vm4868, %v4814, 0
    %v4945 = vsel %vm4868, %v4815, 0
    %v4948 = vsel %vm4868, %v4816, 0
    %v4951 = vsel %vm4868, %v4817, 0
    %v4954 = vsel %vm4868, %v4818, 0
    %v4957 = vsel %vm4868, %v4819, 0
    %v4960 = vsel %vm4868, %v4820, 0
    %v4963 = vsel %vm4868, %v4821, 0
    %v4966 = vsel %vm4868, %v4822, 0
    %v4969 = vsel %vm4868, %v4823, 0
    %v4972 = vsel %vm4868, %v4824, 0
    %v4975 = vsel %vm4868, %v4825, 0
    %v4978 = vsel %vm4868, %v4826, 0
    %v4981 = vsel %vm4868, %v4827, 0
    %v4984 = vsel %vm4868, %v4828, 0
    %v4987 = vsel %vm4868, %v4829, 0
    %v4990 = vsel %vm4868, %v4830, 0
    %v4993 = vsel %vm4868, %v4831, 0
    %v4996 = vsel %vm4868, %v4832, 0
    %v4999 = vsel %vm4868, %v4833, 0
    %v5002 = vsel %vm4868, %v4834, 0
    %v5005 = vsel %vm4868, %v4835, 0
    %v5008 = vsel %vm4868, %v4836, 0
    %v5011 = vsel %vm4868, %v4837, 0
    %v5014 = vsel %vm4868, %v4838, 0
    %v5017 = vsel %vm4868, %v4839, 0
    %v5020 = vsel %vm4868, %v4840, 0
    %v5023 = vsel %vm4868, %v4841, 0
    %v5026 = vsel %vm4868, %v4842, 0
    %v5029 = vsel %vm4868, %v4843, 0
    %v5032 = vsel %vm4868, %v4844, 0
    %v5035 = vsel %vm4868, %v4845, 0
    %v5038 = vsel %vm4868, %v4846, 0
    %v5041 = vsel %vm4868, %v4847, 0
    %v5044 = vsel %vm4868, %v4848, 0
    %v5047 = vsel %vm4868, %v4849, 0
    %v5050 = vsel %vm4868, %v4850, 0
    %v5053 = vsel %vm4868, %v4851, 0
    %v5056 = vsel %vm4868, %v4852, 0
    %v5059 = vsel %vm4868, %v4853, 0
    %vm5061 = vcmask 1045504
    %v5063 = vsel %vm5061, %v4860, 0
    %5065 = vmatprep.subr.mxu0 0.0
    %5066 = vmatpush1.msra.mxu0 %v4854
    %5067 = vmatprep.subr.mxu0 0.0
    %5068 = vmatpush1.msra.mxu0 %v4855
    %5069 = vmatprep.subr.mxu0 0.0
    %5070 = vmatpush1.msra.mxu0 %v4856
    %5071 = vmatprep.subr.mxu0 0.0
    %5072 = vmatpush1.msra.mxu0 %v4857
    %5073 = vmatprep.subr.mxu0 0.0
    %5074 = vmatpush1.msra.mxu0 %v4858
    %5075 = vmatprep.subr.mxu0 0.0
    %5076 = vmatpush1.msra.mxu0 %v4859
    %5077 = vmatprep.subr.mxu0 0.0
    %5078 = vmatpush1.msra.mxu0 %v5063
    %5079 = vmatprep.subr.mxu0 0.0
    %5080 = vmatpush1.msra.mxu0 0.0
    %5081 = vmatprep.subr.mxu0 0.0
    %5082 = vmatpush1.msra.mxu0 0.0
    %5083 = vmatprep.subr.mxu0 0.0
    %5084 = vmatpush1.msra.mxu0 0.0
    %5085 = vmatprep.subr.mxu0 0.0
    %5086 = vmatpush1.msra.mxu0 0.0
    %5087 = vmatprep.subr.mxu0 0.0
    %5088 = vmatpush1.msra.mxu0 0.0
    %5089 = vmatprep.subr.mxu0 0.0
    %5090 = vmatpush1.msra.mxu0 0.0
    %5091 = vmatprep.subr.mxu0 0.0
    %5092 = vmatpush1.msra.mxu0 0.0
    %5093 = vmatprep.subr.mxu0 0.0
    %5094 = vmatpush1.msra.mxu0 0.0
    %5095 = vmatprep.subr.mxu0 0.0
    %5096 = vmatpush1.msra.mxu0 0.0
    %5097 = vmatprep.subr.mxu0 0.0
    %5098 = vmatpush1.msra.mxu0 0.0
    %5099 = vmatprep.subr.mxu0 0.0
    %5100 = vmatpush1.msra.mxu0 0.0
    %5101 = vmatprep.subr.mxu0 0.0
    %5102 = vmatpush1.msra.mxu0 0.0
    %5103 = vmatprep.subr.mxu0 0.0
    %5104 = vmatpush1.msra.mxu0 0.0
    %5105 = vmatprep.subr.mxu0 0.0
    %5106 = vmatpush1.msra.mxu0 0.0
    %5107 = vmatprep.subr.mxu0 0.0
    %5108 = vmatpush1.msra.mxu0 0.0
    %5109 = vmatprep.subr.mxu0 0.0
    %5110 = vmatpush1.msra.mxu0 0.0
    %5111 = vmatprep.subr.mxu0 0.0
    %5112 = vmatpush1.msra.mxu0 0.0
    %5113 = vmatprep.subr.mxu0 0.0
    %5114 = vmatpush1.msra.mxu0 0.0
    %5115 = vmatprep.subr.mxu0 0.0
    %5116 = vmatpush1.msra.mxu0 0.0
    %5117 = vmatprep.subr.mxu0 0.0
    %5118 = vmatpush1.msra.mxu0 0.0
    %5119 = vmatprep.subr.mxu0 0.0
    %5120 = vmatpush1.msra.mxu0 0.0
    %5121 = vmatprep.subr.mxu0 0.0
    %5122 = vmatpush1.msra.mxu0 0.0
    %5123 = vmatprep.subr.mxu0 0.0
    %5124 = vmatpush1.msra.mxu0 0.0
    %5125 = vmatprep.subr.mxu0 0.0
    %5126 = vmatpush1.msra.mxu0 0.0
    %5127 = vmatprep.subr.mxu0 0.0
    %5128 = vmatpush1.msra.mxu0 0.0
    %5129 = vmatprep.mubr.f32.mxu0 0.0
    %5130 = vmatmul.mubr.f32.gmra.mrb[0].mxu0 %v4870
    %v5131 = vpop.f32.mrb[0].mxu0
    %v5132 = vadd.f32 %v4866, %v5131
    %v5133 = vpop.f32.mrb[0].mxu0
    %5134 = vmatprep.mubr.f32.mxu0 0.0
    %5135 = vmatmul.mubr.f32.gmra.mrb[0].mxu0 %v4873
    %v5136 = vpop.f32.mrb[0].mxu0
    %v5137 = vadd.f32 %v4866, %v5136
    %v5138 = vpop.f32.mrb[0].mxu0
    %5139 = vmatprep.mubr.f32.mxu0 0.0
    %5140 = vmatmul.mubr.f32.gmra.mrb[0].mxu0 %v4876
    %v5141 = vpop.f32.mrb[0].mxu0
    %v5142 = vadd.f32 %v4866, %v5141
    %v5143 = vpop.f32.mrb[0].mxu0
    %5144 = vmatprep.mubr.f32.mxu0 0.0
    %5145 = vmatmul.mubr.f32.gmra.mrb[0].mxu0 %v4879
    %v5146 = vpop.f32.mrb[0].mxu0
    %v5147 = vadd.f32 %v4866, %v5146
    %v5148 = vpop.f32.mrb[0].mxu0
    %5149 = vmatprep.mubr.f32.mxu0 0.0
    %5150 = vmatmul.mubr.f32.gmra.mrb[0].mxu0 %v4882
    %v5151 = vpop.f32.mrb[0].mxu0
    %v5152 = vadd.f32 %v4866, %v5151
    %v5153 = vpop.f32.mrb[0].mxu0
    %5154 = vmatprep.mubr.f32.mxu0 0.0
    %5155 = vmatmul.mubr.f32.gmra.mrb[0].mxu0 %v4885
    %v5156 = vpop.f32.mrb[0].mxu0
    %v5157 = vadd.f32 %v4866, %v5156
    %v5158 = vpop.f32.mrb[0].mxu0
    %5159 = vmatprep.mubr.f32.mxu0 0.0
    %5160 = vmatmul.mubr.f32.gmra.mrb[0].mxu0 %v4888
    %v5161 = vpop.f32.mrb[0].mxu0
    %v5162 = vadd.f32 %v4866, %v5161
    %v5163 = vpop.f32.mrb[0].mxu0
    %5164 = vmatprep.mubr.f32.mxu0 0.0
    %5165 = vmatmul.mubr.f32.gmra.mrb[0].mxu0 %v4891
    %v5166 = vpop.f32.mrb[0].mxu0
    %v5167 = vadd.f32 %v4866, %v5166
    %v5168 = vpop.f32.mrb[0].mxu0
    %5169 = vmatprep.mubr.f32.mxu0 0.0
    %5170 = vmatmul.mubr.f32.gmra.mrb[0].mxu0 %v4894
    %v5171 = vpop.f32.mrb[0].mxu0
    %v5172 = vadd.f32 %v4866, %v5171
    %v5173 = vpop.f32.mrb[0].mxu0
    %5174 = vmatprep.mubr.f32.mxu0 0.0
    %5175 = vmatmul.mubr.f32.gmra.mrb[0].mxu0 %v4897
    %v5176 = vpop.f32.mrb[0].mxu0
    %v5177 = vadd.f32 %v4866, %v5176
    %v5178 = vpop.f32.mrb[0].mxu0
    %5179 = vmatprep.mubr.f32.mxu0 0.0
    %5180 = vmatmul.mubr.f32.gmra.mrb[0].mxu0 %v4900
    %v5181 = vpop.f32.mrb[0].mxu0
    %v5182 = vadd.f32 %v4866, %v5181
    %v5183 = vpop.f32.mrb[0].mxu0
    %5184 = vmatprep.mubr.f32.mxu0 0.0
    %5185 = vmatmul.mubr.f32.gmra.mrb[0].mxu0 %v4903
    %v5186 = vpop.f32.mrb[0].mxu0
    %v5187 = vadd.f32 %v4866, %v5186
    %v5188 = vpop.f32.mrb[0].mxu0
    %5189 = vmatprep.mubr.f32.mxu0 0.0
    %5190 = vmatmul.mubr.f32.gmra.mrb[0].mxu0 %v4906
    %v5191 = vpop.f32.mrb[0].mxu0
    %v5192 = vadd.f32 %v4866, %v5191
    %v5193 = vpop.f32.mrb[0].mxu0
    %5194 = vmatprep.mubr.f32.mxu0 0.0
    %5195 = vmatmul.mubr.f32.gmra.mrb[0].mxu0 %v4909
    %v5196 = vpop.f32.mrb[0].mxu0
    %v5197 = vadd.f32 %v4866, %v5196
    %v5198 = vpop.f32.mrb[0].mxu0
    %5199 = vmatprep.mubr.f32.mxu0 0.0
    %5200 = vmatmul.mubr.f32.gmra.mrb[0].mxu0 %v4912
    %v5201 = vpop.f32.mrb[0].mxu0
    %v5202 = vadd.f32 %v4866, %v5201
    %v5203 = vpop.f32.mrb[0].mxu0
    %5204 = vmatprep.mubr.f32.mxu0 0.0
    %5205 = vmatmul.mubr.f32.gmra.mrb[0].mxu0 %v4915
    %v5206 = vpop.f32.mrb[0].mxu0
    %v5207 = vadd.f32 %v4866, %v5206
    %v5208 = vpop.f32.mrb[0].mxu0
    %5209 = vmatprep.mubr.f32.mxu0 0.0
    %5210 = vmatmul.mubr.f32.gmra.mrb[0].mxu0 %v4918
    %v5211 = vpop.f32.mrb[0].mxu0
    %v5212 = vadd.f32 %v4866, %v5211
    %v5213 = vpop.f32.mrb[0].mxu0
    %5214 = vmatprep.mubr.f32.mxu0 0.0
    %5215 = vmatmul.mubr.f32.gmra.mrb[0].mxu0 %v4921
    %v5216 = vpop.f32.mrb[0].mxu0
    %v5217 = vadd.f32 %v4866, %v5216
    %v5218 = vpop.f32.mrb[0].mxu0
    %5219 = vmatprep.mubr.f32.mxu0 0.0
    %5220 = vmatmul.mubr.f32.gmra.mrb[0].mxu0 %v4924
    %v5221 = vpop.f32.mrb[0].mxu0
    %v5222 = vadd.f32 %v4866, %v5221
    %v5223 = vpop.f32.mrb[0].mxu0
    %5224 = vmatprep.mubr.f32.mxu0 0.0
    %5225 = vmatmul.mubr.f32.gmra.mrb[0].mxu0 %v4927
    %v5226 = vpop.f32.mrb[0].mxu0
    %v5227 = vadd.f32 %v4866, %v5226
    %v5228 = vpop.f32.mrb[0].mxu0
    %5229 = vmatprep.mubr.f32.mxu0 0.0
    %5230 = vmatmul.mubr.f32.gmra.mrb[0].mxu0 %v4930
    %v5231 = vpop.f32.mrb[0].mxu0
    %v5232 = vadd.f32 %v4866, %v5231
    %v5233 = vpop.f32.mrb[0].mxu0
    %5234 = vmatprep.mubr.f32.mxu0 0.0
    %5235 = vmatmul.mubr.f32.gmra.mrb[0].mxu0 %v4933
    %v5236 = vpop.f32.mrb[0].mxu0
    %v5237 = vadd.f32 %v4866, %v5236
    %v5238 = vpop.f32.mrb[0].mxu0
    %5239 = vmatprep.mubr.f32.mxu0 0.0
    %5240 = vmatmul.mubr.f32.gmra.mrb[0].mxu0 %v4936
    %v5241 = vpop.f32.mrb[0].mxu0
    %v5242 = vadd.f32 %v4866, %v5241
    %v5243 = vpop.f32.mrb[0].mxu0
    %5244 = vmatprep.mubr.f32.mxu0 0.0
    %5245 = vmatmul.mubr.f32.gmra.mrb[0].mxu0 %v4939
    %v5246 = vpop.f32.mrb[0].mxu0
    %v5247 = vadd.f32 %v4866, %v5246
    %v5248 = vpop.f32.mrb[0].mxu0
    %5249 = vmatprep.mubr.f32.mxu0 0.0
    %5250 = vmatmul.mubr.f32.gmra.mrb[0].mxu0 %v4942
    %v5251 = vpop.f32.mrb[0].mxu0
    %v5252 = vadd.f32 %v4866, %v5251
    %v5253 = vpop.f32.mrb[0].mxu0
    %5254 = vmatprep.mubr.f32.mxu0 0.0
    %5255 = vmatmul.mubr.f32.gmra.mrb[0].mxu0 %v4945
    %v5256 = vpop.f32.mrb[0].mxu0
    %v5257 = vadd.f32 %v4866, %v5256
    %v5258 = vpop.f32.mrb[0].mxu0
    %5259 = vmatprep.mubr.f32.mxu0 0.0
    %5260 = vmatmul.mubr.f32.gmra.mrb[0].mxu0 %v4948
    %v5261 = vpop.f32.mrb[0].mxu0
    %v5262 = vadd.f32 %v4866, %v5261
    %v5263 = vpop.f32.mrb[0].mxu0
    %5264 = vmatprep.mubr.f32.mxu0 0.0
    %5265 = vmatmul.mubr.f32.gmra.mrb[0].mxu0 %v4951
    %v5266 = vpop.f32.mrb[0].mxu0
    %v5267 = vadd.f32 %v4866, %v5266
    %v5268 = vpop.f32.mrb[0].mxu0
    %5269 = vmatprep.mubr.f32.mxu0 0.0
    %5270 = vmatmul.mubr.f32.gmra.mrb[0].mxu0 %v4954
    %v5271 = vpop.f32.mrb[0].mxu0
    %v5272 = vadd.f32 %v4866, %v5271
    %v5273 = vpop.f32.mrb[0].mxu0
    %5274 = vmatprep.mubr.f32.mxu0 0.0
    %5275 = vmatmul.mubr.f32.gmra.mrb[0].mxu0 %v4957
    %v5276 = vpop.f32.mrb[0].mxu0
    %v5277 = vadd.f32 %v4866, %v5276
    %v5278 = vpop.f32.mrb[0].mxu0
    %5279 = vmatprep.mubr.f32.mxu0 0.0
    %5280 = vmatmul.mubr.f32.gmra.mrb[0].mxu0 %v4960
    %v5281 = vpop.f32.mrb[0].mxu0
    %v5282 = vadd.f32 %v4866, %v5281
    %v5283 = vpop.f32.mrb[0].mxu0
    %5284 = vmatprep.mubr.f32.mxu0 0.0
    %5285 = vmatmul.mubr.f32.gmra.mrb[0].mxu0 %v4963
    %v5286 = vpop.f32.mrb[0].mxu0
    %v5287 = vadd.f32 %v4866, %v5286
    %v5288 = vpop.f32.mrb[0].mxu0
    %5289 = vmatprep.mubr.f32.mxu0 0.0
    %5290 = vmatmul.mubr.f32.gmra.mrb[0].mxu0 %v4966
    %v5291 = vpop.f32.mrb[0].mxu0
    %v5292 = vadd.f32 %v4866, %v5291
    %v5293 = vpop.f32.mrb[0].mxu0
    %5294 = vmatprep.mubr.f32.mxu0 0.0
    %5295 = vmatmul.mubr.f32.gmra.mrb[0].mxu0 %v4969
    %v5296 = vpop.f32.mrb[0].mxu0
    %v5297 = vadd.f32 %v4866, %v5296
    %v5298 = vpop.f32.mrb[0].mxu0
    %5299 = vmatprep.mubr.f32.mxu0 0.0
    %5300 = vmatmul.mubr.f32.gmra.mrb[0].mxu0 %v4972
    %v5301 = vpop.f32.mrb[0].mxu0
    %v5302 = vadd.f32 %v4866, %v5301
    %v5303 = vpop.f32.mrb[0].mxu0
    %5304 = vmatprep.mubr.f32.mxu0 0.0
    %5305 = vmatmul.mubr.f32.gmra.mrb[0].mxu0 %v4975
    %v5306 = vpop.f32.mrb[0].mxu0
    %v5307 = vadd.f32 %v4866, %v5306
    %v5308 = vpop.f32.mrb[0].mxu0
    %5309 = vmatprep.mubr.f32.mxu0 0.0
    %5310 = vmatmul.mubr.f32.gmra.mrb[0].mxu0 %v4978
    %v5311 = vpop.f32.mrb[0].mxu0
    %v5312 = vadd.f32 %v4866, %v5311
    %v5313 = vpop.f32.mrb[0].mxu0
    %5314 = vmatprep.mubr.f32.mxu0 0.0
    %5315 = vmatmul.mubr.f32.gmra.mrb[0].mxu0 %v4981
    %v5316 = vpop.f32.mrb[0].mxu0
    %v5317 = vadd.f32 %v4866, %v5316
    %v5318 = vpop.f32.mrb[0].mxu0
    %5319 = vmatprep.mubr.f32.mxu0 0.0
    %5320 = vmatmul.mubr.f32.gmra.mrb[0].mxu0 %v4984
    %v5321 = vpop.f32.mrb[0].mxu0
    %v5322 = vadd.f32 %v4866, %v5321
    %v5323 = vpop.f32.mrb[0].mxu0
    %5324 = vmatprep.mubr.f32.mxu0 0.0
    %5325 = vmatmul.mubr.f32.gmra.mrb[0].mxu0 %v4987
    %v5326 = vpop.f32.mrb[0].mxu0
    %v5327 = vadd.f32 %v4866, %v5326
    %v5328 = vpop.f32.mrb[0].mxu0
    %5329 = vmatprep.mubr.f32.mxu0 0.0
    %5330 = vmatmul.mubr.f32.gmra.mrb[0].mxu0 %v4990
    %v5331 = vpop.f32.mrb[0].mxu0
    %v5332 = vadd.f32 %v4866, %v5331
    %v5333 = vpop.f32.mrb[0].mxu0
    %5334 = vmatprep.mubr.f32.mxu0 0.0
    %5335 = vmatmul.mubr.f32.gmra.mrb[0].mxu0 %v4993
    %v5336 = vpop.f32.mrb[0].mxu0
    %v5337 = vadd.f32 %v4866, %v5336
    %v5338 = vpop.f32.mrb[0].mxu0
    %5339 = vmatprep.mubr.f32.mxu0 0.0
    %5340 = vmatmul.mubr.f32.gmra.mrb[0].mxu0 %v4996
    %v5341 = vpop.f32.mrb[0].mxu0
    %v5342 = vadd.f32 %v4866, %v5341
    %v5343 = vpop.f32.mrb[0].mxu0
    %5344 = vmatprep.mubr.f32.mxu0 0.0
    %5345 = vmatmul.mubr.f32.gmra.mrb[0].mxu0 %v4999
    %v5346 = vpop.f32.mrb[0].mxu0
    %v5347 = vadd.f32 %v4866, %v5346
    %v5348 = vpop.f32.mrb[0].mxu0
    %5349 = vmatprep.mubr.f32.mxu0 0.0
    %5350 = vmatmul.mubr.f32.gmra.mrb[0].mxu0 %v5002
    %v5351 = vpop.f32.mrb[0].mxu0
    %v5352 = vadd.f32 %v4866, %v5351
    %v5353 = vpop.f32.mrb[0].mxu0
    %5354 = vmatprep.mubr.f32.mxu0 0.0
    %5355 = vmatmul.mubr.f32.gmra.mrb[0].mxu0 %v5005
    %v5356 = vpop.f32.mrb[0].mxu0
    %v5357 = vadd.f32 %v4866, %v5356
    %v5358 = vpop.f32.mrb[0].mxu0
    %5359 = vmatprep.mubr.f32.mxu0 0.0
    %5360 = vmatmul.mubr.f32.gmra.mrb[0].mxu0 %v5008
    %v5361 = vpop.f32.mrb[0].mxu0
    %v5362 = vadd.f32 %v4866, %v5361
    %v5363 = vpop.f32.mrb[0].mxu0
    %5364 = vmatprep.mubr.f32.mxu0 0.0
    %5365 = vmatmul.mubr.f32.gmra.mrb[0].mxu0 %v5011
    %v5366 = vpop.f32.mrb[0].mxu0
    %v5367 = vadd.f32 %v4866, %v5366
    %v5368 = vpop.f32.mrb[0].mxu0
    %5369 = vmatprep.mubr.f32.mxu0 0.0
    %5370 = vmatmul.mubr.f32.gmra.mrb[0].mxu0 %v5014
    %v5371 = vpop.f32.mrb[0].mxu0
    %v5372 = vadd.f32 %v4866, %v5371
    %v5373 = vpop.f32.mrb[0].mxu0
    %5374 = vmatprep.mubr.f32.mxu0 0.0
    %5375 = vmatmul.mubr.f32.gmra.mrb[0].mxu0 %v5017
    %v5376 = vpop.f32.mrb[0].mxu0
    %v5377 = vadd.f32 %v4866, %v5376
    %v5378 = vpop.f32.mrb[0].mxu0
    %5379 = vmatprep.mubr.f32.mxu0 0.0
    %5380 = vmatmul.mubr.f32.gmra.mrb[0].mxu0 %v5020
    %v5381 = vpop.f32.mrb[0].mxu0
    %v5382 = vadd.f32 %v4866, %v5381
    %v5383 = vpop.f32.mrb[0].mxu0
    %5384 = vmatprep.mubr.f32.mxu0 0.0
    %5385 = vmatmul.mubr.f32.gmra.mrb[0].mxu0 %v5023
    %v5386 = vpop.f32.mrb[0].mxu0
    %v5387 = vadd.f32 %v4866, %v5386
    %v5388 = vpop.f32.mrb[0].mxu0
    %5389 = vmatprep.mubr.f32.mxu0 0.0
    %5390 = vmatmul.mubr.f32.gmra.mrb[0].mxu0 %v5026
    %v5391 = vpop.f32.mrb[0].mxu0
    %v5392 = vadd.f32 %v4866, %v5391
    %v5393 = vpop.f32.mrb[0].mxu0
    %5394 = vmatprep.mubr.f32.mxu0 0.0
    %5395 = vmatmul.mubr.f32.gmra.mrb[0].mxu0 %v5029
    %v5396 = vpop.f32.mrb[0].mxu0
    %v5397 = vadd.f32 %v4866, %v5396
    %v5398 = vpop.f32.mrb[0].mxu0
    %5399 = vmatprep.mubr.f32.mxu0 0.0
    %5400 = vmatmul.mubr.f32.gmra.mrb[0].mxu0 %v5032
    %v5401 = vpop.f32.mrb[0].mxu0
    %v5402 = vadd.f32 %v4866, %v5401
    %v5403 = vpop.f32.mrb[0].mxu0
    %5404 = vmatprep.mubr.f32.mxu0 0.0
    %5405 = vmatmul.mubr.f32.gmra.mrb[0].mxu0 %v5035
    %v5406 = vpop.f32.mrb[0].mxu0
    %v5407 = vadd.f32 %v4866, %v5406
    %v5408 = vpop.f32.mrb[0].mxu0
    %5409 = vmatprep.mubr.f32.mxu0 0.0
    %5410 = vmatmul.mubr.f32.gmra.mrb[0].mxu0 %v5038
    %v5411 = vpop.f32.mrb[0].mxu0
    %v5412 = vadd.f32 %v4866, %v5411
    %v5413 = vpop.f32.mrb[0].mxu0
    %5414 = vmatprep.mubr.f32.mxu0 0.0
    %5415 = vmatmul.mubr.f32.gmra.mrb[0].mxu0 %v5041
    %v5416 = vpop.f32.mrb[0].mxu0
    %v5417 = vadd.f32 %v4866, %v5416
    %v5418 = vpop.f32.mrb[0].mxu0
    %5419 = vmatprep.mubr.f32.mxu0 0.0
    %5420 = vmatmul.mubr.f32.gmra.mrb[0].mxu0 %v5044
    %v5421 = vpop.f32.mrb[0].mxu0
    %v5422 = vadd.f32 %v4866, %v5421
    %v5423 = vpop.f32.mrb[0].mxu0
    %5424 = vmatprep.mubr.f32.mxu0 0.0
    %5425 = vmatmul.mubr.f32.gmra.mrb[0].mxu0 %v5047
    %v5426 = vpop.f32.mrb[0].mxu0
    %v5427 = vadd.f32 %v4866, %v5426
    %v5428 = vpop.f32.mrb[0].mxu0
    %5429 = vmatprep.mubr.f32.mxu0 0.0
    %5430 = vmatmul.mubr.f32.gmra.mrb[0].mxu0 %v5050
    %v5431 = vpop.f32.mrb[0].mxu0
    %v5432 = vadd.f32 %v4866, %v5431
    %v5433 = vpop.f32.mrb[0].mxu0
    %5434 = vmatprep.mubr.f32.mxu0 0.0
    %5435 = vmatmul.mubr.f32.gmra.mrb[0].mxu0 %v5053
    %v5436 = vpop.f32.mrb[0].mxu0
    %v5437 = vadd.f32 %v4866, %v5436
    %v5438 = vpop.f32.mrb[0].mxu0
    %5439 = vmatprep.mubr.f32.mxu0 0.0
    %5440 = vmatmul.mubr.f32.gmra.mrb[0].mxu0 %v5056
    %v5441 = vpop.f32.mrb[0].mxu0
    %v5442 = vadd.f32 %v4866, %v5441
    %v5443 = vpop.f32.mrb[0].mxu0
    %5444 = vmatprep.mubr.f32.mxu0 0.0
    %5445 = vmatmul.mubr.f32.gmra.mrb[0].mxu0 %v5059
    %v5446 = vpop.f32.mrb[0].mxu0
    %v5447 = vadd.f32 %v4866, %v5446
    %v5448 = vpop.f32.mrb[0].mxu0
    %5449 = vdwg.mxu0
    %v5450 = vmax.f32 %v5132, 0.0
    %v5451 = vmax.f32 %v5137, 0.0
    %v5452 = vmax.f32 %v5142, 0.0
    %v5453 = vmax.f32 %v5147, 0.0
    %v5454 = vmax.f32 %v5152, 0.0
    %v5455 = vmax.f32 %v5157, 0.0
    %v5456 = vmax.f32 %v5162, 0.0
    %v5457 = vmax.f32 %v5167, 0.0
    %v5458 = vmax.f32 %v5172, 0.0
    %v5459 = vmax.f32 %v5177, 0.0
    %v5460 = vmax.f32 %v5182, 0.0
    %v5461 = vmax.f32 %v5187, 0.0
    %v5462 = vmax.f32 %v5192, 0.0
    %v5463 = vmax.f32 %v5197, 0.0
    %v5464 = vmax.f32 %v5202, 0.0
    %v5465 = vmax.f32 %v5207, 0.0
    %v5466 = vmax.f32 %v5212, 0.0
    %v5467 = vmax.f32 %v5217, 0.0
    %v5468 = vmax.f32 %v5222, 0.0
    %v5469 = vmax.f32 %v5227, 0.0
    %v5470 = vmax.f32 %v5232, 0.0
    %v5471 = vmax.f32 %v5237, 0.0
    %v5472 = vmax.f32 %v5242, 0.0
    %v5473 = vmax.f32 %v5247, 0.0
    %v5474 = vmax.f32 %v5252, 0.0
    %v5475 = vmax.f32 %v5257, 0.0
    %v5476 = vmax.f32 %v5262, 0.0
    %v5477 = vmax.f32 %v5267, 0.0
    %v5478 = vmax.f32 %v5272, 0.0
    %v5479 = vmax.f32 %v5277, 0.0
    %v5480 = vmax.f32 %v5282, 0.0
    %v5481 = vmax.f32 %v5287, 0.0
    %v5482 = vmax.f32 %v5292, 0.0
    %v5483 = vmax.f32 %v5297, 0.0
    %v5484 = vmax.f32 %v5302, 0.0
    %v5485 = vmax.f32 %v5307, 0.0
    %v5486 = vmax.f32 %v5312, 0.0
    %v5487 = vmax.f32 %v5317, 0.0
    %v5488 = vmax.f32 %v5322, 0.0
    %v5489 = vmax.f32 %v5327, 0.0
    %v5490 = vmax.f32 %v5332, 0.0
    %v5491 = vmax.f32 %v5337, 0.0
    %v5492 = vmax.f32 %v5342, 0.0
    %v5493 = vmax.f32 %v5347, 0.0
    %v5494 = vmax.f32 %v5352, 0.0
    %v5495 = vmax.f32 %v5357, 0.0
    %v5496 = vmax.f32 %v5362, 0.0
    %v5497 = vmax.f32 %v5367, 0.0
    %v5498 = vmax.f32 %v5372, 0.0
    %v5499 = vmax.f32 %v5377, 0.0
    %v5500 = vmax.f32 %v5382, 0.0
    %v5501 = vmax.f32 %v5387, 0.0
    %v5502 = vmax.f32 %v5392, 0.0
    %v5503 = vmax.f32 %v5397, 0.0
    %v5504 = vmax.f32 %v5402, 0.0
    %v5505 = vmax.f32 %v5407, 0.0
    %v5506 = vmax.f32 %v5412, 0.0
    %v5507 = vmax.f32 %v5417, 0.0
    %v5508 = vmax.f32 %v5422, 0.0
    %v5509 = vmax.f32 %v5427, 0.0
    %v5510 = vmax.f32 %v5432, 0.0
    %v5511 = vmax.f32 %v5437, 0.0
    %v5512 = vmax.f32 %v5442, 0.0
    %v5513 = vmax.f32 %v5447, 0.0
    %v5514 = vmax.f32 %v5450, %v5451
    %v5515 = vmax.f32 %v5452, %v5453
    %v5516 = vmax.f32 %v5454, %v5455
    %v5517 = vmax.f32 %v5456, %v5457
    %v5518 = vmax.f32 %v5458, %v5459
    %v5519 = vmax.f32 %v5460, %v5461
    %v5520 = vmax.f32 %v5462, %v5463
    %v5521 = vmax.f32 %v5464, %v5465
    %v5522 = vmax.f32 %v5466, %v5467
    %v5523 = vmax.f32 %v5468, %v5469
    %v5524 = vmax.f32 %v5470, %v5471
    %v5525 = vmax.f32 %v5472, %v5473
    %v5526 = vmax.f32 %v5474, %v5475
    %v5527 = vmax.f32 %v5476, %v5477
    %v5528 = vmax.f32 %v5478, %v5479
    %v5529 = vmax.f32 %v5480, %v5481
    %v5530 = vmax.f32 %v5482, %v5483
    %v5531 = vmax.f32 %v5484, %v5485
    %v5532 = vmax.f32 %v5486, %v5487
    %v5533 = vmax.f32 %v5488, %v5489
    %v5534 = vmax.f32 %v5490, %v5491
    %v5535 = vmax.f32 %v5492, %v5493
    %v5536 = vmax.f32 %v5494, %v5495
    %v5537 = vmax.f32 %v5496, %v5497
    %v5538 = vmax.f32 %v5498, %v5499
    %v5539 = vmax.f32 %v5500, %v5501
    %v5540 = vmax.f32 %v5502, %v5503
    %v5541 = vmax.f32 %v5504, %v5505
    %v5542 = vmax.f32 %v5506, %v5507
    %v5543 = vmax.f32 %v5508, %v5509
    %v5544 = vmax.f32 %v5510, %v5511
    %v5545 = vmax.f32 %v5512, %v5513
    %5546 = vst.msk [vmem:[#allocation2] sm:$0xff] %vm4789, %v5514
    %5547 = vst.msk [vmem:[#allocation2 + $0x8] sm:$0xff] %vm4789, %v5515
    %5548 = vst.msk [vmem:[#allocation2 + $0x10] sm:$0xff] %vm4789, %v5516
    %5549 = vst.msk [vmem:[#allocation2 + $0x18] sm:$0xff] %vm4789, %v5517
    %5550 = vst.msk [vmem:[#allocation2 + $0x20] sm:$0xff] %vm4789, %v5518
    %5551 = vst.msk [vmem:[#allocation2 + $0x28] sm:$0xff] %vm4789, %v5519
    %5552 = vst.msk [vmem:[#allocation2 + $0x30] sm:$0xff] %vm4789, %v5520
    %5553 = vst.msk [vmem:[#allocation2 + $0x38] sm:$0xff] %vm4789, %v5521
    %5554 = vst.msk [vmem:[#allocation2 + $0x40] sm:$0xff] %vm4789, %v5522
    %5555 = vst.msk [vmem:[#allocation2 + $0x48] sm:$0xff] %vm4789, %v5523
    %5556 = vst.msk [vmem:[#allocation2 + $0x50] sm:$0xff] %vm4789, %v5524
    %5557 = vst.msk [vmem:[#allocation2 + $0x58] sm:$0xff] %vm4789, %v5525
    %5558 = vst.msk [vmem:[#allocation2 + $0x60] sm:$0xff] %vm4789, %v5526
    %5559 = vst.msk [vmem:[#allocation2 + $0x68] sm:$0xff] %vm4789, %v5527
    %5560 = vst.msk [vmem:[#allocation2 + $0x70] sm:$0xff] %vm4789, %v5528
    %5561 = vst.msk [vmem:[#allocation2 + $0x78] sm:$0xff] %vm4789, %v5529
    %5562 = vst.msk [vmem:[#allocation2 + $0x80] sm:$0xff] %vm4789, %v5530
    %5563 = vst.msk [vmem:[#allocation2 + $0x88] sm:$0xff] %vm4789, %v5531
    %5564 = vst.msk [vmem:[#allocation2 + $0x90] sm:$0xff] %vm4789, %v5532
    %5565 = vst.msk [vmem:[#allocation2 + $0x98] sm:$0xff] %vm4789, %v5533
    %5566 = vst.msk [vmem:[#allocation2 + $0xa0] sm:$0xff] %vm4789, %v5534
    %5567 = vst.msk [vmem:[#allocation2 + $0xa8] sm:$0xff] %vm4789, %v5535
    %5568 = vst.msk [vmem:[#allocation2 + $0xb0] sm:$0xff] %vm4789, %v5536
    %5569 = vst.msk [vmem:[#allocation2 + $0xb8] sm:$0xff] %vm4789, %v5537
    %5570 = vst.msk [vmem:[#allocation2 + $0xc0] sm:$0xff] %vm4789, %v5538
    %5571 = vst.msk [vmem:[#allocation2 + $0xc8] sm:$0xff] %vm4789, %v5539
    %5572 = vst.msk [vmem:[#allocation2 + $0xd0] sm:$0xff] %vm4789, %v5540
    %5573 = vst.msk [vmem:[#allocation2 + $0xd8] sm:$0xff] %vm4789, %v5541
    %5574 = vst.msk [vmem:[#allocation2 + $0xe0] sm:$0xff] %vm4789, %v5542
    %5575 = vst.msk [vmem:[#allocation2 + $0xe8] sm:$0xff] %vm4789, %v5543
    %5576 = vst.msk [vmem:[#allocation2 + $0xf0] sm:$0xff] %vm4789, %v5544
    %5577 = vst.msk [vmem:[#allocation2 + $0xf8] sm:$0xff] %vm4789, %v5545
    %v5578 = vld [vmem:[#allocation2] sm:$0xff]
    %v5579 = vld [vmem:[%s5] sm:$0xff]
    %v5580 = vld [vmem:[%s5 + $0x8] sm:$0xff]
    %v5581 = vld [vmem:[%s5 + $0x10] sm:$0xff]
    %v5582 = vld [vmem:[%s5 + $0x18] sm:$0xff]
    %v5583 = vld [vmem:[%s5 + $0x20] sm:$0xf]
    %s5584 = scalar_lea.vmem [#allocation2], 8
    %v5585 = vld [vmem:[%s5584] sm:$0xff]
    %s5586 = scalar_lea.vmem %s5, 40
    %v5587 = vld [vmem:[%s5586] sm:$0xff]
    %v5588 = vld [vmem:[%s5586 + $0x8] sm:$0xff]
    %v5589 = vld [vmem:[%s5586 + $0x10] sm:$0xff]
    %v5590 = vld [vmem:[%s5586 + $0x18] sm:$0xff]
    %v5591 = vld [vmem:[%s5586 + $0x20] sm:$0xf]
    %s5592 = scalar_lea.vmem [#allocation2], 16
    %v5593 = vld [vmem:[%s5592] sm:$0xff]
    %s5594 = scalar_lea.vmem %s5, 80
    %v5595 = vld [vmem:[%s5594] sm:$0xff]
    %v5596 = vld [vmem:[%s5594 + $0x8] sm:$0xff]
    %v5597 = vld [vmem:[%s5594 + $0x10] sm:$0xff]
    %v5598 = vld [vmem:[%s5594 + $0x18] sm:$0xff]
    %v5599 = vld [vmem:[%s5594 + $0x20] sm:$0xf]
    %s5600 = scalar_lea.vmem [#allocation2], 24
    %v5601 = vld [vmem:[%s5600] sm:$0xff]
    %s5602 = scalar_lea.vmem %s5, 120
    %v5603 = vld [vmem:[%s5602] sm:$0xff]
    %v5604 = vld [vmem:[%s5602 + $0x8] sm:$0xff]
    %v5605 = vld [vmem:[%s5602 + $0x10] sm:$0xff]
    %v5606 = vld [vmem:[%s5602 + $0x18] sm:$0xff]
    %v5607 = vld [vmem:[%s5602 + $0x20] sm:$0xf]
    %s5608 = scalar_lea.vmem [#allocation2], 32
    %v5609 = vld [vmem:[%s5608] sm:$0xff]
    %s5610 = scalar_lea.vmem %s5, 160
    %v5611 = vld [vmem:[%s5610] sm:$0xff]
    %v5612 = vld [vmem:[%s5610 + $0x8] sm:$0xff]
    %v5613 = vld [vmem:[%s5610 + $0x10] sm:$0xff]
    %v5614 = vld [vmem:[%s5610 + $0x18] sm:$0xff]
    %v5615 = vld [vmem:[%s5610 + $0x20] sm:$0xf]
    %v5617 = vsel %vm4789, %v5609, 0
    %vm5619 = vcmask 1043456
    %v5621 = vsel %vm5619, %v5615, 0
    %5623 = vmatprep.subr.mxu0 0.0
    %5624 = vmatpush1.msra.mxu0 %v5611
    %5625 = vmatprep.subr.mxu0 0.0
    %5626 = vmatpush1.msra.mxu0 %v5612
    %5627 = vmatprep.subr.mxu0 0.0
    %5628 = vmatpush1.msra.mxu0 %v5613
    %5629 = vmatprep.subr.mxu0 0.0
    %5630 = vmatpush1.msra.mxu0 %v5614
    %5631 = vmatprep.subr.mxu0 0.0
    %5632 = vmatpush1.msra.mxu0 %v5621
    %5633 = vmatprep.subr.mxu0 0.0
    %5634 = vmatpush1.msra.mxu0 0.0
    %5635 = vmatprep.subr.mxu0 0.0
    %5636 = vmatpush1.msra.mxu0 0.0
    %5637 = vmatprep.subr.mxu0 0.0
    %5638 = vmatpush1.msra.mxu0 0.0
    %5639 = vmatprep.subr.mxu0 0.0
    %5640 = vmatpush1.msra.mxu0 0.0
    %5641 = vmatprep.subr.mxu0 0.0
    %5642 = vmatpush1.msra.mxu0 0.0
    %5643 = vmatprep.subr.mxu0 0.0
    %5644 = vmatpush1.msra.mxu0 0.0
    %5645 = vmatprep.subr.mxu0 0.0
    %5646 = vmatpush1.msra.mxu0 0.0
    %5647 = vmatprep.subr.mxu0 0.0
    %5648 = vmatpush1.msra.mxu0 0.0
    %5649 = vmatprep.subr.mxu0 0.0
    %5650 = vmatpush1.msra.mxu0 0.0
    %5651 = vmatprep.subr.mxu0 0.0
    %5652 = vmatpush1.msra.mxu0 0.0
    %5653 = vmatprep.subr.mxu0 0.0
    %5654 = vmatpush1.msra.mxu0 0.0
    %5655 = vmatprep.subr.mxu0 0.0
    %5656 = vmatpush1.msra.mxu0 0.0
    %5657 = vmatprep.subr.mxu0 0.0
    %5658 = vmatpush1.msra.mxu0 0.0
    %5659 = vmatprep.subr.mxu0 0.0
    %5660 = vmatpush1.msra.mxu0 0.0
    %5661 = vmatprep.subr.mxu0 0.0
    %5662 = vmatpush1.msra.mxu0 0.0
    %5663 = vmatprep.subr.mxu0 0.0
    %5664 = vmatpush1.msra.mxu0 0.0
    %5665 = vmatprep.subr.mxu0 0.0
    %5666 = vmatpush1.msra.mxu0 0.0
    %5667 = vmatprep.subr.mxu0 0.0
    %5668 = vmatpush1.msra.mxu0 0.0
    %5669 = vmatprep.subr.mxu0 0.0
    %5670 = vmatpush1.msra.mxu0 0.0
    %5671 = vmatprep.subr.mxu0 0.0
    %5672 = vmatpush1.msra.mxu0 0.0
    %5673 = vmatprep.subr.mxu0 0.0
    %5674 = vmatpush1.msra.mxu0 0.0
    %5675 = vmatprep.subr.mxu0 0.0
    %5676 = vmatpush1.msra.mxu0 0.0
    %5677 = vmatprep.subr.mxu0 0.0
    %5678 = vmatpush1.msra.mxu0 0.0
    %5679 = vmatprep.subr.mxu0 0.0
    %5680 = vmatpush1.msra.mxu0 0.0
    %5681 = vmatprep.subr.mxu0 0.0
    %5682 = vmatpush1.msra.mxu0 0.0
    %5683 = vmatprep.subr.mxu0 0.0
    %5684 = vmatpush1.msra.mxu0 0.0
    %5685 = vmatprep.subr.mxu0 0.0
    %5686 = vmatpush1.msra.mxu0 0.0
    %5687 = vmatprep.mubr.f32.mxu0 0.0
    %5688 = vmatmul.mubr.f32.gmra.mrb[0].mxu0 %v5617
    %v5689 = vpop.f32.mrb[0].mxu0
    %v5690 = vadd.f32 0.0, %v5689
    %v5691 = vpop.f32.mrb[0].mxu0
    %5692 = vdwg.mxu0
    %v5694 = vsel %vm4789, %v5578, 0
    %v5697 = vsel %vm5619, %v5583, 0
    %5699 = vmatprep.subr.mxu0 0.0
    %5700 = vmatpush1.msra.mxu0 %v5579
    %5701 = vmatprep.subr.mxu0 0.0
    %5702 = vmatpush1.msra.mxu0 %v5580
    %5703 = vmatprep.subr.mxu0 0.0
    %5704 = vmatpush1.msra.mxu0 %v5581
    %5705 = vmatprep.subr.mxu0 0.0
    %5706 = vmatpush1.msra.mxu0 %v5582
    %5707 = vmatprep.subr.mxu0 0.0
    %5708 = vmatpush1.msra.mxu0 %v5697
    %5709 = vmatprep.subr.mxu0 0.0
    %5710 = vmatpush1.msra.mxu0 0.0
    %5711 = vmatprep.subr.mxu0 0.0
    %5712 = vmatpush1.msra.mxu0 0.0
    %5713 = vmatprep.subr.mxu0 0.0
    %5714 = vmatpush1.msra.mxu0 0.0
    %5715 = vmatprep.subr.mxu0 0.0
    %5716 = vmatpush1.msra.mxu0 0.0
    %5717 = vmatprep.subr.mxu0 0.0
    %5718 = vmatpush1.msra.mxu0 0.0
    %5719 = vmatprep.subr.mxu0 0.0
    %5720 = vmatpush1.msra.mxu0 0.0
    %5721 = vmatprep.subr.mxu0 0.0
    %5722 = vmatpush1.msra.mxu0 0.0
    %5723 = vmatprep.subr.mxu0 0.0
    %5724 = vmatpush1.msra.mxu0 0.0
    %5725 = vmatprep.subr.mxu0 0.0
    %5726 = vmatpush1.msra.mxu0 0.0
    %5727 = vmatprep.subr.mxu0 0.0
    %5728 = vmatpush1.msra.mxu0 0.0
    %5729 = vmatprep.subr.mxu0 0.0
    %5730 = vmatpush1.msra.mxu0 0.0
    %5731 = vmatprep.subr.mxu0 0.0
    %5732 = vmatpush1.msra.mxu0 0.0
    %5733 = vmatprep.subr.mxu0 0.0
    %5734 = vmatpush1.msra.mxu0 0.0
    %5735 = vmatprep.subr.mxu0 0.0
    %5736 = vmatpush1.msra.mxu0 0.0
    %5737 = vmatprep.subr.mxu0 0.0
    %5738 = vmatpush1.msra.mxu0 0.0
    %5739 = vmatprep.subr.mxu0 0.0
    %5740 = vmatpush1.msra.mxu0 0.0
    %5741 = vmatprep.subr.mxu0 0.0
    %5742 = vmatpush1.msra.mxu0 0.0
    %5743 = vmatprep.subr.mxu0 0.0
    %5744 = vmatpush1.msra.mxu0 0.0
    %5745 = vmatprep.subr.mxu0 0.0
    %5746 = vmatpush1.msra.mxu0 0.0
    %5747 = vmatprep.subr.mxu0 0.0
    %5748 = vmatpush1.msra.mxu0 0.0
    %5749 = vmatprep.subr.mxu0 0.0
    %5750 = vmatpush1.msra.mxu0 0.0
    %5751 = vmatprep.subr.mxu0 0.0
    %5752 = vmatpush1.msra.mxu0 0.0
    %5753 = vmatprep.subr.mxu0 0.0
    %5754 = vmatpush1.msra.mxu0 0.0
    %5755 = vmatprep.subr.mxu0 0.0
    %5756 = vmatpush1.msra.mxu0 0.0
    %5757 = vmatprep.subr.mxu0 0.0
    %5758 = vmatpush1.msra.mxu0 0.0
    %5759 = vmatprep.subr.mxu0 0.0
    %5760 = vmatpush1.msra.mxu0 0.0
    %5761 = vmatprep.subr.mxu0 0.0
    %5762 = vmatpush1.msra.mxu0 0.0
    %5763 = vmatprep.mubr.f32.mxu0 0.0
    %5764 = vmatmul.mubr.f32.gmra.mrb[0].mxu0 %v5694
    %v5765 = vpop.f32.mrb[0].mxu0
    %v5766 = vadd.f32 %v5690, %v5765
    %v5767 = vpop.f32.mrb[0].mxu0
    %5768 = vdwg.mxu0
    %s5769 = scalar_lea.vmem [#allocation2], 40
    %v5770 = vld [vmem:[%s5769] sm:$0xff]
    %s5771 = scalar_lea.vmem %s5, 200
    %v5772 = vld [vmem:[%s5771] sm:$0xff]
    %v5773 = vld [vmem:[%s5771 + $0x8] sm:$0xff]
    %v5774 = vld [vmem:[%s5771 + $0x10] sm:$0xff]
    %v5775 = vld [vmem:[%s5771 + $0x18] sm:$0xff]
    %v5776 = vld [vmem:[%s5771 + $0x20] sm:$0xf]
    %v5778 = vsel %vm4789, %v5770, 0
    %v5781 = vsel %vm5619, %v5776, 0
    %5783 = vmatprep.subr.mxu0 0.0
    %5784 = vmatpush1.msra.mxu0 %v5772
    %5785 = vmatprep.subr.mxu0 0.0
    %5786 = vmatpush1.msra.mxu0 %v5773
    %5787 = vmatprep.subr.mxu0 0.0
    %5788 = vmatpush1.msra.mxu0 %v5774
    %5789 = vmatprep.subr.mxu0 0.0
    %5790 = vmatpush1.msra.mxu0 %v5775
    %5791 = vmatprep.subr.mxu0 0.0
    %5792 = vmatpush1.msra.mxu0 %v5781
    %5793 = vmatprep.subr.mxu0 0.0
    %5794 = vmatpush1.msra.mxu0 0.0
    %5795 = vmatprep.subr.mxu0 0.0
    %5796 = vmatpush1.msra.mxu0 0.0
    %5797 = vmatprep.subr.mxu0 0.0
    %5798 = vmatpush1.msra.mxu0 0.0
    %5799 = vmatprep.subr.mxu0 0.0
    %5800 = vmatpush1.msra.mxu0 0.0
    %5801 = vmatprep.subr.mxu0 0.0
    %5802 = vmatpush1.msra.mxu0 0.0
    %5803 = vmatprep.subr.mxu0 0.0
    %5804 = vmatpush1.msra.mxu0 0.0
    %5805 = vmatprep.subr.mxu0 0.0
    %5806 = vmatpush1.msra.mxu0 0.0
    %5807 = vmatprep.subr.mxu0 0.0
    %5808 = vmatpush1.msra.mxu0 0.0
    %5809 = vmatprep.subr.mxu0 0.0
    %5810 = vmatpush1.msra.mxu0 0.0
    %5811 = vmatprep.subr.mxu0 0.0
    %5812 = vmatpush1.msra.mxu0 0.0
    %5813 = vmatprep.subr.mxu0 0.0
    %5814 = vmatpush1.msra.mxu0 0.0
    %5815 = vmatprep.subr.mxu0 0.0
    %5816 = vmatpush1.msra.mxu0 0.0
    %5817 = vmatprep.subr.mxu0 0.0
    %5818 = vmatpush1.msra.mxu0 0.0
    %5819 = vmatprep.subr.mxu0 0.0
    %5820 = vmatpush1.msra.mxu0 0.0
    %5821 = vmatprep.subr.mxu0 0.0
    %5822 = vmatpush1.msra.mxu0 0.0
    %5823 = vmatprep.subr.mxu0 0.0
    %5824 = vmatpush1.msra.mxu0 0.0
    %5825 = vmatprep.subr.mxu0 0.0
    %5826 = vmatpush1.msra.mxu0 0.0
    %5827 = vmatprep.subr.mxu0 0.0
    %5828 = vmatpush1.msra.mxu0 0.0
    %5829 = vmatprep.subr.mxu0 0.0
    %5830 = vmatpush1.msra.mxu0 0.0
    %5831 = vmatprep.subr.mxu0 0.0
    %5832 = vmatpush1.msra.mxu0 0.0
    %5833 = vmatprep.subr.mxu0 0.0
    %5834 = vmatpush1.msra.mxu0 0.0
    %5835 = vmatprep.subr.mxu0 0.0
    %5836 = vmatpush1.msra.mxu0 0.0
    %5837 = vmatprep.subr.mxu0 0.0
    %5838 = vmatpush1.msra.mxu0 0.0
    %5839 = vmatprep.subr.mxu0 0.0
    %5840 = vmatpush1.msra.mxu0 0.0
    %5841 = vmatprep.subr.mxu0 0.0
    %5842 = vmatpush1.msra.mxu0 0.0
    %5843 = vmatprep.subr.mxu0 0.0
    %5844 = vmatpush1.msra.mxu0 0.0
    %5845 = vmatprep.subr.mxu0 0.0
    %5846 = vmatpush1.msra.mxu0 0.0
    %5847 = vmatprep.mubr.f32.mxu0 0.0
    %5848 = vmatmul.mubr.f32.gmra.mrb[0].mxu0 %v5778
    %v5849 = vpop.f32.mrb[0].mxu0
    %v5850 = vadd.f32 0.0, %v5849
    %v5851 = vpop.f32.mrb[0].mxu0
    %5852 = vdwg.mxu0
    %v5854 = vsel %vm4789, %v5585, 0
    %v5857 = vsel %vm5619, %v5591, 0
    %5859 = vmatprep.subr.mxu0 0.0
    %5860 = vmatpush1.msra.mxu0 %v5587
    %5861 = vmatprep.subr.mxu0 0.0
    %5862 = vmatpush1.msra.mxu0 %v5588
    %5863 = vmatprep.subr.mxu0 0.0
    %5864 = vmatpush1.msra.mxu0 %v5589
    %5865 = vmatprep.subr.mxu0 0.0
    %5866 = vmatpush1.msra.mxu0 %v5590
    %5867 = vmatprep.subr.mxu0 0.0
    %5868 = vmatpush1.msra.mxu0 %v5857
    %5869 = vmatprep.subr.mxu0 0.0
    %5870 = vmatpush1.msra.mxu0 0.0
    %5871 = vmatprep.subr.mxu0 0.0
    %5872 = vmatpush1.msra.mxu0 0.0
    %5873 = vmatprep.subr.mxu0 0.0
    %5874 = vmatpush1.msra.mxu0 0.0
    %5875 = vmatprep.subr.mxu0 0.0
    %5876 = vmatpush1.msra.mxu0 0.0
    %5877 = vmatprep.subr.mxu0 0.0
    %5878 = vmatpush1.msra.mxu0 0.0
    %5879 = vmatprep.subr.mxu0 0.0
    %5880 = vmatpush1.msra.mxu0 0.0
    %5881 = vmatprep.subr.mxu0 0.0
    %5882 = vmatpush1.msra.mxu0 0.0
    %5883 = vmatprep.subr.mxu0 0.0
    %5884 = vmatpush1.msra.mxu0 0.0
    %5885 = vmatprep.subr.mxu0 0.0
    %5886 = vmatpush1.msra.mxu0 0.0
    %5887 = vmatprep.subr.mxu0 0.0
    %5888 = vmatpush1.msra.mxu0 0.0
    %5889 = vmatprep.subr.mxu0 0.0
    %5890 = vmatpush1.msra.mxu0 0.0
    %5891 = vmatprep.subr.mxu0 0.0
    %5892 = vmatpush1.msra.mxu0 0.0
    %5893 = vmatprep.subr.mxu0 0.0
    %5894 = vmatpush1.msra.mxu0 0.0
    %5895 = vmatprep.subr.mxu0 0.0
    %5896 = vmatpush1.msra.mxu0 0.0
    %5897 = vmatprep.subr.mxu0 0.0
    %5898 = vmatpush1.msra.mxu0 0.0
    %5899 = vmatprep.subr.mxu0 0.0
    %5900 = vmatpush1.msra.mxu0 0.0
    %5901 = vmatprep.subr.mxu0 0.0
    %5902 = vmatpush1.msra.mxu0 0.0
    %5903 = vmatprep.subr.mxu0 0.0
    %5904 = vmatpush1.msra.mxu0 0.0
    %5905 = vmatprep.subr.mxu0 0.0
    %5906 = vmatpush1.msra.mxu0 0.0
    %5907 = vmatprep.subr.mxu0 0.0
    %5908 = vmatpush1.msra.mxu0 0.0
    %5909 = vmatprep.subr.mxu0 0.0
    %5910 = vmatpush1.msra.mxu0 0.0
    %5911 = vmatprep.subr.mxu0 0.0
    %5912 = vmatpush1.msra.mxu0 0.0
    %5913 = vmatprep.subr.mxu0 0.0
    %5914 = vmatpush1.msra.mxu0 0.0
    %5915 = vmatprep.subr.mxu0 0.0
    %5916 = vmatpush1.msra.mxu0 0.0
    %5917 = vmatprep.subr.mxu0 0.0
    %5918 = vmatpush1.msra.mxu0 0.0
    %5919 = vmatprep.subr.mxu0 0.0
    %5920 = vmatpush1.msra.mxu0 0.0
    %5921 = vmatprep.subr.mxu0 0.0
    %5922 = vmatpush1.msra.mxu0 0.0
    %5923 = vmatprep.mubr.f32.mxu0 0.0
    %5924 = vmatmul.mubr.f32.gmra.mrb[0].mxu0 %v5854
    %v5925 = vpop.f32.mrb[0].mxu0
    %v5926 = vadd.f32 %v5850, %v5925
    %v5927 = vpop.f32.mrb[0].mxu0
    %5928 = vdwg.mxu0
    %s5929 = scalar_lea.vmem [#allocation2], 48
    %v5930 = vld [vmem:[%s5929] sm:$0xff]
    %s5931 = scalar_lea.vmem %s5, 240
    %v5932 = vld [vmem:[%s5931] sm:$0xff]
    %v5933 = vld [vmem:[%s5931 + $0x8] sm:$0xff]
    %v5934 = vld [vmem:[%s5931 + $0x10] sm:$0xff]
    %v5935 = vld [vmem:[%s5931 + $0x18] sm:$0xff]
    %v5936 = vld [vmem:[%s5931 + $0x20] sm:$0xf]
    %v5938 = vsel %vm4789, %v5930, 0
    %v5941 = vsel %vm5619, %v5936, 0
    %5943 = vmatprep.subr.mxu0 0.0
    %5944 = vmatpush1.msra.mxu0 %v5932
    %5945 = vmatprep.subr.mxu0 0.0
    %5946 = vmatpush1.msra.mxu0 %v5933
    %5947 = vmatprep.subr.mxu0 0.0
    %5948 = vmatpush1.msra.mxu0 %v5934
    %5949 = vmatprep.subr.mxu0 0.0
    %5950 = vmatpush1.msra.mxu0 %v5935
    %5951 = vmatprep.subr.mxu0 0.0
    %5952 = vmatpush1.msra.mxu0 %v5941
    %5953 = vmatprep.subr.mxu0 0.0
    %5954 = vmatpush1.msra.mxu0 0.0
    %5955 = vmatprep.subr.mxu0 0.0
    %5956 = vmatpush1.msra.mxu0 0.0
    %5957 = vmatprep.subr.mxu0 0.0
    %5958 = vmatpush1.msra.mxu0 0.0
    %5959 = vmatprep.subr.mxu0 0.0
    %5960 = vmatpush1.msra.mxu0 0.0
    %5961 = vmatprep.subr.mxu0 0.0
    %5962 = vmatpush1.msra.mxu0 0.0
    %5963 = vmatprep.subr.mxu0 0.0
    %5964 = vmatpush1.msra.mxu0 0.0
    %5965 = vmatprep.subr.mxu0 0.0
    %5966 = vmatpush1.msra.mxu0 0.0
    %5967 = vmatprep.subr.mxu0 0.0
    %5968 = vmatpush1.msra.mxu0 0.0
    %5969 = vmatprep.subr.mxu0 0.0
    %5970 = vmatpush1.msra.mxu0 0.0
    %5971 = vmatprep.subr.mxu0 0.0
    %5972 = vmatpush1.msra.mxu0 0.0
    %5973 = vmatprep.subr.mxu0 0.0
    %5974 = vmatpush1.msra.mxu0 0.0
    %5975 = vmatprep.subr.mxu0 0.0
    %5976 = vmatpush1.msra.mxu0 0.0
    %5977 = vmatprep.subr.mxu0 0.0
    %5978 = vmatpush1.msra.mxu0 0.0
    %5979 = vmatprep.subr.mxu0 0.0
    %5980 = vmatpush1.msra.mxu0 0.0
    %5981 = vmatprep.subr.mxu0 0.0
    %5982 = vmatpush1.msra.mxu0 0.0
    %5983 = vmatprep.subr.mxu0 0.0
    %5984 = vmatpush1.msra.mxu0 0.0
    %5985 = vmatprep.subr.mxu0 0.0
    %5986 = vmatpush1.msra.mxu0 0.0
    %5987 = vmatprep.subr.mxu0 0.0
    %5988 = vmatpush1.msra.mxu0 0.0
    %5989 = vmatprep.subr.mxu0 0.0
    %5990 = vmatpush1.msra.mxu0 0.0
    %5991 = vmatprep.subr.mxu0 0.0
    %5992 = vmatpush1.msra.mxu0 0.0
    %5993 = vmatprep.subr.mxu0 0.0
    %5994 = vmatpush1.msra.mxu0 0.0
    %5995 = vmatprep.subr.mxu0 0.0
    %5996 = vmatpush1.msra.mxu0 0.0
    %5997 = vmatprep.subr.mxu0 0.0
    %5998 = vmatpush1.msra.mxu0 0.0
    %5999 = vmatprep.subr.mxu0 0.0
    %6000 = vmatpush1.msra.mxu0 0.0
    %6001 = vmatprep.subr.mxu0 0.0
    %6002 = vmatpush1.msra.mxu0 0.0
    %6003 = vmatprep.subr.mxu0 0.0
    %6004 = vmatpush1.msra.mxu0 0.0
    %6005 = vmatprep.subr.mxu0 0.0
    %6006 = vmatpush1.msra.mxu0 0.0
    %6007 = vmatprep.mubr.f32.mxu0 0.0
    %6008 = vmatmul.mubr.f32.gmra.mrb[0].mxu0 %v5938
    %v6009 = vpop.f32.mrb[0].mxu0
    %v6010 = vadd.f32 0.0, %v6009
    %v6011 = vpop.f32.mrb[0].mxu0
    %6012 = vdwg.mxu0
    %v6014 = vsel %vm4789, %v5593, 0
    %v6017 = vsel %vm5619, %v5599, 0
    %6019 = vmatprep.subr.mxu0 0.0
    %6020 = vmatpush1.msra.mxu0 %v5595
    %6021 = vmatprep.subr.mxu0 0.0
    %6022 = vmatpush1.msra.mxu0 %v5596
    %6023 = vmatprep.subr.mxu0 0.0
    %6024 = vmatpush1.msra.mxu0 %v5597
    %6025 = vmatprep.subr.mxu0 0.0
    %6026 = vmatpush1.msra.mxu0 %v5598
    %6027 = vmatprep.subr.mxu0 0.0
    %6028 = vmatpush1.msra.mxu0 %v6017
    %6029 = vmatprep.subr.mxu0 0.0
    %6030 = vmatpush1.msra.mxu0 0.0
    %6031 = vmatprep.subr.mxu0 0.0
    %6032 = vmatpush1.msra.mxu0 0.0
    %6033 = vmatprep.subr.mxu0 0.0
    %6034 = vmatpush1.msra.mxu0 0.0
    %6035 = vmatprep.subr.mxu0 0.0
    %6036 = vmatpush1.msra.mxu0 0.0
    %6037 = vmatprep.subr.mxu0 0.0
    %6038 = vmatpush1.msra.mxu0 0.0
    %6039 = vmatprep.subr.mxu0 0.0
    %6040 = vmatpush1.msra.mxu0 0.0
    %6041 = vmatprep.subr.mxu0 0.0
    %6042 = vmatpush1.msra.mxu0 0.0
    %6043 = vmatprep.subr.mxu0 0.0
    %6044 = vmatpush1.msra.mxu0 0.0
    %6045 = vmatprep.subr.mxu0 0.0
    %6046 = vmatpush1.msra.mxu0 0.0
    %6047 = vmatprep.subr.mxu0 0.0
    %6048 = vmatpush1.msra.mxu0 0.0
    %6049 = vmatprep.subr.mxu0 0.0
    %6050 = vmatpush1.msra.mxu0 0.0
    %6051 = vmatprep.subr.mxu0 0.0
    %6052 = vmatpush1.msra.mxu0 0.0
    %6053 = vmatprep.subr.mxu0 0.0
    %6054 = vmatpush1.msra.mxu0 0.0
    %6055 = vmatprep.subr.mxu0 0.0
    %6056 = vmatpush1.msra.mxu0 0.0
    %6057 = vmatprep.subr.mxu0 0.0
    %6058 = vmatpush1.msra.mxu0 0.0
    %6059 = vmatprep.subr.mxu0 0.0
    %6060 = vmatpush1.msra.mxu0 0.0
    %6061 = vmatprep.subr.mxu0 0.0
    %6062 = vmatpush1.msra.mxu0 0.0
    %6063 = vmatprep.subr.mxu0 0.0
    %6064 = vmatpush1.msra.mxu0 0.0
    %6065 = vmatprep.subr.mxu0 0.0
    %6066 = vmatpush1.msra.mxu0 0.0
    %6067 = vmatprep.subr.mxu0 0.0
    %6068 = vmatpush1.msra.mxu0 0.0
    %6069 = vmatprep.subr.mxu0 0.0
    %6070 = vmatpush1.msra.mxu0 0.0
    %6071 = vmatprep.subr.mxu0 0.0
    %6072 = vmatpush1.msra.mxu0 0.0
    %6073 = vmatprep.subr.mxu0 0.0
    %6074 = vmatpush1.msra.mxu0 0.0
    %6075 = vmatprep.subr.mxu0 0.0
    %6076 = vmatpush1.msra.mxu0 0.0
    %6077 = vmatprep.subr.mxu0 0.0
    %6078 = vmatpush1.msra.mxu0 0.0
    %6079 = vmatprep.subr.mxu0 0.0
    %6080 = vmatpush1.msra.mxu0 0.0
    %6081 = vmatprep.subr.mxu0 0.0
    %6082 = vmatpush1.msra.mxu0 0.0
    %6083 = vmatprep.mubr.f32.mxu0 0.0
    %6084 = vmatmul.mubr.f32.gmra.mrb[0].mxu0 %v6014
    %v6085 = vpop.f32.mrb[0].mxu0
    %v6086 = vadd.f32 %v6010, %v6085
    %v6087 = vpop.f32.mrb[0].mxu0
    %6088 = vdwg.mxu0
    %s6089 = scalar_lea.vmem [#allocation2], 56
    %v6090 = vld [vmem:[%s6089] sm:$0xff]
    %s6091 = scalar_lea.vmem %s5, 280
    %v6092 = vld [vmem:[%s6091] sm:$0xff]
    %v6093 = vld [vmem:[%s6091 + $0x8] sm:$0xff]
    %v6094 = vld [vmem:[%s6091 + $0x10] sm:$0xff]
    %v6095 = vld [vmem:[%s6091 + $0x18] sm:$0xff]
    %v6096 = vld [vmem:[%s6091 + $0x20] sm:$0xf]
    %v6098 = vsel %vm4789, %v6090, 0
    %v6101 = vsel %vm5619, %v6096, 0
    %6103 = vmatprep.subr.mxu0 0.0
    %6104 = vmatpush1.msra.mxu0 %v6092
    %6105 = vmatprep.subr.mxu0 0.0
    %6106 = vmatpush1.msra.mxu0 %v6093
    %6107 = vmatprep.subr.mxu0 0.0
    %6108 = vmatpush1.msra.mxu0 %v6094
    %6109 = vmatprep.subr.mxu0 0.0
    %6110 = vmatpush1.msra.mxu0 %v6095
    %6111 = vmatprep.subr.mxu0 0.0
    %6112 = vmatpush1.msra.mxu0 %v6101
    %6113 = vmatprep.subr.mxu0 0.0
    %6114 = vmatpush1.msra.mxu0 0.0
    %6115 = vmatprep.subr.mxu0 0.0
    %6116 = vmatpush1.msra.mxu0 0.0
    %6117 = vmatprep.subr.mxu0 0.0
    %6118 = vmatpush1.msra.mxu0 0.0
    %6119 = vmatprep.subr.mxu0 0.0
    %6120 = vmatpush1.msra.mxu0 0.0
    %6121 = vmatprep.subr.mxu0 0.0
    %6122 = vmatpush1.msra.mxu0 0.0
    %6123 = vmatprep.subr.mxu0 0.0
    %6124 = vmatpush1.msra.mxu0 0.0
    %6125 = vmatprep.subr.mxu0 0.0
    %6126 = vmatpush1.msra.mxu0 0.0
    %6127 = vmatprep.subr.mxu0 0.0
    %6128 = vmatpush1.msra.mxu0 0.0
    %6129 = vmatprep.subr.mxu0 0.0
    %6130 = vmatpush1.msra.mxu0 0.0
    %6131 = vmatprep.subr.mxu0 0.0
    %6132 = vmatpush1.msra.mxu0 0.0
    %6133 = vmatprep.subr.mxu0 0.0
    %6134 = vmatpush1.msra.mxu0 0.0
    %6135 = vmatprep.subr.mxu0 0.0
    %6136 = vmatpush1.msra.mxu0 0.0
    %6137 = vmatprep.subr.mxu0 0.0
    %6138 = vmatpush1.msra.mxu0 0.0
    %6139 = vmatprep.subr.mxu0 0.0
    %6140 = vmatpush1.msra.mxu0 0.0
    %6141 = vmatprep.subr.mxu0 0.0
    %6142 = vmatpush1.msra.mxu0 0.0
    %6143 = vmatprep.subr.mxu0 0.0
    %6144 = vmatpush1.msra.mxu0 0.0
    %6145 = vmatprep.subr.mxu0 0.0
    %6146 = vmatpush1.msra.mxu0 0.0
    %6147 = vmatprep.subr.mxu0 0.0
    %6148 = vmatpush1.msra.mxu0 0.0
    %6149 = vmatprep.subr.mxu0 0.0
    %6150 = vmatpush1.msra.mxu0 0.0
    %6151 = vmatprep.subr.mxu0 0.0
    %6152 = vmatpush1.msra.mxu0 0.0
    %6153 = vmatprep.subr.mxu0 0.0
    %6154 = vmatpush1.msra.mxu0 0.0
    %6155 = vmatprep.subr.mxu0 0.0
    %6156 = vmatpush1.msra.mxu0 0.0
    %6157 = vmatprep.subr.mxu0 0.0
    %6158 = vmatpush1.msra.mxu0 0.0
    %6159 = vmatprep.subr.mxu0 0.0
    %6160 = vmatpush1.msra.mxu0 0.0
    %6161 = vmatprep.subr.mxu0 0.0
    %6162 = vmatpush1.msra.mxu0 0.0
    %6163 = vmatprep.subr.mxu0 0.0
    %6164 = vmatpush1.msra.mxu0 0.0
    %6165 = vmatprep.subr.mxu0 0.0
    %6166 = vmatpush1.msra.mxu0 0.0
    %6167 = vmatprep.mubr.f32.mxu0 0.0
    %6168 = vmatmul.mubr.f32.gmra.mrb[0].mxu0 %v6098
    %v6169 = vpop.f32.mrb[0].mxu0
    %v6170 = vadd.f32 0.0, %v6169
    %v6171 = vpop.f32.mrb[0].mxu0
    %6172 = vdwg.mxu0
    %v6174 = vsel %vm4789, %v5601, 0
    %v6177 = vsel %vm5619, %v5607, 0
    %6179 = vmatprep.subr.mxu0 0.0
    %6180 = vmatpush1.msra.mxu0 %v5603
    %6181 = vmatprep.subr.mxu0 0.0
    %6182 = vmatpush1.msra.mxu0 %v5604
    %6183 = vmatprep.subr.mxu0 0.0
    %6184 = vmatpush1.msra.mxu0 %v5605
    %6185 = vmatprep.subr.mxu0 0.0
    %6186 = vmatpush1.msra.mxu0 %v5606
    %6187 = vmatprep.subr.mxu0 0.0
    %6188 = vmatpush1.msra.mxu0 %v6177
    %6189 = vmatprep.subr.mxu0 0.0
    %6190 = vmatpush1.msra.mxu0 0.0
    %6191 = vmatprep.subr.mxu0 0.0
    %6192 = vmatpush1.msra.mxu0 0.0
    %6193 = vmatprep.subr.mxu0 0.0
    %6194 = vmatpush1.msra.mxu0 0.0
    %6195 = vmatprep.subr.mxu0 0.0
    %6196 = vmatpush1.msra.mxu0 0.0
    %6197 = vmatprep.subr.mxu0 0.0
    %6198 = vmatpush1.msra.mxu0 0.0
    %6199 = vmatprep.subr.mxu0 0.0
    %6200 = vmatpush1.msra.mxu0 0.0
    %6201 = vmatprep.subr.mxu0 0.0
    %6202 = vmatpush1.msra.mxu0 0.0
    %6203 = vmatprep.subr.mxu0 0.0
    %6204 = vmatpush1.msra.mxu0 0.0
    %6205 = vmatprep.subr.mxu0 0.0
    %6206 = vmatpush1.msra.mxu0 0.0
    %6207 = vmatprep.subr.mxu0 0.0
    %6208 = vmatpush1.msra.mxu0 0.0
    %6209 = vmatprep.subr.mxu0 0.0
    %6210 = vmatpush1.msra.mxu0 0.0
    %6211 = vmatprep.subr.mxu0 0.0
    %6212 = vmatpush1.msra.mxu0 0.0
    %6213 = vmatprep.subr.mxu0 0.0
    %6214 = vmatpush1.msra.mxu0 0.0
    %6215 = vmatprep.subr.mxu0 0.0
    %6216 = vmatpush1.msra.mxu0 0.0
    %6217 = vmatprep.subr.mxu0 0.0
    %6218 = vmatpush1.msra.mxu0 0.0
    %6219 = vmatprep.subr.mxu0 0.0
    %6220 = vmatpush1.msra.mxu0 0.0
    %6221 = vmatprep.subr.mxu0 0.0
    %6222 = vmatpush1.msra.mxu0 0.0
    %6223 = vmatprep.subr.mxu0 0.0
    %6224 = vmatpush1.msra.mxu0 0.0
    %6225 = vmatprep.subr.mxu0 0.0
    %6226 = vmatpush1.msra.mxu0 0.0
    %6227 = vmatprep.subr.mxu0 0.0
    %6228 = vmatpush1.msra.mxu0 0.0
    %6229 = vmatprep.subr.mxu0 0.0
    %6230 = vmatpush1.msra.mxu0 0.0
    %6231 = vmatprep.subr.mxu0 0.0
    %6232 = vmatpush1.msra.mxu0 0.0
    %6233 = vmatprep.subr.mxu0 0.0
    %6234 = vmatpush1.msra.mxu0 0.0
    %6235 = vmatprep.subr.mxu0 0.0
    %6236 = vmatpush1.msra.mxu0 0.0
    %6237 = vmatprep.subr.mxu0 0.0
    %6238 = vmatpush1.msra.mxu0 0.0
    %6239 = vmatprep.subr.mxu0 0.0
    %6240 = vmatpush1.msra.mxu0 0.0
    %6241 = vmatprep.subr.mxu0 0.0
    %6242 = vmatpush1.msra.mxu0 0.0
    %6243 = vmatprep.mubr.f32.mxu0 0.0
    %6244 = vmatmul.mubr.f32.gmra.mrb[0].mxu0 %v6174
    %v6245 = vpop.f32.mrb[0].mxu0
    %v6246 = vadd.f32 %v6170, %v6245
    %v6247 = vpop.f32.mrb[0].mxu0
    %6248 = vdwg.mxu0
    %s6249 = scalar_lea.vmem [#allocation2], 64
    %v6250 = vld [vmem:[%s6249] sm:$0xff]
    %s6251 = scalar_lea.vmem %s5, 320
    %v6252 = vld [vmem:[%s6251] sm:$0xff]
    %v6253 = vld [vmem:[%s6251 + $0x8] sm:$0xff]
    %v6254 = vld [vmem:[%s6251 + $0x10] sm:$0xff]
    %v6255 = vld [vmem:[%s6251 + $0x18] sm:$0xff]
    %v6256 = vld [vmem:[%s6251 + $0x20] sm:$0xf]
    %v6258 = vsel %vm4789, %v6250, 0
    %v6261 = vsel %vm5619, %v6256, 0
    %6263 = vmatprep.subr.mxu0 0.0
    %6264 = vmatpush1.msra.mxu0 %v6252
    %6265 = vmatprep.subr.mxu0 0.0
    %6266 = vmatpush1.msra.mxu0 %v6253
    %6267 = vmatprep.subr.mxu0 0.0
    %6268 = vmatpush1.msra.mxu0 %v6254
    %6269 = vmatprep.subr.mxu0 0.0
    %6270 = vmatpush1.msra.mxu0 %v6255
    %6271 = vmatprep.subr.mxu0 0.0
    %6272 = vmatpush1.msra.mxu0 %v6261
    %6273 = vmatprep.subr.mxu0 0.0
    %6274 = vmatpush1.msra.mxu0 0.0
    %6275 = vmatprep.subr.mxu0 0.0
    %6276 = vmatpush1.msra.mxu0 0.0
    %6277 = vmatprep.subr.mxu0 0.0
    %6278 = vmatpush1.msra.mxu0 0.0
    %6279 = vmatprep.subr.mxu0 0.0
    %6280 = vmatpush1.msra.mxu0 0.0
    %6281 = vmatprep.subr.mxu0 0.0
    %6282 = vmatpush1.msra.mxu0 0.0
    %6283 = vmatprep.subr.mxu0 0.0
    %6284 = vmatpush1.msra.mxu0 0.0
    %6285 = vmatprep.subr.mxu0 0.0
    %6286 = vmatpush1.msra.mxu0 0.0
    %6287 = vmatprep.subr.mxu0 0.0
    %6288 = vmatpush1.msra.mxu0 0.0
    %6289 = vmatprep.subr.mxu0 0.0
    %6290 = vmatpush1.msra.mxu0 0.0
    %6291 = vmatprep.subr.mxu0 0.0
    %6292 = vmatpush1.msra.mxu0 0.0
    %6293 = vmatprep.subr.mxu0 0.0
    %6294 = vmatpush1.msra.mxu0 0.0
    %6295 = vmatprep.subr.mxu0 0.0
    %6296 = vmatpush1.msra.mxu0 0.0
    %6297 = vmatprep.subr.mxu0 0.0
    %6298 = vmatpush1.msra.mxu0 0.0
    %6299 = vmatprep.subr.mxu0 0.0
    %6300 = vmatpush1.msra.mxu0 0.0
    %6301 = vmatprep.subr.mxu0 0.0
    %6302 = vmatpush1.msra.mxu0 0.0
    %6303 = vmatprep.subr.mxu0 0.0
    %6304 = vmatpush1.msra.mxu0 0.0
    %6305 = vmatprep.subr.mxu0 0.0
    %6306 = vmatpush1.msra.mxu0 0.0
    %6307 = vmatprep.subr.mxu0 0.0
    %6308 = vmatpush1.msra.mxu0 0.0
    %6309 = vmatprep.subr.mxu0 0.0
    %6310 = vmatpush1.msra.mxu0 0.0
    %6311 = vmatprep.subr.mxu0 0.0
    %6312 = vmatpush1.msra.mxu0 0.0
    %6313 = vmatprep.subr.mxu0 0.0
    %6314 = vmatpush1.msra.mxu0 0.0
    %6315 = vmatprep.subr.mxu0 0.0
    %6316 = vmatpush1.msra.mxu0 0.0
    %6317 = vmatprep.subr.mxu0 0.0
    %6318 = vmatpush1.msra.mxu0 0.0
    %6319 = vmatprep.subr.mxu0 0.0
    %6320 = vmatpush1.msra.mxu0 0.0
    %6321 = vmatprep.subr.mxu0 0.0
    %6322 = vmatpush1.msra.mxu0 0.0
    %6323 = vmatprep.subr.mxu0 0.0
    %6324 = vmatpush1.msra.mxu0 0.0
    %6325 = vmatprep.subr.mxu0 0.0
    %6326 = vmatpush1.msra.mxu0 0.0
    %6327 = vmatprep.mubr.f32.mxu0 0.0
    %6328 = vmatmul.mubr.f32.gmra.mrb[0].mxu0 %v6258
    %v6329 = vpop.f32.mrb[0].mxu0
    %v6330 = vadd.f32 0.0, %v6329
    %v6331 = vpop.f32.mrb[0].mxu0
    %6332 = vdwg.mxu0
    %v6333 = vadd.f32 %v5766, %v6330
    %s6334 = scalar_lea.vmem [#allocation2], 72
    %v6335 = vld [vmem:[%s6334] sm:$0xff]
    %s6336 = scalar_lea.vmem %s5, 360
    %v6337 = vld [vmem:[%s6336] sm:$0xff]
    %v6338 = vld [vmem:[%s6336 + $0x8] sm:$0xff]
    %v6339 = vld [vmem:[%s6336 + $0x10] sm:$0xff]
    %v6340 = vld [vmem:[%s6336 + $0x18] sm:$0xff]
    %v6341 = vld [vmem:[%s6336 + $0x20] sm:$0xf]
    %v6343 = vsel %vm4789, %v6335, 0
    %v6346 = vsel %vm5619, %v6341, 0
    %6348 = vmatprep.subr.mxu0 0.0
    %6349 = vmatpush1.msra.mxu0 %v6337
    %6350 = vmatprep.subr.mxu0 0.0
    %6351 = vmatpush1.msra.mxu0 %v6338
    %6352 = vmatprep.subr.mxu0 0.0
    %6353 = vmatpush1.msra.mxu0 %v6339
    %6354 = vmatprep.subr.mxu0 0.0
    %6355 = vmatpush1.msra.mxu0 %v6340
    %6356 = vmatprep.subr.mxu0 0.0
    %6357 = vmatpush1.msra.mxu0 %v6346
    %6358 = vmatprep.subr.mxu0 0.0
    %6359 = vmatpush1.msra.mxu0 0.0
    %6360 = vmatprep.subr.mxu0 0.0
    %6361 = vmatpush1.msra.mxu0 0.0
    %6362 = vmatprep.subr.mxu0 0.0
    %6363 = vmatpush1.msra.mxu0 0.0
    %6364 = vmatprep.subr.mxu0 0.0
    %6365 = vmatpush1.msra.mxu0 0.0
    %6366 = vmatprep.subr.mxu0 0.0
    %6367 = vmatpush1.msra.mxu0 0.0
    %6368 = vmatprep.subr.mxu0 0.0
    %6369 = vmatpush1.msra.mxu0 0.0
    %6370 = vmatprep.subr.mxu0 0.0
    %6371 = vmatpush1.msra.mxu0 0.0
    %6372 = vmatprep.subr.mxu0 0.0
    %6373 = vmatpush1.msra.mxu0 0.0
    %6374 = vmatprep.subr.mxu0 0.0
    %6375 = vmatpush1.msra.mxu0 0.0
    %6376 = vmatprep.subr.mxu0 0.0
    %6377 = vmatpush1.msra.mxu0 0.0
    %6378 = vmatprep.subr.mxu0 0.0
    %6379 = vmatpush1.msra.mxu0 0.0
    %6380 = vmatprep.subr.mxu0 0.0
    %6381 = vmatpush1.msra.mxu0 0.0
    %6382 = vmatprep.subr.mxu0 0.0
    %6383 = vmatpush1.msra.mxu0 0.0
    %6384 = vmatprep.subr.mxu0 0.0
    %6385 = vmatpush1.msra.mxu0 0.0
    %6386 = vmatprep.subr.mxu0 0.0
    %6387 = vmatpush1.msra.mxu0 0.0
    %6388 = vmatprep.subr.mxu0 0.0
    %6389 = vmatpush1.msra.mxu0 0.0
    %6390 = vmatprep.subr.mxu0 0.0
    %6391 = vmatpush1.msra.mxu0 0.0
    %6392 = vmatprep.subr.mxu0 0.0
    %6393 = vmatpush1.msra.mxu0 0.0
    %6394 = vmatprep.subr.mxu0 0.0
    %6395 = vmatpush1.msra.mxu0 0.0
    %6396 = vmatprep.subr.mxu0 0.0
    %6397 = vmatpush1.msra.mxu0 0.0
    %6398 = vmatprep.subr.mxu0 0.0
    %6399 = vmatpush1.msra.mxu0 0.0
    %6400 = vmatprep.subr.mxu0 0.0
    %6401 = vmatpush1.msra.mxu0 0.0
    %6402 = vmatprep.subr.mxu0 0.0
    %6403 = vmatpush1.msra.mxu0 0.0
    %6404 = vmatprep.subr.mxu0 0.0
    %6405 = vmatpush1.msra.mxu0 0.0
    %6406 = vmatprep.subr.mxu0 0.0
    %6407 = vmatpush1.msra.mxu0 0.0
    %6408 = vmatprep.subr.mxu0 0.0
    %6409 = vmatpush1.msra.mxu0 0.0
    %6410 = vmatprep.subr.mxu0 0.0
    %6411 = vmatpush1.msra.mxu0 0.0
    %6412 = vmatprep.mubr.f32.mxu0 0.0
    %6413 = vmatmul.mubr.f32.gmra.mrb[0].mxu0 %v6343
    %v6414 = vpop.f32.mrb[0].mxu0
    %v6415 = vadd.f32 0.0, %v6414
    %v6416 = vpop.f32.mrb[0].mxu0
    %6417 = vdwg.mxu0
    %v6418 = vadd.f32 %v5926, %v6415
    %s6419 = scalar_lea.vmem [#allocation2], 80
    %v6420 = vld [vmem:[%s6419] sm:$0xff]
    %s6421 = scalar_lea.vmem %s5, 400
    %v6422 = vld [vmem:[%s6421] sm:$0xff]
    %v6423 = vld [vmem:[%s6421 + $0x8] sm:$0xff]
    %v6424 = vld [vmem:[%s6421 + $0x10] sm:$0xff]
    %v6425 = vld [vmem:[%s6421 + $0x18] sm:$0xff]
    %v6426 = vld [vmem:[%s6421 + $0x20] sm:$0xf]
    %v6428 = vsel %vm4789, %v6420, 0
    %v6431 = vsel %vm5619, %v6426, 0
    %6433 = vmatprep.subr.mxu0 0.0
    %6434 = vmatpush1.msra.mxu0 %v6422
    %6435 = vmatprep.subr.mxu0 0.0
    %6436 = vmatpush1.msra.mxu0 %v6423
    %6437 = vmatprep.subr.mxu0 0.0
    %6438 = vmatpush1.msra.mxu0 %v6424
    %6439 = vmatprep.subr.mxu0 0.0
    %6440 = vmatpush1.msra.mxu0 %v6425
    %6441 = vmatprep.subr.mxu0 0.0
    %6442 = vmatpush1.msra.mxu0 %v6431
    %6443 = vmatprep.subr.mxu0 0.0
    %6444 = vmatpush1.msra.mxu0 0.0
    %6445 = vmatprep.subr.mxu0 0.0
    %6446 = vmatpush1.msra.mxu0 0.0
    %6447 = vmatprep.subr.mxu0 0.0
    %6448 = vmatpush1.msra.mxu0 0.0
    %6449 = vmatprep.subr.mxu0 0.0
    %6450 = vmatpush1.msra.mxu0 0.0
    %6451 = vmatprep.subr.mxu0 0.0
    %6452 = vmatpush1.msra.mxu0 0.0
    %6453 = vmatprep.subr.mxu0 0.0
    %6454 = vmatpush1.msra.mxu0 0.0
    %6455 = vmatprep.subr.mxu0 0.0
    %6456 = vmatpush1.msra.mxu0 0.0
    %6457 = vmatprep.subr.mxu0 0.0
    %6458 = vmatpush1.msra.mxu0 0.0
    %6459 = vmatprep.subr.mxu0 0.0
    %6460 = vmatpush1.msra.mxu0 0.0
    %6461 = vmatprep.subr.mxu0 0.0
    %6462 = vmatpush1.msra.mxu0 0.0
    %6463 = vmatprep.subr.mxu0 0.0
    %6464 = vmatpush1.msra.mxu0 0.0
    %6465 = vmatprep.subr.mxu0 0.0
    %6466 = vmatpush1.msra.mxu0 0.0
    %6467 = vmatprep.subr.mxu0 0.0
    %6468 = vmatpush1.msra.mxu0 0.0
    %6469 = vmatprep.subr.mxu0 0.0
    %6470 = vmatpush1.msra.mxu0 0.0
    %6471 = vmatprep.subr.mxu0 0.0
    %6472 = vmatpush1.msra.mxu0 0.0
    %6473 = vmatprep.subr.mxu0 0.0
    %6474 = vmatpush1.msra.mxu0 0.0
    %6475 = vmatprep.subr.mxu0 0.0
    %6476 = vmatpush1.msra.mxu0 0.0
    %6477 = vmatprep.subr.mxu0 0.0
    %6478 = vmatpush1.msra.mxu0 0.0
    %6479 = vmatprep.subr.mxu0 0.0
    %6480 = vmatpush1.msra.mxu0 0.0
    %6481 = vmatprep.subr.mxu0 0.0
    %6482 = vmatpush1.msra.mxu0 0.0
    %6483 = vmatprep.subr.mxu0 0.0
    %6484 = vmatpush1.msra.mxu0 0.0
    %6485 = vmatprep.subr.mxu0 0.0
    %6486 = vmatpush1.msra.mxu0 0.0
    %6487 = vmatprep.subr.mxu0 0.0
    %6488 = vmatpush1.msra.mxu0 0.0
    %6489 = vmatprep.subr.mxu0 0.0
    %6490 = vmatpush1.msra.mxu0 0.0
    %6491 = vmatprep.subr.mxu0 0.0
    %6492 = vmatpush1.msra.mxu0 0.0
    %6493 = vmatprep.subr.mxu0 0.0
    %6494 = vmatpush1.msra.mxu0 0.0
    %6495 = vmatprep.subr.mxu0 0.0
    %6496 = vmatpush1.msra.mxu0 0.0
    %6497 = vmatprep.mubr.f32.mxu0 0.0
    %6498 = vmatmul.mubr.f32.gmra.mrb[0].mxu0 %v6428
    %v6499 = vpop.f32.mrb[0].mxu0
    %v6500 = vadd.f32 0.0, %v6499
    %v6501 = vpop.f32.mrb[0].mxu0
    %6502 = vdwg.mxu0
    %v6503 = vadd.f32 %v6086, %v6500
    %s6504 = scalar_lea.vmem [#allocation2], 88
    %v6505 = vld [vmem:[%s6504] sm:$0xff]
    %s6506 = scalar_lea.vmem %s5, 440
    %v6507 = vld [vmem:[%s6506] sm:$0xff]
    %v6508 = vld [vmem:[%s6506 + $0x8] sm:$0xff]
    %v6509 = vld [vmem:[%s6506 + $0x10] sm:$0xff]
    %v6510 = vld [vmem:[%s6506 + $0x18] sm:$0xff]
    %v6511 = vld [vmem:[%s6506 + $0x20] sm:$0xf]
    %v6513 = vsel %vm4789, %v6505, 0
    %v6516 = vsel %vm5619, %v6511, 0
    %6518 = vmatprep.subr.mxu0 0.0
    %6519 = vmatpush1.msra.mxu0 %v6507
    %6520 = vmatprep.subr.mxu0 0.0
    %6521 = vmatpush1.msra.mxu0 %v6508
    %6522 = vmatprep.subr.mxu0 0.0
    %6523 = vmatpush1.msra.mxu0 %v6509
    %6524 = vmatprep.subr.mxu0 0.0
    %6525 = vmatpush1.msra.mxu0 %v6510
    %6526 = vmatprep.subr.mxu0 0.0
    %6527 = vmatpush1.msra.mxu0 %v6516
    %6528 = vmatprep.subr.mxu0 0.0
    %6529 = vmatpush1.msra.mxu0 0.0
    %6530 = vmatprep.subr.mxu0 0.0
    %6531 = vmatpush1.msra.mxu0 0.0
    %6532 = vmatprep.subr.mxu0 0.0
    %6533 = vmatpush1.msra.mxu0 0.0
    %6534 = vmatprep.subr.mxu0 0.0
    %6535 = vmatpush1.msra.mxu0 0.0
    %6536 = vmatprep.subr.mxu0 0.0
    %6537 = vmatpush1.msra.mxu0 0.0
    %6538 = vmatprep.subr.mxu0 0.0
    %6539 = vmatpush1.msra.mxu0 0.0
    %6540 = vmatprep.subr.mxu0 0.0
    %6541 = vmatpush1.msra.mxu0 0.0
    %6542 = vmatprep.subr.mxu0 0.0
    %6543 = vmatpush1.msra.mxu0 0.0
    %6544 = vmatprep.subr.mxu0 0.0
    %6545 = vmatpush1.msra.mxu0 0.0
    %6546 = vmatprep.subr.mxu0 0.0
    %6547 = vmatpush1.msra.mxu0 0.0
    %6548 = vmatprep.subr.mxu0 0.0
    %6549 = vmatpush1.msra.mxu0 0.0
    %6550 = vmatprep.subr.mxu0 0.0
    %6551 = vmatpush1.msra.mxu0 0.0
    %6552 = vmatprep.subr.mxu0 0.0
    %6553 = vmatpush1.msra.mxu0 0.0
    %6554 = vmatprep.subr.mxu0 0.0
    %6555 = vmatpush1.msra.mxu0 0.0
    %6556 = vmatprep.subr.mxu0 0.0
    %6557 = vmatpush1.msra.mxu0 0.0
    %6558 = vmatprep.subr.mxu0 0.0
    %6559 = vmatpush1.msra.mxu0 0.0
    %6560 = vmatprep.subr.mxu0 0.0
    %6561 = vmatpush1.msra.mxu0 0.0
    %6562 = vmatprep.subr.mxu0 0.0
    %6563 = vmatpush1.msra.mxu0 0.0
    %6564 = vmatprep.subr.mxu0 0.0
    %6565 = vmatpush1.msra.mxu0 0.0
    %6566 = vmatprep.subr.mxu0 0.0
    %6567 = vmatpush1.msra.mxu0 0.0
    %6568 = vmatprep.subr.mxu0 0.0
    %6569 = vmatpush1.msra.mxu0 0.0
    %6570 = vmatprep.subr.mxu0 0.0
    %6571 = vmatpush1.msra.mxu0 0.0
    %6572 = vmatprep.subr.mxu0 0.0
    %6573 = vmatpush1.msra.mxu0 0.0
    %6574 = vmatprep.subr.mxu0 0.0
    %6575 = vmatpush1.msra.mxu0 0.0
    %6576 = vmatprep.subr.mxu0 0.0
    %6577 = vmatpush1.msra.mxu0 0.0
    %6578 = vmatprep.subr.mxu0 0.0
    %6579 = vmatpush1.msra.mxu0 0.0
    %6580 = vmatprep.subr.mxu0 0.0
    %6581 = vmatpush1.msra.mxu0 0.0
    %6582 = vmatprep.mubr.f32.mxu0 0.0
    %6583 = vmatmul.mubr.f32.gmra.mrb[0].mxu0 %v6513
    %v6584 = vpop.f32.mrb[0].mxu0
    %v6585 = vadd.f32 0.0, %v6584
    %v6586 = vpop.f32.mrb[0].mxu0
    %6587 = vdwg.mxu0
    %v6588 = vadd.f32 %v6246, %v6585
    %s6589 = scalar_lea.vmem [#allocation2], 96
    %v6590 = vld [vmem:[%s6589] sm:$0xff]
    %s6591 = scalar_lea.vmem %s5, 480
    %v6592 = vld [vmem:[%s6591] sm:$0xff]
    %v6593 = vld [vmem:[%s6591 + $0x8] sm:$0xff]
    %v6594 = vld [vmem:[%s6591 + $0x10] sm:$0xff]
    %v6595 = vld [vmem:[%s6591 + $0x18] sm:$0xff]
    %v6596 = vld [vmem:[%s6591 + $0x20] sm:$0xf]
    %v6598 = vsel %vm4789, %v6590, 0
    %v6601 = vsel %vm5619, %v6596, 0
    %6603 = vmatprep.subr.mxu0 0.0
    %6604 = vmatpush1.msra.mxu0 %v6592
    %6605 = vmatprep.subr.mxu0 0.0
    %6606 = vmatpush1.msra.mxu0 %v6593
    %6607 = vmatprep.subr.mxu0 0.0
    %6608 = vmatpush1.msra.mxu0 %v6594
    %6609 = vmatprep.subr.mxu0 0.0
    %6610 = vmatpush1.msra.mxu0 %v6595
    %6611 = vmatprep.subr.mxu0 0.0
    %6612 = vmatpush1.msra.mxu0 %v6601
    %6613 = vmatprep.subr.mxu0 0.0
    %6614 = vmatpush1.msra.mxu0 0.0
    %6615 = vmatprep.subr.mxu0 0.0
    %6616 = vmatpush1.msra.mxu0 0.0
    %6617 = vmatprep.subr.mxu0 0.0
    %6618 = vmatpush1.msra.mxu0 0.0
    %6619 = vmatprep.subr.mxu0 0.0
    %6620 = vmatpush1.msra.mxu0 0.0
    %6621 = vmatprep.subr.mxu0 0.0
    %6622 = vmatpush1.msra.mxu0 0.0
    %6623 = vmatprep.subr.mxu0 0.0
    %6624 = vmatpush1.msra.mxu0 0.0
    %6625 = vmatprep.subr.mxu0 0.0
    %6626 = vmatpush1.msra.mxu0 0.0
    %6627 = vmatprep.subr.mxu0 0.0
    %6628 = vmatpush1.msra.mxu0 0.0
    %6629 = vmatprep.subr.mxu0 0.0
    %6630 = vmatpush1.msra.mxu0 0.0
    %6631 = vmatprep.subr.mxu0 0.0
    %6632 = vmatpush1.msra.mxu0 0.0
    %6633 = vmatprep.subr.mxu0 0.0
    %6634 = vmatpush1.msra.mxu0 0.0
    %6635 = vmatprep.subr.mxu0 0.0
    %6636 = vmatpush1.msra.mxu0 0.0
    %6637 = vmatprep.subr.mxu0 0.0
    %6638 = vmatpush1.msra.mxu0 0.0
    %6639 = vmatprep.subr.mxu0 0.0
    %6640 = vmatpush1.msra.mxu0 0.0
    %6641 = vmatprep.subr.mxu0 0.0
    %6642 = vmatpush1.msra.mxu0 0.0
    %6643 = vmatprep.subr.mxu0 0.0
    %6644 = vmatpush1.msra.mxu0 0.0
    %6645 = vmatprep.subr.mxu0 0.0
    %6646 = vmatpush1.msra.mxu0 0.0
    %6647 = vmatprep.subr.mxu0 0.0
    %6648 = vmatpush1.msra.mxu0 0.0
    %6649 = vmatprep.subr.mxu0 0.0
    %6650 = vmatpush1.msra.mxu0 0.0
    %6651 = vmatprep.subr.mxu0 0.0
    %6652 = vmatpush1.msra.mxu0 0.0
    %6653 = vmatprep.subr.mxu0 0.0
    %6654 = vmatpush1.msra.mxu0 0.0
    %6655 = vmatprep.subr.mxu0 0.0
    %6656 = vmatpush1.msra.mxu0 0.0
    %6657 = vmatprep.subr.mxu0 0.0
    %6658 = vmatpush1.msra.mxu0 0.0
    %6659 = vmatprep.subr.mxu0 0.0
    %6660 = vmatpush1.msra.mxu0 0.0
    %6661 = vmatprep.subr.mxu0 0.0
    %6662 = vmatpush1.msra.mxu0 0.0
    %6663 = vmatprep.subr.mxu0 0.0
    %6664 = vmatpush1.msra.mxu0 0.0
    %6665 = vmatprep.subr.mxu0 0.0
    %6666 = vmatpush1.msra.mxu0 0.0
    %6667 = vmatprep.mubr.f32.mxu0 0.0
    %6668 = vmatmul.mubr.f32.gmra.mrb[0].mxu0 %v6598
    %v6669 = vpop.f32.mrb[0].mxu0
    %v6670 = vadd.f32 0.0, %v6669
    %v6671 = vpop.f32.mrb[0].mxu0
    %6672 = vdwg.mxu0
    %v6673 = vadd.f32 %v6333, %v6670
    %s6674 = scalar_lea.vmem [#allocation2], 104
    %v6675 = vld [vmem:[%s6674] sm:$0xff]
    %s6676 = scalar_lea.vmem %s5, 520
    %v6677 = vld [vmem:[%s6676] sm:$0xff]
    %v6678 = vld [vmem:[%s6676 + $0x8] sm:$0xff]
    %v6679 = vld [vmem:[%s6676 + $0x10] sm:$0xff]
    %v6680 = vld [vmem:[%s6676 + $0x18] sm:$0xff]
    %v6681 = vld [vmem:[%s6676 + $0x20] sm:$0xf]
    %v6683 = vsel %vm4789, %v6675, 0
    %v6686 = vsel %vm5619, %v6681, 0
    %6688 = vmatprep.subr.mxu0 0.0
    %6689 = vmatpush1.msra.mxu0 %v6677
    %6690 = vmatprep.subr.mxu0 0.0
    %6691 = vmatpush1.msra.mxu0 %v6678
    %6692 = vmatprep.subr.mxu0 0.0
    %6693 = vmatpush1.msra.mxu0 %v6679
    %6694 = vmatprep.subr.mxu0 0.0
    %6695 = vmatpush1.msra.mxu0 %v6680
    %6696 = vmatprep.subr.mxu0 0.0
    %6697 = vmatpush1.msra.mxu0 %v6686
    %6698 = vmatprep.subr.mxu0 0.0
    %6699 = vmatpush1.msra.mxu0 0.0
    %6700 = vmatprep.subr.mxu0 0.0
    %6701 = vmatpush1.msra.mxu0 0.0
    %6702 = vmatprep.subr.mxu0 0.0
    %6703 = vmatpush1.msra.mxu0 0.0
    %6704 = vmatprep.subr.mxu0 0.0
    %6705 = vmatpush1.msra.mxu0 0.0
    %6706 = vmatprep.subr.mxu0 0.0
    %6707 = vmatpush1.msra.mxu0 0.0
    %6708 = vmatprep.subr.mxu0 0.0
    %6709 = vmatpush1.msra.mxu0 0.0
    %6710 = vmatprep.subr.mxu0 0.0
    %6711 = vmatpush1.msra.mxu0 0.0
    %6712 = vmatprep.subr.mxu0 0.0
    %6713 = vmatpush1.msra.mxu0 0.0
    %6714 = vmatprep.subr.mxu0 0.0
    %6715 = vmatpush1.msra.mxu0 0.0
    %6716 = vmatprep.subr.mxu0 0.0
    %6717 = vmatpush1.msra.mxu0 0.0
    %6718 = vmatprep.subr.mxu0 0.0
    %6719 = vmatpush1.msra.mxu0 0.0
    %6720 = vmatprep.subr.mxu0 0.0
    %6721 = vmatpush1.msra.mxu0 0.0
    %6722 = vmatprep.subr.mxu0 0.0
    %6723 = vmatpush1.msra.mxu0 0.0
    %6724 = vmatprep.subr.mxu0 0.0
    %6725 = vmatpush1.msra.mxu0 0.0
    %6726 = vmatprep.subr.mxu0 0.0
    %6727 = vmatpush1.msra.mxu0 0.0
    %6728 = vmatprep.subr.mxu0 0.0
    %6729 = vmatpush1.msra.mxu0 0.0
    %6730 = vmatprep.subr.mxu0 0.0
    %6731 = vmatpush1.msra.mxu0 0.0
    %6732 = vmatprep.subr.mxu0 0.0
    %6733 = vmatpush1.msra.mxu0 0.0
    %6734 = vmatprep.subr.mxu0 0.0
    %6735 = vmatpush1.msra.mxu0 0.0
    %6736 = vmatprep.subr.mxu0 0.0
    %6737 = vmatpush1.msra.mxu0 0.0
    %6738 = vmatprep.subr.mxu0 0.0
    %6739 = vmatpush1.msra.mxu0 0.0
    %6740 = vmatprep.subr.mxu0 0.0
    %6741 = vmatpush1.msra.mxu0 0.0
    %6742 = vmatprep.subr.mxu0 0.0
    %6743 = vmatpush1.msra.mxu0 0.0
    %6744 = vmatprep.subr.mxu0 0.0
    %6745 = vmatpush1.msra.mxu0 0.0
    %6746 = vmatprep.subr.mxu0 0.0
    %6747 = vmatpush1.msra.mxu0 0.0
    %6748 = vmatprep.subr.mxu0 0.0
    %6749 = vmatpush1.msra.mxu0 0.0
    %6750 = vmatprep.subr.mxu0 0.0
    %6751 = vmatpush1.msra.mxu0 0.0
    %6752 = vmatprep.mubr.f32.mxu0 0.0
    %6753 = vmatmul.mubr.f32.gmra.mrb[0].mxu0 %v6683
    %v6754 = vpop.f32.mrb[0].mxu0
    %v6755 = vadd.f32 0.0, %v6754
    %v6756 = vpop.f32.mrb[0].mxu0
    %6757 = vdwg.mxu0
    %v6758 = vadd.f32 %v6418, %v6755
    %s6759 = scalar_lea.vmem [#allocation2], 112
    %v6760 = vld [vmem:[%s6759] sm:$0xff]
    %s6761 = scalar_lea.vmem %s5, 560
    %v6762 = vld [vmem:[%s6761] sm:$0xff]
    %v6763 = vld [vmem:[%s6761 + $0x8] sm:$0xff]
    %v6764 = vld [vmem:[%s6761 + $0x10] sm:$0xff]
    %v6765 = vld [vmem:[%s6761 + $0x18] sm:$0xff]
    %v6766 = vld [vmem:[%s6761 + $0x20] sm:$0xf]
    %v6768 = vsel %vm4789, %v6760, 0
    %v6771 = vsel %vm5619, %v6766, 0
    %6773 = vmatprep.subr.mxu0 0.0
    %6774 = vmatpush1.msra.mxu0 %v6762
    %6775 = vmatprep.subr.mxu0 0.0
    %6776 = vmatpush1.msra.mxu0 %v6763
    %6777 = vmatprep.subr.mxu0 0.0
    %6778 = vmatpush1.msra.mxu0 %v6764
    %6779 = vmatprep.subr.mxu0 0.0
    %6780 = vmatpush1.msra.mxu0 %v6765
    %6781 = vmatprep.subr.mxu0 0.0
    %6782 = vmatpush1.msra.mxu0 %v6771
    %6783 = vmatprep.subr.mxu0 0.0
    %6784 = vmatpush1.msra.mxu0 0.0
    %6785 = vmatprep.subr.mxu0 0.0
    %6786 = vmatpush1.msra.mxu0 0.0
    %6787 = vmatprep.subr.mxu0 0.0
    %6788 = vmatpush1.msra.mxu0 0.0
    %6789 = vmatprep.subr.mxu0 0.0
    %6790 = vmatpush1.msra.mxu0 0.0
    %6791 = vmatprep.subr.mxu0 0.0
    %6792 = vmatpush1.msra.mxu0 0.0
    %6793 = vmatprep.subr.mxu0 0.0
    %6794 = vmatpush1.msra.mxu0 0.0
    %6795 = vmatprep.subr.mxu0 0.0
    %6796 = vmatpush1.msra.mxu0 0.0
    %6797 = vmatprep.subr.mxu0 0.0
    %6798 = vmatpush1.msra.mxu0 0.0
    %6799 = vmatprep.subr.mxu0 0.0
    %6800 = vmatpush1.msra.mxu0 0.0
    %6801 = vmatprep.subr.mxu0 0.0
    %6802 = vmatpush1.msra.mxu0 0.0
    %6803 = vmatprep.subr.mxu0 0.0
    %6804 = vmatpush1.msra.mxu0 0.0
    %6805 = vmatprep.subr.mxu0 0.0
    %6806 = vmatpush1.msra.mxu0 0.0
    %6807 = vmatprep.subr.mxu0 0.0
    %6808 = vmatpush1.msra.mxu0 0.0
    %6809 = vmatprep.subr.mxu0 0.0
    %6810 = vmatpush1.msra.mxu0 0.0
    %6811 = vmatprep.subr.mxu0 0.0
    %6812 = vmatpush1.msra.mxu0 0.0
    %6813 = vmatprep.subr.mxu0 0.0
    %6814 = vmatpush1.msra.mxu0 0.0
    %6815 = vmatprep.subr.mxu0 0.0
    %6816 = vmatpush1.msra.mxu0 0.0
    %6817 = vmatprep.subr.mxu0 0.0
    %6818 = vmatpush1.msra.mxu0 0.0
    %6819 = vmatprep.subr.mxu0 0.0
    %6820 = vmatpush1.msra.mxu0 0.0
    %6821 = vmatprep.subr.mxu0 0.0
    %6822 = vmatpush1.msra.mxu0 0.0
    %6823 = vmatprep.subr.mxu0 0.0
    %6824 = vmatpush1.msra.mxu0 0.0
    %6825 = vmatprep.subr.mxu0 0.0
    %6826 = vmatpush1.msra.mxu0 0.0
    %6827 = vmatprep.subr.mxu0 0.0
    %6828 = vmatpush1.msra.mxu0 0.0
    %6829 = vmatprep.subr.mxu0 0.0
    %6830 = vmatpush1.msra.mxu0 0.0
    %6831 = vmatprep.subr.mxu0 0.0
    %6832 = vmatpush1.msra.mxu0 0.0
    %6833 = vmatprep.subr.mxu0 0.0
    %6834 = vmatpush1.msra.mxu0 0.0
    %6835 = vmatprep.subr.mxu0 0.0
    %6836 = vmatpush1.msra.mxu0 0.0
    %6837 = vmatprep.mubr.f32.mxu0 0.0
    %6838 = vmatmul.mubr.f32.gmra.mrb[0].mxu0 %v6768
    %v6839 = vpop.f32.mrb[0].mxu0
    %v6840 = vadd.f32 0.0, %v6839
    %v6841 = vpop.f32.mrb[0].mxu0
    %6842 = vdwg.mxu0
    %v6843 = vadd.f32 %v6503, %v6840
    %s6844 = scalar_lea.vmem [#allocation2], 120
    %v6845 = vld [vmem:[%s6844] sm:$0xff]
    %s6846 = scalar_lea.vmem %s5, 600
    %v6847 = vld [vmem:[%s6846] sm:$0xff]
    %v6848 = vld [vmem:[%s6846 + $0x8] sm:$0xff]
    %v6849 = vld [vmem:[%s6846 + $0x10] sm:$0xff]
    %v6850 = vld [vmem:[%s6846 + $0x18] sm:$0xff]
    %v6851 = vld [vmem:[%s6846 + $0x20] sm:$0xf]
    %v6853 = vsel %vm4789, %v6845, 0
    %v6856 = vsel %vm5619, %v6851, 0
    %6858 = vmatprep.subr.mxu0 0.0
    %6859 = vmatpush1.msra.mxu0 %v6847
    %6860 = vmatprep.subr.mxu0 0.0
    %6861 = vmatpush1.msra.mxu0 %v6848
    %6862 = vmatprep.subr.mxu0 0.0
    %6863 = vmatpush1.msra.mxu0 %v6849
    %6864 = vmatprep.subr.mxu0 0.0
    %6865 = vmatpush1.msra.mxu0 %v6850
    %6866 = vmatprep.subr.mxu0 0.0
    %6867 = vmatpush1.msra.mxu0 %v6856
    %6868 = vmatprep.subr.mxu0 0.0
    %6869 = vmatpush1.msra.mxu0 0.0
    %6870 = vmatprep.subr.mxu0 0.0
    %6871 = vmatpush1.msra.mxu0 0.0
    %6872 = vmatprep.subr.mxu0 0.0
    %6873 = vmatpush1.msra.mxu0 0.0
    %6874 = vmatprep.subr.mxu0 0.0
    %6875 = vmatpush1.msra.mxu0 0.0
    %6876 = vmatprep.subr.mxu0 0.0
    %6877 = vmatpush1.msra.mxu0 0.0
    %6878 = vmatprep.subr.mxu0 0.0
    %6879 = vmatpush1.msra.mxu0 0.0
    %6880 = vmatprep.subr.mxu0 0.0
    %6881 = vmatpush1.msra.mxu0 0.0
    %6882 = vmatprep.subr.mxu0 0.0
    %6883 = vmatpush1.msra.mxu0 0.0
    %6884 = vmatprep.subr.mxu0 0.0
    %6885 = vmatpush1.msra.mxu0 0.0
    %6886 = vmatprep.subr.mxu0 0.0
    %6887 = vmatpush1.msra.mxu0 0.0
    %6888 = vmatprep.subr.mxu0 0.0
    %6889 = vmatpush1.msra.mxu0 0.0
    %6890 = vmatprep.subr.mxu0 0.0
    %6891 = vmatpush1.msra.mxu0 0.0
    %6892 = vmatprep.subr.mxu0 0.0
    %6893 = vmatpush1.msra.mxu0 0.0
    %6894 = vmatprep.subr.mxu0 0.0
    %6895 = vmatpush1.msra.mxu0 0.0
    %6896 = vmatprep.subr.mxu0 0.0
    %6897 = vmatpush1.msra.mxu0 0.0
    %6898 = vmatprep.subr.mxu0 0.0
    %6899 = vmatpush1.msra.mxu0 0.0
    %6900 = vmatprep.subr.mxu0 0.0
    %6901 = vmatpush1.msra.mxu0 0.0
    %6902 = vmatprep.subr.mxu0 0.0
    %6903 = vmatpush1.msra.mxu0 0.0
    %6904 = vmatprep.subr.mxu0 0.0
    %6905 = vmatpush1.msra.mxu0 0.0
    %6906 = vmatprep.subr.mxu0 0.0
    %6907 = vmatpush1.msra.mxu0 0.0
    %6908 = vmatprep.subr.mxu0 0.0
    %6909 = vmatpush1.msra.mxu0 0.0
    %6910 = vmatprep.subr.mxu0 0.0
    %6911 = vmatpush1.msra.mxu0 0.0
    %6912 = vmatprep.subr.mxu0 0.0
    %6913 = vmatpush1.msra.mxu0 0.0
    %6914 = vmatprep.subr.mxu0 0.0
    %6915 = vmatpush1.msra.mxu0 0.0
    %6916 = vmatprep.subr.mxu0 0.0
    %6917 = vmatpush1.msra.mxu0 0.0
    %6918 = vmatprep.subr.mxu0 0.0
    %6919 = vmatpush1.msra.mxu0 0.0
    %6920 = vmatprep.subr.mxu0 0.0
    %6921 = vmatpush1.msra.mxu0 0.0
    %6922 = vmatprep.mubr.f32.mxu0 0.0
    %6923 = vmatmul.mubr.f32.gmra.mrb[0].mxu0 %v6853
    %v6924 = vpop.f32.mrb[0].mxu0
    %v6925 = vadd.f32 0.0, %v6924
    %v6926 = vpop.f32.mrb[0].mxu0
    %6927 = vdwg.mxu0
    %v6928 = vadd.f32 %v6588, %v6925
    %s6929 = scalar_lea.vmem [#allocation2], 128
    %v6930 = vld [vmem:[%s6929] sm:$0xff]
    %s6931 = scalar_lea.vmem %s5, 640
    %v6932 = vld [vmem:[%s6931] sm:$0xff]
    %v6933 = vld [vmem:[%s6931 + $0x8] sm:$0xff]
    %v6934 = vld [vmem:[%s6931 + $0x10] sm:$0xff]
    %v6935 = vld [vmem:[%s6931 + $0x18] sm:$0xff]
    %v6936 = vld [vmem:[%s6931 + $0x20] sm:$0xf]
    %v6938 = vsel %vm4789, %v6930, 0
    %v6941 = vsel %vm5619, %v6936, 0
    %6943 = vmatprep.subr.mxu0 0.0
    %6944 = vmatpush1.msra.mxu0 %v6932
    %6945 = vmatprep.subr.mxu0 0.0
    %6946 = vmatpush1.msra.mxu0 %v6933
    %6947 = vmatprep.subr.mxu0 0.0
    %6948 = vmatpush1.msra.mxu0 %v6934
    %6949 = vmatprep.subr.mxu0 0.0
    %6950 = vmatpush1.msra.mxu0 %v6935
    %6951 = vmatprep.subr.mxu0 0.0
    %6952 = vmatpush1.msra.mxu0 %v6941
    %6953 = vmatprep.subr.mxu0 0.0
    %6954 = vmatpush1.msra.mxu0 0.0
    %6955 = vmatprep.subr.mxu0 0.0
    %6956 = vmatpush1.msra.mxu0 0.0
    %6957 = vmatprep.subr.mxu0 0.0
    %6958 = vmatpush1.msra.mxu0 0.0
    %6959 = vmatprep.subr.mxu0 0.0
    %6960 = vmatpush1.msra.mxu0 0.0
    %6961 = vmatprep.subr.mxu0 0.0
    %6962 = vmatpush1.msra.mxu0 0.0
    %6963 = vmatprep.subr.mxu0 0.0
    %6964 = vmatpush1.msra.mxu0 0.0
    %6965 = vmatprep.subr.mxu0 0.0
    %6966 = vmatpush1.msra.mxu0 0.0
    %6967 = vmatprep.subr.mxu0 0.0
    %6968 = vmatpush1.msra.mxu0 0.0
    %6969 = vmatprep.subr.mxu0 0.0
    %6970 = vmatpush1.msra.mxu0 0.0
    %6971 = vmatprep.subr.mxu0 0.0
    %6972 = vmatpush1.msra.mxu0 0.0
    %6973 = vmatprep.subr.mxu0 0.0
    %6974 = vmatpush1.msra.mxu0 0.0
    %6975 = vmatprep.subr.mxu0 0.0
    %6976 = vmatpush1.msra.mxu0 0.0
    %6977 = vmatprep.subr.mxu0 0.0
    %6978 = vmatpush1.msra.mxu0 0.0
    %6979 = vmatprep.subr.mxu0 0.0
    %6980 = vmatpush1.msra.mxu0 0.0
    %6981 = vmatprep.subr.mxu0 0.0
    %6982 = vmatpush1.msra.mxu0 0.0
    %6983 = vmatprep.subr.mxu0 0.0
    %6984 = vmatpush1.msra.mxu0 0.0
    %6985 = vmatprep.subr.mxu0 0.0
    %6986 = vmatpush1.msra.mxu0 0.0
    %6987 = vmatprep.subr.mxu0 0.0
    %6988 = vmatpush1.msra.mxu0 0.0
    %6989 = vmatprep.subr.mxu0 0.0
    %6990 = vmatpush1.msra.mxu0 0.0
    %6991 = vmatprep.subr.mxu0 0.0
    %6992 = vmatpush1.msra.mxu0 0.0
    %6993 = vmatprep.subr.mxu0 0.0
    %6994 = vmatpush1.msra.mxu0 0.0
    %6995 = vmatprep.subr.mxu0 0.0
    %6996 = vmatpush1.msra.mxu0 0.0
    %6997 = vmatprep.subr.mxu0 0.0
    %6998 = vmatpush1.msra.mxu0 0.0
    %6999 = vmatprep.subr.mxu0 0.0
    %7000 = vmatpush1.msra.mxu0 0.0
    %7001 = vmatprep.subr.mxu0 0.0
    %7002 = vmatpush1.msra.mxu0 0.0
    %7003 = vmatprep.subr.mxu0 0.0
    %7004 = vmatpush1.msra.mxu0 0.0
    %7005 = vmatprep.subr.mxu0 0.0
    %7006 = vmatpush1.msra.mxu0 0.0
    %7007 = vmatprep.mubr.f32.mxu0 0.0
    %7008 = vmatmul.mubr.f32.gmra.mrb[0].mxu0 %v6938
    %v7009 = vpop.f32.mrb[0].mxu0
    %v7010 = vadd.f32 0.0, %v7009
    %v7011 = vpop.f32.mrb[0].mxu0
    %7012 = vdwg.mxu0
    %v7013 = vadd.f32 %v6673, %v7010
    %s7014 = scalar_lea.vmem [#allocation2], 136
    %v7015 = vld [vmem:[%s7014] sm:$0xff]
    %s7016 = scalar_lea.vmem %s5, 680
    %v7017 = vld [vmem:[%s7016] sm:$0xff]
    %v7018 = vld [vmem:[%s7016 + $0x8] sm:$0xff]
    %v7019 = vld [vmem:[%s7016 + $0x10] sm:$0xff]
    %v7020 = vld [vmem:[%s7016 + $0x18] sm:$0xff]
    %v7021 = vld [vmem:[%s7016 + $0x20] sm:$0xf]
    %v7023 = vsel %vm4789, %v7015, 0
    %v7026 = vsel %vm5619, %v7021, 0
    %7028 = vmatprep.subr.mxu0 0.0
    %7029 = vmatpush1.msra.mxu0 %v7017
    %7030 = vmatprep.subr.mxu0 0.0
    %7031 = vmatpush1.msra.mxu0 %v7018
    %7032 = vmatprep.subr.mxu0 0.0
    %7033 = vmatpush1.msra.mxu0 %v7019
    %7034 = vmatprep.subr.mxu0 0.0
    %7035 = vmatpush1.msra.mxu0 %v7020
    %7036 = vmatprep.subr.mxu0 0.0
    %7037 = vmatpush1.msra.mxu0 %v7026
    %7038 = vmatprep.subr.mxu0 0.0
    %7039 = vmatpush1.msra.mxu0 0.0
    %7040 = vmatprep.subr.mxu0 0.0
    %7041 = vmatpush1.msra.mxu0 0.0
    %7042 = vmatprep.subr.mxu0 0.0
    %7043 = vmatpush1.msra.mxu0 0.0
    %7044 = vmatprep.subr.mxu0 0.0
    %7045 = vmatpush1.msra.mxu0 0.0
    %7046 = vmatprep.subr.mxu0 0.0
    %7047 = vmatpush1.msra.mxu0 0.0
    %7048 = vmatprep.subr.mxu0 0.0
    %7049 = vmatpush1.msra.mxu0 0.0
    %7050 = vmatprep.subr.mxu0 0.0
    %7051 = vmatpush1.msra.mxu0 0.0
    %7052 = vmatprep.subr.mxu0 0.0
    %7053 = vmatpush1.msra.mxu0 0.0
    %7054 = vmatprep.subr.mxu0 0.0
    %7055 = vmatpush1.msra.mxu0 0.0
    %7056 = vmatprep.subr.mxu0 0.0
    %7057 = vmatpush1.msra.mxu0 0.0
    %7058 = vmatprep.subr.mxu0 0.0
    %7059 = vmatpush1.msra.mxu0 0.0
    %7060 = vmatprep.subr.mxu0 0.0
    %7061 = vmatpush1.msra.mxu0 0.0
    %7062 = vmatprep.subr.mxu0 0.0
    %7063 = vmatpush1.msra.mxu0 0.0
    %7064 = vmatprep.subr.mxu0 0.0
    %7065 = vmatpush1.msra.mxu0 0.0
    %7066 = vmatprep.subr.mxu0 0.0
    %7067 = vmatpush1.msra.mxu0 0.0
    %7068 = vmatprep.subr.mxu0 0.0
    %7069 = vmatpush1.msra.mxu0 0.0
    %7070 = vmatprep.subr.mxu0 0.0
    %7071 = vmatpush1.msra.mxu0 0.0
    %7072 = vmatprep.subr.mxu0 0.0
    %7073 = vmatpush1.msra.mxu0 0.0
    %7074 = vmatprep.subr.mxu0 0.0
    %7075 = vmatpush1.msra.mxu0 0.0
    %7076 = vmatprep.subr.mxu0 0.0
    %7077 = vmatpush1.msra.mxu0 0.0
    %7078 = vmatprep.subr.mxu0 0.0
    %7079 = vmatpush1.msra.mxu0 0.0
    %7080 = vmatprep.subr.mxu0 0.0
    %7081 = vmatpush1.msra.mxu0 0.0
    %7082 = vmatprep.subr.mxu0 0.0
    %7083 = vmatpush1.msra.mxu0 0.0
    %7084 = vmatprep.subr.mxu0 0.0
    %7085 = vmatpush1.msra.mxu0 0.0
    %7086 = vmatprep.subr.mxu0 0.0
    %7087 = vmatpush1.msra.mxu0 0.0
    %7088 = vmatprep.subr.mxu0 0.0
    %7089 = vmatpush1.msra.mxu0 0.0
    %7090 = vmatprep.subr.mxu0 0.0
    %7091 = vmatpush1.msra.mxu0 0.0
    %7092 = vmatprep.mubr.f32.mxu0 0.0
    %7093 = vmatmul.mubr.f32.gmra.mrb[0].mxu0 %v7023
    %v7094 = vpop.f32.mrb[0].mxu0
    %v7095 = vadd.f32 0.0, %v7094
    %v7096 = vpop.f32.mrb[0].mxu0
    %7097 = vdwg.mxu0
    %v7098 = vadd.f32 %v6758, %v7095
    %s7099 = scalar_lea.vmem [#allocation2], 144
    %v7100 = vld [vmem:[%s7099] sm:$0xff]
    %s7101 = scalar_lea.vmem %s5, 720
    %v7102 = vld [vmem:[%s7101] sm:$0xff]
    %v7103 = vld [vmem:[%s7101 + $0x8] sm:$0xff]
    %v7104 = vld [vmem:[%s7101 + $0x10] sm:$0xff]
    %v7105 = vld [vmem:[%s7101 + $0x18] sm:$0xff]
    %v7106 = vld [vmem:[%s7101 + $0x20] sm:$0xf]
    %v7108 = vsel %vm4789, %v7100, 0
    %v7111 = vsel %vm5619, %v7106, 0
    %7113 = vmatprep.subr.mxu0 0.0
    %7114 = vmatpush1.msra.mxu0 %v7102
    %7115 = vmatprep.subr.mxu0 0.0
    %7116 = vmatpush1.msra.mxu0 %v7103
    %7117 = vmatprep.subr.mxu0 0.0
    %7118 = vmatpush1.msra.mxu0 %v7104
    %7119 = vmatprep.subr.mxu0 0.0
    %7120 = vmatpush1.msra.mxu0 %v7105
    %7121 = vmatprep.subr.mxu0 0.0
    %7122 = vmatpush1.msra.mxu0 %v7111
    %7123 = vmatprep.subr.mxu0 0.0
    %7124 = vmatpush1.msra.mxu0 0.0
    %7125 = vmatprep.subr.mxu0 0.0
    %7126 = vmatpush1.msra.mxu0 0.0
    %7127 = vmatprep.subr.mxu0 0.0
    %7128 = vmatpush1.msra.mxu0 0.0
    %7129 = vmatprep.subr.mxu0 0.0
    %7130 = vmatpush1.msra.mxu0 0.0
    %7131 = vmatprep.subr.mxu0 0.0
    %7132 = vmatpush1.msra.mxu0 0.0
    %7133 = vmatprep.subr.mxu0 0.0
    %7134 = vmatpush1.msra.mxu0 0.0
    %7135 = vmatprep.subr.mxu0 0.0
    %7136 = vmatpush1.msra.mxu0 0.0
    %7137 = vmatprep.subr.mxu0 0.0
    %7138 = vmatpush1.msra.mxu0 0.0
    %7139 = vmatprep.subr.mxu0 0.0
    %7140 = vmatpush1.msra.mxu0 0.0
    %7141 = vmatprep.subr.mxu0 0.0
    %7142 = vmatpush1.msra.mxu0 0.0
    %7143 = vmatprep.subr.mxu0 0.0
    %7144 = vmatpush1.msra.mxu0 0.0
    %7145 = vmatprep.subr.mxu0 0.0
    %7146 = vmatpush1.msra.mxu0 0.0
    %7147 = vmatprep.subr.mxu0 0.0
    %7148 = vmatpush1.msra.mxu0 0.0
    %7149 = vmatprep.subr.mxu0 0.0
    %7150 = vmatpush1.msra.mxu0 0.0
    %7151 = vmatprep.subr.mxu0 0.0
    %7152 = vmatpush1.msra.mxu0 0.0
    %7153 = vmatprep.subr.mxu0 0.0
    %7154 = vmatpush1.msra.mxu0 0.0
    %7155 = vmatprep.subr.mxu0 0.0
    %7156 = vmatpush1.msra.mxu0 0.0
    %7157 = vmatprep.subr.mxu0 0.0
    %7158 = vmatpush1.msra.mxu0 0.0
    %7159 = vmatprep.subr.mxu0 0.0
    %7160 = vmatpush1.msra.mxu0 0.0
    %7161 = vmatprep.subr.mxu0 0.0
    %7162 = vmatpush1.msra.mxu0 0.0
    %7163 = vmatprep.subr.mxu0 0.0
    %7164 = vmatpush1.msra.mxu0 0.0
    %7165 = vmatprep.subr.mxu0 0.0
    %7166 = vmatpush1.msra.mxu0 0.0
    %7167 = vmatprep.subr.mxu0 0.0
    %7168 = vmatpush1.msra.mxu0 0.0
    %7169 = vmatprep.subr.mxu0 0.0
    %7170 = vmatpush1.msra.mxu0 0.0
    %7171 = vmatprep.subr.mxu0 0.0
    %7172 = vmatpush1.msra.mxu0 0.0
    %7173 = vmatprep.subr.mxu0 0.0
    %7174 = vmatpush1.msra.mxu0 0.0
    %7175 = vmatprep.subr.mxu0 0.0
    %7176 = vmatpush1.msra.mxu0 0.0
    %7177 = vmatprep.mubr.f32.mxu0 0.0
    %7178 = vmatmul.mubr.f32.gmra.mrb[0].mxu0 %v7108
    %v7179 = vpop.f32.mrb[0].mxu0
    %v7180 = vadd.f32 0.0, %v7179
    %v7181 = vpop.f32.mrb[0].mxu0
    %7182 = vdwg.mxu0
    %v7183 = vadd.f32 %v6843, %v7180
    %s7184 = scalar_lea.vmem [#allocation2], 152
    %v7185 = vld [vmem:[%s7184] sm:$0xff]
    %s7186 = scalar_lea.vmem %s5, 760
    %v7187 = vld [vmem:[%s7186] sm:$0xff]
    %v7188 = vld [vmem:[%s7186 + $0x8] sm:$0xff]
    %v7189 = vld [vmem:[%s7186 + $0x10] sm:$0xff]
    %v7190 = vld [vmem:[%s7186 + $0x18] sm:$0xff]
    %v7191 = vld [vmem:[%s7186 + $0x20] sm:$0xf]
    %v7193 = vsel %vm4789, %v7185, 0
    %v7196 = vsel %vm5619, %v7191, 0
    %7198 = vmatprep.subr.mxu0 0.0
    %7199 = vmatpush1.msra.mxu0 %v7187
    %7200 = vmatprep.subr.mxu0 0.0
    %7201 = vmatpush1.msra.mxu0 %v7188
    %7202 = vmatprep.subr.mxu0 0.0
    %7203 = vmatpush1.msra.mxu0 %v7189
    %7204 = vmatprep.subr.mxu0 0.0
    %7205 = vmatpush1.msra.mxu0 %v7190
    %7206 = vmatprep.subr.mxu0 0.0
    %7207 = vmatpush1.msra.mxu0 %v7196
    %7208 = vmatprep.subr.mxu0 0.0
    %7209 = vmatpush1.msra.mxu0 0.0
    %7210 = vmatprep.subr.mxu0 0.0
    %7211 = vmatpush1.msra.mxu0 0.0
    %7212 = vmatprep.subr.mxu0 0.0
    %7213 = vmatpush1.msra.mxu0 0.0
    %7214 = vmatprep.subr.mxu0 0.0
    %7215 = vmatpush1.msra.mxu0 0.0
    %7216 = vmatprep.subr.mxu0 0.0
    %7217 = vmatpush1.msra.mxu0 0.0
    %7218 = vmatprep.subr.mxu0 0.0
    %7219 = vmatpush1.msra.mxu0 0.0
    %7220 = vmatprep.subr.mxu0 0.0
    %7221 = vmatpush1.msra.mxu0 0.0
    %7222 = vmatprep.subr.mxu0 0.0
    %7223 = vmatpush1.msra.mxu0 0.0
    %7224 = vmatprep.subr.mxu0 0.0
    %7225 = vmatpush1.msra.mxu0 0.0
    %7226 = vmatprep.subr.mxu0 0.0
    %7227 = vmatpush1.msra.mxu0 0.0
    %7228 = vmatprep.subr.mxu0 0.0
    %7229 = vmatpush1.msra.mxu0 0.0
    %7230 = vmatprep.subr.mxu0 0.0
    %7231 = vmatpush1.msra.mxu0 0.0
    %7232 = vmatprep.subr.mxu0 0.0
    %7233 = vmatpush1.msra.mxu0 0.0
    %7234 = vmatprep.subr.mxu0 0.0
    %7235 = vmatpush1.msra.mxu0 0.0
    %7236 = vmatprep.subr.mxu0 0.0
    %7237 = vmatpush1.msra.mxu0 0.0
    %7238 = vmatprep.subr.mxu0 0.0
    %7239 = vmatpush1.msra.mxu0 0.0
    %7240 = vmatprep.subr.mxu0 0.0
    %7241 = vmatpush1.msra.mxu0 0.0
    %7242 = vmatprep.subr.mxu0 0.0
    %7243 = vmatpush1.msra.mxu0 0.0
    %7244 = vmatprep.subr.mxu0 0.0
    %7245 = vmatpush1.msra.mxu0 0.0
    %7246 = vmatprep.subr.mxu0 0.0
    %7247 = vmatpush1.msra.mxu0 0.0
    %7248 = vmatprep.subr.mxu0 0.0
    %7249 = vmatpush1.msra.mxu0 0.0
    %7250 = vmatprep.subr.mxu0 0.0
    %7251 = vmatpush1.msra.mxu0 0.0
    %7252 = vmatprep.subr.mxu0 0.0
    %7253 = vmatpush1.msra.mxu0 0.0
    %7254 = vmatprep.subr.mxu0 0.0
    %7255 = vmatpush1.msra.mxu0 0.0
    %7256 = vmatprep.subr.mxu0 0.0
    %7257 = vmatpush1.msra.mxu0 0.0
    %7258 = vmatprep.subr.mxu0 0.0
    %7259 = vmatpush1.msra.mxu0 0.0
    %7260 = vmatprep.subr.mxu0 0.0
    %7261 = vmatpush1.msra.mxu0 0.0
    %7262 = vmatprep.mubr.f32.mxu0 0.0
    %7263 = vmatmul.mubr.f32.gmra.mrb[0].mxu0 %v7193
    %v7264 = vpop.f32.mrb[0].mxu0
    %v7265 = vadd.f32 0.0, %v7264
    %v7266 = vpop.f32.mrb[0].mxu0
    %7267 = vdwg.mxu0
    %v7268 = vadd.f32 %v6928, %v7265
    %s7269 = scalar_lea.vmem [#allocation2], 160
    %v7270 = vld [vmem:[%s7269] sm:$0xff]
    %s7271 = scalar_lea.vmem %s5, 800
    %v7272 = vld [vmem:[%s7271] sm:$0xff]
    %v7273 = vld [vmem:[%s7271 + $0x8] sm:$0xff]
    %v7274 = vld [vmem:[%s7271 + $0x10] sm:$0xff]
    %v7275 = vld [vmem:[%s7271 + $0x18] sm:$0xff]
    %v7276 = vld [vmem:[%s7271 + $0x20] sm:$0xf]
    %v7278 = vsel %vm4789, %v7270, 0
    %v7281 = vsel %vm5619, %v7276, 0
    %7283 = vmatprep.subr.mxu0 0.0
    %7284 = vmatpush1.msra.mxu0 %v7272
    %7285 = vmatprep.subr.mxu0 0.0
    %7286 = vmatpush1.msra.mxu0 %v7273
    %7287 = vmatprep.subr.mxu0 0.0
    %7288 = vmatpush1.msra.mxu0 %v7274
    %7289 = vmatprep.subr.mxu0 0.0
    %7290 = vmatpush1.msra.mxu0 %v7275
    %7291 = vmatprep.subr.mxu0 0.0
    %7292 = vmatpush1.msra.mxu0 %v7281
    %7293 = vmatprep.subr.mxu0 0.0
    %7294 = vmatpush1.msra.mxu0 0.0
    %7295 = vmatprep.subr.mxu0 0.0
    %7296 = vmatpush1.msra.mxu0 0.0
    %7297 = vmatprep.subr.mxu0 0.0
    %7298 = vmatpush1.msra.mxu0 0.0
    %7299 = vmatprep.subr.mxu0 0.0
    %7300 = vmatpush1.msra.mxu0 0.0
    %7301 = vmatprep.subr.mxu0 0.0
    %7302 = vmatpush1.msra.mxu0 0.0
    %7303 = vmatprep.subr.mxu0 0.0
    %7304 = vmatpush1.msra.mxu0 0.0
    %7305 = vmatprep.subr.mxu0 0.0
    %7306 = vmatpush1.msra.mxu0 0.0
    %7307 = vmatprep.subr.mxu0 0.0
    %7308 = vmatpush1.msra.mxu0 0.0
    %7309 = vmatprep.subr.mxu0 0.0
    %7310 = vmatpush1.msra.mxu0 0.0
    %7311 = vmatprep.subr.mxu0 0.0
    %7312 = vmatpush1.msra.mxu0 0.0
    %7313 = vmatprep.subr.mxu0 0.0
    %7314 = vmatpush1.msra.mxu0 0.0
    %7315 = vmatprep.subr.mxu0 0.0
    %7316 = vmatpush1.msra.mxu0 0.0
    %7317 = vmatprep.subr.mxu0 0.0
    %7318 = vmatpush1.msra.mxu0 0.0
    %7319 = vmatprep.subr.mxu0 0.0
    %7320 = vmatpush1.msra.mxu0 0.0
    %7321 = vmatprep.subr.mxu0 0.0
    %7322 = vmatpush1.msra.mxu0 0.0
    %7323 = vmatprep.subr.mxu0 0.0
    %7324 = vmatpush1.msra.mxu0 0.0
    %7325 = vmatprep.subr.mxu0 0.0
    %7326 = vmatpush1.msra.mxu0 0.0
    %7327 = vmatprep.subr.mxu0 0.0
    %7328 = vmatpush1.msra.mxu0 0.0
    %7329 = vmatprep.subr.mxu0 0.0
    %7330 = vmatpush1.msra.mxu0 0.0
    %7331 = vmatprep.subr.mxu0 0.0
    %7332 = vmatpush1.msra.mxu0 0.0
    %7333 = vmatprep.subr.mxu0 0.0
    %7334 = vmatpush1.msra.mxu0 0.0
    %7335 = vmatprep.subr.mxu0 0.0
    %7336 = vmatpush1.msra.mxu0 0.0
    %7337 = vmatprep.subr.mxu0 0.0
    %7338 = vmatpush1.msra.mxu0 0.0
    %7339 = vmatprep.subr.mxu0 0.0
    %7340 = vmatpush1.msra.mxu0 0.0
    %7341 = vmatprep.subr.mxu0 0.0
    %7342 = vmatpush1.msra.mxu0 0.0
    %7343 = vmatprep.subr.mxu0 0.0
    %7344 = vmatpush1.msra.mxu0 0.0
    %7345 = vmatprep.subr.mxu0 0.0
    %7346 = vmatpush1.msra.mxu0 0.0
    %7347 = vmatprep.mubr.f32.mxu0 0.0
    %7348 = vmatmul.mubr.f32.gmra.mrb[0].mxu0 %v7278
    %v7349 = vpop.f32.mrb[0].mxu0
    %v7350 = vadd.f32 0.0, %v7349
    %v7351 = vpop.f32.mrb[0].mxu0
    %7352 = vdwg.mxu0
    %v7353 = vadd.f32 %v7013, %v7350
    %s7354 = scalar_lea.vmem [#allocation2], 168
    %v7355 = vld [vmem:[%s7354] sm:$0xff]
    %s7356 = scalar_lea.vmem %s5, 840
    %v7357 = vld [vmem:[%s7356] sm:$0xff]
    %v7358 = vld [vmem:[%s7356 + $0x8] sm:$0xff]
    %v7359 = vld [vmem:[%s7356 + $0x10] sm:$0xff]
    %v7360 = vld [vmem:[%s7356 + $0x18] sm:$0xff]
    %v7361 = vld [vmem:[%s7356 + $0x20] sm:$0xf]
    %v7363 = vsel %vm4789, %v7355, 0
    %v7366 = vsel %vm5619, %v7361, 0
    %7368 = vmatprep.subr.mxu0 0.0
    %7369 = vmatpush1.msra.mxu0 %v7357
    %7370 = vmatprep.subr.mxu0 0.0
    %7371 = vmatpush1.msra.mxu0 %v7358
    %7372 = vmatprep.subr.mxu0 0.0
    %7373 = vmatpush1.msra.mxu0 %v7359
    %7374 = vmatprep.subr.mxu0 0.0
    %7375 = vmatpush1.msra.mxu0 %v7360
    %7376 = vmatprep.subr.mxu0 0.0
    %7377 = vmatpush1.msra.mxu0 %v7366
    %7378 = vmatprep.subr.mxu0 0.0
    %7379 = vmatpush1.msra.mxu0 0.0
    %7380 = vmatprep.subr.mxu0 0.0
    %7381 = vmatpush1.msra.mxu0 0.0
    %7382 = vmatprep.subr.mxu0 0.0
    %7383 = vmatpush1.msra.mxu0 0.0
    %7384 = vmatprep.subr.mxu0 0.0
    %7385 = vmatpush1.msra.mxu0 0.0
    %7386 = vmatprep.subr.mxu0 0.0
    %7387 = vmatpush1.msra.mxu0 0.0
    %7388 = vmatprep.subr.mxu0 0.0
    %7389 = vmatpush1.msra.mxu0 0.0
    %7390 = vmatprep.subr.mxu0 0.0
    %7391 = vmatpush1.msra.mxu0 0.0
    %7392 = vmatprep.subr.mxu0 0.0
    %7393 = vmatpush1.msra.mxu0 0.0
    %7394 = vmatprep.subr.mxu0 0.0
    %7395 = vmatpush1.msra.mxu0 0.0
    %7396 = vmatprep.subr.mxu0 0.0
    %7397 = vmatpush1.msra.mxu0 0.0
    %7398 = vmatprep.subr.mxu0 0.0
    %7399 = vmatpush1.msra.mxu0 0.0
    %7400 = vmatprep.subr.mxu0 0.0
    %7401 = vmatpush1.msra.mxu0 0.0
    %7402 = vmatprep.subr.mxu0 0.0
    %7403 = vmatpush1.msra.mxu0 0.0
    %7404 = vmatprep.subr.mxu0 0.0
    %7405 = vmatpush1.msra.mxu0 0.0
    %7406 = vmatprep.subr.mxu0 0.0
    %7407 = vmatpush1.msra.mxu0 0.0
    %7408 = vmatprep.subr.mxu0 0.0
    %7409 = vmatpush1.msra.mxu0 0.0
    %7410 = vmatprep.subr.mxu0 0.0
    %7411 = vmatpush1.msra.mxu0 0.0
    %7412 = vmatprep.subr.mxu0 0.0
    %7413 = vmatpush1.msra.mxu0 0.0
    %7414 = vmatprep.subr.mxu0 0.0
    %7415 = vmatpush1.msra.mxu0 0.0
    %7416 = vmatprep.subr.mxu0 0.0
    %7417 = vmatpush1.msra.mxu0 0.0
    %7418 = vmatprep.subr.mxu0 0.0
    %7419 = vmatpush1.msra.mxu0 0.0
    %7420 = vmatprep.subr.mxu0 0.0
    %7421 = vmatpush1.msra.mxu0 0.0
    %7422 = vmatprep.subr.mxu0 0.0
    %7423 = vmatpush1.msra.mxu0 0.0
    %7424 = vmatprep.subr.mxu0 0.0
    %7425 = vmatpush1.msra.mxu0 0.0
    %7426 = vmatprep.subr.mxu0 0.0
    %7427 = vmatpush1.msra.mxu0 0.0
    %7428 = vmatprep.subr.mxu0 0.0
    %7429 = vmatpush1.msra.mxu0 0.0
    %7430 = vmatprep.subr.mxu0 0.0
    %7431 = vmatpush1.msra.mxu0 0.0
    %7432 = vmatprep.mubr.f32.mxu0 0.0
    %7433 = vmatmul.mubr.f32.gmra.mrb[0].mxu0 %v7363
    %v7434 = vpop.f32.mrb[0].mxu0
    %v7435 = vadd.f32 0.0, %v7434
    %v7436 = vpop.f32.mrb[0].mxu0
    %7437 = vdwg.mxu0
    %v7438 = vadd.f32 %v7098, %v7435
    %s7439 = scalar_lea.vmem [#allocation2], 176
    %v7440 = vld [vmem:[%s7439] sm:$0xff]
    %s7441 = scalar_lea.vmem %s5, 880
    %v7442 = vld [vmem:[%s7441] sm:$0xff]
    %v7443 = vld [vmem:[%s7441 + $0x8] sm:$0xff]
    %v7444 = vld [vmem:[%s7441 + $0x10] sm:$0xff]
    %v7445 = vld [vmem:[%s7441 + $0x18] sm:$0xff]
    %v7446 = vld [vmem:[%s7441 + $0x20] sm:$0xf]
    %v7448 = vsel %vm4789, %v7440, 0
    %v7451 = vsel %vm5619, %v7446, 0
    %7453 = vmatprep.subr.mxu0 0.0
    %7454 = vmatpush1.msra.mxu0 %v7442
    %7455 = vmatprep.subr.mxu0 0.0
    %7456 = vmatpush1.msra.mxu0 %v7443
    %7457 = vmatprep.subr.mxu0 0.0
    %7458 = vmatpush1.msra.mxu0 %v7444
    %7459 = vmatprep.subr.mxu0 0.0
    %7460 = vmatpush1.msra.mxu0 %v7445
    %7461 = vmatprep.subr.mxu0 0.0
    %7462 = vmatpush1.msra.mxu0 %v7451
    %7463 = vmatprep.subr.mxu0 0.0
    %7464 = vmatpush1.msra.mxu0 0.0
    %7465 = vmatprep.subr.mxu0 0.0
    %7466 = vmatpush1.msra.mxu0 0.0
    %7467 = vmatprep.subr.mxu0 0.0
    %7468 = vmatpush1.msra.mxu0 0.0
    %7469 = vmatprep.subr.mxu0 0.0
    %7470 = vmatpush1.msra.mxu0 0.0
    %7471 = vmatprep.subr.mxu0 0.0
    %7472 = vmatpush1.msra.mxu0 0.0
    %7473 = vmatprep.subr.mxu0 0.0
    %7474 = vmatpush1.msra.mxu0 0.0
    %7475 = vmatprep.subr.mxu0 0.0
    %7476 = vmatpush1.msra.mxu0 0.0
    %7477 = vmatprep.subr.mxu0 0.0
    %7478 = vmatpush1.msra.mxu0 0.0
    %7479 = vmatprep.subr.mxu0 0.0
    %7480 = vmatpush1.msra.mxu0 0.0
    %7481 = vmatprep.subr.mxu0 0.0
    %7482 = vmatpush1.msra.mxu0 0.0
    %7483 = vmatprep.subr.mxu0 0.0
    %7484 = vmatpush1.msra.mxu0 0.0
    %7485 = vmatprep.subr.mxu0 0.0
    %7486 = vmatpush1.msra.mxu0 0.0
    %7487 = vmatprep.subr.mxu0 0.0
    %7488 = vmatpush1.msra.mxu0 0.0
    %7489 = vmatprep.subr.mxu0 0.0
    %7490 = vmatpush1.msra.mxu0 0.0
    %7491 = vmatprep.subr.mxu0 0.0
    %7492 = vmatpush1.msra.mxu0 0.0
    %7493 = vmatprep.subr.mxu0 0.0
    %7494 = vmatpush1.msra.mxu0 0.0
    %7495 = vmatprep.subr.mxu0 0.0
    %7496 = vmatpush1.msra.mxu0 0.0
    %7497 = vmatprep.subr.mxu0 0.0
    %7498 = vmatpush1.msra.mxu0 0.0
    %7499 = vmatprep.subr.mxu0 0.0
    %7500 = vmatpush1.msra.mxu0 0.0
    %7501 = vmatprep.subr.mxu0 0.0
    %7502 = vmatpush1.msra.mxu0 0.0
    %7503 = vmatprep.subr.mxu0 0.0
    %7504 = vmatpush1.msra.mxu0 0.0
    %7505 = vmatprep.subr.mxu0 0.0
    %7506 = vmatpush1.msra.mxu0 0.0
    %7507 = vmatprep.subr.mxu0 0.0
    %7508 = vmatpush1.msra.mxu0 0.0
    %7509 = vmatprep.subr.mxu0 0.0
    %7510 = vmatpush1.msra.mxu0 0.0
    %7511 = vmatprep.subr.mxu0 0.0
    %7512 = vmatpush1.msra.mxu0 0.0
    %7513 = vmatprep.subr.mxu0 0.0
    %7514 = vmatpush1.msra.mxu0 0.0
    %7515 = vmatprep.subr.mxu0 0.0
    %7516 = vmatpush1.msra.mxu0 0.0
    %7517 = vmatprep.mubr.f32.mxu0 0.0
    %7518 = vmatmul.mubr.f32.gmra.mrb[0].mxu0 %v7448
    %v7519 = vpop.f32.mrb[0].mxu0
    %v7520 = vadd.f32 0.0, %v7519
    %v7521 = vpop.f32.mrb[0].mxu0
    %7522 = vdwg.mxu0
    %v7523 = vadd.f32 %v7183, %v7520
    %s7524 = scalar_lea.vmem [#allocation2], 184
    %v7525 = vld [vmem:[%s7524] sm:$0xff]
    %s7526 = scalar_lea.vmem %s5, 920
    %v7527 = vld [vmem:[%s7526] sm:$0xff]
    %v7528 = vld [vmem:[%s7526 + $0x8] sm:$0xff]
    %v7529 = vld [vmem:[%s7526 + $0x10] sm:$0xff]
    %v7530 = vld [vmem:[%s7526 + $0x18] sm:$0xff]
    %v7531 = vld [vmem:[%s7526 + $0x20] sm:$0xf]
    %v7533 = vsel %vm4789, %v7525, 0
    %v7536 = vsel %vm5619, %v7531, 0
    %7538 = vmatprep.subr.mxu0 0.0
    %7539 = vmatpush1.msra.mxu0 %v7527
    %7540 = vmatprep.subr.mxu0 0.0
    %7541 = vmatpush1.msra.mxu0 %v7528
    %7542 = vmatprep.subr.mxu0 0.0
    %7543 = vmatpush1.msra.mxu0 %v7529
    %7544 = vmatprep.subr.mxu0 0.0
    %7545 = vmatpush1.msra.mxu0 %v7530
    %7546 = vmatprep.subr.mxu0 0.0
    %7547 = vmatpush1.msra.mxu0 %v7536
    %7548 = vmatprep.subr.mxu0 0.0
    %7549 = vmatpush1.msra.mxu0 0.0
    %7550 = vmatprep.subr.mxu0 0.0
    %7551 = vmatpush1.msra.mxu0 0.0
    %7552 = vmatprep.subr.mxu0 0.0
    %7553 = vmatpush1.msra.mxu0 0.0
    %7554 = vmatprep.subr.mxu0 0.0
    %7555 = vmatpush1.msra.mxu0 0.0
    %7556 = vmatprep.subr.mxu0 0.0
    %7557 = vmatpush1.msra.mxu0 0.0
    %7558 = vmatprep.subr.mxu0 0.0
    %7559 = vmatpush1.msra.mxu0 0.0
    %7560 = vmatprep.subr.mxu0 0.0
    %7561 = vmatpush1.msra.mxu0 0.0
    %7562 = vmatprep.subr.mxu0 0.0
    %7563 = vmatpush1.msra.mxu0 0.0
    %7564 = vmatprep.subr.mxu0 0.0
    %7565 = vmatpush1.msra.mxu0 0.0
    %7566 = vmatprep.subr.mxu0 0.0
    %7567 = vmatpush1.msra.mxu0 0.0
    %7568 = vmatprep.subr.mxu0 0.0
    %7569 = vmatpush1.msra.mxu0 0.0
    %7570 = vmatprep.subr.mxu0 0.0
    %7571 = vmatpush1.msra.mxu0 0.0
    %7572 = vmatprep.subr.mxu0 0.0
    %7573 = vmatpush1.msra.mxu0 0.0
    %7574 = vmatprep.subr.mxu0 0.0
    %7575 = vmatpush1.msra.mxu0 0.0
    %7576 = vmatprep.subr.mxu0 0.0
    %7577 = vmatpush1.msra.mxu0 0.0
    %7578 = vmatprep.subr.mxu0 0.0
    %7579 = vmatpush1.msra.mxu0 0.0
    %7580 = vmatprep.subr.mxu0 0.0
    %7581 = vmatpush1.msra.mxu0 0.0
    %7582 = vmatprep.subr.mxu0 0.0
    %7583 = vmatpush1.msra.mxu0 0.0
    %7584 = vmatprep.subr.mxu0 0.0
    %7585 = vmatpush1.msra.mxu0 0.0
    %7586 = vmatprep.subr.mxu0 0.0
    %7587 = vmatpush1.msra.mxu0 0.0
    %7588 = vmatprep.subr.mxu0 0.0
    %7589 = vmatpush1.msra.mxu0 0.0
    %7590 = vmatprep.subr.mxu0 0.0
    %7591 = vmatpush1.msra.mxu0 0.0
    %7592 = vmatprep.subr.mxu0 0.0
    %7593 = vmatpush1.msra.mxu0 0.0
    %7594 = vmatprep.subr.mxu0 0.0
    %7595 = vmatpush1.msra.mxu0 0.0
    %7596 = vmatprep.subr.mxu0 0.0
    %7597 = vmatpush1.msra.mxu0 0.0
    %7598 = vmatprep.subr.mxu0 0.0
    %7599 = vmatpush1.msra.mxu0 0.0
    %7600 = vmatprep.subr.mxu0 0.0
    %7601 = vmatpush1.msra.mxu0 0.0
    %7602 = vmatprep.mubr.f32.mxu0 0.0
    %7603 = vmatmul.mubr.f32.gmra.mrb[0].mxu0 %v7533
    %v7604 = vpop.f32.mrb[0].mxu0
    %v7605 = vadd.f32 0.0, %v7604
    %v7606 = vpop.f32.mrb[0].mxu0
    %7607 = vdwg.mxu0
    %v7608 = vadd.f32 %v7268, %v7605
    %s7609 = scalar_lea.vmem [#allocation2], 192
    %v7610 = vld [vmem:[%s7609] sm:$0xff]
    %s7611 = scalar_lea.vmem %s5, 960
    %v7612 = vld [vmem:[%s7611] sm:$0xff]
    %v7613 = vld [vmem:[%s7611 + $0x8] sm:$0xff]
    %v7614 = vld [vmem:[%s7611 + $0x10] sm:$0xff]
    %v7615 = vld [vmem:[%s7611 + $0x18] sm:$0xff]
    %v7616 = vld [vmem:[%s7611 + $0x20] sm:$0xf]
    %v7618 = vsel %vm4789, %v7610, 0
    %v7621 = vsel %vm5619, %v7616, 0
    %7623 = vmatprep.subr.mxu0 0.0
    %7624 = vmatpush1.msra.mxu0 %v7612
    %7625 = vmatprep.subr.mxu0 0.0
    %7626 = vmatpush1.msra.mxu0 %v7613
    %7627 = vmatprep.subr.mxu0 0.0
    %7628 = vmatpush1.msra.mxu0 %v7614
    %7629 = vmatprep.subr.mxu0 0.0
    %7630 = vmatpush1.msra.mxu0 %v7615
    %7631 = vmatprep.subr.mxu0 0.0
    %7632 = vmatpush1.msra.mxu0 %v7621
    %7633 = vmatprep.subr.mxu0 0.0
    %7634 = vmatpush1.msra.mxu0 0.0
    %7635 = vmatprep.subr.mxu0 0.0
    %7636 = vmatpush1.msra.mxu0 0.0
    %7637 = vmatprep.subr.mxu0 0.0
    %7638 = vmatpush1.msra.mxu0 0.0
    %7639 = vmatprep.subr.mxu0 0.0
    %7640 = vmatpush1.msra.mxu0 0.0
    %7641 = vmatprep.subr.mxu0 0.0
    %7642 = vmatpush1.msra.mxu0 0.0
    %7643 = vmatprep.subr.mxu0 0.0
    %7644 = vmatpush1.msra.mxu0 0.0
    %7645 = vmatprep.subr.mxu0 0.0
    %7646 = vmatpush1.msra.mxu0 0.0
    %7647 = vmatprep.subr.mxu0 0.0
    %7648 = vmatpush1.msra.mxu0 0.0
    %7649 = vmatprep.subr.mxu0 0.0
    %7650 = vmatpush1.msra.mxu0 0.0
    %7651 = vmatprep.subr.mxu0 0.0
    %7652 = vmatpush1.msra.mxu0 0.0
    %7653 = vmatprep.subr.mxu0 0.0
    %7654 = vmatpush1.msra.mxu0 0.0
    %7655 = vmatprep.subr.mxu0 0.0
    %7656 = vmatpush1.msra.mxu0 0.0
    %7657 = vmatprep.subr.mxu0 0.0
    %7658 = vmatpush1.msra.mxu0 0.0
    %7659 = vmatprep.subr.mxu0 0.0
    %7660 = vmatpush1.msra.mxu0 0.0
    %7661 = vmatprep.subr.mxu0 0.0
    %7662 = vmatpush1.msra.mxu0 0.0
    %7663 = vmatprep.subr.mxu0 0.0
    %7664 = vmatpush1.msra.mxu0 0.0
    %7665 = vmatprep.subr.mxu0 0.0
    %7666 = vmatpush1.msra.mxu0 0.0
    %7667 = vmatprep.subr.mxu0 0.0
    %7668 = vmatpush1.msra.mxu0 0.0
    %7669 = vmatprep.subr.mxu0 0.0
    %7670 = vmatpush1.msra.mxu0 0.0
    %7671 = vmatprep.subr.mxu0 0.0
    %7672 = vmatpush1.msra.mxu0 0.0
    %7673 = vmatprep.subr.mxu0 0.0
    %7674 = vmatpush1.msra.mxu0 0.0
    %7675 = vmatprep.subr.mxu0 0.0
    %7676 = vmatpush1.msra.mxu0 0.0
    %7677 = vmatprep.subr.mxu0 0.0
    %7678 = vmatpush1.msra.mxu0 0.0
    %7679 = vmatprep.subr.mxu0 0.0
    %7680 = vmatpush1.msra.mxu0 0.0
    %7681 = vmatprep.subr.mxu0 0.0
    %7682 = vmatpush1.msra.mxu0 0.0
    %7683 = vmatprep.subr.mxu0 0.0
    %7684 = vmatpush1.msra.mxu0 0.0
    %7685 = vmatprep.subr.mxu0 0.0
    %7686 = vmatpush1.msra.mxu0 0.0
    %7687 = vmatprep.mubr.f32.mxu0 0.0
    %7688 = vmatmul.mubr.f32.gmra.mrb[0].mxu0 %v7618
    %v7689 = vpop.f32.mrb[0].mxu0
    %v7690 = vadd.f32 0.0, %v7689
    %v7691 = vpop.f32.mrb[0].mxu0
    %7692 = vdwg.mxu0
    %v7693 = vadd.f32 %v7353, %v7690
    %s7694 = scalar_lea.vmem [#allocation2], 200
    %v7695 = vld [vmem:[%s7694] sm:$0xff]
    %s7696 = scalar_lea.vmem %s5, 1000
    %v7697 = vld [vmem:[%s7696] sm:$0xff]
    %v7698 = vld [vmem:[%s7696 + $0x8] sm:$0xff]
    %v7699 = vld [vmem:[%s7696 + $0x10] sm:$0xff]
    %v7700 = vld [vmem:[%s7696 + $0x18] sm:$0xff]
    %v7701 = vld [vmem:[%s7696 + $0x20] sm:$0xf]
    %v7703 = vsel %vm4789, %v7695, 0
    %v7706 = vsel %vm5619, %v7701, 0
    %7708 = vmatprep.subr.mxu0 0.0
    %7709 = vmatpush1.msra.mxu0 %v7697
    %7710 = vmatprep.subr.mxu0 0.0
    %7711 = vmatpush1.msra.mxu0 %v7698
    %7712 = vmatprep.subr.mxu0 0.0
    %7713 = vmatpush1.msra.mxu0 %v7699
    %7714 = vmatprep.subr.mxu0 0.0
    %7715 = vmatpush1.msra.mxu0 %v7700
    %7716 = vmatprep.subr.mxu0 0.0
    %7717 = vmatpush1.msra.mxu0 %v7706
    %7718 = vmatprep.subr.mxu0 0.0
    %7719 = vmatpush1.msra.mxu0 0.0
    %7720 = vmatprep.subr.mxu0 0.0
    %7721 = vmatpush1.msra.mxu0 0.0
    %7722 = vmatprep.subr.mxu0 0.0
    %7723 = vmatpush1.msra.mxu0 0.0
    %7724 = vmatprep.subr.mxu0 0.0
    %7725 = vmatpush1.msra.mxu0 0.0
    %7726 = vmatprep.subr.mxu0 0.0
    %7727 = vmatpush1.msra.mxu0 0.0
    %7728 = vmatprep.subr.mxu0 0.0
    %7729 = vmatpush1.msra.mxu0 0.0
    %7730 = vmatprep.subr.mxu0 0.0
    %7731 = vmatpush1.msra.mxu0 0.0
    %7732 = vmatprep.subr.mxu0 0.0
    %7733 = vmatpush1.msra.mxu0 0.0
    %7734 = vmatprep.subr.mxu0 0.0
    %7735 = vmatpush1.msra.mxu0 0.0
    %7736 = vmatprep.subr.mxu0 0.0
    %7737 = vmatpush1.msra.mxu0 0.0
    %7738 = vmatprep.subr.mxu0 0.0
    %7739 = vmatpush1.msra.mxu0 0.0
    %7740 = vmatprep.subr.mxu0 0.0
    %7741 = vmatpush1.msra.mxu0 0.0
    %7742 = vmatprep.subr.mxu0 0.0
    %7743 = vmatpush1.msra.mxu0 0.0
    %7744 = vmatprep.subr.mxu0 0.0
    %7745 = vmatpush1.msra.mxu0 0.0
    %7746 = vmatprep.subr.mxu0 0.0
    %7747 = vmatpush1.msra.mxu0 0.0
    %7748 = vmatprep.subr.mxu0 0.0
    %7749 = vmatpush1.msra.mxu0 0.0
    %7750 = vmatprep.subr.mxu0 0.0
    %7751 = vmatpush1.msra.mxu0 0.0
    %7752 = vmatprep.subr.mxu0 0.0
    %7753 = vmatpush1.msra.mxu0 0.0
    %7754 = vmatprep.subr.mxu0 0.0
    %7755 = vmatpush1.msra.mxu0 0.0
    %7756 = vmatprep.subr.mxu0 0.0
    %7757 = vmatpush1.msra.mxu0 0.0
    %7758 = vmatprep.subr.mxu0 0.0
    %7759 = vmatpush1.msra.mxu0 0.0
    %7760 = vmatprep.subr.mxu0 0.0
    %7761 = vmatpush1.msra.mxu0 0.0
    %7762 = vmatprep.subr.mxu0 0.0
    %7763 = vmatpush1.msra.mxu0 0.0
    %7764 = vmatprep.subr.mxu0 0.0
    %7765 = vmatpush1.msra.mxu0 0.0
    %7766 = vmatprep.subr.mxu0 0.0
    %7767 = vmatpush1.msra.mxu0 0.0
    %7768 = vmatprep.subr.mxu0 0.0
    %7769 = vmatpush1.msra.mxu0 0.0
    %7770 = vmatprep.subr.mxu0 0.0
    %7771 = vmatpush1.msra.mxu0 0.0
    %7772 = vmatprep.mubr.f32.mxu0 0.0
    %7773 = vmatmul.mubr.f32.gmra.mrb[0].mxu0 %v7703
    %v7774 = vpop.f32.mrb[0].mxu0
    %v7775 = vadd.f32 0.0, %v7774
    %v7776 = vpop.f32.mrb[0].mxu0
    %7777 = vdwg.mxu0
    %v7778 = vadd.f32 %v7438, %v7775
    %s7779 = scalar_lea.vmem [#allocation2], 208
    %v7780 = vld [vmem:[%s7779] sm:$0xff]
    %s7781 = scalar_lea.vmem %s5, 1040
    %v7782 = vld [vmem:[%s7781] sm:$0xff]
    %v7783 = vld [vmem:[%s7781 + $0x8] sm:$0xff]
    %v7784 = vld [vmem:[%s7781 + $0x10] sm:$0xff]
    %v7785 = vld [vmem:[%s7781 + $0x18] sm:$0xff]
    %v7786 = vld [vmem:[%s7781 + $0x20] sm:$0xf]
    %v7788 = vsel %vm4789, %v7780, 0
    %v7791 = vsel %vm5619, %v7786, 0
    %7793 = vmatprep.subr.mxu0 0.0
    %7794 = vmatpush1.msra.mxu0 %v7782
    %7795 = vmatprep.subr.mxu0 0.0
    %7796 = vmatpush1.msra.mxu0 %v7783
    %7797 = vmatprep.subr.mxu0 0.0
    %7798 = vmatpush1.msra.mxu0 %v7784
    %7799 = vmatprep.subr.mxu0 0.0
    %7800 = vmatpush1.msra.mxu0 %v7785
    %7801 = vmatprep.subr.mxu0 0.0
    %7802 = vmatpush1.msra.mxu0 %v7791
    %7803 = vmatprep.subr.mxu0 0.0
    %7804 = vmatpush1.msra.mxu0 0.0
    %7805 = vmatprep.subr.mxu0 0.0
    %7806 = vmatpush1.msra.mxu0 0.0
    %7807 = vmatprep.subr.mxu0 0.0
    %7808 = vmatpush1.msra.mxu0 0.0
    %7809 = vmatprep.subr.mxu0 0.0
    %7810 = vmatpush1.msra.mxu0 0.0
    %7811 = vmatprep.subr.mxu0 0.0
    %7812 = vmatpush1.msra.mxu0 0.0
    %7813 = vmatprep.subr.mxu0 0.0
    %7814 = vmatpush1.msra.mxu0 0.0
    %7815 = vmatprep.subr.mxu0 0.0
    %7816 = vmatpush1.msra.mxu0 0.0
    %7817 = vmatprep.subr.mxu0 0.0
    %7818 = vmatpush1.msra.mxu0 0.0
    %7819 = vmatprep.subr.mxu0 0.0
    %7820 = vmatpush1.msra.mxu0 0.0
    %7821 = vmatprep.subr.mxu0 0.0
    %7822 = vmatpush1.msra.mxu0 0.0
    %7823 = vmatprep.subr.mxu0 0.0
    %7824 = vmatpush1.msra.mxu0 0.0
    %7825 = vmatprep.subr.mxu0 0.0
    %7826 = vmatpush1.msra.mxu0 0.0
    %7827 = vmatprep.subr.mxu0 0.0
    %7828 = vmatpush1.msra.mxu0 0.0
    %7829 = vmatprep.subr.mxu0 0.0
    %7830 = vmatpush1.msra.mxu0 0.0
    %7831 = vmatprep.subr.mxu0 0.0
    %7832 = vmatpush1.msra.mxu0 0.0
    %7833 = vmatprep.subr.mxu0 0.0
    %7834 = vmatpush1.msra.mxu0 0.0
    %7835 = vmatprep.subr.mxu0 0.0
    %7836 = vmatpush1.msra.mxu0 0.0
    %7837 = vmatprep.subr.mxu0 0.0
    %7838 = vmatpush1.msra.mxu0 0.0
    %7839 = vmatprep.subr.mxu0 0.0
    %7840 = vmatpush1.msra.mxu0 0.0
    %7841 = vmatprep.subr.mxu0 0.0
    %7842 = vmatpush1.msra.mxu0 0.0
    %7843 = vmatprep.subr.mxu0 0.0
    %7844 = vmatpush1.msra.mxu0 0.0
    %7845 = vmatprep.subr.mxu0 0.0
    %7846 = vmatpush1.msra.mxu0 0.0
    %7847 = vmatprep.subr.mxu0 0.0
    %7848 = vmatpush1.msra.mxu0 0.0
    %7849 = vmatprep.subr.mxu0 0.0
    %7850 = vmatpush1.msra.mxu0 0.0
    %7851 = vmatprep.subr.mxu0 0.0
    %7852 = vmatpush1.msra.mxu0 0.0
    %7853 = vmatprep.subr.mxu0 0.0
    %7854 = vmatpush1.msra.mxu0 0.0
    %7855 = vmatprep.subr.mxu0 0.0
    %7856 = vmatpush1.msra.mxu0 0.0
    %7857 = vmatprep.mubr.f32.mxu0 0.0
    %7858 = vmatmul.mubr.f32.gmra.mrb[0].mxu0 %v7788
    %v7859 = vpop.f32.mrb[0].mxu0
    %v7860 = vadd.f32 0.0, %v7859
    %v7861 = vpop.f32.mrb[0].mxu0
    %7862 = vdwg.mxu0
    %v7863 = vadd.f32 %v7523, %v7860
    %s7864 = scalar_lea.vmem [#allocation2], 216
    %v7865 = vld [vmem:[%s7864] sm:$0xff]
    %s7866 = scalar_lea.vmem %s5, 1080
    %v7867 = vld [vmem:[%s7866] sm:$0xff]
    %v7868 = vld [vmem:[%s7866 + $0x8] sm:$0xff]
    %v7869 = vld [vmem:[%s7866 + $0x10] sm:$0xff]
    %v7870 = vld [vmem:[%s7866 + $0x18] sm:$0xff]
    %v7871 = vld [vmem:[%s7866 + $0x20] sm:$0xf]
    %v7873 = vsel %vm4789, %v7865, 0
    %v7876 = vsel %vm5619, %v7871, 0
    %7878 = vmatprep.subr.mxu0 0.0
    %7879 = vmatpush1.msra.mxu0 %v7867
    %7880 = vmatprep.subr.mxu0 0.0
    %7881 = vmatpush1.msra.mxu0 %v7868
    %7882 = vmatprep.subr.mxu0 0.0
    %7883 = vmatpush1.msra.mxu0 %v7869
    %7884 = vmatprep.subr.mxu0 0.0
    %7885 = vmatpush1.msra.mxu0 %v7870
    %7886 = vmatprep.subr.mxu0 0.0
    %7887 = vmatpush1.msra.mxu0 %v7876
    %7888 = vmatprep.subr.mxu0 0.0
    %7889 = vmatpush1.msra.mxu0 0.0
    %7890 = vmatprep.subr.mxu0 0.0
    %7891 = vmatpush1.msra.mxu0 0.0
    %7892 = vmatprep.subr.mxu0 0.0
    %7893 = vmatpush1.msra.mxu0 0.0
    %7894 = vmatprep.subr.mxu0 0.0
    %7895 = vmatpush1.msra.mxu0 0.0
    %7896 = vmatprep.subr.mxu0 0.0
    %7897 = vmatpush1.msra.mxu0 0.0
    %7898 = vmatprep.subr.mxu0 0.0
    %7899 = vmatpush1.msra.mxu0 0.0
    %7900 = vmatprep.subr.mxu0 0.0
    %7901 = vmatpush1.msra.mxu0 0.0
    %7902 = vmatprep.subr.mxu0 0.0
    %7903 = vmatpush1.msra.mxu0 0.0
    %7904 = vmatprep.subr.mxu0 0.0
    %7905 = vmatpush1.msra.mxu0 0.0
    %7906 = vmatprep.subr.mxu0 0.0
    %7907 = vmatpush1.msra.mxu0 0.0
    %7908 = vmatprep.subr.mxu0 0.0
    %7909 = vmatpush1.msra.mxu0 0.0
    %7910 = vmatprep.subr.mxu0 0.0
    %7911 = vmatpush1.msra.mxu0 0.0
    %7912 = vmatprep.subr.mxu0 0.0
    %7913 = vmatpush1.msra.mxu0 0.0
    %7914 = vmatprep.subr.mxu0 0.0
    %7915 = vmatpush1.msra.mxu0 0.0
    %7916 = vmatprep.subr.mxu0 0.0
    %7917 = vmatpush1.msra.mxu0 0.0
    %7918 = vmatprep.subr.mxu0 0.0
    %7919 = vmatpush1.msra.mxu0 0.0
    %7920 = vmatprep.subr.mxu0 0.0
    %7921 = vmatpush1.msra.mxu0 0.0
    %7922 = vmatprep.subr.mxu0 0.0
    %7923 = vmatpush1.msra.mxu0 0.0
    %7924 = vmatprep.subr.mxu0 0.0
    %7925 = vmatpush1.msra.mxu0 0.0
    %7926 = vmatprep.subr.mxu0 0.0
    %7927 = vmatpush1.msra.mxu0 0.0
    %7928 = vmatprep.subr.mxu0 0.0
    %7929 = vmatpush1.msra.mxu0 0.0
    %7930 = vmatprep.subr.mxu0 0.0
    %7931 = vmatpush1.msra.mxu0 0.0
    %7932 = vmatprep.subr.mxu0 0.0
    %7933 = vmatpush1.msra.mxu0 0.0
    %7934 = vmatprep.subr.mxu0 0.0
    %7935 = vmatpush1.msra.mxu0 0.0
    %7936 = vmatprep.subr.mxu0 0.0
    %7937 = vmatpush1.msra.mxu0 0.0
    %7938 = vmatprep.subr.mxu0 0.0
    %7939 = vmatpush1.msra.mxu0 0.0
    %7940 = vmatprep.subr.mxu0 0.0
    %7941 = vmatpush1.msra.mxu0 0.0
    %7942 = vmatprep.mubr.f32.mxu0 0.0
    %7943 = vmatmul.mubr.f32.gmra.mrb[0].mxu0 %v7873
    %v7944 = vpop.f32.mrb[0].mxu0
    %v7945 = vadd.f32 0.0, %v7944
    %v7946 = vpop.f32.mrb[0].mxu0
    %7947 = vdwg.mxu0
    %v7948 = vadd.f32 %v7608, %v7945
    %s7949 = scalar_lea.vmem [#allocation2], 224
    %v7950 = vld [vmem:[%s7949] sm:$0xff]
    %s7951 = scalar_lea.vmem %s5, 1120
    %v7952 = vld [vmem:[%s7951] sm:$0xff]
    %v7953 = vld [vmem:[%s7951 + $0x8] sm:$0xff]
    %v7954 = vld [vmem:[%s7951 + $0x10] sm:$0xff]
    %v7955 = vld [vmem:[%s7951 + $0x18] sm:$0xff]
    %v7956 = vld [vmem:[%s7951 + $0x20] sm:$0xf]
    %v7958 = vsel %vm4789, %v7950, 0
    %v7961 = vsel %vm5619, %v7956, 0
    %7963 = vmatprep.subr.mxu0 0.0
    %7964 = vmatpush1.msra.mxu0 %v7952
    %7965 = vmatprep.subr.mxu0 0.0
    %7966 = vmatpush1.msra.mxu0 %v7953
    %7967 = vmatprep.subr.mxu0 0.0
    %7968 = vmatpush1.msra.mxu0 %v7954
    %7969 = vmatprep.subr.mxu0 0.0
    %7970 = vmatpush1.msra.mxu0 %v7955
    %7971 = vmatprep.subr.mxu0 0.0
    %7972 = vmatpush1.msra.mxu0 %v7961
    %7973 = vmatprep.subr.mxu0 0.0
    %7974 = vmatpush1.msra.mxu0 0.0
    %7975 = vmatprep.subr.mxu0 0.0
    %7976 = vmatpush1.msra.mxu0 0.0
    %7977 = vmatprep.subr.mxu0 0.0
    %7978 = vmatpush1.msra.mxu0 0.0
    %7979 = vmatprep.subr.mxu0 0.0
    %7980 = vmatpush1.msra.mxu0 0.0
    %7981 = vmatprep.subr.mxu0 0.0
    %7982 = vmatpush1.msra.mxu0 0.0
    %7983 = vmatprep.subr.mxu0 0.0
    %7984 = vmatpush1.msra.mxu0 0.0
    %7985 = vmatprep.subr.mxu0 0.0
    %7986 = vmatpush1.msra.mxu0 0.0
    %7987 = vmatprep.subr.mxu0 0.0
    %7988 = vmatpush1.msra.mxu0 0.0
    %7989 = vmatprep.subr.mxu0 0.0
    %7990 = vmatpush1.msra.mxu0 0.0
    %7991 = vmatprep.subr.mxu0 0.0
    %7992 = vmatpush1.msra.mxu0 0.0
    %7993 = vmatprep.subr.mxu0 0.0
    %7994 = vmatpush1.msra.mxu0 0.0
    %7995 = vmatprep.subr.mxu0 0.0
    %7996 = vmatpush1.msra.mxu0 0.0
    %7997 = vmatprep.subr.mxu0 0.0
    %7998 = vmatpush1.msra.mxu0 0.0
    %7999 = vmatprep.subr.mxu0 0.0
    %8000 = vmatpush1.msra.mxu0 0.0
    %8001 = vmatprep.subr.mxu0 0.0
    %8002 = vmatpush1.msra.mxu0 0.0
    %8003 = vmatprep.subr.mxu0 0.0
    %8004 = vmatpush1.msra.mxu0 0.0
    %8005 = vmatprep.subr.mxu0 0.0
    %8006 = vmatpush1.msra.mxu0 0.0
    %8007 = vmatprep.subr.mxu0 0.0
    %8008 = vmatpush1.msra.mxu0 0.0
    %8009 = vmatprep.subr.mxu0 0.0
    %8010 = vmatpush1.msra.mxu0 0.0
    %8011 = vmatprep.subr.mxu0 0.0
    %8012 = vmatpush1.msra.mxu0 0.0
    %8013 = vmatprep.subr.mxu0 0.0
    %8014 = vmatpush1.msra.mxu0 0.0
    %8015 = vmatprep.subr.mxu0 0.0
    %8016 = vmatpush1.msra.mxu0 0.0
    %8017 = vmatprep.subr.mxu0 0.0
    %8018 = vmatpush1.msra.mxu0 0.0
    %8019 = vmatprep.subr.mxu0 0.0
    %8020 = vmatpush1.msra.mxu0 0.0
    %8021 = vmatprep.subr.mxu0 0.0
    %8022 = vmatpush1.msra.mxu0 0.0
    %8023 = vmatprep.subr.mxu0 0.0
    %8024 = vmatpush1.msra.mxu0 0.0
    %8025 = vmatprep.subr.mxu0 0.0
    %8026 = vmatpush1.msra.mxu0 0.0
    %8027 = vmatprep.mubr.f32.mxu0 0.0
    %8028 = vmatmul.mubr.f32.gmra.mrb[0].mxu0 %v7958
    %v8029 = vpop.f32.mrb[0].mxu0
    %v8030 = vadd.f32 0.0, %v8029
    %v8031 = vpop.f32.mrb[0].mxu0
    %8032 = vdwg.mxu0
    %v8033 = vadd.f32 %v7693, %v8030
    %s8034 = scalar_lea.vmem [#allocation2], 232
    %v8035 = vld [vmem:[%s8034] sm:$0xff]
    %s8036 = scalar_lea.vmem %s5, 1160
    %v8037 = vld [vmem:[%s8036] sm:$0xff]
    %v8038 = vld [vmem:[%s8036 + $0x8] sm:$0xff]
    %v8039 = vld [vmem:[%s8036 + $0x10] sm:$0xff]
    %v8040 = vld [vmem:[%s8036 + $0x18] sm:$0xff]
    %v8041 = vld [vmem:[%s8036 + $0x20] sm:$0xf]
    %v8043 = vsel %vm4789, %v8035, 0
    %v8046 = vsel %vm5619, %v8041, 0
    %8048 = vmatprep.subr.mxu0 0.0
    %8049 = vmatpush1.msra.mxu0 %v8037
    %8050 = vmatprep.subr.mxu0 0.0
    %8051 = vmatpush1.msra.mxu0 %v8038
    %8052 = vmatprep.subr.mxu0 0.0
    %8053 = vmatpush1.msra.mxu0 %v8039
    %8054 = vmatprep.subr.mxu0 0.0
    %8055 = vmatpush1.msra.mxu0 %v8040
    %8056 = vmatprep.subr.mxu0 0.0
    %8057 = vmatpush1.msra.mxu0 %v8046
    %8058 = vmatprep.subr.mxu0 0.0
    %8059 = vmatpush1.msra.mxu0 0.0
    %8060 = vmatprep.subr.mxu0 0.0
    %8061 = vmatpush1.msra.mxu0 0.0
    %8062 = vmatprep.subr.mxu0 0.0
    %8063 = vmatpush1.msra.mxu0 0.0
    %8064 = vmatprep.subr.mxu0 0.0
    %8065 = vmatpush1.msra.mxu0 0.0
    %8066 = vmatprep.subr.mxu0 0.0
    %8067 = vmatpush1.msra.mxu0 0.0
    %8068 = vmatprep.subr.mxu0 0.0
    %8069 = vmatpush1.msra.mxu0 0.0
    %8070 = vmatprep.subr.mxu0 0.0
    %8071 = vmatpush1.msra.mxu0 0.0
    %8072 = vmatprep.subr.mxu0 0.0
    %8073 = vmatpush1.msra.mxu0 0.0
    %8074 = vmatprep.subr.mxu0 0.0
    %8075 = vmatpush1.msra.mxu0 0.0
    %8076 = vmatprep.subr.mxu0 0.0
    %8077 = vmatpush1.msra.mxu0 0.0
    %8078 = vmatprep.subr.mxu0 0.0
    %8079 = vmatpush1.msra.mxu0 0.0
    %8080 = vmatprep.subr.mxu0 0.0
    %8081 = vmatpush1.msra.mxu0 0.0
    %8082 = vmatprep.subr.mxu0 0.0
    %8083 = vmatpush1.msra.mxu0 0.0
    %8084 = vmatprep.subr.mxu0 0.0
    %8085 = vmatpush1.msra.mxu0 0.0
    %8086 = vmatprep.subr.mxu0 0.0
    %8087 = vmatpush1.msra.mxu0 0.0
    %8088 = vmatprep.subr.mxu0 0.0
    %8089 = vmatpush1.msra.mxu0 0.0
    %8090 = vmatprep.subr.mxu0 0.0
    %8091 = vmatpush1.msra.mxu0 0.0
    %8092 = vmatprep.subr.mxu0 0.0
    %8093 = vmatpush1.msra.mxu0 0.0
    %8094 = vmatprep.subr.mxu0 0.0
    %8095 = vmatpush1.msra.mxu0 0.0
    %8096 = vmatprep.subr.mxu0 0.0
    %8097 = vmatpush1.msra.mxu0 0.0
    %8098 = vmatprep.subr.mxu0 0.0
    %8099 = vmatpush1.msra.mxu0 0.0
    %8100 = vmatprep.subr.mxu0 0.0
    %8101 = vmatpush1.msra.mxu0 0.0
    %8102 = vmatprep.subr.mxu0 0.0
    %8103 = vmatpush1.msra.mxu0 0.0
    %8104 = vmatprep.subr.mxu0 0.0
    %8105 = vmatpush1.msra.mxu0 0.0
    %8106 = vmatprep.subr.mxu0 0.0
    %8107 = vmatpush1.msra.mxu0 0.0
    %8108 = vmatprep.subr.mxu0 0.0
    %8109 = vmatpush1.msra.mxu0 0.0
    %8110 = vmatprep.subr.mxu0 0.0
    %8111 = vmatpush1.msra.mxu0 0.0
    %8112 = vmatprep.mubr.f32.mxu0 0.0
    %8113 = vmatmul.mubr.f32.gmra.mrb[0].mxu0 %v8043
    %v8114 = vpop.f32.mrb[0].mxu0
    %v8115 = vadd.f32 0.0, %v8114
    %v8116 = vpop.f32.mrb[0].mxu0
    %8117 = vdwg.mxu0
    %v8118 = vadd.f32 %v7778, %v8115
    %s8119 = scalar_lea.vmem [#allocation2], 240
    %v8120 = vld [vmem:[%s8119] sm:$0xff]
    %s8121 = scalar_lea.vmem %s5, 1200
    %v8122 = vld [vmem:[%s8121] sm:$0xff]
    %v8123 = vld [vmem:[%s8121 + $0x8] sm:$0xff]
    %v8124 = vld [vmem:[%s8121 + $0x10] sm:$0xff]
    %v8125 = vld [vmem:[%s8121 + $0x18] sm:$0xff]
    %v8126 = vld [vmem:[%s8121 + $0x20] sm:$0xf]
    %v8128 = vsel %vm4789, %v8120, 0
    %v8131 = vsel %vm5619, %v8126, 0
    %8133 = vmatprep.subr.mxu0 0.0
    %8134 = vmatpush1.msra.mxu0 %v8122
    %8135 = vmatprep.subr.mxu0 0.0
    %8136 = vmatpush1.msra.mxu0 %v8123
    %8137 = vmatprep.subr.mxu0 0.0
    %8138 = vmatpush1.msra.mxu0 %v8124
    %8139 = vmatprep.subr.mxu0 0.0
    %8140 = vmatpush1.msra.mxu0 %v8125
    %8141 = vmatprep.subr.mxu0 0.0
    %8142 = vmatpush1.msra.mxu0 %v8131
    %8143 = vmatprep.subr.mxu0 0.0
    %8144 = vmatpush1.msra.mxu0 0.0
    %8145 = vmatprep.subr.mxu0 0.0
    %8146 = vmatpush1.msra.mxu0 0.0
    %8147 = vmatprep.subr.mxu0 0.0
    %8148 = vmatpush1.msra.mxu0 0.0
    %8149 = vmatprep.subr.mxu0 0.0
    %8150 = vmatpush1.msra.mxu0 0.0
    %8151 = vmatprep.subr.mxu0 0.0
    %8152 = vmatpush1.msra.mxu0 0.0
    %8153 = vmatprep.subr.mxu0 0.0
    %8154 = vmatpush1.msra.mxu0 0.0
    %8155 = vmatprep.subr.mxu0 0.0
    %8156 = vmatpush1.msra.mxu0 0.0
    %8157 = vmatprep.subr.mxu0 0.0
    %8158 = vmatpush1.msra.mxu0 0.0
    %8159 = vmatprep.subr.mxu0 0.0
    %8160 = vmatpush1.msra.mxu0 0.0
    %8161 = vmatprep.subr.mxu0 0.0
    %8162 = vmatpush1.msra.mxu0 0.0
    %8163 = vmatprep.subr.mxu0 0.0
    %8164 = vmatpush1.msra.mxu0 0.0
    %8165 = vmatprep.subr.mxu0 0.0
    %8166 = vmatpush1.msra.mxu0 0.0
    %8167 = vmatprep.subr.mxu0 0.0
    %8168 = vmatpush1.msra.mxu0 0.0
    %8169 = vmatprep.subr.mxu0 0.0
    %8170 = vmatpush1.msra.mxu0 0.0
    %8171 = vmatprep.subr.mxu0 0.0
    %8172 = vmatpush1.msra.mxu0 0.0
    %8173 = vmatprep.subr.mxu0 0.0
    %8174 = vmatpush1.msra.mxu0 0.0
    %8175 = vmatprep.subr.mxu0 0.0
    %8176 = vmatpush1.msra.mxu0 0.0
    %8177 = vmatprep.subr.mxu0 0.0
    %8178 = vmatpush1.msra.mxu0 0.0
    %8179 = vmatprep.subr.mxu0 0.0
    %8180 = vmatpush1.msra.mxu0 0.0
    %8181 = vmatprep.subr.mxu0 0.0
    %8182 = vmatpush1.msra.mxu0 0.0
    %8183 = vmatprep.subr.mxu0 0.0
    %8184 = vmatpush1.msra.mxu0 0.0
    %8185 = vmatprep.subr.mxu0 0.0
    %8186 = vmatpush1.msra.mxu0 0.0
    %8187 = vmatprep.subr.mxu0 0.0
    %8188 = vmatpush1.msra.mxu0 0.0
    %8189 = vmatprep.subr.mxu0 0.0
    %8190 = vmatpush1.msra.mxu0 0.0
    %8191 = vmatprep.subr.mxu0 0.0
    %8192 = vmatpush1.msra.mxu0 0.0
    %8193 = vmatprep.subr.mxu0 0.0
    %8194 = vmatpush1.msra.mxu0 0.0
    %8195 = vmatprep.subr.mxu0 0.0
    %8196 = vmatpush1.msra.mxu0 0.0
    %8197 = vmatprep.mubr.f32.mxu0 0.0
    %8198 = vmatmul.mubr.f32.gmra.mrb[0].mxu0 %v8128
    %v8199 = vpop.f32.mrb[0].mxu0
    %v8200 = vadd.f32 0.0, %v8199
    %v8201 = vpop.f32.mrb[0].mxu0
    %8202 = vdwg.mxu0
    %v8203 = vadd.f32 %v7863, %v8200
    %s8204 = scalar_lea.vmem [#allocation2], 248
    %v8205 = vld [vmem:[%s8204] sm:$0xff]
    %s8206 = scalar_lea.vmem %s5, 1240
    %v8207 = vld [vmem:[%s8206] sm:$0xff]
    %v8208 = vld [vmem:[%s8206 + $0x8] sm:$0xff]
    %v8209 = vld [vmem:[%s8206 + $0x10] sm:$0xff]
    %v8210 = vld [vmem:[%s8206 + $0x18] sm:$0xff]
    %v8211 = vld [vmem:[%s8206 + $0x20] sm:$0xf]
    %v8213 = vsel %vm4789, %v8205, 0
    %v8216 = vsel %vm5619, %v8211, 0
    %8218 = vmatprep.subr.mxu0 0.0
    %8219 = vmatpush1.msra.mxu0 %v8207
    %8220 = vmatprep.subr.mxu0 0.0
    %8221 = vmatpush1.msra.mxu0 %v8208
    %8222 = vmatprep.subr.mxu0 0.0
    %8223 = vmatpush1.msra.mxu0 %v8209
    %8224 = vmatprep.subr.mxu0 0.0
    %8225 = vmatpush1.msra.mxu0 %v8210
    %8226 = vmatprep.subr.mxu0 0.0
    %8227 = vmatpush1.msra.mxu0 %v8216
    %8228 = vmatprep.subr.mxu0 0.0
    %8229 = vmatpush1.msra.mxu0 0.0
    %8230 = vmatprep.subr.mxu0 0.0
    %8231 = vmatpush1.msra.mxu0 0.0
    %8232 = vmatprep.subr.mxu0 0.0
    %8233 = vmatpush1.msra.mxu0 0.0
    %8234 = vmatprep.subr.mxu0 0.0
    %8235 = vmatpush1.msra.mxu0 0.0
    %8236 = vmatprep.subr.mxu0 0.0
    %8237 = vmatpush1.msra.mxu0 0.0
    %8238 = vmatprep.subr.mxu0 0.0
    %8239 = vmatpush1.msra.mxu0 0.0
    %8240 = vmatprep.subr.mxu0 0.0
    %8241 = vmatpush1.msra.mxu0 0.0
    %8242 = vmatprep.subr.mxu0 0.0
    %8243 = vmatpush1.msra.mxu0 0.0
    %8244 = vmatprep.subr.mxu0 0.0
    %8245 = vmatpush1.msra.mxu0 0.0
    %8246 = vmatprep.subr.mxu0 0.0
    %8247 = vmatpush1.msra.mxu0 0.0
    %8248 = vmatprep.subr.mxu0 0.0
    %8249 = vmatpush1.msra.mxu0 0.0
    %8250 = vmatprep.subr.mxu0 0.0
    %8251 = vmatpush1.msra.mxu0 0.0
    %8252 = vmatprep.subr.mxu0 0.0
    %8253 = vmatpush1.msra.mxu0 0.0
    %8254 = vmatprep.subr.mxu0 0.0
    %8255 = vmatpush1.msra.mxu0 0.0
    %8256 = vmatprep.subr.mxu0 0.0
    %8257 = vmatpush1.msra.mxu0 0.0
    %8258 = vmatprep.subr.mxu0 0.0
    %8259 = vmatpush1.msra.mxu0 0.0
    %8260 = vmatprep.subr.mxu0 0.0
    %8261 = vmatpush1.msra.mxu0 0.0
    %8262 = vmatprep.subr.mxu0 0.0
    %8263 = vmatpush1.msra.mxu0 0.0
    %8264 = vmatprep.subr.mxu0 0.0
    %8265 = vmatpush1.msra.mxu0 0.0
    %8266 = vmatprep.subr.mxu0 0.0
    %8267 = vmatpush1.msra.mxu0 0.0
    %8268 = vmatprep.subr.mxu0 0.0
    %8269 = vmatpush1.msra.mxu0 0.0
    %8270 = vmatprep.subr.mxu0 0.0
    %8271 = vmatpush1.msra.mxu0 0.0
    %8272 = vmatprep.subr.mxu0 0.0
    %8273 = vmatpush1.msra.mxu0 0.0
    %8274 = vmatprep.subr.mxu0 0.0
    %8275 = vmatpush1.msra.mxu0 0.0
    %8276 = vmatprep.subr.mxu0 0.0
    %8277 = vmatpush1.msra.mxu0 0.0
    %8278 = vmatprep.subr.mxu0 0.0
    %8279 = vmatpush1.msra.mxu0 0.0
    %8280 = vmatprep.subr.mxu0 0.0
    %8281 = vmatpush1.msra.mxu0 0.0
    %8282 = vmatprep.mubr.f32.mxu0 0.0
    %8283 = vmatmul.mubr.f32.gmra.mrb[0].mxu0 %v8213
    %v8284 = vpop.f32.mrb[0].mxu0
    %v8285 = vadd.f32 0.0, %v8284
    %v8286 = vpop.f32.mrb[0].mxu0
    %8287 = vdwg.mxu0
    %v8288 = vadd.f32 %v7948, %v8285
    %v8289 = vadd.f32 %v8033, %v8118
    %v8290 = vadd.f32 %v8203, %v8288
    %v8291 = vadd.f32 %v8289, %v8290
    %v8292 = vld [vmem:[%s6] sm:$0x1]
    %v8294 = vlaneseq
    %v8295 = vshrl.u32 %v8294, 7
    %v8296 = vsub.s32 0, %v8295
    %v8297 = vrot.slane %v8292, %v8296
    %v8299 = vadd.f32 %v8291, %v8297
    %v8300 = vmax.f32 %v8299, 0.0
    %v8301 = vld [vmem:[%s7] sm:$0xff]
    %v8302 = vld [vmem:[%s7 + $0x8] sm:$0xff]
    %v8303 = vld [vmem:[%s7 + $0x10] sm:$0xff]
    %v8304 = vld [vmem:[%s7 + $0x18] sm:$0xff]
    %v8305 = vld [vmem:[%s7 + $0x20] sm:$0xff]
    %v8306 = vld [vmem:[%s7 + $0x28] sm:$0xff]
    %v8307 = vld [vmem:[%s7 + $0x30] sm:$0xff]
    %v8308 = vld [vmem:[%s7 + $0x38] sm:$0xff]
    %v8309 = vld [vmem:[%s7 + $0x40] sm:$0xff]
    %v8310 = vld [vmem:[%s7 + $0x48] sm:$0xff]
    %v8311 = vld [vmem:[%s7 + $0x50] sm:$0xff]
    %v8312 = vld [vmem:[%s7 + $0x58] sm:$0xff]
    %v8313 = vld [vmem:[%s7 + $0x60] sm:$0xff]
    %v8314 = vld [vmem:[%s7 + $0x68] sm:$0xff]
    %v8315 = vld [vmem:[%s7 + $0x70] sm:$0xff]
    %v8316 = vld [vmem:[%s7 + $0x78] sm:$0xff]
    %v8317 = vld [vmem:[%s8] sm:$0x1]
    %v8319 = vlaneseq
    %v8320 = vshrl.u32 %v8319, 7
    %v8321 = vsub.s32 0, %v8320
    %v8322 = vrot.slane %v8317, %v8321
    %8324 = vmatprep.subr.mxu0 0.0
    %8325 = vmatpush1.msra.mxu0 %v8301
    %8326 = vmatprep.subr.mxu0 0.0
    %8327 = vmatpush1.msra.mxu0 %v8302
    %8328 = vmatprep.subr.mxu0 0.0
    %8329 = vmatpush1.msra.mxu0 %v8303
    %8330 = vmatprep.subr.mxu0 0.0
    %8331 = vmatpush1.msra.mxu0 %v8304
    %8332 = vmatprep.subr.mxu0 0.0
    %8333 = vmatpush1.msra.mxu0 %v8305
    %8334 = vmatprep.subr.mxu0 0.0
    %8335 = vmatpush1.msra.mxu0 %v8306
    %8336 = vmatprep.subr.mxu0 0.0
    %8337 = vmatpush1.msra.mxu0 %v8307
    %8338 = vmatprep.subr.mxu0 0.0
    %8339 = vmatpush1.msra.mxu0 %v8308
    %8340 = vmatprep.subr.mxu0 0.0
    %8341 = vmatpush1.msra.mxu0 %v8309
    %8342 = vmatprep.subr.mxu0 0.0
    %8343 = vmatpush1.msra.mxu0 %v8310
    %8344 = vmatprep.subr.mxu0 0.0
    %8345 = vmatpush1.msra.mxu0 %v8311
    %8346 = vmatprep.subr.mxu0 0.0
    %8347 = vmatpush1.msra.mxu0 %v8312
    %8348 = vmatprep.subr.mxu0 0.0
    %8349 = vmatpush1.msra.mxu0 %v8313
    %8350 = vmatprep.subr.mxu0 0.0
    %8351 = vmatpush1.msra.mxu0 %v8314
    %8352 = vmatprep.subr.mxu0 0.0
    %8353 = vmatpush1.msra.mxu0 %v8315
    %8354 = vmatprep.subr.mxu0 0.0
    %8355 = vmatpush1.msra.mxu0 %v8316
    %8356 = vmatprep.subr.mxu0 0.0
    %8357 = vmatpush1.msra.mxu0 0.0
    %8358 = vmatprep.subr.mxu0 0.0
    %8359 = vmatpush1.msra.mxu0 0.0
    %8360 = vmatprep.subr.mxu0 0.0
    %8361 = vmatpush1.msra.mxu0 0.0
    %8362 = vmatprep.subr.mxu0 0.0
    %8363 = vmatpush1.msra.mxu0 0.0
    %8364 = vmatprep.subr.mxu0 0.0
    %8365 = vmatpush1.msra.mxu0 0.0
    %8366 = vmatprep.subr.mxu0 0.0
    %8367 = vmatpush1.msra.mxu0 0.0
    %8368 = vmatprep.subr.mxu0 0.0
    %8369 = vmatpush1.msra.mxu0 0.0
    %8370 = vmatprep.subr.mxu0 0.0
    %8371 = vmatpush1.msra.mxu0 0.0
    %8372 = vmatprep.subr.mxu0 0.0
    %8373 = vmatpush1.msra.mxu0 0.0
    %8374 = vmatprep.subr.mxu0 0.0
    %8375 = vmatpush1.msra.mxu0 0.0
    %8376 = vmatprep.subr.mxu0 0.0
    %8377 = vmatpush1.msra.mxu0 0.0
    %8378 = vmatprep.subr.mxu0 0.0
    %8379 = vmatpush1.msra.mxu0 0.0
    %8380 = vmatprep.subr.mxu0 0.0
    %8381 = vmatpush1.msra.mxu0 0.0
    %8382 = vmatprep.subr.mxu0 0.0
    %8383 = vmatpush1.msra.mxu0 0.0
    %8384 = vmatprep.subr.mxu0 0.0
    %8385 = vmatpush1.msra.mxu0 0.0
    %8386 = vmatprep.subr.mxu0 0.0
    %8387 = vmatpush1.msra.mxu0 0.0
    %8388 = vmatprep.mubr.f32.mxu0 0.0
    %8389 = vmatmul.mubr.f32.gmra.mrb[0].mxu0 %v8300
    %v8390 = vpop.f32.mrb[0].mxu0
    %v8391 = vadd.f32 %v8322, %v8390
    %v8392 = vpop.f32.mrb[0].mxu0
    %8393 = vdwg.mxu0
    %8394 = vst [vmem:[#allocation3] sm:$0xff] %v8391
    // Predicated region
    $region38: #{tpu_custom_call.1} parent=1 // pred_check
      _
    $region39: #{tpu_custom_call.1} parent=1 // pred_check_branch
      %8396 = sbr.rel (0) target = $region41
    $region40: #{tpu_custom_call.1} parent=1 // pred_region
      %s8398 = ssub.s32 128, 128
      %8399 = vsyncadd [#allocation4], %s8398
      %s8401 = sshll.u32 [#allocation3], 4
      %s8402 = int_to_ptr.vmem [resolvable:$true] %s8401
      %8404 = dma.vmem_to_hbm [thread:$0]  %s8402, 128, %s9, [#allocation4]
    $region41: #{tpu_custom_call.1} parent=1 // pred_fallthru
      _
    // Predicated region
    $region42: #{tpu_custom_call.1} parent=1 // pred_check
      _
    $region43: #{tpu_custom_call.1} parent=1 // pred_check_branch
      %8406 = sbr.rel (0) target = $region45
    $region44: #{tpu_custom_call.1} parent=1 // pred_region
      %8407 = dma.done [#allocation4], 128
    $region45: #{tpu_custom_call.1} parent=1 // pred_fallthru
      _
    %8408 = vsyncpa [#allocation4], 1

</llo_original>
